<compile_context>
chip_gen: v7x
topology: tpu7x:2x2x1
jax: 0.10.0
libtpu: 0.0.40
codegen_flags: <defaults>
</compile_context>

<pallas_src>
import functools

import jax
import jax.numpy as jnp
from jax import lax
from jax.experimental import pallas as pl
from jax.experimental.pallas import tpu as pltpu

GATE_PAD = 128  # one full 128-lane block per gate (r / z / n)


# ----------------------------------------------------------------------------
# Kernel
# ----------------------------------------------------------------------------
def gru_kernel(x_ref, wih0_ref, wihr_ref, whh_ref, bih_ref, bhh_ref,
               out_ref, gin_scr, *, num_layers, seq_len, batch_p, gp):
    T, BP, GP, L = seq_len, batch_p, gp, num_layers
    G3 = 3 * GP

    # Hoisted layer-0 input projection for the whole sequence (one matmul,
    # input bias folded in).  Spilled to VMEM scratch so the unrolled wave
    # loop does not hold T*BP*3GP f32 live in vregs; per-step reads below are
    # aligned (8,128) ref slices.
    x = x_ref[...].astype(jnp.float32)
    gin_scr[...] = jnp.dot(x, wih0_ref[...],
                           preferred_element_type=jnp.float32) + bih_ref[0]

    # Hidden-side / recurrent-input biases pre-broadcast once per layer
    # (no per-step broadcast_in_dim inside the unrolled loop).
    bhh = [jnp.broadcast_to(bhh_ref[l], (BP, G3)) for l in range(L)]
    bih_r = [jnp.broadcast_to(bih_ref[l], (BP, G3)) for l in range(1, L)]

    def sigmoid(v):
        # sigmoid(x) == 0.5*tanh(0.5*x) + 0.5 : one EUP op per vreg.
        return 0.5 * jnp.tanh(0.5 * v) + 0.5

    def gru_cell(gi, h, l):
        # Single fused recurrent matmul per cell; gate blocks are 128-lane
        # aligned, so every slice below selects whole vregs (no relayout).
        gh = jnp.dot(h, whh_ref[l], preferred_element_type=jnp.float32) + bhh[l]
        rz = sigmoid(gi[:, :2 * GP] + gh[:, :2 * GP])
        r, z = rz[:, :GP], rz[:, GP:]
        n = jnp.tanh(gi[:, 2 * GP:] + r * gh[:, 2 * GP:])
        return n + z * (h - n)            # == (1-z)*n + z*h, one fewer VALU op

    # Layer-time wavefront: all cells inside one wave depend only on wave w-1
    # state, so the serial chain is T+L-1 cells instead of T*L.  Layers are
    # processed top-down within a wave so layer l reads layer l-1's
    # previous-wave hidden state.
    h = [jnp.zeros((BP, GP), jnp.float32) for _ in range(L)]
    for w in range(T + L - 1):
        for l in range(L - 1, -1, -1):
            t = w - l
            if not (0 <= t < T):
                continue
            if l == 0:
                gi = gin_scr[pl.ds(t * BP, BP), :]
            else:
                # Off-critical-path per-step input projection for layer > 0;
                # independent of this layer's recurrence, pipelines on MXU.
                gi = jnp.dot(h[l - 1], wihr_ref[l - 1],
                             preferred_element_type=jnp.float32) + bih_r[l - 1]
            h[l] = gru_cell(gi, h[l], l)
            if l == L - 1:
                # Lane-dense, aligned (8,128) store of the top-layer output.
                out_ref[pl.ds(t * BP, BP), :] = h[l]


# ----------------------------------------------------------------------------
# Wrapper: weight packing + pallas_call
# ----------------------------------------------------------------------------
def pack_gates(W, b, hidden, rows):
    """PyTorch (3H, in)/(3H,) -> (rows, 3*GATE_PAD)/(1, 3*GATE_PAD).

    Gate g occupies columns [g*GATE_PAD, g*GATE_PAD + H); everything else is
    zero, so padded lanes / rows contribute exact zeros.
    """
    H, GP = hidden, GATE_PAD
    in_dim = W.shape[1]
    Wp = jnp.zeros((rows, 3 * GP), jnp.float32)
    bp = jnp.zeros((1, 3 * GP), jnp.float32)
    for g in range(3):
        Wp = Wp.at[:in_dim, g * GP:g * GP + H].set(W[g * H:(g + 1) * H, :].T)
        bp = bp.at[0, g * GP:g * GP + H].set(b[g * H:(g + 1) * H])
    return Wp, bp


def gru_forward(x, torch_weights, num_layers, hidden):
    T, B, I = x.shape
    GP = GATE_PAD
    # Pad batch to a multiple of 8 sublanes so vector/matrix rows are dense.
    BP = max(8, ((B + 7) // 8) * 8)
    x_p = jnp.zeros((T, BP, I), jnp.float32).at[:, :B, :].set(x)
    x_flat = x_p.reshape(T * BP, I)

    wih0, bih0 = pack_gates(torch_weights[0][0], torch_weights[0][2],
                            hidden, rows=I)
    whh_l, bhh_l, bih_l, wihr_l = [], [], [bih0], []
    for l in range(num_layers):
        W_ih, W_hh, b_ih, b_hh = torch_weights[l]
        w, b = pack_gates(W_hh, b_hh, hidden, rows=GP)
        whh_l.append(w)
        bhh_l.append(b)
        if l > 0:
            wi, bi = pack_gates(W_ih, b_ih, hidden, rows=GP)
            wihr_l.append(wi)
            bih_l.append(bi)

    whh = jnp.stack(whh_l)                        # (L, GP, 3GP)
    bhh = jnp.stack(bhh_l)                        # (L, 1, 3GP)
    bih = jnp.stack(bih_l)                        # (L, 1, 3GP)
    wihr = (jnp.stack(wihr_l) if num_layers > 1
            else jnp.zeros((1, GP, 3 * GP), jnp.float32))  # unused dummy

    vmem = pl.BlockSpec(memory_space=pltpu.MemorySpace.VMEM)
    out = pl.pallas_call(
        functools.partial(gru_kernel, num_layers=num_layers, seq_len=T,
                          batch_p=BP, gp=GP),
        out_shape=jax.ShapeDtypeStruct((T * BP, GP), jnp.float32),
        in_specs=[vmem] * 6,
        out_specs=vmem,
        scratch_shapes=[pltpu.VMEM((T * BP, 3 * GP), jnp.float32)],
    )(x_flat, wih0, wihr, whh, bih, bhh)

    # Strip batch / lane padding; flatten exactly like x.view(1, -1).
    return out.reshape(T, BP, GP)[:, :B, :hidden].reshape(1, -1)


# ----------------------------------------------------------------------------
# Pure-JAX reference (PyTorch nn.GRU semantics)
# ----------------------------------------------------------------------------
def gru_ref(x, torch_weights, num_layers, hidden):
    T, B, _ = x.shape
    seq = x
    for l in range(num_layers):
        W_ih, W_hh, b_ih, b_hh = torch_weights[l]
        h = jnp.zeros((B, hidden), jnp.float32)
        ys = []
        for t in range(T):
            gi = seq[t] @ W_ih.T + b_ih
            gh = h @ W_hh.T + b_hh
            i_r, i_z, i_n = jnp.split(gi, 3, axis=-1)
            h_r, h_z, h_n = jnp.split(gh, 3, axis=-1)
            r = jax.nn.sigmoid(i_r + h_r)
            z = jax.nn.sigmoid(i_z + h_z)
            n = jnp.tanh(i_n + r * h_n)
            h = (1.0 - z) * n + z * h
            ys.append(h)
        seq = jnp.stack(ys)
    return seq.reshape(1, -1)


if __name__ == "__main__":
    SEQ, BATCH = 8, 2
    IN_FEATURES, HIDDEN, NUM_LAYERS = 16, 32, 2

    key = jax.random.PRNGKey(0)
    key, kx = jax.random.split(key)
    x = jax.random.normal(kx, (SEQ, BATCH, IN_FEATURES), jnp.float32)

    # Deterministic PyTorch-style init: U(-1/sqrt(H), 1/sqrt(H)).
    bound = 1.0 / (HIDDEN ** 0.5)
    torch_weights = []
    for l in range(NUM_LAYERS):
        in_dim = IN_FEATURES if l == 0 else HIDDEN
        key, k1, k2, k3, k4 = jax.random.split(key, 5)
        W_ih = jax.random.uniform(k1, (3 * HIDDEN, in_dim), jnp.float32, -bound, bound)
        W_hh = jax.random.uniform(k2, (3 * HIDDEN, HIDDEN), jnp.float32, -bound, bound)
        b_ih = jax.random.uniform(k3, (3 * HIDDEN,), jnp.float32, -bound, bound)
        b_hh = jax.random.uniform(k4, (3 * HIDDEN,), jnp.float32, -bound, bound)
        torch_weights.append((W_ih, W_hh, b_ih, b_hh))

    y = gru_forward(x, torch_weights, NUM_LAYERS, HIDDEN)
    y = jax.block_until_ready(y)

    y_ref = gru_ref(x, torch_weights, NUM_LAYERS, HIDDEN)
    assert y.shape == (1, SEQ * BATCH * HIDDEN), y.shape
    assert jnp.allclose(y, y_ref, atol=1e-5, rtol=1e-4), "mismatch vs reference"

    print("KERNEL_OK")
</pallas_src>

<mosaic_0001>
module attributes {stable_mosaic.version = 11 : i64} {
  func.func @gru_kernel(%arg0: memref<64x16xf32, #tpu.memory_space<vmem>>, %arg1: memref<16x384xf32, #tpu.memory_space<vmem>>, %arg2: memref<1x128x384xf32, #tpu.memory_space<vmem>>, %arg3: memref<2x128x384xf32, #tpu.memory_space<vmem>>, %arg4: memref<2x1x384xf32, #tpu.memory_space<vmem>>, %arg5: memref<2x1x384xf32, #tpu.memory_space<vmem>>, %arg6: memref<64x128xf32, #tpu.memory_space<vmem>>, %arg7: memref<64x384xf32, #tpu.memory_space<vmem>>) attributes {dimension_semantics = [], scalar_prefetch = 0 : i64, scratch_operands = 1 : i64, tpu.core_type = #tpu.core_type<tc>} {
    %c0 = arith.constant 0 : index
    %c0_0 = arith.constant 0 : index
    %0 = vector.load %arg0[%c0, %c0_0] : memref<64x16xf32, #tpu.memory_space<vmem>>, vector<64x16xf32>
    %c0_1 = arith.constant 0 : index
    %c0_2 = arith.constant 0 : index
    %1 = vector.load %arg1[%c0_1, %c0_2] : memref<16x384xf32, #tpu.memory_space<vmem>>, vector<16x384xf32>
    %cst = arith.constant dense<0.000000e+00> : vector<64x384xf32>
    %2 = tpu.matmul %0, %1, %cst {dimension_numbers = #tpu.dot_dimension_numbers<[1], [0], [0], [1], [0, 0, 1, 1], [], []>} : vector<64x16xf32>, vector<16x384xf32>, vector<64x384xf32> -> vector<64x384xf32>
    %c0_3 = arith.constant 0 : index
    %c0_4 = arith.constant 0 : index
    %c0_5 = arith.constant 0 : index
    %3 = vector.load %arg4[%c0_3, %c0_4, %c0_5] : memref<2x1x384xf32, #tpu.memory_space<vmem>>, vector<1x1x384xf32>
    %4 = vector.shape_cast %3 : vector<1x1x384xf32> to vector<1x384xf32>
    %5 = vector.broadcast %4 : vector<1x384xf32> to vector<64x384xf32>
    %6 = arith.addf %2, %5 : vector<64x384xf32>
    %c0_6 = arith.constant 0 : index
    %c0_7 = arith.constant 0 : index
    %7 = vector.load %arg7[%c0_6, %c0_7] : memref<64x384xf32, #tpu.memory_space<vmem>>, vector<64x384xf32>
    tpu.vector_store %arg7[%c0_6, %c0_7], %6 {strides = array<i32>} : memref<64x384xf32, #tpu.memory_space<vmem>>, vector<64x384xf32>,
    %c0_8 = arith.constant 0 : index
    %c0_9 = arith.constant 0 : index
    %c0_10 = arith.constant 0 : index
    %8 = vector.load %arg5[%c0_8, %c0_9, %c0_10] : memref<2x1x384xf32, #tpu.memory_space<vmem>>, vector<1x1x384xf32>
    %9 = vector.shape_cast %8 : vector<1x1x384xf32> to vector<1x384xf32>
    %10 = vector.shape_cast %9 : vector<1x384xf32> to vector<1x384xf32>
    %11 = vector.broadcast %10 : vector<1x384xf32> to vector<8x384xf32>
    %c1 = arith.constant 1 : index
    %c0_11 = arith.constant 0 : index
    %c0_12 = arith.constant 0 : index
    %12 = vector.load %arg5[%c1, %c0_11, %c0_12] : memref<2x1x384xf32, #tpu.memory_space<vmem>>, vector<1x1x384xf32>
    %13 = vector.shape_cast %12 : vector<1x1x384xf32> to vector<1x384xf32>
    %14 = vector.shape_cast %13 : vector<1x384xf32> to vector<1x384xf32>
    %15 = vector.broadcast %14 : vector<1x384xf32> to vector<8x384xf32>
    %c1_13 = arith.constant 1 : index
    %c0_14 = arith.constant 0 : index
    %c0_15 = arith.constant 0 : index
    %16 = vector.load %arg4[%c1_13, %c0_14, %c0_15] : memref<2x1x384xf32, #tpu.memory_space<vmem>>, vector<1x1x384xf32>
    %17 = vector.shape_cast %16 : vector<1x1x384xf32> to vector<1x384xf32>
    %18 = vector.shape_cast %17 : vector<1x384xf32> to vector<1x384xf32>
    %19 = vector.broadcast %18 : vector<1x384xf32> to vector<8x384xf32>
    %cst_16 = arith.constant 0.000000e+00 : f32
    %20 = vector.broadcast %cst_16 : f32 to vector<8x128xf32>
    %cst_17 = arith.constant 0.000000e+00 : f32
    %21 = vector.broadcast %cst_17 : f32 to vector<8x128xf32>
    %c0_18 = arith.constant 0 : index
    %c0_19 = arith.constant 0 : index
    %22 = vector.load %arg7[%c0_18, %c0_19] : memref<64x384xf32, #tpu.memory_space<vmem>>, vector<8x384xf32>
    %c0_20 = arith.constant 0 : index
    %c0_21 = arith.constant 0 : index
    %c0_22 = arith.constant 0 : index
    %23 = vector.load %arg3[%c0_20, %c0_21, %c0_22] : memref<2x128x384xf32, #tpu.memory_space<vmem>>, vector<1x128x384xf32>
    %24 = vector.shape_cast %23 : vector<1x128x384xf32> to vector<128x384xf32>
    %cst_23 = arith.constant dense<0.000000e+00> : vector<8x384xf32>
    %25 = tpu.matmul %20, %24, %cst_23 {dimension_numbers = #tpu.dot_dimension_numbers<[1], [0], [0], [1], [0, 0, 1, 1], [], []>} : vector<8x128xf32>, vector<128x384xf32>, vector<8x384xf32> -> vector<8x384xf32>
    %26 = arith.addf %25, %11 : vector<8x384xf32>
    %27 = vector.extract_strided_slice %22 {offsets = [0, 0], sizes = [8, 256], strides = [1, 1]} : vector<8x384xf32> to vector<8x256xf32>
    %28 = vector.extract_strided_slice %26 {offsets = [0, 0], sizes = [8, 256], strides = [1, 1]} : vector<8x384xf32> to vector<8x256xf32>
    %29 = arith.addf %27, %28 : vector<8x256xf32>
    %cst_24 = arith.constant 5.000000e-01 : f32
    %30 = vector.broadcast %cst_24 : f32 to vector<8x256xf32>
    %31 = arith.mulf %30, %29 : vector<8x256xf32>
    %32 = math.tanh %31 : vector<8x256xf32>
    %cst_25 = arith.constant 5.000000e-01 : f32
    %33 = vector.broadcast %cst_25 : f32 to vector<8x256xf32>
    %34 = arith.mulf %33, %32 : vector<8x256xf32>
    %cst_26 = arith.constant 5.000000e-01 : f32
    %35 = vector.broadcast %cst_26 : f32 to vector<8x256xf32>
    %36 = arith.addf %34, %35 : vector<8x256xf32>
    %37 = vector.extract_strided_slice %36 {offsets = [0, 0], sizes = [8, 128], strides = [1, 1]} : vector<8x256xf32> to vector<8x128xf32>
    %38 = vector.extract_strided_slice %36 {offsets = [0, 128], sizes = [8, 128], strides = [1, 1]} : vector<8x256xf32> to vector<8x128xf32>
    %39 = vector.extract_strided_slice %22 {offsets = [0, 256], sizes = [8, 128], strides = [1, 1]} : vector<8x384xf32> to vector<8x128xf32>
    %40 = vector.extract_strided_slice %26 {offsets = [0, 256], sizes = [8, 128], strides = [1, 1]} : vector<8x384xf32> to vector<8x128xf32>
    %41 = arith.mulf %37, %40 : vector<8x128xf32>
    %42 = arith.addf %39, %41 : vector<8x128xf32>
    %43 = math.tanh %42 : vector<8x128xf32>
    %44 = arith.subf %20, %43 : vector<8x128xf32>
    %45 = arith.mulf %38, %44 : vector<8x128xf32>
    %46 = arith.addf %43, %45 : vector<8x128xf32>
    %c0_27 = arith.constant 0 : index
    %c0_28 = arith.constant 0 : index
    %c0_29 = arith.constant 0 : index
    %47 = vector.load %arg2[%c0_27, %c0_28, %c0_29] : memref<1x128x384xf32, #tpu.memory_space<vmem>>, vector<1x128x384xf32>
    %48 = vector.shape_cast %47 : vector<1x128x384xf32> to vector<128x384xf32>
    %cst_30 = arith.constant dense<0.000000e+00> : vector<8x384xf32>
    %49 = tpu.matmul %46, %48, %cst_30 {dimension_numbers = #tpu.dot_dimension_numbers<[1], [0], [0], [1], [0, 0, 1, 1], [], []>} : vector<8x128xf32>, vector<128x384xf32>, vector<8x384xf32> -> vector<8x384xf32>
    %50 = arith.addf %49, %19 : vector<8x384xf32>
    %c1_31 = arith.constant 1 : index
    %c0_32 = arith.constant 0 : index
    %c0_33 = arith.constant 0 : index
    %51 = vector.load %arg3[%c1_31, %c0_32, %c0_33] : memref<2x128x384xf32, #tpu.memory_space<vmem>>, vector<1x128x384xf32>
    %52 = vector.shape_cast %51 : vector<1x128x384xf32> to vector<128x384xf32>
    %cst_34 = arith.constant dense<0.000000e+00> : vector<8x384xf32>
    %53 = tpu.matmul %21, %52, %cst_34 {dimension_numbers = #tpu.dot_dimension_numbers<[1], [0], [0], [1], [0, 0, 1, 1], [], []>} : vector<8x128xf32>, vector<128x384xf32>, vector<8x384xf32> -> vector<8x384xf32>
    %54 = arith.addf %53, %15 : vector<8x384xf32>
    %55 = vector.extract_strided_slice %50 {offsets = [0, 0], sizes = [8, 256], strides = [1, 1]} : vector<8x384xf32> to vector<8x256xf32>
    %56 = vector.extract_strided_slice %54 {offsets = [0, 0], sizes = [8, 256], strides = [1, 1]} : vector<8x384xf32> to vector<8x256xf32>
    %57 = arith.addf %55, %56 : vector<8x256xf32>
    %cst_35 = arith.constant 5.000000e-01 : f32
    %58 = vector.broadcast %cst_35 : f32 to vector<8x256xf32>
    %59 = arith.mulf %58, %57 : vector<8x256xf32>
    %60 = math.tanh %59 : vector<8x256xf32>
    %cst_36 = arith.constant 5.000000e-01 : f32
    %61 = vector.broadcast %cst_36 : f32 to vector<8x256xf32>
    %62 = arith.mulf %61, %60 : vector<8x256xf32>
    %cst_37 = arith.constant 5.000000e-01 : f32
    %63 = vector.broadcast %cst_37 : f32 to vector<8x256xf32>
    %64 = arith.addf %62, %63 : vector<8x256xf32>
    %65 = vector.extract_strided_slice %64 {offsets = [0, 0], sizes = [8, 128], strides = [1, 1]} : vector<8x256xf32> to vector<8x128xf32>
    %66 = vector.extract_strided_slice %64 {offsets = [0, 128], sizes = [8, 128], strides = [1, 1]} : vector<8x256xf32> to vector<8x128xf32>
    %67 = vector.extract_strided_slice %50 {offsets = [0, 256], sizes = [8, 128], strides = [1, 1]} : vector<8x384xf32> to vector<8x128xf32>
    %68 = vector.extract_strided_slice %54 {offsets = [0, 256], sizes = [8, 128], strides = [1, 1]} : vector<8x384xf32> to vector<8x128xf32>
    %69 = arith.mulf %65, %68 : vector<8x128xf32>
    %70 = arith.addf %67, %69 : vector<8x128xf32>
    %71 = math.tanh %70 : vector<8x128xf32>
    %72 = arith.subf %21, %71 : vector<8x128xf32>
    %73 = arith.mulf %66, %72 : vector<8x128xf32>
    %74 = arith.addf %71, %73 : vector<8x128xf32>
    %c0_38 = arith.constant 0 : index
    %c0_39 = arith.constant 0 : index
    %75 = vector.load %arg6[%c0_38, %c0_39] : memref<64x128xf32, #tpu.memory_space<vmem>>, vector<8x128xf32>
    tpu.vector_store %arg6[%c0_38, %c0_39], %74 {strides = array<i32>} : memref<64x128xf32, #tpu.memory_space<vmem>>, vector<8x128xf32>,
    %c8 = arith.constant 8 : index
    %c0_40 = arith.constant 0 : index
    %76 = vector.load %arg7[%c8, %c0_40] : memref<64x384xf32, #tpu.memory_space<vmem>>, vector<8x384xf32>
    %c0_41 = arith.constant 0 : index
    %c0_42 = arith.constant 0 : index
    %c0_43 = arith.constant 0 : index
    %77 = vector.load %arg3[%c0_41, %c0_42, %c0_43] : memref<2x128x384xf32, #tpu.memory_space<vmem>>, vector<1x128x384xf32>
    %78 = vector.shape_cast %77 : vector<1x128x384xf32> to vector<128x384xf32>
    %cst_44 = arith.constant dense<0.000000e+00> : vector<8x384xf32>
    %79 = tpu.matmul %46, %78, %cst_44 {dimension_numbers = #tpu.dot_dimension_numbers<[1], [0], [0], [1], [0, 0, 1, 1], [], []>} : vector<8x128xf32>, vector<128x384xf32>, vector<8x384xf32> -> vector<8x384xf32>
    %80 = arith.addf %79, %11 : vector<8x384xf32>
    %81 = vector.extract_strided_slice %76 {offsets = [0, 0], sizes = [8, 256], strides = [1, 1]} : vector<8x384xf32> to vector<8x256xf32>
    %82 = vector.extract_strided_slice %80 {offsets = [0, 0], sizes = [8, 256], strides = [1, 1]} : vector<8x384xf32> to vector<8x256xf32>
    %83 = arith.addf %81, %82 : vector<8x256xf32>
    %cst_45 = arith.constant 5.000000e-01 : f32
    %84 = vector.broadcast %cst_45 : f32 to vector<8x256xf32>
    %85 = arith.mulf %84, %83 : vector<8x256xf32>
    %86 = math.tanh %85 : vector<8x256xf32>
    %cst_46 = arith.constant 5.000000e-01 : f32
    %87 = vector.broadcast %cst_46 : f32 to vector<8x256xf32>
    %88 = arith.mulf %87, %86 : vector<8x256xf32>
    %cst_47 = arith.constant 5.000000e-01 : f32
    %89 = vector.broadcast %cst_47 : f32 to vector<8x256xf32>
    %90 = arith.addf %88, %89 : vector<8x256xf32>
    %91 = vector.extract_strided_slice %90 {offsets = [0, 0], sizes = [8, 128], strides = [1, 1]} : vector<8x256xf32> to vector<8x128xf32>
    %92 = vector.extract_strided_slice %90 {offsets = [0, 128], sizes = [8, 128], strides = [1, 1]} : vector<8x256xf32> to vector<8x128xf32>
    %93 = vector.extract_strided_slice %76 {offsets = [0, 256], sizes = [8, 128], strides = [1, 1]} : vector<8x384xf32> to vector<8x128xf32>
    %94 = vector.extract_strided_slice %80 {offsets = [0, 256], sizes = [8, 128], strides = [1, 1]} : vector<8x384xf32> to vector<8x128xf32>
    %95 = arith.mulf %91, %94 : vector<8x128xf32>
    %96 = arith.addf %93, %95 : vector<8x128xf32>
    %97 = math.tanh %96 : vector<8x128xf32>
    %98 = arith.subf %46, %97 : vector<8x128xf32>
    %99 = arith.mulf %92, %98 : vector<8x128xf32>
    %100 = arith.addf %97, %99 : vector<8x128xf32>
    %c0_48 = arith.constant 0 : index
    %c0_49 = arith.constant 0 : index
    %c0_50 = arith.constant 0 : index
    %101 = vector.load %arg2[%c0_48, %c0_49, %c0_50] : memref<1x128x384xf32, #tpu.memory_space<vmem>>, vector<1x128x384xf32>
    %102 = vector.shape_cast %101 : vector<1x128x384xf32> to vector<128x384xf32>
    %cst_51 = arith.constant dense<0.000000e+00> : vector<8x384xf32>
    %103 = tpu.matmul %100, %102, %cst_51 {dimension_numbers = #tpu.dot_dimension_numbers<[1], [0], [0], [1], [0, 0, 1, 1], [], []>} : vector<8x128xf32>, vector<128x384xf32>, vector<8x384xf32> -> vector<8x384xf32>
    %104 = arith.addf %103, %19 : vector<8x384xf32>
    %c1_52 = arith.constant 1 : index
    %c0_53 = arith.constant 0 : index
    %c0_54 = arith.constant 0 : index
    %105 = vector.load %arg3[%c1_52, %c0_53, %c0_54] : memref<2x128x384xf32, #tpu.memory_space<vmem>>, vector<1x128x384xf32>
    %106 = vector.shape_cast %105 : vector<1x128x384xf32> to vector<128x384xf32>
    %cst_55 = arith.constant dense<0.000000e+00> : vector<8x384xf32>
    %107 = tpu.matmul %74, %106, %cst_55 {dimension_numbers = #tpu.dot_dimension_numbers<[1], [0], [0], [1], [0, 0, 1, 1], [], []>} : vector<8x128xf32>, vector<128x384xf32>, vector<8x384xf32> -> vector<8x384xf32>
    %108 = arith.addf %107, %15 : vector<8x384xf32>
    %109 = vector.extract_strided_slice %104 {offsets = [0, 0], sizes = [8, 256], strides = [1, 1]} : vector<8x384xf32> to vector<8x256xf32>
    %110 = vector.extract_strided_slice %108 {offsets = [0, 0], sizes = [8, 256], strides = [1, 1]} : vector<8x384xf32> to vector<8x256xf32>
    %111 = arith.addf %109, %110 : vector<8x256xf32>
    %cst_56 = arith.constant 5.000000e-01 : f32
    %112 = vector.broadcast %cst_56 : f32 to vector<8x256xf32>
    %113 = arith.mulf %112, %111 : vector<8x256xf32>
    %114 = math.tanh %113 : vector<8x256xf32>
    %cst_57 = arith.constant 5.000000e-01 : f32
    %115 = vector.broadcast %cst_57 : f32 to vector<8x256xf32>
    %116 = arith.mulf %115, %114 : vector<8x256xf32>
    %cst_58 = arith.constant 5.000000e-01 : f32
    %117 = vector.broadcast %cst_58 : f32 to vector<8x256xf32>
    %118 = arith.addf %116, %117 : vector<8x256xf32>
    %119 = vector.extract_strided_slice %118 {offsets = [0, 0], sizes = [8, 128], strides = [1, 1]} : vector<8x256xf32> to vector<8x128xf32>
    %120 = vector.extract_strided_slice %118 {offsets = [0, 128], sizes = [8, 128], strides = [1, 1]} : vector<8x256xf32> to vector<8x128xf32>
    %121 = vector.extract_strided_slice %104 {offsets = [0, 256], sizes = [8, 128], strides = [1, 1]} : vector<8x384xf32> to vector<8x128xf32>
    %122 = vector.extract_strided_slice %108 {offsets = [0, 256], sizes = [8, 128], strides = [1, 1]} : vector<8x384xf32> to vector<8x128xf32>
    %123 = arith.mulf %119, %122 : vector<8x128xf32>
    %124 = arith.addf %121, %123 : vector<8x128xf32>
    %125 = math.tanh %124 : vector<8x128xf32>
    %126 = arith.subf %74, %125 : vector<8x128xf32>
    %127 = arith.mulf %120, %126 : vector<8x128xf32>
    %128 = arith.addf %125, %127 : vector<8x128xf32>
    %c8_59 = arith.constant 8 : index
    %c0_60 = arith.constant 0 : index
    %129 = vector.load %arg6[%c8_59, %c0_60] : memref<64x128xf32, #tpu.memory_space<vmem>>, vector<8x128xf32>
    tpu.vector_store %arg6[%c8_59, %c0_60], %128 {strides = array<i32>} : memref<64x128xf32, #tpu.memory_space<vmem>>, vector<8x128xf32>,
    %c16 = arith.constant 16 : index
    %c0_61 = arith.constant 0 : index
    %130 = vector.load %arg7[%c16, %c0_61] : memref<64x384xf32, #tpu.memory_space<vmem>>, vector<8x384xf32>
    %c0_62 = arith.constant 0 : index
    %c0_63 = arith.constant 0 : index
    %c0_64 = arith.constant 0 : index
    %131 = vector.load %arg3[%c0_62, %c0_63, %c0_64] : memref<2x128x384xf32, #tpu.memory_space<vmem>>, vector<1x128x384xf32>
    %132 = vector.shape_cast %131 : vector<1x128x384xf32> to vector<128x384xf32>
    %cst_65 = arith.constant dense<0.000000e+00> : vector<8x384xf32>
    %133 = tpu.matmul %100, %132, %cst_65 {dimension_numbers = #tpu.dot_dimension_numbers<[1], [0], [0], [1], [0, 0, 1, 1], [], []>} : vector<8x128xf32>, vector<128x384xf32>, vector<8x384xf32> -> vector<8x384xf32>
    %134 = arith.addf %133, %11 : vector<8x384xf32>
    %135 = vector.extract_strided_slice %130 {offsets = [0, 0], sizes = [8, 256], strides = [1, 1]} : vector<8x384xf32> to vector<8x256xf32>
    %136 = vector.extract_strided_slice %134 {offsets = [0, 0], sizes = [8, 256], strides = [1, 1]} : vector<8x384xf32> to vector<8x256xf32>
    %137 = arith.addf %135, %136 : vector<8x256xf32>
    %cst_66 = arith.constant 5.000000e-01 : f32
    %138 = vector.broadcast %cst_66 : f32 to vector<8x256xf32>
    %139 = arith.mulf %138, %137 : vector<8x256xf32>
    %140 = math.tanh %139 : vector<8x256xf32>
    %cst_67 = arith.constant 5.000000e-01 : f32
    %141 = vector.broadcast %cst_67 : f32 to vector<8x256xf32>
    %142 = arith.mulf %141, %140 : vector<8x256xf32>
    %cst_68 = arith.constant 5.000000e-01 : f32
    %143 = vector.broadcast %cst_68 : f32 to vector<8x256xf32>
    %144 = arith.addf %142, %143 : vector<8x256xf32>
    %145 = vector.extract_strided_slice %144 {offsets = [0, 0], sizes = [8, 128], strides = [1, 1]} : vector<8x256xf32> to vector<8x128xf32>
    %146 = vector.extract_strided_slice %144 {offsets = [0, 128], sizes = [8, 128], strides = [1, 1]} : vector<8x256xf32> to vector<8x128xf32>
    %147 = vector.extract_strided_slice %130 {offsets = [0, 256], sizes = [8, 128], strides = [1, 1]} : vector<8x384xf32> to vector<8x128xf32>
    %148 = vector.extract_strided_slice %134 {offsets = [0, 256], sizes = [8, 128], strides = [1, 1]} : vector<8x384xf32> to vector<8x128xf32>
    %149 = arith.mulf %145, %148 : vector<8x128xf32>
    %150 = arith.addf %147, %149 : vector<8x128xf32>
    %151 = math.tanh %150 : vector<8x128xf32>
    %152 = arith.subf %100, %151 : vector<8x128xf32>
    %153 = arith.mulf %146, %152 : vector<8x128xf32>
    %154 = arith.addf %151, %153 : vector<8x128xf32>
    %c0_69 = arith.constant 0 : index
    %c0_70 = arith.constant 0 : index
    %c0_71 = arith.constant 0 : index
    %155 = vector.load %arg2[%c0_69, %c0_70, %c0_71] : memref<1x128x384xf32, #tpu.memory_space<vmem>>, vector<1x128x384xf32>
    %156 = vector.shape_cast %155 : vector<1x128x384xf32> to vector<128x384xf32>
    %cst_72 = arith.constant dense<0.000000e+00> : vector<8x384xf32>
    %157 = tpu.matmul %154, %156, %cst_72 {dimension_numbers = #tpu.dot_dimension_numbers<[1], [0], [0], [1], [0, 0, 1, 1], [], []>} : vector<8x128xf32>, vector<128x384xf32>, vector<8x384xf32> -> vector<8x384xf32>
    %158 = arith.addf %157, %19 : vector<8x384xf32>
    %c1_73 = arith.constant 1 : index
    %c0_74 = arith.constant 0 : index
    %c0_75 = arith.constant 0 : index
    %159 = vector.load %arg3[%c1_73, %c0_74, %c0_75] : memref<2x128x384xf32, #tpu.memory_space<vmem>>, vector<1x128x384xf32>
    %160 = vector.shape_cast %159 : vector<1x128x384xf32> to vector<128x384xf32>
    %cst_76 = arith.constant dense<0.000000e+00> : vector<8x384xf32>
    %161 = tpu.matmul %128, %160, %cst_76 {dimension_numbers = #tpu.dot_dimension_numbers<[1], [0], [0], [1], [0, 0, 1, 1], [], []>} : vector<8x128xf32>, vector<128x384xf32>, vector<8x384xf32> -> vector<8x384xf32>
    %162 = arith.addf %161, %15 : vector<8x384xf32>
    %163 = vector.extract_strided_slice %158 {offsets = [0, 0], sizes = [8, 256], strides = [1, 1]} : vector<8x384xf32> to vector<8x256xf32>
    %164 = vector.extract_strided_slice %162 {offsets = [0, 0], sizes = [8, 256], strides = [1, 1]} : vector<8x384xf32> to vector<8x256xf32>
    %165 = arith.addf %163, %164 : vector<8x256xf32>
    %cst_77 = arith.constant 5.000000e-01 : f32
    %166 = vector.broadcast %cst_77 : f32 to vector<8x256xf32>
    %167 = arith.mulf %166, %165 : vector<8x256xf32>
    %168 = math.tanh %167 : vector<8x256xf32>
    %cst_78 = arith.constant 5.000000e-01 : f32
    %169 = vector.broadcast %cst_78 : f32 to vector<8x256xf32>
    %170 = arith.mulf %169, %168 : vector<8x256xf32>
    %cst_79 = arith.constant 5.000000e-01 : f32
    %171 = vector.broadcast %cst_79 : f32 to vector<8x256xf32>
    %172 = arith.addf %170, %171 : vector<8x256xf32>
    %173 = vector.extract_strided_slice %172 {offsets = [0, 0], sizes = [8, 128], strides = [1, 1]} : vector<8x256xf32> to vector<8x128xf32>
    %174 = vector.extract_strided_slice %172 {offsets = [0, 128], sizes = [8, 128], strides = [1, 1]} : vector<8x256xf32> to vector<8x128xf32>
    %175 = vector.extract_strided_slice %158 {offsets = [0, 256], sizes = [8, 128], strides = [1, 1]} : vector<8x384xf32> to vector<8x128xf32>
    %176 = vector.extract_strided_slice %162 {offsets = [0, 256], sizes = [8, 128], strides = [1, 1]} : vector<8x384xf32> to vector<8x128xf32>
    %177 = arith.mulf %173, %176 : vector<8x128xf32>
    %178 = arith.addf %175, %177 : vector<8x128xf32>
    %179 = math.tanh %178 : vector<8x128xf32>
    %180 = arith.subf %128, %179 : vector<8x128xf32>
    %181 = arith.mulf %174, %180 : vector<8x128xf32>
    %182 = arith.addf %179, %181 : vector<8x128xf32>
    %c16_80 = arith.constant 16 : index
    %c0_81 = arith.constant 0 : index
    %183 = vector.load %arg6[%c16_80, %c0_81] : memref<64x128xf32, #tpu.memory_space<vmem>>, vector<8x128xf32>
    tpu.vector_store %arg6[%c16_80, %c0_81], %182 {strides = array<i32>} : memref<64x128xf32, #tpu.memory_space<vmem>>, vector<8x128xf32>,
    %c24 = arith.constant 24 : index
    %c0_82 = arith.constant 0 : index
    %184 = vector.load %arg7[%c24, %c0_82] : memref<64x384xf32, #tpu.memory_space<vmem>>, vector<8x384xf32>
    %c0_83 = arith.constant 0 : index
    %c0_84 = arith.constant 0 : index
    %c0_85 = arith.constant 0 : index
    %185 = vector.load %arg3[%c0_83, %c0_84, %c0_85] : memref<2x128x384xf32, #tpu.memory_space<vmem>>, vector<1x128x384xf32>
    %186 = vector.shape_cast %185 : vector<1x128x384xf32> to vector<128x384xf32>
    %cst_86 = arith.constant dense<0.000000e+00> : vector<8x384xf32>
    %187 = tpu.matmul %154, %186, %cst_86 {dimension_numbers = #tpu.dot_dimension_numbers<[1], [0], [0], [1], [0, 0, 1, 1], [], []>} : vector<8x128xf32>, vector<128x384xf32>, vector<8x384xf32> -> vector<8x384xf32>
    %188 = arith.addf %187, %11 : vector<8x384xf32>
    %189 = vector.extract_strided_slice %184 {offsets = [0, 0], sizes = [8, 256], strides = [1, 1]} : vector<8x384xf32> to vector<8x256xf32>
    %190 = vector.extract_strided_slice %188 {offsets = [0, 0], sizes = [8, 256], strides = [1, 1]} : vector<8x384xf32> to vector<8x256xf32>
    %191 = arith.addf %189, %190 : vector<8x256xf32>
    %cst_87 = arith.constant 5.000000e-01 : f32
    %192 = vector.broadcast %cst_87 : f32 to vector<8x256xf32>
    %193 = arith.mulf %192, %191 : vector<8x256xf32>
    %194 = math.tanh %193 : vector<8x256xf32>
    %cst_88 = arith.constant 5.000000e-01 : f32
    %195 = vector.broadcast %cst_88 : f32 to vector<8x256xf32>
    %196 = arith.mulf %195, %194 : vector<8x256xf32>
    %cst_89 = arith.constant 5.000000e-01 : f32
    %197 = vector.broadcast %cst_89 : f32 to vector<8x256xf32>
    %198 = arith.addf %196, %197 : vector<8x256xf32>
    %199 = vector.extract_strided_slice %198 {offsets = [0, 0], sizes = [8, 128], strides = [1, 1]} : vector<8x256xf32> to vector<8x128xf32>
    %200 = vector.extract_strided_slice %198 {offsets = [0, 128], sizes = [8, 128], strides = [1, 1]} : vector<8x256xf32> to vector<8x128xf32>
    %201 = vector.extract_strided_slice %184 {offsets = [0, 256], sizes = [8, 128], strides = [1, 1]} : vector<8x384xf32> to vector<8x128xf32>
    %202 = vector.extract_strided_slice %188 {offsets = [0, 256], sizes = [8, 128], strides = [1, 1]} : vector<8x384xf32> to vector<8x128xf32>
    %203 = arith.mulf %199, %202 : vector<8x128xf32>
    %204 = arith.addf %201, %203 : vector<8x128xf32>
    %205 = math.tanh %204 : vector<8x128xf32>
    %206 = arith.subf %154, %205 : vector<8x128xf32>
    %207 = arith.mulf %200, %206 : vector<8x128xf32>
    %208 = arith.addf %205, %207 : vector<8x128xf32>
    %c0_90 = arith.constant 0 : index
    %c0_91 = arith.constant 0 : index
    %c0_92 = arith.constant 0 : index
    %209 = vector.load %arg2[%c0_90, %c0_91, %c0_92] : memref<1x128x384xf32, #tpu.memory_space<vmem>>, vector<1x128x384xf32>
    %210 = vector.shape_cast %209 : vector<1x128x384xf32> to vector<128x384xf32>
    %cst_93 = arith.constant dense<0.000000e+00> : vector<8x384xf32>
    %211 = tpu.matmul %208, %210, %cst_93 {dimension_numbers = #tpu.dot_dimension_numbers<[1], [0], [0], [1], [0, 0, 1, 1], [], []>} : vector<8x128xf32>, vector<128x384xf32>, vector<8x384xf32> -> vector<8x384xf32>
    %212 = arith.addf %211, %19 : vector<8x384xf32>
    %c1_94 = arith.constant 1 : index
    %c0_95 = arith.constant 0 : index
    %c0_96 = arith.constant 0 : index
    %213 = vector.load %arg3[%c1_94, %c0_95, %c0_96] : memref<2x128x384xf32, #tpu.memory_space<vmem>>, vector<1x128x384xf32>
    %214 = vector.shape_cast %213 : vector<1x128x384xf32> to vector<128x384xf32>
    %cst_97 = arith.constant dense<0.000000e+00> : vector<8x384xf32>
    %215 = tpu.matmul %182, %214, %cst_97 {dimension_numbers = #tpu.dot_dimension_numbers<[1], [0], [0], [1], [0, 0, 1, 1], [], []>} : vector<8x128xf32>, vector<128x384xf32>, vector<8x384xf32> -> vector<8x384xf32>
    %216 = arith.addf %215, %15 : vector<8x384xf32>
    %217 = vector.extract_strided_slice %212 {offsets = [0, 0], sizes = [8, 256], strides = [1, 1]} : vector<8x384xf32> to vector<8x256xf32>
    %218 = vector.extract_strided_slice %216 {offsets = [0, 0], sizes = [8, 256], strides = [1, 1]} : vector<8x384xf32> to vector<8x256xf32>
    %219 = arith.addf %217, %218 : vector<8x256xf32>
    %cst_98 = arith.constant 5.000000e-01 : f32
    %220 = vector.broadcast %cst_98 : f32 to vector<8x256xf32>
    %221 = arith.mulf %220, %219 : vector<8x256xf32>
    %222 = math.tanh %221 : vector<8x256xf32>
    %cst_99 = arith.constant 5.000000e-01 : f32
    %223 = vector.broadcast %cst_99 : f32 to vector<8x256xf32>
    %224 = arith.mulf %223, %222 : vector<8x256xf32>
    %cst_100 = arith.constant 5.000000e-01 : f32
    %225 = vector.broadcast %cst_100 : f32 to vector<8x256xf32>
    %226 = arith.addf %224, %225 : vector<8x256xf32>
    %227 = vector.extract_strided_slice %226 {offsets = [0, 0], sizes = [8, 128], strides = [1, 1]} : vector<8x256xf32> to vector<8x128xf32>
    %228 = vector.extract_strided_slice %226 {offsets = [0, 128], sizes = [8, 128], strides = [1, 1]} : vector<8x256xf32> to vector<8x128xf32>
    %229 = vector.extract_strided_slice %212 {offsets = [0, 256], sizes = [8, 128], strides = [1, 1]} : vector<8x384xf32> to vector<8x128xf32>
    %230 = vector.extract_strided_slice %216 {offsets = [0, 256], sizes = [8, 128], strides = [1, 1]} : vector<8x384xf32> to vector<8x128xf32>
    %231 = arith.mulf %227, %230 : vector<8x128xf32>
    %232 = arith.addf %229, %231 : vector<8x128xf32>
    %233 = math.tanh %232 : vector<8x128xf32>
    %234 = arith.subf %182, %233 : vector<8x128xf32>
    %235 = arith.mulf %228, %234 : vector<8x128xf32>
    %236 = arith.addf %233, %235 : vector<8x128xf32>
    %c24_101 = arith.constant 24 : index
    %c0_102 = arith.constant 0 : index
    %237 = vector.load %arg6[%c24_101, %c0_102] : memref<64x128xf32, #tpu.memory_space<vmem>>, vector<8x128xf32>
    tpu.vector_store %arg6[%c24_101, %c0_102], %236 {strides = array<i32>} : memref<64x128xf32, #tpu.memory_space<vmem>>, vector<8x128xf32>,
    %c32 = arith.constant 32 : index
    %c0_103 = arith.constant 0 : index
    %238 = vector.load %arg7[%c32, %c0_103] : memref<64x384xf32, #tpu.memory_space<vmem>>, vector<8x384xf32>
    %c0_104 = arith.constant 0 : index
    %c0_105 = arith.constant 0 : index
    %c0_106 = arith.constant 0 : index
    %239 = vector.load %arg3[%c0_104, %c0_105, %c0_106] : memref<2x128x384xf32, #tpu.memory_space<vmem>>, vector<1x128x384xf32>
    %240 = vector.shape_cast %239 : vector<1x128x384xf32> to vector<128x384xf32>
    %cst_107 = arith.constant dense<0.000000e+00> : vector<8x384xf32>
    %241 = tpu.matmul %208, %240, %cst_107 {dimension_numbers = #tpu.dot_dimension_numbers<[1], [0], [0], [1], [0, 0, 1, 1], [], []>} : vector<8x128xf32>, vector<128x384xf32>, vector<8x384xf32> -> vector<8x384xf32>
    %242 = arith.addf %241, %11 : vector<8x384xf32>
    %243 = vector.extract_strided_slice %238 {offsets = [0, 0], sizes = [8, 256], strides = [1, 1]} : vector<8x384xf32> to vector<8x256xf32>
    %244 = vector.extract_strided_slice %242 {offsets = [0, 0], sizes = [8, 256], strides = [1, 1]} : vector<8x384xf32> to vector<8x256xf32>
    %245 = arith.addf %243, %244 : vector<8x256xf32>
    %cst_108 = arith.constant 5.000000e-01 : f32
    %246 = vector.broadcast %cst_108 : f32 to vector<8x256xf32>
    %247 = arith.mulf %246, %245 : vector<8x256xf32>
    %248 = math.tanh %247 : vector<8x256xf32>
    %cst_109 = arith.constant 5.000000e-01 : f32
    %249 = vector.broadcast %cst_109 : f32 to vector<8x256xf32>
    %250 = arith.mulf %249, %248 : vector<8x256xf32>
    %cst_110 = arith.constant 5.000000e-01 : f32
    %251 = vector.broadcast %cst_110 : f32 to vector<8x256xf32>
    %252 = arith.addf %250, %251 : vector<8x256xf32>
    %253 = vector.extract_strided_slice %252 {offsets = [0, 0], sizes = [8, 128], strides = [1, 1]} : vector<8x256xf32> to vector<8x128xf32>
    %254 = vector.extract_strided_slice %252 {offsets = [0, 128], sizes = [8, 128], strides = [1, 1]} : vector<8x256xf32> to vector<8x128xf32>
    %255 = vector.extract_strided_slice %238 {offsets = [0, 256], sizes = [8, 128], strides = [1, 1]} : vector<8x384xf32> to vector<8x128xf32>
    %256 = vector.extract_strided_slice %242 {offsets = [0, 256], sizes = [8, 128], strides = [1, 1]} : vector<8x384xf32> to vector<8x128xf32>
    %257 = arith.mulf %253, %256 : vector<8x128xf32>
    %258 = arith.addf %255, %257 : vector<8x128xf32>
    %259 = math.tanh %258 : vector<8x128xf32>
    %260 = arith.subf %208, %259 : vector<8x128xf32>
    %261 = arith.mulf %254, %260 : vector<8x128xf32>
    %262 = arith.addf %259, %261 : vector<8x128xf32>
    %c0_111 = arith.constant 0 : index
    %c0_112 = arith.constant 0 : index
    %c0_113 = arith.constant 0 : index
    %263 = vector.load %arg2[%c0_111, %c0_112, %c0_113] : memref<1x128x384xf32, #tpu.memory_space<vmem>>, vector<1x128x384xf32>
    %264 = vector.shape_cast %263 : vector<1x128x384xf32> to vector<128x384xf32>
    %cst_114 = arith.constant dense<0.000000e+00> : vector<8x384xf32>
    %265 = tpu.matmul %262, %264, %cst_114 {dimension_numbers = #tpu.dot_dimension_numbers<[1], [0], [0], [1], [0, 0, 1, 1], [], []>} : vector<8x128xf32>, vector<128x384xf32>, vector<8x384xf32> -> vector<8x384xf32>
    %266 = arith.addf %265, %19 : vector<8x384xf32>
    %c1_115 = arith.constant 1 : index
    %c0_116 = arith.constant 0 : index
    %c0_117 = arith.constant 0 : index
    %267 = vector.load %arg3[%c1_115, %c0_116, %c0_117] : memref<2x128x384xf32, #tpu.memory_space<vmem>>, vector<1x128x384xf32>
    %268 = vector.shape_cast %267 : vector<1x128x384xf32> to vector<128x384xf32>
    %cst_118 = arith.constant dense<0.000000e+00> : vector<8x384xf32>
    %269 = tpu.matmul %236, %268, %cst_118 {dimension_numbers = #tpu.dot_dimension_numbers<[1], [0], [0], [1], [0, 0, 1, 1], [], []>} : vector<8x128xf32>, vector<128x384xf32>, vector<8x384xf32> -> vector<8x384xf32>
    %270 = arith.addf %269, %15 : vector<8x384xf32>
    %271 = vector.extract_strided_slice %266 {offsets = [0, 0], sizes = [8, 256], strides = [1, 1]} : vector<8x384xf32> to vector<8x256xf32>
    %272 = vector.extract_strided_slice %270 {offsets = [0, 0], sizes = [8, 256], strides = [1, 1]} : vector<8x384xf32> to vector<8x256xf32>
    %273 = arith.addf %271, %272 : vector<8x256xf32>
    %cst_119 = arith.constant 5.000000e-01 : f32
    %274 = vector.broadcast %cst_119 : f32 to vector<8x256xf32>
    %275 = arith.mulf %274, %273 : vector<8x256xf32>
    %276 = math.tanh %275 : vector<8x256xf32>
    %cst_120 = arith.constant 5.000000e-01 : f32
    %277 = vector.broadcast %cst_120 : f32 to vector<8x256xf32>
    %278 = arith.mulf %277, %276 : vector<8x256xf32>
    %cst_121 = arith.constant 5.000000e-01 : f32
    %279 = vector.broadcast %cst_121 : f32 to vector<8x256xf32>
    %280 = arith.addf %278, %279 : vector<8x256xf32>
    %281 = vector.extract_strided_slice %280 {offsets = [0, 0], sizes = [8, 128], strides = [1, 1]} : vector<8x256xf32> to vector<8x128xf32>
    %282 = vector.extract_strided_slice %280 {offsets = [0, 128], sizes = [8, 128], strides = [1, 1]} : vector<8x256xf32> to vector<8x128xf32>
    %283 = vector.extract_strided_slice %266 {offsets = [0, 256], sizes = [8, 128], strides = [1, 1]} : vector<8x384xf32> to vector<8x128xf32>
    %284 = vector.extract_strided_slice %270 {offsets = [0, 256], sizes = [8, 128], strides = [1, 1]} : vector<8x384xf32> to vector<8x128xf32>
    %285 = arith.mulf %281, %284 : vector<8x128xf32>
    %286 = arith.addf %283, %285 : vector<8x128xf32>
    %287 = math.tanh %286 : vector<8x128xf32>
    %288 = arith.subf %236, %287 : vector<8x128xf32>
    %289 = arith.mulf %282, %288 : vector<8x128xf32>
    %290 = arith.addf %287, %289 : vector<8x128xf32>
    %c32_122 = arith.constant 32 : index
    %c0_123 = arith.constant 0 : index
    %291 = vector.load %arg6[%c32_122, %c0_123] : memref<64x128xf32, #tpu.memory_space<vmem>>, vector<8x128xf32>
    tpu.vector_store %arg6[%c32_122, %c0_123], %290 {strides = array<i32>} : memref<64x128xf32, #tpu.memory_space<vmem>>, vector<8x128xf32>,
    %c40 = arith.constant 40 : index
    %c0_124 = arith.constant 0 : index
    %292 = vector.load %arg7[%c40, %c0_124] : memref<64x384xf32, #tpu.memory_space<vmem>>, vector<8x384xf32>
    %c0_125 = arith.constant 0 : index
    %c0_126 = arith.constant 0 : index
    %c0_127 = arith.constant 0 : index
    %293 = vector.load %arg3[%c0_125, %c0_126, %c0_127] : memref<2x128x384xf32, #tpu.memory_space<vmem>>, vector<1x128x384xf32>
    %294 = vector.shape_cast %293 : vector<1x128x384xf32> to vector<128x384xf32>
    %cst_128 = arith.constant dense<0.000000e+00> : vector<8x384xf32>
    %295 = tpu.matmul %262, %294, %cst_128 {dimension_numbers = #tpu.dot_dimension_numbers<[1], [0], [0], [1], [0, 0, 1, 1], [], []>} : vector<8x128xf32>, vector<128x384xf32>, vector<8x384xf32> -> vector<8x384xf32>
    %296 = arith.addf %295, %11 : vector<8x384xf32>
    %297 = vector.extract_strided_slice %292 {offsets = [0, 0], sizes = [8, 256], strides = [1, 1]} : vector<8x384xf32> to vector<8x256xf32>
    %298 = vector.extract_strided_slice %296 {offsets = [0, 0], sizes = [8, 256], strides = [1, 1]} : vector<8x384xf32> to vector<8x256xf32>
    %299 = arith.addf %297, %298 : vector<8x256xf32>
    %cst_129 = arith.constant 5.000000e-01 : f32
    %300 = vector.broadcast %cst_129 : f32 to vector<8x256xf32>
    %301 = arith.mulf %300, %299 : vector<8x256xf32>
    %302 = math.tanh %301 : vector<8x256xf32>
    %cst_130 = arith.constant 5.000000e-01 : f32
    %303 = vector.broadcast %cst_130 : f32 to vector<8x256xf32>
    %304 = arith.mulf %303, %302 : vector<8x256xf32>
    %cst_131 = arith.constant 5.000000e-01 : f32
    %305 = vector.broadcast %cst_131 : f32 to vector<8x256xf32>
    %306 = arith.addf %304, %305 : vector<8x256xf32>
    %307 = vector.extract_strided_slice %306 {offsets = [0, 0], sizes = [8, 128], strides = [1, 1]} : vector<8x256xf32> to vector<8x128xf32>
    %308 = vector.extract_strided_slice %306 {offsets = [0, 128], sizes = [8, 128], strides = [1, 1]} : vector<8x256xf32> to vector<8x128xf32>
    %309 = vector.extract_strided_slice %292 {offsets = [0, 256], sizes = [8, 128], strides = [1, 1]} : vector<8x384xf32> to vector<8x128xf32>
    %310 = vector.extract_strided_slice %296 {offsets = [0, 256], sizes = [8, 128], strides = [1, 1]} : vector<8x384xf32> to vector<8x128xf32>
    %311 = arith.mulf %307, %310 : vector<8x128xf32>
    %312 = arith.addf %309, %311 : vector<8x128xf32>
    %313 = math.tanh %312 : vector<8x128xf32>
    %314 = arith.subf %262, %313 : vector<8x128xf32>
    %315 = arith.mulf %308, %314 : vector<8x128xf32>
    %316 = arith.addf %313, %315 : vector<8x128xf32>
    %c0_132 = arith.constant 0 : index
    %c0_133 = arith.constant 0 : index
    %c0_134 = arith.constant 0 : index
    %317 = vector.load %arg2[%c0_132, %c0_133, %c0_134] : memref<1x128x384xf32, #tpu.memory_space<vmem>>, vector<1x128x384xf32>
    %318 = vector.shape_cast %317 : vector<1x128x384xf32> to vector<128x384xf32>
    %cst_135 = arith.constant dense<0.000000e+00> : vector<8x384xf32>
    %319 = tpu.matmul %316, %318, %cst_135 {dimension_numbers = #tpu.dot_dimension_numbers<[1], [0], [0], [1], [0, 0, 1, 1], [], []>} : vector<8x128xf32>, vector<128x384xf32>, vector<8x384xf32> -> vector<8x384xf32>
    %320 = arith.addf %319, %19 : vector<8x384xf32>
    %c1_136 = arith.constant 1 : index
    %c0_137 = arith.constant 0 : index
    %c0_138 = arith.constant 0 : index
    %321 = vector.load %arg3[%c1_136, %c0_137, %c0_138] : memref<2x128x384xf32, #tpu.memory_space<vmem>>, vector<1x128x384xf32>
    %322 = vector.shape_cast %321 : vector<1x128x384xf32> to vector<128x384xf32>
    %cst_139 = arith.constant dense<0.000000e+00> : vector<8x384xf32>
    %323 = tpu.matmul %290, %322, %cst_139 {dimension_numbers = #tpu.dot_dimension_numbers<[1], [0], [0], [1], [0, 0, 1, 1], [], []>} : vector<8x128xf32>, vector<128x384xf32>, vector<8x384xf32> -> vector<8x384xf32>
    %324 = arith.addf %323, %15 : vector<8x384xf32>
    %325 = vector.extract_strided_slice %320 {offsets = [0, 0], sizes = [8, 256], strides = [1, 1]} : vector<8x384xf32> to vector<8x256xf32>
    %326 = vector.extract_strided_slice %324 {offsets = [0, 0], sizes = [8, 256], strides = [1, 1]} : vector<8x384xf32> to vector<8x256xf32>
    %327 = arith.addf %325, %326 : vector<8x256xf32>
    %cst_140 = arith.constant 5.000000e-01 : f32
    %328 = vector.broadcast %cst_140 : f32 to vector<8x256xf32>
    %329 = arith.mulf %328, %327 : vector<8x256xf32>
    %330 = math.tanh %329 : vector<8x256xf32>
    %cst_141 = arith.constant 5.000000e-01 : f32
    %331 = vector.broadcast %cst_141 : f32 to vector<8x256xf32>
    %332 = arith.mulf %331, %330 : vector<8x256xf32>
    %cst_142 = arith.constant 5.000000e-01 : f32
    %333 = vector.broadcast %cst_142 : f32 to vector<8x256xf32>
    %334 = arith.addf %332, %333 : vector<8x256xf32>
    %335 = vector.extract_strided_slice %334 {offsets = [0, 0], sizes = [8, 128], strides = [1, 1]} : vector<8x256xf32> to vector<8x128xf32>
    %336 = vector.extract_strided_slice %334 {offsets = [0, 128], sizes = [8, 128], strides = [1, 1]} : vector<8x256xf32> to vector<8x128xf32>
    %337 = vector.extract_strided_slice %320 {offsets = [0, 256], sizes = [8, 128], strides = [1, 1]} : vector<8x384xf32> to vector<8x128xf32>
    %338 = vector.extract_strided_slice %324 {offsets = [0, 256], sizes = [8, 128], strides = [1, 1]} : vector<8x384xf32> to vector<8x128xf32>
    %339 = arith.mulf %335, %338 : vector<8x128xf32>
    %340 = arith.addf %337, %339 : vector<8x128xf32>
    %341 = math.tanh %340 : vector<8x128xf32>
    %342 = arith.subf %290, %341 : vector<8x128xf32>
    %343 = arith.mulf %336, %342 : vector<8x128xf32>
    %344 = arith.addf %341, %343 : vector<8x128xf32>
    %c40_143 = arith.constant 40 : index
    %c0_144 = arith.constant 0 : index
    %345 = vector.load %arg6[%c40_143, %c0_144] : memref<64x128xf32, #tpu.memory_space<vmem>>, vector<8x128xf32>
    tpu.vector_store %arg6[%c40_143, %c0_144], %344 {strides = array<i32>} : memref<64x128xf32, #tpu.memory_space<vmem>>, vector<8x128xf32>,
    %c48 = arith.constant 48 : index
    %c0_145 = arith.constant 0 : index
    %346 = vector.load %arg7[%c48, %c0_145] : memref<64x384xf32, #tpu.memory_space<vmem>>, vector<8x384xf32>
    %c0_146 = arith.constant 0 : index
    %c0_147 = arith.constant 0 : index
    %c0_148 = arith.constant 0 : index
    %347 = vector.load %arg3[%c0_146, %c0_147, %c0_148] : memref<2x128x384xf32, #tpu.memory_space<vmem>>, vector<1x128x384xf32>
    %348 = vector.shape_cast %347 : vector<1x128x384xf32> to vector<128x384xf32>
    %cst_149 = arith.constant dense<0.000000e+00> : vector<8x384xf32>
    %349 = tpu.matmul %316, %348, %cst_149 {dimension_numbers = #tpu.dot_dimension_numbers<[1], [0], [0], [1], [0, 0, 1, 1], [], []>} : vector<8x128xf32>, vector<128x384xf32>, vector<8x384xf32> -> vector<8x384xf32>
    %350 = arith.addf %349, %11 : vector<8x384xf32>
    %351 = vector.extract_strided_slice %346 {offsets = [0, 0], sizes = [8, 256], strides = [1, 1]} : vector<8x384xf32> to vector<8x256xf32>
    %352 = vector.extract_strided_slice %350 {offsets = [0, 0], sizes = [8, 256], strides = [1, 1]} : vector<8x384xf32> to vector<8x256xf32>
    %353 = arith.addf %351, %352 : vector<8x256xf32>
    %cst_150 = arith.constant 5.000000e-01 : f32
    %354 = vector.broadcast %cst_150 : f32 to vector<8x256xf32>
    %355 = arith.mulf %354, %353 : vector<8x256xf32>
    %356 = math.tanh %355 : vector<8x256xf32>
    %cst_151 = arith.constant 5.000000e-01 : f32
    %357 = vector.broadcast %cst_151 : f32 to vector<8x256xf32>
    %358 = arith.mulf %357, %356 : vector<8x256xf32>
    %cst_152 = arith.constant 5.000000e-01 : f32
    %359 = vector.broadcast %cst_152 : f32 to vector<8x256xf32>
    %360 = arith.addf %358, %359 : vector<8x256xf32>
    %361 = vector.extract_strided_slice %360 {offsets = [0, 0], sizes = [8, 128], strides = [1, 1]} : vector<8x256xf32> to vector<8x128xf32>
    %362 = vector.extract_strided_slice %360 {offsets = [0, 128], sizes = [8, 128], strides = [1, 1]} : vector<8x256xf32> to vector<8x128xf32>
    %363 = vector.extract_strided_slice %346 {offsets = [0, 256], sizes = [8, 128], strides = [1, 1]} : vector<8x384xf32> to vector<8x128xf32>
    %364 = vector.extract_strided_slice %350 {offsets = [0, 256], sizes = [8, 128], strides = [1, 1]} : vector<8x384xf32> to vector<8x128xf32>
    %365 = arith.mulf %361, %364 : vector<8x128xf32>
    %366 = arith.addf %363, %365 : vector<8x128xf32>
    %367 = math.tanh %366 : vector<8x128xf32>
    %368 = arith.subf %316, %367 : vector<8x128xf32>
    %369 = arith.mulf %362, %368 : vector<8x128xf32>
    %370 = arith.addf %367, %369 : vector<8x128xf32>
    %c0_153 = arith.constant 0 : index
    %c0_154 = arith.constant 0 : index
    %c0_155 = arith.constant 0 : index
    %371 = vector.load %arg2[%c0_153, %c0_154, %c0_155] : memref<1x128x384xf32, #tpu.memory_space<vmem>>, vector<1x128x384xf32>
    %372 = vector.shape_cast %371 : vector<1x128x384xf32> to vector<128x384xf32>
    %cst_156 = arith.constant dense<0.000000e+00> : vector<8x384xf32>
    %373 = tpu.matmul %370, %372, %cst_156 {dimension_numbers = #tpu.dot_dimension_numbers<[1], [0], [0], [1], [0, 0, 1, 1], [], []>} : vector<8x128xf32>, vector<128x384xf32>, vector<8x384xf32> -> vector<8x384xf32>
    %374 = arith.addf %373, %19 : vector<8x384xf32>
    %c1_157 = arith.constant 1 : index
    %c0_158 = arith.constant 0 : index
    %c0_159 = arith.constant 0 : index
    %375 = vector.load %arg3[%c1_157, %c0_158, %c0_159] : memref<2x128x384xf32, #tpu.memory_space<vmem>>, vector<1x128x384xf32>
    %376 = vector.shape_cast %375 : vector<1x128x384xf32> to vector<128x384xf32>
    %cst_160 = arith.constant dense<0.000000e+00> : vector<8x384xf32>
    %377 = tpu.matmul %344, %376, %cst_160 {dimension_numbers = #tpu.dot_dimension_numbers<[1], [0], [0], [1], [0, 0, 1, 1], [], []>} : vector<8x128xf32>, vector<128x384xf32>, vector<8x384xf32> -> vector<8x384xf32>
    %378 = arith.addf %377, %15 : vector<8x384xf32>
    %379 = vector.extract_strided_slice %374 {offsets = [0, 0], sizes = [8, 256], strides = [1, 1]} : vector<8x384xf32> to vector<8x256xf32>
    %380 = vector.extract_strided_slice %378 {offsets = [0, 0], sizes = [8, 256], strides = [1, 1]} : vector<8x384xf32> to vector<8x256xf32>
    %381 = arith.addf %379, %380 : vector<8x256xf32>
    %cst_161 = arith.constant 5.000000e-01 : f32
    %382 = vector.broadcast %cst_161 : f32 to vector<8x256xf32>
    %383 = arith.mulf %382, %381 : vector<8x256xf32>
    %384 = math.tanh %383 : vector<8x256xf32>
    %cst_162 = arith.constant 5.000000e-01 : f32
    %385 = vector.broadcast %cst_162 : f32 to vector<8x256xf32>
    %386 = arith.mulf %385, %384 : vector<8x256xf32>
    %cst_163 = arith.constant 5.000000e-01 : f32
    %387 = vector.broadcast %cst_163 : f32 to vector<8x256xf32>
    %388 = arith.addf %386, %387 : vector<8x256xf32>
    %389 = vector.extract_strided_slice %388 {offsets = [0, 0], sizes = [8, 128], strides = [1, 1]} : vector<8x256xf32> to vector<8x128xf32>
    %390 = vector.extract_strided_slice %388 {offsets = [0, 128], sizes = [8, 128], strides = [1, 1]} : vector<8x256xf32> to vector<8x128xf32>
    %391 = vector.extract_strided_slice %374 {offsets = [0, 256], sizes = [8, 128], strides = [1, 1]} : vector<8x384xf32> to vector<8x128xf32>
    %392 = vector.extract_strided_slice %378 {offsets = [0, 256], sizes = [8, 128], strides = [1, 1]} : vector<8x384xf32> to vector<8x128xf32>
    %393 = arith.mulf %389, %392 : vector<8x128xf32>
    %394 = arith.addf %391, %393 : vector<8x128xf32>
    %395 = math.tanh %394 : vector<8x128xf32>
    %396 = arith.subf %344, %395 : vector<8x128xf32>
    %397 = arith.mulf %390, %396 : vector<8x128xf32>
    %398 = arith.addf %395, %397 : vector<8x128xf32>
    %c48_164 = arith.constant 48 : index
    %c0_165 = arith.constant 0 : index
    %399 = vector.load %arg6[%c48_164, %c0_165] : memref<64x128xf32, #tpu.memory_space<vmem>>, vector<8x128xf32>
    tpu.vector_store %arg6[%c48_164, %c0_165], %398 {strides = array<i32>} : memref<64x128xf32, #tpu.memory_space<vmem>>, vector<8x128xf32>,
    %c56 = arith.constant 56 : index
    %c0_166 = arith.constant 0 : index
    %400 = vector.load %arg7[%c56, %c0_166] : memref<64x384xf32, #tpu.memory_space<vmem>>, vector<8x384xf32>
    %c0_167 = arith.constant 0 : index
    %c0_168 = arith.constant 0 : index
    %c0_169 = arith.constant 0 : index
    %401 = vector.load %arg3[%c0_167, %c0_168, %c0_169] : memref<2x128x384xf32, #tpu.memory_space<vmem>>, vector<1x128x384xf32>
    %402 = vector.shape_cast %401 : vector<1x128x384xf32> to vector<128x384xf32>
    %cst_170 = arith.constant dense<0.000000e+00> : vector<8x384xf32>
    %403 = tpu.matmul %370, %402, %cst_170 {dimension_numbers = #tpu.dot_dimension_numbers<[1], [0], [0], [1], [0, 0, 1, 1], [], []>} : vector<8x128xf32>, vector<128x384xf32>, vector<8x384xf32> -> vector<8x384xf32>
    %404 = arith.addf %403, %11 : vector<8x384xf32>
    %405 = vector.extract_strided_slice %400 {offsets = [0, 0], sizes = [8, 256], strides = [1, 1]} : vector<8x384xf32> to vector<8x256xf32>
    %406 = vector.extract_strided_slice %404 {offsets = [0, 0], sizes = [8, 256], strides = [1, 1]} : vector<8x384xf32> to vector<8x256xf32>
    %407 = arith.addf %405, %406 : vector<8x256xf32>
    %cst_171 = arith.constant 5.000000e-01 : f32
    %408 = vector.broadcast %cst_171 : f32 to vector<8x256xf32>
    %409 = arith.mulf %408, %407 : vector<8x256xf32>
    %410 = math.tanh %409 : vector<8x256xf32>
    %cst_172 = arith.constant 5.000000e-01 : f32
    %411 = vector.broadcast %cst_172 : f32 to vector<8x256xf32>
    %412 = arith.mulf %411, %410 : vector<8x256xf32>
    %cst_173 = arith.constant 5.000000e-01 : f32
    %413 = vector.broadcast %cst_173 : f32 to vector<8x256xf32>
    %414 = arith.addf %412, %413 : vector<8x256xf32>
    %415 = vector.extract_strided_slice %414 {offsets = [0, 0], sizes = [8, 128], strides = [1, 1]} : vector<8x256xf32> to vector<8x128xf32>
    %416 = vector.extract_strided_slice %414 {offsets = [0, 128], sizes = [8, 128], strides = [1, 1]} : vector<8x256xf32> to vector<8x128xf32>
    %417 = vector.extract_strided_slice %400 {offsets = [0, 256], sizes = [8, 128], strides = [1, 1]} : vector<8x384xf32> to vector<8x128xf32>
    %418 = vector.extract_strided_slice %404 {offsets = [0, 256], sizes = [8, 128], strides = [1, 1]} : vector<8x384xf32> to vector<8x128xf32>
    %419 = arith.mulf %415, %418 : vector<8x128xf32>
    %420 = arith.addf %417, %419 : vector<8x128xf32>
    %421 = math.tanh %420 : vector<8x128xf32>
    %422 = arith.subf %370, %421 : vector<8x128xf32>
    %423 = arith.mulf %416, %422 : vector<8x128xf32>
    %424 = arith.addf %421, %423 : vector<8x128xf32>
    %c0_174 = arith.constant 0 : index
    %c0_175 = arith.constant 0 : index
    %c0_176 = arith.constant 0 : index
    %425 = vector.load %arg2[%c0_174, %c0_175, %c0_176] : memref<1x128x384xf32, #tpu.memory_space<vmem>>, vector<1x128x384xf32>
    %426 = vector.shape_cast %425 : vector<1x128x384xf32> to vector<128x384xf32>
    %cst_177 = arith.constant dense<0.000000e+00> : vector<8x384xf32>
    %427 = tpu.matmul %424, %426, %cst_177 {dimension_numbers = #tpu.dot_dimension_numbers<[1], [0], [0], [1], [0, 0, 1, 1], [], []>} : vector<8x128xf32>, vector<128x384xf32>, vector<8x384xf32> -> vector<8x384xf32>
    %428 = arith.addf %427, %19 : vector<8x384xf32>
    %c1_178 = arith.constant 1 : index
    %c0_179 = arith.constant 0 : index
    %c0_180 = arith.constant 0 : index
    %429 = vector.load %arg3[%c1_178, %c0_179, %c0_180] : memref<2x128x384xf32, #tpu.memory_space<vmem>>, vector<1x128x384xf32>
    %430 = vector.shape_cast %429 : vector<1x128x384xf32> to vector<128x384xf32>
    %cst_181 = arith.constant dense<0.000000e+00> : vector<8x384xf32>
    %431 = tpu.matmul %398, %430, %cst_181 {dimension_numbers = #tpu.dot_dimension_numbers<[1], [0], [0], [1], [0, 0, 1, 1], [], []>} : vector<8x128xf32>, vector<128x384xf32>, vector<8x384xf32> -> vector<8x384xf32>
    %432 = arith.addf %431, %15 : vector<8x384xf32>
    %433 = vector.extract_strided_slice %428 {offsets = [0, 0], sizes = [8, 256], strides = [1, 1]} : vector<8x384xf32> to vector<8x256xf32>
    %434 = vector.extract_strided_slice %432 {offsets = [0, 0], sizes = [8, 256], strides = [1, 1]} : vector<8x384xf32> to vector<8x256xf32>
    %435 = arith.addf %433, %434 : vector<8x256xf32>
    %cst_182 = arith.constant 5.000000e-01 : f32
    %436 = vector.broadcast %cst_182 : f32 to vector<8x256xf32>
    %437 = arith.mulf %436, %435 : vector<8x256xf32>
    %438 = math.tanh %437 : vector<8x256xf32>
    %cst_183 = arith.constant 5.000000e-01 : f32
    %439 = vector.broadcast %cst_183 : f32 to vector<8x256xf32>
    %440 = arith.mulf %439, %438 : vector<8x256xf32>
    %cst_184 = arith.constant 5.000000e-01 : f32
    %441 = vector.broadcast %cst_184 : f32 to vector<8x256xf32>
    %442 = arith.addf %440, %441 : vector<8x256xf32>
    %443 = vector.extract_strided_slice %442 {offsets = [0, 0], sizes = [8, 128], strides = [1, 1]} : vector<8x256xf32> to vector<8x128xf32>
    %444 = vector.extract_strided_slice %442 {offsets = [0, 128], sizes = [8, 128], strides = [1, 1]} : vector<8x256xf32> to vector<8x128xf32>
    %445 = vector.extract_strided_slice %428 {offsets = [0, 256], sizes = [8, 128], strides = [1, 1]} : vector<8x384xf32> to vector<8x128xf32>
    %446 = vector.extract_strided_slice %432 {offsets = [0, 256], sizes = [8, 128], strides = [1, 1]} : vector<8x384xf32> to vector<8x128xf32>
    %447 = arith.mulf %443, %446 : vector<8x128xf32>
    %448 = arith.addf %445, %447 : vector<8x128xf32>
    %449 = math.tanh %448 : vector<8x128xf32>
    %450 = arith.subf %398, %449 : vector<8x128xf32>
    %451 = arith.mulf %444, %450 : vector<8x128xf32>
    %452 = arith.addf %449, %451 : vector<8x128xf32>
    %c56_185 = arith.constant 56 : index
    %c0_186 = arith.constant 0 : index
    %453 = vector.load %arg6[%c56_185, %c0_186] : memref<64x128xf32, #tpu.memory_space<vmem>>, vector<8x128xf32>
    tpu.vector_store %arg6[%c56_185, %c0_186], %452 {strides = array<i32>} : memref<64x128xf32, #tpu.memory_space<vmem>>, vector<8x128xf32>,
    return
  }
}

</mosaic_0001>

<llo_original>
// kernel: tpu_custom_call.1
$region0: #{tpu_custom_call.1}
  #allocation0 [shape = 'u32[]', space=smem, size = 0x4, offset = 0x4, fixed_abs, tag = 'smem constant byte address 0x4 - core index']
  #allocation1 [shape = 'u32[144,128]{1,0:T(1,128)}', space=vmem, size = 0x12000, scoped, tag = 'internal scratch']
  #allocation2 [shape = 'f32[64,384]{1,0:T(8,128)}', space=vmem, size = 0x18000, scoped, tag = 'scratch operand']
  %s0 = inlined_call_operand.vmem [shape: f32[64,16], index: 0, kind: input, shape index: {}]
  %s1 = inlined_call_operand.vmem [shape: f32[16,384], index: 1, kind: input, shape index: {}]
  %s2 = inlined_call_operand.hbm [shape: f32[1,128,384], index: 2, kind: input, shape index: {}]
  %s3 = inlined_call_operand.hbm [shape: f32[2,128,384], index: 3, kind: input, shape index: {}]
  %s4 = inlined_call_operand.vmem [shape: f32[2,1,384], index: 4, kind: input, shape index: {}]
  %s5 = inlined_call_operand.vmem [shape: f32[2,1,384], index: 5, kind: input, shape index: {}]
  %s6 = inlined_call_operand.hbm [shape: f32[64,128], index: 6, kind: output, shape index: {}]
  %s7 = sld [smem:[#allocation0]]
  $region42: #{tpu_custom_call.1} parent=0
    _
  %s9 = ssub.s32 1, %s7
  %s10 = scalar_select 0, %s9, %s7
  $region1: #{tpu_custom_call.1} parent=0
    #allocation3 [shape = 'u8[196608]{0}', space=vmem, size = 0x30000, scoped, tag = 'input window, operand 2, single buffered']
    #allocation4 [shape = 's32[1]{0}', space=sflag, size = 0x4, scoped, tag = 'scoped memory for tpu_custom_call.1']
    #allocation5 [shape = 's32[1]{0}', space=sflag, size = 0x4, scoped, tag = 'scoped memory for tpu_custom_call.1']
    #allocation6 [shape = 'u8[393216]{0}', space=vmem, size = 0x60000, scoped, tag = 'input window, operand 3, single buffered']
    #allocation7 [shape = 's32[1]{0}', space=sflag, size = 0x4, scoped, tag = 'scoped memory for tpu_custom_call.1']
    #allocation8 [shape = 'u8[32768]{0}', space=vmem, size = 0x8000, scoped, tag = 'output window, operand 0, single buffered']
    %11 = vsyncpa [#allocation4], 0
    %12 = vsyncpa [#allocation7], 0
    %13 = vsyncpa [#allocation5], 0
    // Predicated region
    $region2: #{tpu_custom_call.1} parent=1 // pred_check
      _
    $region3: #{tpu_custom_call.1} parent=1 // pred_check_branch
      %15 = sbr.rel (0) target = $region5
    $region4: #{tpu_custom_call.1} parent=1 // pred_region
      _
    $region5: #{tpu_custom_call.1} parent=1 // pred_fallthru
      _
    // Predicated region
    $region6: #{tpu_custom_call.1} parent=1 // pred_check
      _
    $region7: #{tpu_custom_call.1} parent=1 // pred_check_branch
      %17 = sbr.rel (0) target = $region9
    $region8: #{tpu_custom_call.1} parent=1 // pred_region
      _
    $region9: #{tpu_custom_call.1} parent=1 // pred_fallthru
      _
    // Predicated region
    $region10: #{tpu_custom_call.1} parent=1 // pred_check
      _
    $region11: #{tpu_custom_call.1} parent=1 // pred_check_branch
      %19 = sbr.rel (0) target = $region13
    $region12: #{tpu_custom_call.1} parent=1 // pred_region
      %s21 = ssub.s32 6144, 6144
      %22 = vsyncadd [#allocation4], %s21
      %s23 = sshll.u32 [#allocation3], 4
      %s24 = int_to_ptr.vmem [resolvable:$true] %s23
      %29 = dma.hbm_to_vmem [thread:$0]  %s2, 6144, %s24, [#allocation4], 384, 384, 24
    $region13: #{tpu_custom_call.1} parent=1 // pred_fallthru
      _
    // Predicated region
    $region14: #{tpu_custom_call.1} parent=1 // pred_check
      _
    $region15: #{tpu_custom_call.1} parent=1 // pred_check_branch
      %31 = sbr.rel (0) target = $region17
    $region16: #{tpu_custom_call.1} parent=1 // pred_region
      %s33 = ssub.s32 12288, 12288
      %34 = vsyncadd [#allocation7], %s33
      %s35 = sshll.u32 [#allocation6], 4
      %s36 = int_to_ptr.vmem [resolvable:$true] %s35
      %41 = dma.hbm_to_vmem [thread:$0]  %s3, 12288, %s36, [#allocation7], 384, 384, 24
    $region17: #{tpu_custom_call.1} parent=1 // pred_fallthru
      _
    // Predicated region
    $region18: #{tpu_custom_call.1} parent=1 // pred_check
      _
    $region19: #{tpu_custom_call.1} parent=1 // pred_check_branch
      %43 = sbr.rel (0) target = $region21
    $region20: #{tpu_custom_call.1} parent=1 // pred_region
      _
    $region21: #{tpu_custom_call.1} parent=1 // pred_fallthru
      _
    // Predicated region
    $region22: #{tpu_custom_call.1} parent=1 // pred_check
      _
    $region23: #{tpu_custom_call.1} parent=1 // pred_check_branch
      %45 = sbr.rel (0) target = $region25
    $region24: #{tpu_custom_call.1} parent=1 // pred_region
      _
    $region25: #{tpu_custom_call.1} parent=1 // pred_fallthru
      _
    // Predicated region
    $region26: #{tpu_custom_call.1} parent=1 // pred_check
      _
    $region27: #{tpu_custom_call.1} parent=1 // pred_check_branch
      %47 = sbr.rel (0) target = $region29
    $region28: #{tpu_custom_call.1} parent=1 // pred_region
      %48 = dma.done [#allocation4], 6144
    $region29: #{tpu_custom_call.1} parent=1 // pred_fallthru
      _
    // Predicated region
    $region30: #{tpu_custom_call.1} parent=1 // pred_check
      _
    $region31: #{tpu_custom_call.1} parent=1 // pred_check_branch
      %50 = sbr.rel (0) target = $region33
    $region32: #{tpu_custom_call.1} parent=1 // pred_region
      %51 = dma.done [#allocation7], 12288
    $region33: #{tpu_custom_call.1} parent=1 // pred_fallthru
      _
    %v52 = vld [vmem:[%s0] sm:$0xff]
    %v53 = vld [vmem:[%s0 + $0x8] sm:$0xff]
    %v54 = vld [vmem:[%s0 + $0x10] sm:$0xff]
    %v55 = vld [vmem:[%s0 + $0x18] sm:$0xff]
    %v56 = vld [vmem:[%s0 + $0x20] sm:$0xff]
    %v57 = vld [vmem:[%s0 + $0x28] sm:$0xff]
    %v58 = vld [vmem:[%s0 + $0x30] sm:$0xff]
    %v59 = vld [vmem:[%s0 + $0x38] sm:$0xff]
    %v60 = vld [vmem:[%s1] sm:$0xff]
    %v61 = vld [vmem:[%s1 + $0x8] sm:$0xff]
    %v62 = vld [vmem:[%s1 + $0x10] sm:$0xff]
    %v63 = vld [vmem:[%s1 + $0x18] sm:$0xff]
    %v64 = vld [vmem:[%s1 + $0x20] sm:$0xff]
    %v65 = vld [vmem:[%s1 + $0x28] sm:$0xff]
    %v66 = vld [vmem:[%s4] sm:$0x7]
    %v68 = vlaneseq
    %v69 = vshrl.u32 %v68, 7
    %v70 = vsub.s32 0, %v69
    %v71 = vrot.slane %v66, %v70
    %v72 = vlaneseq
    %v73 = vshrl.u32 %v72, 7
    %v74 = vsub.s32 1, %v73
    %v75 = vrot.slane %v66, %v74
    %v76 = vlaneseq
    %v77 = vshrl.u32 %v76, 7
    %v78 = vsub.s32 2, %v77
    %v79 = vrot.slane %v66, %v78
    %vm83 = vcmask 130048
    %v85 = vsel %vm83, %v52, 0
    %v88 = vsel %vm83, %v53, 0
    %v91 = vsel %vm83, %v54, 0
    %v94 = vsel %vm83, %v55, 0
    %v97 = vsel %vm83, %v56, 0
    %v100 = vsel %vm83, %v57, 0
    %v103 = vsel %vm83, %v58, 0
    %v106 = vsel %vm83, %v59, 0
    %108 = vmatprep.subr.mxu0 %v61
    %109 = vmatpush1.msra.mxu0 %v60
    %110 = vmatprep.subr.mxu0 %v64
    %111 = vmatpush1.msra.mxu0 %v63
    %112 = vmatprep.subr.mxu0 0.0
    %113 = vmatpush1.msra.mxu0 0.0
    %114 = vmatprep.subr.mxu0 0.0
    %115 = vmatpush1.msra.mxu0 0.0
    %116 = vmatprep.subr.mxu0 0.0
    %117 = vmatpush1.msra.mxu0 0.0
    %118 = vmatprep.subr.mxu0 0.0
    %119 = vmatpush1.msra.mxu0 0.0
    %120 = vmatprep.subr.mxu0 0.0
    %121 = vmatpush1.msra.mxu0 0.0
    %122 = vmatprep.subr.mxu0 0.0
    %123 = vmatpush1.msra.mxu0 0.0
    %124 = vmatprep.subr.mxu0 0.0
    %125 = vmatpush1.msra.mxu0 0.0
    %126 = vmatprep.subr.mxu0 0.0
    %127 = vmatpush1.msra.mxu0 0.0
    %128 = vmatprep.subr.mxu0 0.0
    %129 = vmatpush1.msra.mxu0 0.0
    %130 = vmatprep.subr.mxu0 0.0
    %131 = vmatpush1.msra.mxu0 0.0
    %132 = vmatprep.subr.mxu0 0.0
    %133 = vmatpush1.msra.mxu0 0.0
    %134 = vmatprep.subr.mxu0 0.0
    %135 = vmatpush1.msra.mxu0 0.0
    %136 = vmatprep.subr.mxu0 0.0
    %137 = vmatpush1.msra.mxu0 0.0
    %138 = vmatprep.subr.mxu0 0.0
    %139 = vmatpush1.msra.mxu0 0.0
    %140 = vmatprep.subr.mxu0 0.0
    %141 = vmatpush1.msra.mxu0 0.0
    %142 = vmatprep.subr.mxu0 0.0
    %143 = vmatpush1.msra.mxu0 0.0
    %144 = vmatprep.subr.mxu0 0.0
    %145 = vmatpush1.msra.mxu0 0.0
    %146 = vmatprep.subr.mxu0 0.0
    %147 = vmatpush1.msra.mxu0 0.0
    %148 = vmatprep.subr.mxu0 0.0
    %149 = vmatpush1.msra.mxu0 0.0
    %150 = vmatprep.subr.mxu0 0.0
    %151 = vmatpush1.msra.mxu0 0.0
    %152 = vmatprep.subr.mxu0 0.0
    %153 = vmatpush1.msra.mxu0 0.0
    %154 = vmatprep.subr.mxu0 0.0
    %155 = vmatpush1.msra.mxu0 0.0
    %156 = vmatprep.subr.mxu0 0.0
    %157 = vmatpush1.msra.mxu0 0.0
    %158 = vmatprep.subr.mxu0 0.0
    %159 = vmatpush1.msra.mxu0 0.0
    %160 = vmatprep.subr.mxu0 0.0
    %161 = vmatpush1.msra.mxu0 0.0
    %162 = vmatprep.subr.mxu0 0.0
    %163 = vmatpush1.msra.mxu0 0.0
    %164 = vmatprep.subr.mxu0 0.0
    %165 = vmatpush1.msra.mxu0 0.0
    %166 = vmatprep.subr.mxu0 0.0
    %167 = vmatpush1.msra.mxu0 0.0
    %168 = vmatprep.subr.mxu0 0.0
    %169 = vmatpush1.msra.mxu0 0.0
    %170 = vmatprep.subr.mxu0 0.0
    %171 = vmatpush1.msra.mxu0 0.0
    %172 = vmatprep.mubr.f32.mxu0 0.0
    %173 = vmatmul.mubr.f32.gmra.mrb[0].mxu0 %v85
    %v174 = vpop.f32.mrb[0].mxu0
    %v175 = vadd.f32 %v71, %v174
    %v176 = vpop.f32.mrb[0].mxu0
    %v177 = vadd.f32 %v75, %v176
    %178 = vmatprep.mubr.f32.mxu0 0.0
    %179 = vmatmul.mubr.f32.gmra.mrb[0].mxu0 %v88
    %v180 = vpop.f32.mrb[0].mxu0
    %v181 = vadd.f32 %v71, %v180
    %v182 = vpop.f32.mrb[0].mxu0
    %v183 = vadd.f32 %v75, %v182
    %184 = vmatprep.mubr.f32.mxu0 0.0
    %185 = vmatmul.mubr.f32.gmra.mrb[0].mxu0 %v91
    %v186 = vpop.f32.mrb[0].mxu0
    %v187 = vadd.f32 %v71, %v186
    %v188 = vpop.f32.mrb[0].mxu0
    %v189 = vadd.f32 %v75, %v188
    %190 = vmatprep.mubr.f32.mxu0 0.0
    %191 = vmatmul.mubr.f32.gmra.mrb[0].mxu0 %v94
    %v192 = vpop.f32.mrb[0].mxu0
    %v193 = vadd.f32 %v71, %v192
    %v194 = vpop.f32.mrb[0].mxu0
    %v195 = vadd.f32 %v75, %v194
    %196 = vmatprep.mubr.f32.mxu0 0.0
    %197 = vmatmul.mubr.f32.gmra.mrb[0].mxu0 %v97
    %v198 = vpop.f32.mrb[0].mxu0
    %v199 = vadd.f32 %v71, %v198
    %v200 = vpop.f32.mrb[0].mxu0
    %v201 = vadd.f32 %v75, %v200
    %202 = vmatprep.mubr.f32.mxu0 0.0
    %203 = vmatmul.mubr.f32.gmra.mrb[0].mxu0 %v100
    %v204 = vpop.f32.mrb[0].mxu0
    %v205 = vadd.f32 %v71, %v204
    %v206 = vpop.f32.mrb[0].mxu0
    %v207 = vadd.f32 %v75, %v206
    %208 = vmatprep.mubr.f32.mxu0 0.0
    %209 = vmatmul.mubr.f32.gmra.mrb[0].mxu0 %v103
    %v210 = vpop.f32.mrb[0].mxu0
    %v211 = vadd.f32 %v71, %v210
    %v212 = vpop.f32.mrb[0].mxu0
    %v213 = vadd.f32 %v75, %v212
    %214 = vmatprep.mubr.f32.mxu0 0.0
    %215 = vmatmul.mubr.f32.gmra.mrb[0].mxu0 %v106
    %v216 = vpop.f32.mrb[0].mxu0
    %v217 = vadd.f32 %v71, %v216
    %v218 = vpop.f32.mrb[0].mxu0
    %v219 = vadd.f32 %v75, %v218
    %220 = vdwg.mxu0
    %221 = vmatprep.subr.mxu0 0.0
    %222 = vmatpush1.msra.mxu0 %v62
    %223 = vmatprep.subr.mxu0 0.0
    %224 = vmatpush1.msra.mxu0 %v65
    %225 = vmatprep.subr.mxu0 0.0
    %226 = vmatpush1.msra.mxu0 0.0
    %227 = vmatprep.subr.mxu0 0.0
    %228 = vmatpush1.msra.mxu0 0.0
    %229 = vmatprep.subr.mxu0 0.0
    %230 = vmatpush1.msra.mxu0 0.0
    %231 = vmatprep.subr.mxu0 0.0
    %232 = vmatpush1.msra.mxu0 0.0
    %233 = vmatprep.subr.mxu0 0.0
    %234 = vmatpush1.msra.mxu0 0.0
    %235 = vmatprep.subr.mxu0 0.0
    %236 = vmatpush1.msra.mxu0 0.0
    %237 = vmatprep.subr.mxu0 0.0
    %238 = vmatpush1.msra.mxu0 0.0
    %239 = vmatprep.subr.mxu0 0.0
    %240 = vmatpush1.msra.mxu0 0.0
    %241 = vmatprep.subr.mxu0 0.0
    %242 = vmatpush1.msra.mxu0 0.0
    %243 = vmatprep.subr.mxu0 0.0
    %244 = vmatpush1.msra.mxu0 0.0
    %245 = vmatprep.subr.mxu0 0.0
    %246 = vmatpush1.msra.mxu0 0.0
    %247 = vmatprep.subr.mxu0 0.0
    %248 = vmatpush1.msra.mxu0 0.0
    %249 = vmatprep.subr.mxu0 0.0
    %250 = vmatpush1.msra.mxu0 0.0
    %251 = vmatprep.subr.mxu0 0.0
    %252 = vmatpush1.msra.mxu0 0.0
    %253 = vmatprep.subr.mxu0 0.0
    %254 = vmatpush1.msra.mxu0 0.0
    %255 = vmatprep.subr.mxu0 0.0
    %256 = vmatpush1.msra.mxu0 0.0
    %257 = vmatprep.subr.mxu0 0.0
    %258 = vmatpush1.msra.mxu0 0.0
    %259 = vmatprep.subr.mxu0 0.0
    %260 = vmatpush1.msra.mxu0 0.0
    %261 = vmatprep.subr.mxu0 0.0
    %262 = vmatpush1.msra.mxu0 0.0
    %263 = vmatprep.subr.mxu0 0.0
    %264 = vmatpush1.msra.mxu0 0.0
    %265 = vmatprep.subr.mxu0 0.0
    %266 = vmatpush1.msra.mxu0 0.0
    %267 = vmatprep.subr.mxu0 0.0
    %268 = vmatpush1.msra.mxu0 0.0
    %269 = vmatprep.subr.mxu0 0.0
    %270 = vmatpush1.msra.mxu0 0.0
    %271 = vmatprep.subr.mxu0 0.0
    %272 = vmatpush1.msra.mxu0 0.0
    %273 = vmatprep.subr.mxu0 0.0
    %274 = vmatpush1.msra.mxu0 0.0
    %275 = vmatprep.subr.mxu0 0.0
    %276 = vmatpush1.msra.mxu0 0.0
    %277 = vmatprep.subr.mxu0 0.0
    %278 = vmatpush1.msra.mxu0 0.0
    %279 = vmatprep.subr.mxu0 0.0
    %280 = vmatpush1.msra.mxu0 0.0
    %281 = vmatprep.subr.mxu0 0.0
    %282 = vmatpush1.msra.mxu0 0.0
    %283 = vmatprep.subr.mxu0 0.0
    %284 = vmatpush1.msra.mxu0 0.0
    %285 = vmatprep.mubr.f32.mxu0 0.0
    %286 = vmatmul.mubr.f32.gmra.mrb[0].mxu0 %v85
    %v287 = vpop.f32.mrb[0].mxu0
    %v288 = vadd.f32 %v79, %v287
    %v289 = vpop.f32.mrb[0].mxu0
    %290 = vmatprep.mubr.f32.mxu0 0.0
    %291 = vmatmul.mubr.f32.gmra.mrb[0].mxu0 %v88
    %v292 = vpop.f32.mrb[0].mxu0
    %v293 = vadd.f32 %v79, %v292
    %v294 = vpop.f32.mrb[0].mxu0
    %295 = vmatprep.mubr.f32.mxu0 0.0
    %296 = vmatmul.mubr.f32.gmra.mrb[0].mxu0 %v91
    %v297 = vpop.f32.mrb[0].mxu0
    %v298 = vadd.f32 %v79, %v297
    %v299 = vpop.f32.mrb[0].mxu0
    %300 = vmatprep.mubr.f32.mxu0 0.0
    %301 = vmatmul.mubr.f32.gmra.mrb[0].mxu0 %v94
    %v302 = vpop.f32.mrb[0].mxu0
    %v303 = vadd.f32 %v79, %v302
    %v304 = vpop.f32.mrb[0].mxu0
    %305 = vmatprep.mubr.f32.mxu0 0.0
    %306 = vmatmul.mubr.f32.gmra.mrb[0].mxu0 %v97
    %v307 = vpop.f32.mrb[0].mxu0
    %v308 = vadd.f32 %v79, %v307
    %v309 = vpop.f32.mrb[0].mxu0
    %310 = vmatprep.mubr.f32.mxu0 0.0
    %311 = vmatmul.mubr.f32.gmra.mrb[0].mxu0 %v100
    %v312 = vpop.f32.mrb[0].mxu0
    %v313 = vadd.f32 %v79, %v312
    %v314 = vpop.f32.mrb[0].mxu0
    %315 = vmatprep.mubr.f32.mxu0 0.0
    %316 = vmatmul.mubr.f32.gmra.mrb[0].mxu0 %v103
    %v317 = vpop.f32.mrb[0].mxu0
    %v318 = vadd.f32 %v79, %v317
    %v319 = vpop.f32.mrb[0].mxu0
    %320 = vmatprep.mubr.f32.mxu0 0.0
    %321 = vmatmul.mubr.f32.gmra.mrb[0].mxu0 %v106
    %v322 = vpop.f32.mrb[0].mxu0
    %v323 = vadd.f32 %v79, %v322
    %v324 = vpop.f32.mrb[0].mxu0
    %325 = vdwg.mxu0
    %326 = vst [vmem:[#allocation2] sm:$0xff] %v175
    %327 = vst [vmem:[#allocation2 + $0x8] sm:$0xff] %v177
    %328 = vst [vmem:[#allocation2 + $0x10] sm:$0xff] %v288
    %329 = vst [vmem:[#allocation2 + $0x18] sm:$0xff] %v181
    %330 = vst [vmem:[#allocation2 + $0x20] sm:$0xff] %v183
    %331 = vst [vmem:[#allocation2 + $0x28] sm:$0xff] %v293
    %332 = vst [vmem:[#allocation2 + $0x30] sm:$0xff] %v187
    %333 = vst [vmem:[#allocation2 + $0x38] sm:$0xff] %v189
    %334 = vst [vmem:[#allocation2 + $0x40] sm:$0xff] %v298
    %335 = vst [vmem:[#allocation2 + $0x48] sm:$0xff] %v193
    %336 = vst [vmem:[#allocation2 + $0x50] sm:$0xff] %v195
    %337 = vst [vmem:[#allocation2 + $0x58] sm:$0xff] %v303
    %338 = vst [vmem:[#allocation2 + $0x60] sm:$0xff] %v199
    %339 = vst [vmem:[#allocation2 + $0x68] sm:$0xff] %v201
    %340 = vst [vmem:[#allocation2 + $0x70] sm:$0xff] %v308
    %341 = vst [vmem:[#allocation2 + $0x78] sm:$0xff] %v205
    %342 = vst [vmem:[#allocation2 + $0x80] sm:$0xff] %v207
    %343 = vst [vmem:[#allocation2 + $0x88] sm:$0xff] %v313
    %344 = vst [vmem:[#allocation2 + $0x90] sm:$0xff] %v211
    %345 = vst [vmem:[#allocation2 + $0x98] sm:$0xff] %v213
    %346 = vst [vmem:[#allocation2 + $0xa0] sm:$0xff] %v318
    %347 = vst [vmem:[#allocation2 + $0xa8] sm:$0xff] %v217
    %348 = vst [vmem:[#allocation2 + $0xb0] sm:$0xff] %v219
    %349 = vst [vmem:[#allocation2 + $0xb8] sm:$0xff] %v323
    %v350 = vld [vmem:[%s5] sm:$0x7]
    %v352 = vlaneseq
    %v353 = vshrl.u32 %v352, 7
    %v354 = vsub.s32 0, %v353
    %v355 = vrot.slane %v350, %v354
    %v356 = vlaneseq
    %v357 = vshrl.u32 %v356, 7
    %v358 = vsub.s32 1, %v357
    %v359 = vrot.slane %v350, %v358
    %v360 = vlaneseq
    %v361 = vshrl.u32 %v360, 7
    %v362 = vsub.s32 2, %v361
    %v363 = vrot.slane %v350, %v362
    %s367 = scalar_lea.vmem %s5, 3
    %v368 = vld [vmem:[%s367] sm:$0x7]
    %v370 = vlaneseq
    %v371 = vshrl.u32 %v370, 7
    %v372 = vsub.s32 0, %v371
    %v373 = vrot.slane %v368, %v372
    %v374 = vlaneseq
    %v375 = vshrl.u32 %v374, 7
    %v376 = vsub.s32 1, %v375
    %v377 = vrot.slane %v368, %v376
    %v378 = vlaneseq
    %v379 = vshrl.u32 %v378, 7
    %v380 = vsub.s32 2, %v379
    %v381 = vrot.slane %v368, %v380
    %s385 = scalar_lea.vmem %s4, 3
    %v386 = vld [vmem:[%s385] sm:$0x7]
    %v388 = vlaneseq
    %v389 = vshrl.u32 %v388, 7
    %v390 = vsub.s32 0, %v389
    %v391 = vrot.slane %v386, %v390
    %v392 = vlaneseq
    %v393 = vshrl.u32 %v392, 7
    %v394 = vsub.s32 1, %v393
    %v395 = vrot.slane %v386, %v394
    %v396 = vlaneseq
    %v397 = vshrl.u32 %v396, 7
    %v398 = vsub.s32 2, %v397
    %v399 = vrot.slane %v386, %v398
    %v403 = vld [vmem:[#allocation2] sm:$0xff]
    %v404 = vld [vmem:[#allocation2 + $0x8] sm:$0xff]
    %v405 = vld [vmem:[#allocation2 + $0x10] sm:$0xff]
    %v406 = vld [vmem:[#allocation6] sm:$0xff]
    %v407 = vld [vmem:[#allocation6 + $0x8] sm:$0xff]
    %v408 = vld [vmem:[#allocation6 + $0x10] sm:$0xff]
    %v409 = vld [vmem:[#allocation6 + $0x18] sm:$0xff]
    %v410 = vld [vmem:[#allocation6 + $0x20] sm:$0xff]
    %v411 = vld [vmem:[#allocation6 + $0x28] sm:$0xff]
    %v412 = vld [vmem:[#allocation6 + $0x30] sm:$0xff]
    %v413 = vld [vmem:[#allocation6 + $0x38] sm:$0xff]
    %v414 = vld [vmem:[#allocation6 + $0x40] sm:$0xff]
    %v415 = vld [vmem:[#allocation6 + $0x48] sm:$0xff]
    %v416 = vld [vmem:[#allocation6 + $0x50] sm:$0xff]
    %v417 = vld [vmem:[#allocation6 + $0x58] sm:$0xff]
    %v418 = vld [vmem:[#allocation6 + $0x60] sm:$0xff]
    %v419 = vld [vmem:[#allocation6 + $0x68] sm:$0xff]
    %v420 = vld [vmem:[#allocation6 + $0x70] sm:$0xff]
    %v421 = vld [vmem:[#allocation6 + $0x78] sm:$0xff]
    %v422 = vld [vmem:[#allocation6 + $0x80] sm:$0xff]
    %v423 = vld [vmem:[#allocation6 + $0x88] sm:$0xff]
    %v424 = vld [vmem:[#allocation6 + $0x90] sm:$0xff]
    %v425 = vld [vmem:[#allocation6 + $0x98] sm:$0xff]
    %v426 = vld [vmem:[#allocation6 + $0xa0] sm:$0xff]
    %v427 = vld [vmem:[#allocation6 + $0xa8] sm:$0xff]
    %v428 = vld [vmem:[#allocation6 + $0xb0] sm:$0xff]
    %v429 = vld [vmem:[#allocation6 + $0xb8] sm:$0xff]
    %v430 = vld [vmem:[#allocation6 + $0xc0] sm:$0xff]
    %v431 = vld [vmem:[#allocation6 + $0xc8] sm:$0xff]
    %v432 = vld [vmem:[#allocation6 + $0xd0] sm:$0xff]
    %v433 = vld [vmem:[#allocation6 + $0xd8] sm:$0xff]
    %v434 = vld [vmem:[#allocation6 + $0xe0] sm:$0xff]
    %v435 = vld [vmem:[#allocation6 + $0xe8] sm:$0xff]
    %v436 = vld [vmem:[#allocation6 + $0xf0] sm:$0xff]
    %v437 = vld [vmem:[#allocation6 + $0xf8] sm:$0xff]
    %v438 = vld [vmem:[#allocation6 + $0x100] sm:$0xff]
    %v439 = vld [vmem:[#allocation6 + $0x108] sm:$0xff]
    %v440 = vld [vmem:[#allocation6 + $0x110] sm:$0xff]
    %v441 = vld [vmem:[#allocation6 + $0x118] sm:$0xff]
    %v442 = vld [vmem:[#allocation6 + $0x120] sm:$0xff]
    %v443 = vld [vmem:[#allocation6 + $0x128] sm:$0xff]
    %v444 = vld [vmem:[#allocation6 + $0x130] sm:$0xff]
    %v445 = vld [vmem:[#allocation6 + $0x138] sm:$0xff]
    %v446 = vld [vmem:[#allocation6 + $0x140] sm:$0xff]
    %v447 = vld [vmem:[#allocation6 + $0x148] sm:$0xff]
    %v448 = vld [vmem:[#allocation6 + $0x150] sm:$0xff]
    %v449 = vld [vmem:[#allocation6 + $0x158] sm:$0xff]
    %v450 = vld [vmem:[#allocation6 + $0x160] sm:$0xff]
    %v451 = vld [vmem:[#allocation6 + $0x168] sm:$0xff]
    %v452 = vld [vmem:[#allocation6 + $0x170] sm:$0xff]
    %v453 = vld [vmem:[#allocation6 + $0x178] sm:$0xff]
    %454 = vmatprep.subr.mxu0 %v407
    %455 = vmatpush1.msra.mxu0 %v406
    %456 = vmatprep.subr.mxu0 %v410
    %457 = vmatpush1.msra.mxu0 %v409
    %458 = vmatprep.subr.mxu0 %v413
    %459 = vmatpush1.msra.mxu0 %v412
    %460 = vmatprep.subr.mxu0 %v416
    %461 = vmatpush1.msra.mxu0 %v415
    %462 = vmatprep.subr.mxu0 %v419
    %463 = vmatpush1.msra.mxu0 %v418
    %464 = vmatprep.subr.mxu0 %v422
    %465 = vmatpush1.msra.mxu0 %v421
    %466 = vmatprep.subr.mxu0 %v425
    %467 = vmatpush1.msra.mxu0 %v424
    %468 = vmatprep.subr.mxu0 %v428
    %469 = vmatpush1.msra.mxu0 %v427
    %470 = vmatprep.subr.mxu0 %v431
    %471 = vmatpush1.msra.mxu0 %v430
    %472 = vmatprep.subr.mxu0 %v434
    %473 = vmatpush1.msra.mxu0 %v433
    %474 = vmatprep.subr.mxu0 %v437
    %475 = vmatpush1.msra.mxu0 %v436
    %476 = vmatprep.subr.mxu0 %v440
    %477 = vmatpush1.msra.mxu0 %v439
    %478 = vmatprep.subr.mxu0 %v443
    %479 = vmatpush1.msra.mxu0 %v442
    %480 = vmatprep.subr.mxu0 %v446
    %481 = vmatpush1.msra.mxu0 %v445
    %482 = vmatprep.subr.mxu0 %v449
    %483 = vmatpush1.msra.mxu0 %v448
    %484 = vmatprep.subr.mxu0 %v452
    %485 = vmatpush1.msra.mxu0 %v451
    %486 = vmatprep.subr.mxu0 0.0
    %487 = vmatpush1.msra.mxu0 0.0
    %488 = vmatprep.subr.mxu0 0.0
    %489 = vmatpush1.msra.mxu0 0.0
    %490 = vmatprep.subr.mxu0 0.0
    %491 = vmatpush1.msra.mxu0 0.0
    %492 = vmatprep.subr.mxu0 0.0
    %493 = vmatpush1.msra.mxu0 0.0
    %494 = vmatprep.subr.mxu0 0.0
    %495 = vmatpush1.msra.mxu0 0.0
    %496 = vmatprep.subr.mxu0 0.0
    %497 = vmatpush1.msra.mxu0 0.0
    %498 = vmatprep.subr.mxu0 0.0
    %499 = vmatpush1.msra.mxu0 0.0
    %500 = vmatprep.subr.mxu0 0.0
    %501 = vmatpush1.msra.mxu0 0.0
    %502 = vmatprep.subr.mxu0 0.0
    %503 = vmatpush1.msra.mxu0 0.0
    %504 = vmatprep.subr.mxu0 0.0
    %505 = vmatpush1.msra.mxu0 0.0
    %506 = vmatprep.subr.mxu0 0.0
    %507 = vmatpush1.msra.mxu0 0.0
    %508 = vmatprep.subr.mxu0 0.0
    %509 = vmatpush1.msra.mxu0 0.0
    %510 = vmatprep.subr.mxu0 0.0
    %511 = vmatpush1.msra.mxu0 0.0
    %512 = vmatprep.subr.mxu0 0.0
    %513 = vmatpush1.msra.mxu0 0.0
    %514 = vmatprep.subr.mxu0 0.0
    %515 = vmatpush1.msra.mxu0 0.0
    %516 = vmatprep.subr.mxu0 0.0
    %517 = vmatpush1.msra.mxu0 0.0
    %518 = vmatprep.mubr.f32.mxu0 0.0
    %519 = vmatmul.mubr.f32.gmra.mrb[0].mxu0 0.0
    %v520 = vpop.f32.mrb[0].mxu0
    %v521 = vadd.f32 %v355, %v520
    %v522 = vpop.f32.mrb[0].mxu0
    %v523 = vadd.f32 %v359, %v522
    %524 = vdwg.mxu0
    %525 = vmatprep.subr.mxu0 0.0
    %526 = vmatpush1.msra.mxu0 %v408
    %527 = vmatprep.subr.mxu0 0.0
    %528 = vmatpush1.msra.mxu0 %v411
    %529 = vmatprep.subr.mxu0 0.0
    %530 = vmatpush1.msra.mxu0 %v414
    %531 = vmatprep.subr.mxu0 0.0
    %532 = vmatpush1.msra.mxu0 %v417
    %533 = vmatprep.subr.mxu0 0.0
    %534 = vmatpush1.msra.mxu0 %v420
    %535 = vmatprep.subr.mxu0 0.0
    %536 = vmatpush1.msra.mxu0 %v423
    %537 = vmatprep.subr.mxu0 0.0
    %538 = vmatpush1.msra.mxu0 %v426
    %539 = vmatprep.subr.mxu0 0.0
    %540 = vmatpush1.msra.mxu0 %v429
    %541 = vmatprep.subr.mxu0 0.0
    %542 = vmatpush1.msra.mxu0 %v432
    %543 = vmatprep.subr.mxu0 0.0
    %544 = vmatpush1.msra.mxu0 %v435
    %545 = vmatprep.subr.mxu0 0.0
    %546 = vmatpush1.msra.mxu0 %v438
    %547 = vmatprep.subr.mxu0 0.0
    %548 = vmatpush1.msra.mxu0 %v441
    %549 = vmatprep.subr.mxu0 0.0
    %550 = vmatpush1.msra.mxu0 %v444
    %551 = vmatprep.subr.mxu0 0.0
    %552 = vmatpush1.msra.mxu0 %v447
    %553 = vmatprep.subr.mxu0 0.0
    %554 = vmatpush1.msra.mxu0 %v450
    %555 = vmatprep.subr.mxu0 0.0
    %556 = vmatpush1.msra.mxu0 %v453
    %557 = vmatprep.subr.mxu0 0.0
    %558 = vmatpush1.msra.mxu0 0.0
    %559 = vmatprep.subr.mxu0 0.0
    %560 = vmatpush1.msra.mxu0 0.0
    %561 = vmatprep.subr.mxu0 0.0
    %562 = vmatpush1.msra.mxu0 0.0
    %563 = vmatprep.subr.mxu0 0.0
    %564 = vmatpush1.msra.mxu0 0.0
    %565 = vmatprep.subr.mxu0 0.0
    %566 = vmatpush1.msra.mxu0 0.0
    %567 = vmatprep.subr.mxu0 0.0
    %568 = vmatpush1.msra.mxu0 0.0
    %569 = vmatprep.subr.mxu0 0.0
    %570 = vmatpush1.msra.mxu0 0.0
    %571 = vmatprep.subr.mxu0 0.0
    %572 = vmatpush1.msra.mxu0 0.0
    %573 = vmatprep.subr.mxu0 0.0
    %574 = vmatpush1.msra.mxu0 0.0
    %575 = vmatprep.subr.mxu0 0.0
    %576 = vmatpush1.msra.mxu0 0.0
    %577 = vmatprep.subr.mxu0 0.0
    %578 = vmatpush1.msra.mxu0 0.0
    %579 = vmatprep.subr.mxu0 0.0
    %580 = vmatpush1.msra.mxu0 0.0
    %581 = vmatprep.subr.mxu0 0.0
    %582 = vmatpush1.msra.mxu0 0.0
    %583 = vmatprep.subr.mxu0 0.0
    %584 = vmatpush1.msra.mxu0 0.0
    %585 = vmatprep.subr.mxu0 0.0
    %586 = vmatpush1.msra.mxu0 0.0
    %587 = vmatprep.subr.mxu0 0.0
    %588 = vmatpush1.msra.mxu0 0.0
    %589 = vmatprep.mubr.f32.mxu0 0.0
    %590 = vmatmul.mubr.f32.gmra.mrb[0].mxu0 0.0
    %v591 = vpop.f32.mrb[0].mxu0
    %v592 = vadd.f32 %v363, %v591
    %v593 = vpop.f32.mrb[0].mxu0
    %594 = vdwg.mxu0
    %v595 = vadd.f32 %v403, %v521
    %v596 = vadd.f32 %v404, %v523
    %v597 = vmul.f32 %v595, 0.5
    %v598 = vmul.f32 %v596, 0.5
    %v599 = vtanh.pop %v597
    %v600 = vtanh.pop %v598
    %v601 = vmul.f32 %v599, 0.5
    %v602 = vmul.f32 %v600, 0.5
    %v603 = vadd.f32 %v601, 0.5
    %v604 = vadd.f32 %v602, 0.5
    %v605 = vmul.f32 %v603, %v592
    %v606 = vadd.f32 %v405, %v605
    %v607 = vtanh.pop %v606
    %v608 = vsub.f32 0.0, %v607
    %v609 = vmul.f32 %v604, %v608
    %v610 = vadd.f32 %v607, %v609
    %v611 = vld [vmem:[#allocation3] sm:$0xff]
    %v612 = vld [vmem:[#allocation3 + $0x8] sm:$0xff]
    %v613 = vld [vmem:[#allocation3 + $0x10] sm:$0xff]
    %v614 = vld [vmem:[#allocation3 + $0x18] sm:$0xff]
    %v615 = vld [vmem:[#allocation3 + $0x20] sm:$0xff]
    %v616 = vld [vmem:[#allocation3 + $0x28] sm:$0xff]
    %v617 = vld [vmem:[#allocation3 + $0x30] sm:$0xff]
    %v618 = vld [vmem:[#allocation3 + $0x38] sm:$0xff]
    %v619 = vld [vmem:[#allocation3 + $0x40] sm:$0xff]
    %v620 = vld [vmem:[#allocation3 + $0x48] sm:$0xff]
    %v621 = vld [vmem:[#allocation3 + $0x50] sm:$0xff]
    %v622 = vld [vmem:[#allocation3 + $0x58] sm:$0xff]
    %v623 = vld [vmem:[#allocation3 + $0x60] sm:$0xff]
    %v624 = vld [vmem:[#allocation3 + $0x68] sm:$0xff]
    %v625 = vld [vmem:[#allocation3 + $0x70] sm:$0xff]
    %v626 = vld [vmem:[#allocation3 + $0x78] sm:$0xff]
    %v627 = vld [vmem:[#allocation3 + $0x80] sm:$0xff]
    %v628 = vld [vmem:[#allocation3 + $0x88] sm:$0xff]
    %v629 = vld [vmem:[#allocation3 + $0x90] sm:$0xff]
    %v630 = vld [vmem:[#allocation3 + $0x98] sm:$0xff]
    %v631 = vld [vmem:[#allocation3 + $0xa0] sm:$0xff]
    %v632 = vld [vmem:[#allocation3 + $0xa8] sm:$0xff]
    %v633 = vld [vmem:[#allocation3 + $0xb0] sm:$0xff]
    %v634 = vld [vmem:[#allocation3 + $0xb8] sm:$0xff]
    %v635 = vld [vmem:[#allocation3 + $0xc0] sm:$0xff]
    %v636 = vld [vmem:[#allocation3 + $0xc8] sm:$0xff]
    %v637 = vld [vmem:[#allocation3 + $0xd0] sm:$0xff]
    %v638 = vld [vmem:[#allocation3 + $0xd8] sm:$0xff]
    %v639 = vld [vmem:[#allocation3 + $0xe0] sm:$0xff]
    %v640 = vld [vmem:[#allocation3 + $0xe8] sm:$0xff]
    %v641 = vld [vmem:[#allocation3 + $0xf0] sm:$0xff]
    %v642 = vld [vmem:[#allocation3 + $0xf8] sm:$0xff]
    %v643 = vld [vmem:[#allocation3 + $0x100] sm:$0xff]
    %v644 = vld [vmem:[#allocation3 + $0x108] sm:$0xff]
    %v645 = vld [vmem:[#allocation3 + $0x110] sm:$0xff]
    %v646 = vld [vmem:[#allocation3 + $0x118] sm:$0xff]
    %v647 = vld [vmem:[#allocation3 + $0x120] sm:$0xff]
    %v648 = vld [vmem:[#allocation3 + $0x128] sm:$0xff]
    %v649 = vld [vmem:[#allocation3 + $0x130] sm:$0xff]
    %v650 = vld [vmem:[#allocation3 + $0x138] sm:$0xff]
    %v651 = vld [vmem:[#allocation3 + $0x140] sm:$0xff]
    %v652 = vld [vmem:[#allocation3 + $0x148] sm:$0xff]
    %v653 = vld [vmem:[#allocation3 + $0x150] sm:$0xff]
    %v654 = vld [vmem:[#allocation3 + $0x158] sm:$0xff]
    %v655 = vld [vmem:[#allocation3 + $0x160] sm:$0xff]
    %v656 = vld [vmem:[#allocation3 + $0x168] sm:$0xff]
    %v657 = vld [vmem:[#allocation3 + $0x170] sm:$0xff]
    %v658 = vld [vmem:[#allocation3 + $0x178] sm:$0xff]
    %659 = vmatprep.subr.mxu0 %v612
    %660 = vmatpush1.msra.mxu0 %v611
    %661 = vmatprep.subr.mxu0 %v615
    %662 = vmatpush1.msra.mxu0 %v614
    %663 = vmatprep.subr.mxu0 %v618
    %664 = vmatpush1.msra.mxu0 %v617
    %665 = vmatprep.subr.mxu0 %v621
    %666 = vmatpush1.msra.mxu0 %v620
    %667 = vmatprep.subr.mxu0 %v624
    %668 = vmatpush1.msra.mxu0 %v623
    %669 = vmatprep.subr.mxu0 %v627
    %670 = vmatpush1.msra.mxu0 %v626
    %671 = vmatprep.subr.mxu0 %v630
    %672 = vmatpush1.msra.mxu0 %v629
    %673 = vmatprep.subr.mxu0 %v633
    %674 = vmatpush1.msra.mxu0 %v632
    %675 = vmatprep.subr.mxu0 %v636
    %676 = vmatpush1.msra.mxu0 %v635
    %677 = vmatprep.subr.mxu0 %v639
    %678 = vmatpush1.msra.mxu0 %v638
    %679 = vmatprep.subr.mxu0 %v642
    %680 = vmatpush1.msra.mxu0 %v641
    %681 = vmatprep.subr.mxu0 %v645
    %682 = vmatpush1.msra.mxu0 %v644
    %683 = vmatprep.subr.mxu0 %v648
    %684 = vmatpush1.msra.mxu0 %v647
    %685 = vmatprep.subr.mxu0 %v651
    %686 = vmatpush1.msra.mxu0 %v650
    %687 = vmatprep.subr.mxu0 %v654
    %688 = vmatpush1.msra.mxu0 %v653
    %689 = vmatprep.subr.mxu0 %v657
    %690 = vmatpush1.msra.mxu0 %v656
    %691 = vmatprep.subr.mxu0 0.0
    %692 = vmatpush1.msra.mxu0 0.0
    %693 = vmatprep.subr.mxu0 0.0
    %694 = vmatpush1.msra.mxu0 0.0
    %695 = vmatprep.subr.mxu0 0.0
    %696 = vmatpush1.msra.mxu0 0.0
    %697 = vmatprep.subr.mxu0 0.0
    %698 = vmatpush1.msra.mxu0 0.0
    %699 = vmatprep.subr.mxu0 0.0
    %700 = vmatpush1.msra.mxu0 0.0
    %701 = vmatprep.subr.mxu0 0.0
    %702 = vmatpush1.msra.mxu0 0.0
    %703 = vmatprep.subr.mxu0 0.0
    %704 = vmatpush1.msra.mxu0 0.0
    %705 = vmatprep.subr.mxu0 0.0
    %706 = vmatpush1.msra.mxu0 0.0
    %707 = vmatprep.subr.mxu0 0.0
    %708 = vmatpush1.msra.mxu0 0.0
    %709 = vmatprep.subr.mxu0 0.0
    %710 = vmatpush1.msra.mxu0 0.0
    %711 = vmatprep.subr.mxu0 0.0
    %712 = vmatpush1.msra.mxu0 0.0
    %713 = vmatprep.subr.mxu0 0.0
    %714 = vmatpush1.msra.mxu0 0.0
    %715 = vmatprep.subr.mxu0 0.0
    %716 = vmatpush1.msra.mxu0 0.0
    %717 = vmatprep.subr.mxu0 0.0
    %718 = vmatpush1.msra.mxu0 0.0
    %719 = vmatprep.subr.mxu0 0.0
    %720 = vmatpush1.msra.mxu0 0.0
    %721 = vmatprep.subr.mxu0 0.0
    %722 = vmatpush1.msra.mxu0 0.0
    %723 = vmatprep.mubr.f32.mxu0 0.0
    %724 = vmatmul.mubr.f32.gmra.mrb[0].mxu0 %v610
    %v725 = vpop.f32.mrb[0].mxu0
    %v726 = vadd.f32 %v391, %v725
    %v727 = vpop.f32.mrb[0].mxu0
    %v728 = vadd.f32 %v395, %v727
    %729 = vdwg.mxu0
    %730 = vmatprep.subr.mxu0 0.0
    %731 = vmatpush1.msra.mxu0 %v613
    %732 = vmatprep.subr.mxu0 0.0
    %733 = vmatpush1.msra.mxu0 %v616
    %734 = vmatprep.subr.mxu0 0.0
    %735 = vmatpush1.msra.mxu0 %v619
    %736 = vmatprep.subr.mxu0 0.0
    %737 = vmatpush1.msra.mxu0 %v622
    %738 = vmatprep.subr.mxu0 0.0
    %739 = vmatpush1.msra.mxu0 %v625
    %740 = vmatprep.subr.mxu0 0.0
    %741 = vmatpush1.msra.mxu0 %v628
    %742 = vmatprep.subr.mxu0 0.0
    %743 = vmatpush1.msra.mxu0 %v631
    %744 = vmatprep.subr.mxu0 0.0
    %745 = vmatpush1.msra.mxu0 %v634
    %746 = vmatprep.subr.mxu0 0.0
    %747 = vmatpush1.msra.mxu0 %v637
    %748 = vmatprep.subr.mxu0 0.0
    %749 = vmatpush1.msra.mxu0 %v640
    %750 = vmatprep.subr.mxu0 0.0
    %751 = vmatpush1.msra.mxu0 %v643
    %752 = vmatprep.subr.mxu0 0.0
    %753 = vmatpush1.msra.mxu0 %v646
    %754 = vmatprep.subr.mxu0 0.0
    %755 = vmatpush1.msra.mxu0 %v649
    %756 = vmatprep.subr.mxu0 0.0
    %757 = vmatpush1.msra.mxu0 %v652
    %758 = vmatprep.subr.mxu0 0.0
    %759 = vmatpush1.msra.mxu0 %v655
    %760 = vmatprep.subr.mxu0 0.0
    %761 = vmatpush1.msra.mxu0 %v658
    %762 = vmatprep.subr.mxu0 0.0
    %763 = vmatpush1.msra.mxu0 0.0
    %764 = vmatprep.subr.mxu0 0.0
    %765 = vmatpush1.msra.mxu0 0.0
    %766 = vmatprep.subr.mxu0 0.0
    %767 = vmatpush1.msra.mxu0 0.0
    %768 = vmatprep.subr.mxu0 0.0
    %769 = vmatpush1.msra.mxu0 0.0
    %770 = vmatprep.subr.mxu0 0.0
    %771 = vmatpush1.msra.mxu0 0.0
    %772 = vmatprep.subr.mxu0 0.0
    %773 = vmatpush1.msra.mxu0 0.0
    %774 = vmatprep.subr.mxu0 0.0
    %775 = vmatpush1.msra.mxu0 0.0
    %776 = vmatprep.subr.mxu0 0.0
    %777 = vmatpush1.msra.mxu0 0.0
    %778 = vmatprep.subr.mxu0 0.0
    %779 = vmatpush1.msra.mxu0 0.0
    %780 = vmatprep.subr.mxu0 0.0
    %781 = vmatpush1.msra.mxu0 0.0
    %782 = vmatprep.subr.mxu0 0.0
    %783 = vmatpush1.msra.mxu0 0.0
    %784 = vmatprep.subr.mxu0 0.0
    %785 = vmatpush1.msra.mxu0 0.0
    %786 = vmatprep.subr.mxu0 0.0
    %787 = vmatpush1.msra.mxu0 0.0
    %788 = vmatprep.subr.mxu0 0.0
    %789 = vmatpush1.msra.mxu0 0.0
    %790 = vmatprep.subr.mxu0 0.0
    %791 = vmatpush1.msra.mxu0 0.0
    %792 = vmatprep.subr.mxu0 0.0
    %793 = vmatpush1.msra.mxu0 0.0
    %794 = vmatprep.mubr.f32.mxu0 0.0
    %795 = vmatmul.mubr.f32.gmra.mrb[0].mxu0 %v610
    %v796 = vpop.f32.mrb[0].mxu0
    %v797 = vadd.f32 %v399, %v796
    %v798 = vpop.f32.mrb[0].mxu0
    %799 = vdwg.mxu0
    %s800 = scalar_lea.vmem [#allocation6], 384
    %v801 = vld [vmem:[%s800] sm:$0xff]
    %v802 = vld [vmem:[%s800 + $0x8] sm:$0xff]
    %v803 = vld [vmem:[%s800 + $0x10] sm:$0xff]
    %v804 = vld [vmem:[%s800 + $0x18] sm:$0xff]
    %v805 = vld [vmem:[%s800 + $0x20] sm:$0xff]
    %v806 = vld [vmem:[%s800 + $0x28] sm:$0xff]
    %v807 = vld [vmem:[%s800 + $0x30] sm:$0xff]
    %v808 = vld [vmem:[%s800 + $0x38] sm:$0xff]
    %v809 = vld [vmem:[%s800 + $0x40] sm:$0xff]
    %v810 = vld [vmem:[%s800 + $0x48] sm:$0xff]
    %v811 = vld [vmem:[%s800 + $0x50] sm:$0xff]
    %v812 = vld [vmem:[%s800 + $0x58] sm:$0xff]
    %v813 = vld [vmem:[%s800 + $0x60] sm:$0xff]
    %v814 = vld [vmem:[%s800 + $0x68] sm:$0xff]
    %v815 = vld [vmem:[%s800 + $0x70] sm:$0xff]
    %v816 = vld [vmem:[%s800 + $0x78] sm:$0xff]
    %v817 = vld [vmem:[%s800 + $0x80] sm:$0xff]
    %v818 = vld [vmem:[%s800 + $0x88] sm:$0xff]
    %v819 = vld [vmem:[%s800 + $0x90] sm:$0xff]
    %v820 = vld [vmem:[%s800 + $0x98] sm:$0xff]
    %v821 = vld [vmem:[%s800 + $0xa0] sm:$0xff]
    %v822 = vld [vmem:[%s800 + $0xa8] sm:$0xff]
    %v823 = vld [vmem:[%s800 + $0xb0] sm:$0xff]
    %v824 = vld [vmem:[%s800 + $0xb8] sm:$0xff]
    %v825 = vld [vmem:[%s800 + $0xc0] sm:$0xff]
    %v826 = vld [vmem:[%s800 + $0xc8] sm:$0xff]
    %v827 = vld [vmem:[%s800 + $0xd0] sm:$0xff]
    %v828 = vld [vmem:[%s800 + $0xd8] sm:$0xff]
    %v829 = vld [vmem:[%s800 + $0xe0] sm:$0xff]
    %v830 = vld [vmem:[%s800 + $0xe8] sm:$0xff]
    %v831 = vld [vmem:[%s800 + $0xf0] sm:$0xff]
    %v832 = vld [vmem:[%s800 + $0xf8] sm:$0xff]
    %v833 = vld [vmem:[%s800 + $0x100] sm:$0xff]
    %v834 = vld [vmem:[%s800 + $0x108] sm:$0xff]
    %v835 = vld [vmem:[%s800 + $0x110] sm:$0xff]
    %v836 = vld [vmem:[%s800 + $0x118] sm:$0xff]
    %v837 = vld [vmem:[%s800 + $0x120] sm:$0xff]
    %v838 = vld [vmem:[%s800 + $0x128] sm:$0xff]
    %v839 = vld [vmem:[%s800 + $0x130] sm:$0xff]
    %v840 = vld [vmem:[%s800 + $0x138] sm:$0xff]
    %v841 = vld [vmem:[%s800 + $0x140] sm:$0xff]
    %v842 = vld [vmem:[%s800 + $0x148] sm:$0xff]
    %v843 = vld [vmem:[%s800 + $0x150] sm:$0xff]
    %v844 = vld [vmem:[%s800 + $0x158] sm:$0xff]
    %v845 = vld [vmem:[%s800 + $0x160] sm:$0xff]
    %v846 = vld [vmem:[%s800 + $0x168] sm:$0xff]
    %v847 = vld [vmem:[%s800 + $0x170] sm:$0xff]
    %v848 = vld [vmem:[%s800 + $0x178] sm:$0xff]
    %849 = vmatprep.subr.mxu0 %v802
    %850 = vmatpush1.msra.mxu0 %v801
    %851 = vmatprep.subr.mxu0 %v805
    %852 = vmatpush1.msra.mxu0 %v804
    %853 = vmatprep.subr.mxu0 %v808
    %854 = vmatpush1.msra.mxu0 %v807
    %855 = vmatprep.subr.mxu0 %v811
    %856 = vmatpush1.msra.mxu0 %v810
    %857 = vmatprep.subr.mxu0 %v814
    %858 = vmatpush1.msra.mxu0 %v813
    %859 = vmatprep.subr.mxu0 %v817
    %860 = vmatpush1.msra.mxu0 %v816
    %861 = vmatprep.subr.mxu0 %v820
    %862 = vmatpush1.msra.mxu0 %v819
    %863 = vmatprep.subr.mxu0 %v823
    %864 = vmatpush1.msra.mxu0 %v822
    %865 = vmatprep.subr.mxu0 %v826
    %866 = vmatpush1.msra.mxu0 %v825
    %867 = vmatprep.subr.mxu0 %v829
    %868 = vmatpush1.msra.mxu0 %v828
    %869 = vmatprep.subr.mxu0 %v832
    %870 = vmatpush1.msra.mxu0 %v831
    %871 = vmatprep.subr.mxu0 %v835
    %872 = vmatpush1.msra.mxu0 %v834
    %873 = vmatprep.subr.mxu0 %v838
    %874 = vmatpush1.msra.mxu0 %v837
    %875 = vmatprep.subr.mxu0 %v841
    %876 = vmatpush1.msra.mxu0 %v840
    %877 = vmatprep.subr.mxu0 %v844
    %878 = vmatpush1.msra.mxu0 %v843
    %879 = vmatprep.subr.mxu0 %v847
    %880 = vmatpush1.msra.mxu0 %v846
    %881 = vmatprep.subr.mxu0 0.0
    %882 = vmatpush1.msra.mxu0 0.0
    %883 = vmatprep.subr.mxu0 0.0
    %884 = vmatpush1.msra.mxu0 0.0
    %885 = vmatprep.subr.mxu0 0.0
    %886 = vmatpush1.msra.mxu0 0.0
    %887 = vmatprep.subr.mxu0 0.0
    %888 = vmatpush1.msra.mxu0 0.0
    %889 = vmatprep.subr.mxu0 0.0
    %890 = vmatpush1.msra.mxu0 0.0
    %891 = vmatprep.subr.mxu0 0.0
    %892 = vmatpush1.msra.mxu0 0.0
    %893 = vmatprep.subr.mxu0 0.0
    %894 = vmatpush1.msra.mxu0 0.0
    %895 = vmatprep.subr.mxu0 0.0
    %896 = vmatpush1.msra.mxu0 0.0
    %897 = vmatprep.subr.mxu0 0.0
    %898 = vmatpush1.msra.mxu0 0.0
    %899 = vmatprep.subr.mxu0 0.0
    %900 = vmatpush1.msra.mxu0 0.0
    %901 = vmatprep.subr.mxu0 0.0
    %902 = vmatpush1.msra.mxu0 0.0
    %903 = vmatprep.subr.mxu0 0.0
    %904 = vmatpush1.msra.mxu0 0.0
    %905 = vmatprep.subr.mxu0 0.0
    %906 = vmatpush1.msra.mxu0 0.0
    %907 = vmatprep.subr.mxu0 0.0
    %908 = vmatpush1.msra.mxu0 0.0
    %909 = vmatprep.subr.mxu0 0.0
    %910 = vmatpush1.msra.mxu0 0.0
    %911 = vmatprep.subr.mxu0 0.0
    %912 = vmatpush1.msra.mxu0 0.0
    %913 = vmatprep.mubr.f32.mxu0 0.0
    %914 = vmatmul.mubr.f32.gmra.mrb[0].mxu0 0.0
    %v915 = vpop.f32.mrb[0].mxu0
    %v916 = vadd.f32 %v373, %v915
    %v917 = vpop.f32.mrb[0].mxu0
    %v918 = vadd.f32 %v377, %v917
    %919 = vdwg.mxu0
    %920 = vmatprep.subr.mxu0 0.0
    %921 = vmatpush1.msra.mxu0 %v803
    %922 = vmatprep.subr.mxu0 0.0
    %923 = vmatpush1.msra.mxu0 %v806
    %924 = vmatprep.subr.mxu0 0.0
    %925 = vmatpush1.msra.mxu0 %v809
    %926 = vmatprep.subr.mxu0 0.0
    %927 = vmatpush1.msra.mxu0 %v812
    %928 = vmatprep.subr.mxu0 0.0
    %929 = vmatpush1.msra.mxu0 %v815
    %930 = vmatprep.subr.mxu0 0.0
    %931 = vmatpush1.msra.mxu0 %v818
    %932 = vmatprep.subr.mxu0 0.0
    %933 = vmatpush1.msra.mxu0 %v821
    %934 = vmatprep.subr.mxu0 0.0
    %935 = vmatpush1.msra.mxu0 %v824
    %936 = vmatprep.subr.mxu0 0.0
    %937 = vmatpush1.msra.mxu0 %v827
    %938 = vmatprep.subr.mxu0 0.0
    %939 = vmatpush1.msra.mxu0 %v830
    %940 = vmatprep.subr.mxu0 0.0
    %941 = vmatpush1.msra.mxu0 %v833
    %942 = vmatprep.subr.mxu0 0.0
    %943 = vmatpush1.msra.mxu0 %v836
    %944 = vmatprep.subr.mxu0 0.0
    %945 = vmatpush1.msra.mxu0 %v839
    %946 = vmatprep.subr.mxu0 0.0
    %947 = vmatpush1.msra.mxu0 %v842
    %948 = vmatprep.subr.mxu0 0.0
    %949 = vmatpush1.msra.mxu0 %v845
    %950 = vmatprep.subr.mxu0 0.0
    %951 = vmatpush1.msra.mxu0 %v848
    %952 = vmatprep.subr.mxu0 0.0
    %953 = vmatpush1.msra.mxu0 0.0
    %954 = vmatprep.subr.mxu0 0.0
    %955 = vmatpush1.msra.mxu0 0.0
    %956 = vmatprep.subr.mxu0 0.0
    %957 = vmatpush1.msra.mxu0 0.0
    %958 = vmatprep.subr.mxu0 0.0
    %959 = vmatpush1.msra.mxu0 0.0
    %960 = vmatprep.subr.mxu0 0.0
    %961 = vmatpush1.msra.mxu0 0.0
    %962 = vmatprep.subr.mxu0 0.0
    %963 = vmatpush1.msra.mxu0 0.0
    %964 = vmatprep.subr.mxu0 0.0
    %965 = vmatpush1.msra.mxu0 0.0
    %966 = vmatprep.subr.mxu0 0.0
    %967 = vmatpush1.msra.mxu0 0.0
    %968 = vmatprep.subr.mxu0 0.0
    %969 = vmatpush1.msra.mxu0 0.0
    %970 = vmatprep.subr.mxu0 0.0
    %971 = vmatpush1.msra.mxu0 0.0
    %972 = vmatprep.subr.mxu0 0.0
    %973 = vmatpush1.msra.mxu0 0.0
    %974 = vmatprep.subr.mxu0 0.0
    %975 = vmatpush1.msra.mxu0 0.0
    %976 = vmatprep.subr.mxu0 0.0
    %977 = vmatpush1.msra.mxu0 0.0
    %978 = vmatprep.subr.mxu0 0.0
    %979 = vmatpush1.msra.mxu0 0.0
    %980 = vmatprep.subr.mxu0 0.0
    %981 = vmatpush1.msra.mxu0 0.0
    %982 = vmatprep.subr.mxu0 0.0
    %983 = vmatpush1.msra.mxu0 0.0
    %984 = vmatprep.mubr.f32.mxu0 0.0
    %985 = vmatmul.mubr.f32.gmra.mrb[0].mxu0 0.0
    %v986 = vpop.f32.mrb[0].mxu0
    %v987 = vadd.f32 %v381, %v986
    %v988 = vpop.f32.mrb[0].mxu0
    %989 = vdwg.mxu0
    %v990 = vadd.f32 %v726, %v916
    %v991 = vadd.f32 %v728, %v918
    %v992 = vmul.f32 %v990, 0.5
    %v993 = vmul.f32 %v991, 0.5
    %v994 = vtanh.pop %v992
    %v995 = vtanh.pop %v993
    %v996 = vmul.f32 %v994, 0.5
    %v997 = vmul.f32 %v995, 0.5
    %v998 = vadd.f32 %v996, 0.5
    %v999 = vadd.f32 %v997, 0.5
    %v1000 = vmul.f32 %v998, %v987
    %v1001 = vadd.f32 %v797, %v1000
    %v1002 = vtanh.pop %v1001
    %v1003 = vsub.f32 0.0, %v1002
    %v1004 = vmul.f32 %v999, %v1003
    %v1005 = vadd.f32 %v1002, %v1004
    %1006 = vst [vmem:[#allocation8] sm:$0xff] %v1005
    %v1007 = vld [vmem:[#allocation2 + $0x18] sm:$0xff]
    %v1008 = vld [vmem:[#allocation2 + $0x20] sm:$0xff]
    %v1009 = vld [vmem:[#allocation2 + $0x28] sm:$0xff]
    %v1010 = vld [vmem:[#allocation6] sm:$0xff]
    %v1011 = vld [vmem:[#allocation6 + $0x8] sm:$0xff]
    %v1012 = vld [vmem:[#allocation6 + $0x10] sm:$0xff]
    %v1013 = vld [vmem:[#allocation6 + $0x18] sm:$0xff]
    %v1014 = vld [vmem:[#allocation6 + $0x20] sm:$0xff]
    %v1015 = vld [vmem:[#allocation6 + $0x28] sm:$0xff]
    %v1016 = vld [vmem:[#allocation6 + $0x30] sm:$0xff]
    %v1017 = vld [vmem:[#allocation6 + $0x38] sm:$0xff]
    %v1018 = vld [vmem:[#allocation6 + $0x40] sm:$0xff]
    %v1019 = vld [vmem:[#allocation6 + $0x48] sm:$0xff]
    %v1020 = vld [vmem:[#allocation6 + $0x50] sm:$0xff]
    %v1021 = vld [vmem:[#allocation6 + $0x58] sm:$0xff]
    %v1022 = vld [vmem:[#allocation6 + $0x60] sm:$0xff]
    %v1023 = vld [vmem:[#allocation6 + $0x68] sm:$0xff]
    %v1024 = vld [vmem:[#allocation6 + $0x70] sm:$0xff]
    %v1025 = vld [vmem:[#allocation6 + $0x78] sm:$0xff]
    %v1026 = vld [vmem:[#allocation6 + $0x80] sm:$0xff]
    %v1027 = vld [vmem:[#allocation6 + $0x88] sm:$0xff]
    %v1028 = vld [vmem:[#allocation6 + $0x90] sm:$0xff]
    %v1029 = vld [vmem:[#allocation6 + $0x98] sm:$0xff]
    %v1030 = vld [vmem:[#allocation6 + $0xa0] sm:$0xff]
    %v1031 = vld [vmem:[#allocation6 + $0xa8] sm:$0xff]
    %v1032 = vld [vmem:[#allocation6 + $0xb0] sm:$0xff]
    %v1033 = vld [vmem:[#allocation6 + $0xb8] sm:$0xff]
    %v1034 = vld [vmem:[#allocation6 + $0xc0] sm:$0xff]
    %v1035 = vld [vmem:[#allocation6 + $0xc8] sm:$0xff]
    %v1036 = vld [vmem:[#allocation6 + $0xd0] sm:$0xff]
    %v1037 = vld [vmem:[#allocation6 + $0xd8] sm:$0xff]
    %v1038 = vld [vmem:[#allocation6 + $0xe0] sm:$0xff]
    %v1039 = vld [vmem:[#allocation6 + $0xe8] sm:$0xff]
    %v1040 = vld [vmem:[#allocation6 + $0xf0] sm:$0xff]
    %v1041 = vld [vmem:[#allocation6 + $0xf8] sm:$0xff]
    %v1042 = vld [vmem:[#allocation6 + $0x100] sm:$0xff]
    %v1043 = vld [vmem:[#allocation6 + $0x108] sm:$0xff]
    %v1044 = vld [vmem:[#allocation6 + $0x110] sm:$0xff]
    %v1045 = vld [vmem:[#allocation6 + $0x118] sm:$0xff]
    %v1046 = vld [vmem:[#allocation6 + $0x120] sm:$0xff]
    %v1047 = vld [vmem:[#allocation6 + $0x128] sm:$0xff]
    %v1048 = vld [vmem:[#allocation6 + $0x130] sm:$0xff]
    %v1049 = vld [vmem:[#allocation6 + $0x138] sm:$0xff]
    %v1050 = vld [vmem:[#allocation6 + $0x140] sm:$0xff]
    %v1051 = vld [vmem:[#allocation6 + $0x148] sm:$0xff]
    %v1052 = vld [vmem:[#allocation6 + $0x150] sm:$0xff]
    %v1053 = vld [vmem:[#allocation6 + $0x158] sm:$0xff]
    %v1054 = vld [vmem:[#allocation6 + $0x160] sm:$0xff]
    %v1055 = vld [vmem:[#allocation6 + $0x168] sm:$0xff]
    %v1056 = vld [vmem:[#allocation6 + $0x170] sm:$0xff]
    %v1057 = vld [vmem:[#allocation6 + $0x178] sm:$0xff]
    %1058 = vmatprep.subr.mxu0 %v1011
    %1059 = vmatpush1.msra.mxu0 %v1010
    %1060 = vmatprep.subr.mxu0 %v1014
    %1061 = vmatpush1.msra.mxu0 %v1013
    %1062 = vmatprep.subr.mxu0 %v1017
    %1063 = vmatpush1.msra.mxu0 %v1016
    %1064 = vmatprep.subr.mxu0 %v1020
    %1065 = vmatpush1.msra.mxu0 %v1019
    %1066 = vmatprep.subr.mxu0 %v1023
    %1067 = vmatpush1.msra.mxu0 %v1022
    %1068 = vmatprep.subr.mxu0 %v1026
    %1069 = vmatpush1.msra.mxu0 %v1025
    %1070 = vmatprep.subr.mxu0 %v1029
    %1071 = vmatpush1.msra.mxu0 %v1028
    %1072 = vmatprep.subr.mxu0 %v1032
    %1073 = vmatpush1.msra.mxu0 %v1031
    %1074 = vmatprep.subr.mxu0 %v1035
    %1075 = vmatpush1.msra.mxu0 %v1034
    %1076 = vmatprep.subr.mxu0 %v1038
    %1077 = vmatpush1.msra.mxu0 %v1037
    %1078 = vmatprep.subr.mxu0 %v1041
    %1079 = vmatpush1.msra.mxu0 %v1040
    %1080 = vmatprep.subr.mxu0 %v1044
    %1081 = vmatpush1.msra.mxu0 %v1043
    %1082 = vmatprep.subr.mxu0 %v1047
    %1083 = vmatpush1.msra.mxu0 %v1046
    %1084 = vmatprep.subr.mxu0 %v1050
    %1085 = vmatpush1.msra.mxu0 %v1049
    %1086 = vmatprep.subr.mxu0 %v1053
    %1087 = vmatpush1.msra.mxu0 %v1052
    %1088 = vmatprep.subr.mxu0 %v1056
    %1089 = vmatpush1.msra.mxu0 %v1055
    %1090 = vmatprep.subr.mxu0 0.0
    %1091 = vmatpush1.msra.mxu0 0.0
    %1092 = vmatprep.subr.mxu0 0.0
    %1093 = vmatpush1.msra.mxu0 0.0
    %1094 = vmatprep.subr.mxu0 0.0
    %1095 = vmatpush1.msra.mxu0 0.0
    %1096 = vmatprep.subr.mxu0 0.0
    %1097 = vmatpush1.msra.mxu0 0.0
    %1098 = vmatprep.subr.mxu0 0.0
    %1099 = vmatpush1.msra.mxu0 0.0
    %1100 = vmatprep.subr.mxu0 0.0
    %1101 = vmatpush1.msra.mxu0 0.0
    %1102 = vmatprep.subr.mxu0 0.0
    %1103 = vmatpush1.msra.mxu0 0.0
    %1104 = vmatprep.subr.mxu0 0.0
    %1105 = vmatpush1.msra.mxu0 0.0
    %1106 = vmatprep.subr.mxu0 0.0
    %1107 = vmatpush1.msra.mxu0 0.0
    %1108 = vmatprep.subr.mxu0 0.0
    %1109 = vmatpush1.msra.mxu0 0.0
    %1110 = vmatprep.subr.mxu0 0.0
    %1111 = vmatpush1.msra.mxu0 0.0
    %1112 = vmatprep.subr.mxu0 0.0
    %1113 = vmatpush1.msra.mxu0 0.0
    %1114 = vmatprep.subr.mxu0 0.0
    %1115 = vmatpush1.msra.mxu0 0.0
    %1116 = vmatprep.subr.mxu0 0.0
    %1117 = vmatpush1.msra.mxu0 0.0
    %1118 = vmatprep.subr.mxu0 0.0
    %1119 = vmatpush1.msra.mxu0 0.0
    %1120 = vmatprep.subr.mxu0 0.0
    %1121 = vmatpush1.msra.mxu0 0.0
    %1122 = vmatprep.mubr.f32.mxu0 0.0
    %1123 = vmatmul.mubr.f32.gmra.mrb[0].mxu0 %v610
    %v1124 = vpop.f32.mrb[0].mxu0
    %v1125 = vadd.f32 %v355, %v1124
    %v1126 = vpop.f32.mrb[0].mxu0
    %v1127 = vadd.f32 %v359, %v1126
    %1128 = vdwg.mxu0
    %1129 = vmatprep.subr.mxu0 0.0
    %1130 = vmatpush1.msra.mxu0 %v1012
    %1131 = vmatprep.subr.mxu0 0.0
    %1132 = vmatpush1.msra.mxu0 %v1015
    %1133 = vmatprep.subr.mxu0 0.0
    %1134 = vmatpush1.msra.mxu0 %v1018
    %1135 = vmatprep.subr.mxu0 0.0
    %1136 = vmatpush1.msra.mxu0 %v1021
    %1137 = vmatprep.subr.mxu0 0.0
    %1138 = vmatpush1.msra.mxu0 %v1024
    %1139 = vmatprep.subr.mxu0 0.0
    %1140 = vmatpush1.msra.mxu0 %v1027
    %1141 = vmatprep.subr.mxu0 0.0
    %1142 = vmatpush1.msra.mxu0 %v1030
    %1143 = vmatprep.subr.mxu0 0.0
    %1144 = vmatpush1.msra.mxu0 %v1033
    %1145 = vmatprep.subr.mxu0 0.0
    %1146 = vmatpush1.msra.mxu0 %v1036
    %1147 = vmatprep.subr.mxu0 0.0
    %1148 = vmatpush1.msra.mxu0 %v1039
    %1149 = vmatprep.subr.mxu0 0.0
    %1150 = vmatpush1.msra.mxu0 %v1042
    %1151 = vmatprep.subr.mxu0 0.0
    %1152 = vmatpush1.msra.mxu0 %v1045
    %1153 = vmatprep.subr.mxu0 0.0
    %1154 = vmatpush1.msra.mxu0 %v1048
    %1155 = vmatprep.subr.mxu0 0.0
    %1156 = vmatpush1.msra.mxu0 %v1051
    %1157 = vmatprep.subr.mxu0 0.0
    %1158 = vmatpush1.msra.mxu0 %v1054
    %1159 = vmatprep.subr.mxu0 0.0
    %1160 = vmatpush1.msra.mxu0 %v1057
    %1161 = vmatprep.subr.mxu0 0.0
    %1162 = vmatpush1.msra.mxu0 0.0
    %1163 = vmatprep.subr.mxu0 0.0
    %1164 = vmatpush1.msra.mxu0 0.0
    %1165 = vmatprep.subr.mxu0 0.0
    %1166 = vmatpush1.msra.mxu0 0.0
    %1167 = vmatprep.subr.mxu0 0.0
    %1168 = vmatpush1.msra.mxu0 0.0
    %1169 = vmatprep.subr.mxu0 0.0
    %1170 = vmatpush1.msra.mxu0 0.0
    %1171 = vmatprep.subr.mxu0 0.0
    %1172 = vmatpush1.msra.mxu0 0.0
    %1173 = vmatprep.subr.mxu0 0.0
    %1174 = vmatpush1.msra.mxu0 0.0
    %1175 = vmatprep.subr.mxu0 0.0
    %1176 = vmatpush1.msra.mxu0 0.0
    %1177 = vmatprep.subr.mxu0 0.0
    %1178 = vmatpush1.msra.mxu0 0.0
    %1179 = vmatprep.subr.mxu0 0.0
    %1180 = vmatpush1.msra.mxu0 0.0
    %1181 = vmatprep.subr.mxu0 0.0
    %1182 = vmatpush1.msra.mxu0 0.0
    %1183 = vmatprep.subr.mxu0 0.0
    %1184 = vmatpush1.msra.mxu0 0.0
    %1185 = vmatprep.subr.mxu0 0.0
    %1186 = vmatpush1.msra.mxu0 0.0
    %1187 = vmatprep.subr.mxu0 0.0
    %1188 = vmatpush1.msra.mxu0 0.0
    %1189 = vmatprep.subr.mxu0 0.0
    %1190 = vmatpush1.msra.mxu0 0.0
    %1191 = vmatprep.subr.mxu0 0.0
    %1192 = vmatpush1.msra.mxu0 0.0
    %1193 = vmatprep.mubr.f32.mxu0 0.0
    %1194 = vmatmul.mubr.f32.gmra.mrb[0].mxu0 %v610
    %v1195 = vpop.f32.mrb[0].mxu0
    %v1196 = vadd.f32 %v363, %v1195
    %v1197 = vpop.f32.mrb[0].mxu0
    %1198 = vdwg.mxu0
    %v1199 = vadd.f32 %v1007, %v1125
    %v1200 = vadd.f32 %v1008, %v1127
    %v1201 = vmul.f32 %v1199, 0.5
    %v1202 = vmul.f32 %v1200, 0.5
    %v1203 = vtanh.pop %v1201
    %v1204 = vtanh.pop %v1202
    %v1205 = vmul.f32 %v1203, 0.5
    %v1206 = vmul.f32 %v1204, 0.5
    %v1207 = vadd.f32 %v1205, 0.5
    %v1208 = vadd.f32 %v1206, 0.5
    %v1209 = vmul.f32 %v1207, %v1196
    %v1210 = vadd.f32 %v1009, %v1209
    %v1211 = vtanh.pop %v1210
    %v1212 = vsub.f32 %v610, %v1211
    %v1213 = vmul.f32 %v1208, %v1212
    %v1214 = vadd.f32 %v1211, %v1213
    %v1215 = vld [vmem:[#allocation3] sm:$0xff]
    %v1216 = vld [vmem:[#allocation3 + $0x8] sm:$0xff]
    %v1217 = vld [vmem:[#allocation3 + $0x10] sm:$0xff]
    %v1218 = vld [vmem:[#allocation3 + $0x18] sm:$0xff]
    %v1219 = vld [vmem:[#allocation3 + $0x20] sm:$0xff]
    %v1220 = vld [vmem:[#allocation3 + $0x28] sm:$0xff]
    %v1221 = vld [vmem:[#allocation3 + $0x30] sm:$0xff]
    %v1222 = vld [vmem:[#allocation3 + $0x38] sm:$0xff]
    %v1223 = vld [vmem:[#allocation3 + $0x40] sm:$0xff]
    %v1224 = vld [vmem:[#allocation3 + $0x48] sm:$0xff]
    %v1225 = vld [vmem:[#allocation3 + $0x50] sm:$0xff]
    %v1226 = vld [vmem:[#allocation3 + $0x58] sm:$0xff]
    %v1227 = vld [vmem:[#allocation3 + $0x60] sm:$0xff]
    %v1228 = vld [vmem:[#allocation3 + $0x68] sm:$0xff]
    %v1229 = vld [vmem:[#allocation3 + $0x70] sm:$0xff]
    %v1230 = vld [vmem:[#allocation3 + $0x78] sm:$0xff]
    %v1231 = vld [vmem:[#allocation3 + $0x80] sm:$0xff]
    %v1232 = vld [vmem:[#allocation3 + $0x88] sm:$0xff]
    %v1233 = vld [vmem:[#allocation3 + $0x90] sm:$0xff]
    %v1234 = vld [vmem:[#allocation3 + $0x98] sm:$0xff]
    %v1235 = vld [vmem:[#allocation3 + $0xa0] sm:$0xff]
    %v1236 = vld [vmem:[#allocation3 + $0xa8] sm:$0xff]
    %v1237 = vld [vmem:[#allocation3 + $0xb0] sm:$0xff]
    %v1238 = vld [vmem:[#allocation3 + $0xb8] sm:$0xff]
    %v1239 = vld [vmem:[#allocation3 + $0xc0] sm:$0xff]
    %v1240 = vld [vmem:[#allocation3 + $0xc8] sm:$0xff]
    %v1241 = vld [vmem:[#allocation3 + $0xd0] sm:$0xff]
    %v1242 = vld [vmem:[#allocation3 + $0xd8] sm:$0xff]
    %v1243 = vld [vmem:[#allocation3 + $0xe0] sm:$0xff]
    %v1244 = vld [vmem:[#allocation3 + $0xe8] sm:$0xff]
    %v1245 = vld [vmem:[#allocation3 + $0xf0] sm:$0xff]
    %v1246 = vld [vmem:[#allocation3 + $0xf8] sm:$0xff]
    %v1247 = vld [vmem:[#allocation3 + $0x100] sm:$0xff]
    %v1248 = vld [vmem:[#allocation3 + $0x108] sm:$0xff]
    %v1249 = vld [vmem:[#allocation3 + $0x110] sm:$0xff]
    %v1250 = vld [vmem:[#allocation3 + $0x118] sm:$0xff]
    %v1251 = vld [vmem:[#allocation3 + $0x120] sm:$0xff]
    %v1252 = vld [vmem:[#allocation3 + $0x128] sm:$0xff]
    %v1253 = vld [vmem:[#allocation3 + $0x130] sm:$0xff]
    %v1254 = vld [vmem:[#allocation3 + $0x138] sm:$0xff]
    %v1255 = vld [vmem:[#allocation3 + $0x140] sm:$0xff]
    %v1256 = vld [vmem:[#allocation3 + $0x148] sm:$0xff]
    %v1257 = vld [vmem:[#allocation3 + $0x150] sm:$0xff]
    %v1258 = vld [vmem:[#allocation3 + $0x158] sm:$0xff]
    %v1259 = vld [vmem:[#allocation3 + $0x160] sm:$0xff]
    %v1260 = vld [vmem:[#allocation3 + $0x168] sm:$0xff]
    %v1261 = vld [vmem:[#allocation3 + $0x170] sm:$0xff]
    %v1262 = vld [vmem:[#allocation3 + $0x178] sm:$0xff]
    %1263 = vmatprep.subr.mxu0 %v1216
    %1264 = vmatpush1.msra.mxu0 %v1215
    %1265 = vmatprep.subr.mxu0 %v1219
    %1266 = vmatpush1.msra.mxu0 %v1218
    %1267 = vmatprep.subr.mxu0 %v1222
    %1268 = vmatpush1.msra.mxu0 %v1221
    %1269 = vmatprep.subr.mxu0 %v1225
    %1270 = vmatpush1.msra.mxu0 %v1224
    %1271 = vmatprep.subr.mxu0 %v1228
    %1272 = vmatpush1.msra.mxu0 %v1227
    %1273 = vmatprep.subr.mxu0 %v1231
    %1274 = vmatpush1.msra.mxu0 %v1230
    %1275 = vmatprep.subr.mxu0 %v1234
    %1276 = vmatpush1.msra.mxu0 %v1233
    %1277 = vmatprep.subr.mxu0 %v1237
    %1278 = vmatpush1.msra.mxu0 %v1236
    %1279 = vmatprep.subr.mxu0 %v1240
    %1280 = vmatpush1.msra.mxu0 %v1239
    %1281 = vmatprep.subr.mxu0 %v1243
    %1282 = vmatpush1.msra.mxu0 %v1242
    %1283 = vmatprep.subr.mxu0 %v1246
    %1284 = vmatpush1.msra.mxu0 %v1245
    %1285 = vmatprep.subr.mxu0 %v1249
    %1286 = vmatpush1.msra.mxu0 %v1248
    %1287 = vmatprep.subr.mxu0 %v1252
    %1288 = vmatpush1.msra.mxu0 %v1251
    %1289 = vmatprep.subr.mxu0 %v1255
    %1290 = vmatpush1.msra.mxu0 %v1254
    %1291 = vmatprep.subr.mxu0 %v1258
    %1292 = vmatpush1.msra.mxu0 %v1257
    %1293 = vmatprep.subr.mxu0 %v1261
    %1294 = vmatpush1.msra.mxu0 %v1260
    %1295 = vmatprep.subr.mxu0 0.0
    %1296 = vmatpush1.msra.mxu0 0.0
    %1297 = vmatprep.subr.mxu0 0.0
    %1298 = vmatpush1.msra.mxu0 0.0
    %1299 = vmatprep.subr.mxu0 0.0
    %1300 = vmatpush1.msra.mxu0 0.0
    %1301 = vmatprep.subr.mxu0 0.0
    %1302 = vmatpush1.msra.mxu0 0.0
    %1303 = vmatprep.subr.mxu0 0.0
    %1304 = vmatpush1.msra.mxu0 0.0
    %1305 = vmatprep.subr.mxu0 0.0
    %1306 = vmatpush1.msra.mxu0 0.0
    %1307 = vmatprep.subr.mxu0 0.0
    %1308 = vmatpush1.msra.mxu0 0.0
    %1309 = vmatprep.subr.mxu0 0.0
    %1310 = vmatpush1.msra.mxu0 0.0
    %1311 = vmatprep.subr.mxu0 0.0
    %1312 = vmatpush1.msra.mxu0 0.0
    %1313 = vmatprep.subr.mxu0 0.0
    %1314 = vmatpush1.msra.mxu0 0.0
    %1315 = vmatprep.subr.mxu0 0.0
    %1316 = vmatpush1.msra.mxu0 0.0
    %1317 = vmatprep.subr.mxu0 0.0
    %1318 = vmatpush1.msra.mxu0 0.0
    %1319 = vmatprep.subr.mxu0 0.0
    %1320 = vmatpush1.msra.mxu0 0.0
    %1321 = vmatprep.subr.mxu0 0.0
    %1322 = vmatpush1.msra.mxu0 0.0
    %1323 = vmatprep.subr.mxu0 0.0
    %1324 = vmatpush1.msra.mxu0 0.0
    %1325 = vmatprep.subr.mxu0 0.0
    %1326 = vmatpush1.msra.mxu0 0.0
    %1327 = vmatprep.mubr.f32.mxu0 0.0
    %1328 = vmatmul.mubr.f32.gmra.mrb[0].mxu0 %v1214
    %v1329 = vpop.f32.mrb[0].mxu0
    %v1330 = vadd.f32 %v391, %v1329
    %v1331 = vpop.f32.mrb[0].mxu0
    %v1332 = vadd.f32 %v395, %v1331
    %1333 = vdwg.mxu0
    %1334 = vmatprep.subr.mxu0 0.0
    %1335 = vmatpush1.msra.mxu0 %v1217
    %1336 = vmatprep.subr.mxu0 0.0
    %1337 = vmatpush1.msra.mxu0 %v1220
    %1338 = vmatprep.subr.mxu0 0.0
    %1339 = vmatpush1.msra.mxu0 %v1223
    %1340 = vmatprep.subr.mxu0 0.0
    %1341 = vmatpush1.msra.mxu0 %v1226
    %1342 = vmatprep.subr.mxu0 0.0
    %1343 = vmatpush1.msra.mxu0 %v1229
    %1344 = vmatprep.subr.mxu0 0.0
    %1345 = vmatpush1.msra.mxu0 %v1232
    %1346 = vmatprep.subr.mxu0 0.0
    %1347 = vmatpush1.msra.mxu0 %v1235
    %1348 = vmatprep.subr.mxu0 0.0
    %1349 = vmatpush1.msra.mxu0 %v1238
    %1350 = vmatprep.subr.mxu0 0.0
    %1351 = vmatpush1.msra.mxu0 %v1241
    %1352 = vmatprep.subr.mxu0 0.0
    %1353 = vmatpush1.msra.mxu0 %v1244
    %1354 = vmatprep.subr.mxu0 0.0
    %1355 = vmatpush1.msra.mxu0 %v1247
    %1356 = vmatprep.subr.mxu0 0.0
    %1357 = vmatpush1.msra.mxu0 %v1250
    %1358 = vmatprep.subr.mxu0 0.0
    %1359 = vmatpush1.msra.mxu0 %v1253
    %1360 = vmatprep.subr.mxu0 0.0
    %1361 = vmatpush1.msra.mxu0 %v1256
    %1362 = vmatprep.subr.mxu0 0.0
    %1363 = vmatpush1.msra.mxu0 %v1259
    %1364 = vmatprep.subr.mxu0 0.0
    %1365 = vmatpush1.msra.mxu0 %v1262
    %1366 = vmatprep.subr.mxu0 0.0
    %1367 = vmatpush1.msra.mxu0 0.0
    %1368 = vmatprep.subr.mxu0 0.0
    %1369 = vmatpush1.msra.mxu0 0.0
    %1370 = vmatprep.subr.mxu0 0.0
    %1371 = vmatpush1.msra.mxu0 0.0
    %1372 = vmatprep.subr.mxu0 0.0
    %1373 = vmatpush1.msra.mxu0 0.0
    %1374 = vmatprep.subr.mxu0 0.0
    %1375 = vmatpush1.msra.mxu0 0.0
    %1376 = vmatprep.subr.mxu0 0.0
    %1377 = vmatpush1.msra.mxu0 0.0
    %1378 = vmatprep.subr.mxu0 0.0
    %1379 = vmatpush1.msra.mxu0 0.0
    %1380 = vmatprep.subr.mxu0 0.0
    %1381 = vmatpush1.msra.mxu0 0.0
    %1382 = vmatprep.subr.mxu0 0.0
    %1383 = vmatpush1.msra.mxu0 0.0
    %1384 = vmatprep.subr.mxu0 0.0
    %1385 = vmatpush1.msra.mxu0 0.0
    %1386 = vmatprep.subr.mxu0 0.0
    %1387 = vmatpush1.msra.mxu0 0.0
    %1388 = vmatprep.subr.mxu0 0.0
    %1389 = vmatpush1.msra.mxu0 0.0
    %1390 = vmatprep.subr.mxu0 0.0
    %1391 = vmatpush1.msra.mxu0 0.0
    %1392 = vmatprep.subr.mxu0 0.0
    %1393 = vmatpush1.msra.mxu0 0.0
    %1394 = vmatprep.subr.mxu0 0.0
    %1395 = vmatpush1.msra.mxu0 0.0
    %1396 = vmatprep.subr.mxu0 0.0
    %1397 = vmatpush1.msra.mxu0 0.0
    %1398 = vmatprep.mubr.f32.mxu0 0.0
    %1399 = vmatmul.mubr.f32.gmra.mrb[0].mxu0 %v1214
    %v1400 = vpop.f32.mrb[0].mxu0
    %v1401 = vadd.f32 %v399, %v1400
    %v1402 = vpop.f32.mrb[0].mxu0
    %1403 = vdwg.mxu0
    %v1404 = vld [vmem:[%s800] sm:$0xff]
    %v1405 = vld [vmem:[%s800 + $0x8] sm:$0xff]
    %v1406 = vld [vmem:[%s800 + $0x10] sm:$0xff]
    %v1407 = vld [vmem:[%s800 + $0x18] sm:$0xff]
    %v1408 = vld [vmem:[%s800 + $0x20] sm:$0xff]
    %v1409 = vld [vmem:[%s800 + $0x28] sm:$0xff]
    %v1410 = vld [vmem:[%s800 + $0x30] sm:$0xff]
    %v1411 = vld [vmem:[%s800 + $0x38] sm:$0xff]
    %v1412 = vld [vmem:[%s800 + $0x40] sm:$0xff]
    %v1413 = vld [vmem:[%s800 + $0x48] sm:$0xff]
    %v1414 = vld [vmem:[%s800 + $0x50] sm:$0xff]
    %v1415 = vld [vmem:[%s800 + $0x58] sm:$0xff]
    %v1416 = vld [vmem:[%s800 + $0x60] sm:$0xff]
    %v1417 = vld [vmem:[%s800 + $0x68] sm:$0xff]
    %v1418 = vld [vmem:[%s800 + $0x70] sm:$0xff]
    %v1419 = vld [vmem:[%s800 + $0x78] sm:$0xff]
    %v1420 = vld [vmem:[%s800 + $0x80] sm:$0xff]
    %v1421 = vld [vmem:[%s800 + $0x88] sm:$0xff]
    %v1422 = vld [vmem:[%s800 + $0x90] sm:$0xff]
    %v1423 = vld [vmem:[%s800 + $0x98] sm:$0xff]
    %v1424 = vld [vmem:[%s800 + $0xa0] sm:$0xff]
    %v1425 = vld [vmem:[%s800 + $0xa8] sm:$0xff]
    %v1426 = vld [vmem:[%s800 + $0xb0] sm:$0xff]
    %v1427 = vld [vmem:[%s800 + $0xb8] sm:$0xff]
    %v1428 = vld [vmem:[%s800 + $0xc0] sm:$0xff]
    %v1429 = vld [vmem:[%s800 + $0xc8] sm:$0xff]
    %v1430 = vld [vmem:[%s800 + $0xd0] sm:$0xff]
    %v1431 = vld [vmem:[%s800 + $0xd8] sm:$0xff]
    %v1432 = vld [vmem:[%s800 + $0xe0] sm:$0xff]
    %v1433 = vld [vmem:[%s800 + $0xe8] sm:$0xff]
    %v1434 = vld [vmem:[%s800 + $0xf0] sm:$0xff]
    %v1435 = vld [vmem:[%s800 + $0xf8] sm:$0xff]
    %v1436 = vld [vmem:[%s800 + $0x100] sm:$0xff]
    %v1437 = vld [vmem:[%s800 + $0x108] sm:$0xff]
    %v1438 = vld [vmem:[%s800 + $0x110] sm:$0xff]
    %v1439 = vld [vmem:[%s800 + $0x118] sm:$0xff]
    %v1440 = vld [vmem:[%s800 + $0x120] sm:$0xff]
    %v1441 = vld [vmem:[%s800 + $0x128] sm:$0xff]
    %v1442 = vld [vmem:[%s800 + $0x130] sm:$0xff]
    %v1443 = vld [vmem:[%s800 + $0x138] sm:$0xff]
    %v1444 = vld [vmem:[%s800 + $0x140] sm:$0xff]
    %v1445 = vld [vmem:[%s800 + $0x148] sm:$0xff]
    %v1446 = vld [vmem:[%s800 + $0x150] sm:$0xff]
    %v1447 = vld [vmem:[%s800 + $0x158] sm:$0xff]
    %v1448 = vld [vmem:[%s800 + $0x160] sm:$0xff]
    %v1449 = vld [vmem:[%s800 + $0x168] sm:$0xff]
    %v1450 = vld [vmem:[%s800 + $0x170] sm:$0xff]
    %v1451 = vld [vmem:[%s800 + $0x178] sm:$0xff]
    %1452 = vmatprep.subr.mxu0 %v1405
    %1453 = vmatpush1.msra.mxu0 %v1404
    %1454 = vmatprep.subr.mxu0 %v1408
    %1455 = vmatpush1.msra.mxu0 %v1407
    %1456 = vmatprep.subr.mxu0 %v1411
    %1457 = vmatpush1.msra.mxu0 %v1410
    %1458 = vmatprep.subr.mxu0 %v1414
    %1459 = vmatpush1.msra.mxu0 %v1413
    %1460 = vmatprep.subr.mxu0 %v1417
    %1461 = vmatpush1.msra.mxu0 %v1416
    %1462 = vmatprep.subr.mxu0 %v1420
    %1463 = vmatpush1.msra.mxu0 %v1419
    %1464 = vmatprep.subr.mxu0 %v1423
    %1465 = vmatpush1.msra.mxu0 %v1422
    %1466 = vmatprep.subr.mxu0 %v1426
    %1467 = vmatpush1.msra.mxu0 %v1425
    %1468 = vmatprep.subr.mxu0 %v1429
    %1469 = vmatpush1.msra.mxu0 %v1428
    %1470 = vmatprep.subr.mxu0 %v1432
    %1471 = vmatpush1.msra.mxu0 %v1431
    %1472 = vmatprep.subr.mxu0 %v1435
    %1473 = vmatpush1.msra.mxu0 %v1434
    %1474 = vmatprep.subr.mxu0 %v1438
    %1475 = vmatpush1.msra.mxu0 %v1437
    %1476 = vmatprep.subr.mxu0 %v1441
    %1477 = vmatpush1.msra.mxu0 %v1440
    %1478 = vmatprep.subr.mxu0 %v1444
    %1479 = vmatpush1.msra.mxu0 %v1443
    %1480 = vmatprep.subr.mxu0 %v1447
    %1481 = vmatpush1.msra.mxu0 %v1446
    %1482 = vmatprep.subr.mxu0 %v1450
    %1483 = vmatpush1.msra.mxu0 %v1449
    %1484 = vmatprep.subr.mxu0 0.0
    %1485 = vmatpush1.msra.mxu0 0.0
    %1486 = vmatprep.subr.mxu0 0.0
    %1487 = vmatpush1.msra.mxu0 0.0
    %1488 = vmatprep.subr.mxu0 0.0
    %1489 = vmatpush1.msra.mxu0 0.0
    %1490 = vmatprep.subr.mxu0 0.0
    %1491 = vmatpush1.msra.mxu0 0.0
    %1492 = vmatprep.subr.mxu0 0.0
    %1493 = vmatpush1.msra.mxu0 0.0
    %1494 = vmatprep.subr.mxu0 0.0
    %1495 = vmatpush1.msra.mxu0 0.0
    %1496 = vmatprep.subr.mxu0 0.0
    %1497 = vmatpush1.msra.mxu0 0.0
    %1498 = vmatprep.subr.mxu0 0.0
    %1499 = vmatpush1.msra.mxu0 0.0
    %1500 = vmatprep.subr.mxu0 0.0
    %1501 = vmatpush1.msra.mxu0 0.0
    %1502 = vmatprep.subr.mxu0 0.0
    %1503 = vmatpush1.msra.mxu0 0.0
    %1504 = vmatprep.subr.mxu0 0.0
    %1505 = vmatpush1.msra.mxu0 0.0
    %1506 = vmatprep.subr.mxu0 0.0
    %1507 = vmatpush1.msra.mxu0 0.0
    %1508 = vmatprep.subr.mxu0 0.0
    %1509 = vmatpush1.msra.mxu0 0.0
    %1510 = vmatprep.subr.mxu0 0.0
    %1511 = vmatpush1.msra.mxu0 0.0
    %1512 = vmatprep.subr.mxu0 0.0
    %1513 = vmatpush1.msra.mxu0 0.0
    %1514 = vmatprep.subr.mxu0 0.0
    %1515 = vmatpush1.msra.mxu0 0.0
    %1516 = vmatprep.mubr.f32.mxu0 0.0
    %1517 = vmatmul.mubr.f32.gmra.mrb[0].mxu0 %v1005
    %v1518 = vpop.f32.mrb[0].mxu0
    %v1519 = vadd.f32 %v373, %v1518
    %v1520 = vpop.f32.mrb[0].mxu0
    %v1521 = vadd.f32 %v377, %v1520
    %1522 = vdwg.mxu0
    %1523 = vmatprep.subr.mxu0 0.0
    %1524 = vmatpush1.msra.mxu0 %v1406
    %1525 = vmatprep.subr.mxu0 0.0
    %1526 = vmatpush1.msra.mxu0 %v1409
    %1527 = vmatprep.subr.mxu0 0.0
    %1528 = vmatpush1.msra.mxu0 %v1412
    %1529 = vmatprep.subr.mxu0 0.0
    %1530 = vmatpush1.msra.mxu0 %v1415
    %1531 = vmatprep.subr.mxu0 0.0
    %1532 = vmatpush1.msra.mxu0 %v1418
    %1533 = vmatprep.subr.mxu0 0.0
    %1534 = vmatpush1.msra.mxu0 %v1421
    %1535 = vmatprep.subr.mxu0 0.0
    %1536 = vmatpush1.msra.mxu0 %v1424
    %1537 = vmatprep.subr.mxu0 0.0
    %1538 = vmatpush1.msra.mxu0 %v1427
    %1539 = vmatprep.subr.mxu0 0.0
    %1540 = vmatpush1.msra.mxu0 %v1430
    %1541 = vmatprep.subr.mxu0 0.0
    %1542 = vmatpush1.msra.mxu0 %v1433
    %1543 = vmatprep.subr.mxu0 0.0
    %1544 = vmatpush1.msra.mxu0 %v1436
    %1545 = vmatprep.subr.mxu0 0.0
    %1546 = vmatpush1.msra.mxu0 %v1439
    %1547 = vmatprep.subr.mxu0 0.0
    %1548 = vmatpush1.msra.mxu0 %v1442
    %1549 = vmatprep.subr.mxu0 0.0
    %1550 = vmatpush1.msra.mxu0 %v1445
    %1551 = vmatprep.subr.mxu0 0.0
    %1552 = vmatpush1.msra.mxu0 %v1448
    %1553 = vmatprep.subr.mxu0 0.0
    %1554 = vmatpush1.msra.mxu0 %v1451
    %1555 = vmatprep.subr.mxu0 0.0
    %1556 = vmatpush1.msra.mxu0 0.0
    %1557 = vmatprep.subr.mxu0 0.0
    %1558 = vmatpush1.msra.mxu0 0.0
    %1559 = vmatprep.subr.mxu0 0.0
    %1560 = vmatpush1.msra.mxu0 0.0
    %1561 = vmatprep.subr.mxu0 0.0
    %1562 = vmatpush1.msra.mxu0 0.0
    %1563 = vmatprep.subr.mxu0 0.0
    %1564 = vmatpush1.msra.mxu0 0.0
    %1565 = vmatprep.subr.mxu0 0.0
    %1566 = vmatpush1.msra.mxu0 0.0
    %1567 = vmatprep.subr.mxu0 0.0
    %1568 = vmatpush1.msra.mxu0 0.0
    %1569 = vmatprep.subr.mxu0 0.0
    %1570 = vmatpush1.msra.mxu0 0.0
    %1571 = vmatprep.subr.mxu0 0.0
    %1572 = vmatpush1.msra.mxu0 0.0
    %1573 = vmatprep.subr.mxu0 0.0
    %1574 = vmatpush1.msra.mxu0 0.0
    %1575 = vmatprep.subr.mxu0 0.0
    %1576 = vmatpush1.msra.mxu0 0.0
    %1577 = vmatprep.subr.mxu0 0.0
    %1578 = vmatpush1.msra.mxu0 0.0
    %1579 = vmatprep.subr.mxu0 0.0
    %1580 = vmatpush1.msra.mxu0 0.0
    %1581 = vmatprep.subr.mxu0 0.0
    %1582 = vmatpush1.msra.mxu0 0.0
    %1583 = vmatprep.subr.mxu0 0.0
    %1584 = vmatpush1.msra.mxu0 0.0
    %1585 = vmatprep.subr.mxu0 0.0
    %1586 = vmatpush1.msra.mxu0 0.0
    %1587 = vmatprep.mubr.f32.mxu0 0.0
    %1588 = vmatmul.mubr.f32.gmra.mrb[0].mxu0 %v1005
    %v1589 = vpop.f32.mrb[0].mxu0
    %v1590 = vadd.f32 %v381, %v1589
    %v1591 = vpop.f32.mrb[0].mxu0
    %1592 = vdwg.mxu0
    %v1593 = vadd.f32 %v1330, %v1519
    %v1594 = vadd.f32 %v1332, %v1521
    %v1595 = vmul.f32 %v1593, 0.5
    %v1596 = vmul.f32 %v1594, 0.5
    %v1597 = vtanh.pop %v1595
    %v1598 = vtanh.pop %v1596
    %v1599 = vmul.f32 %v1597, 0.5
    %v1600 = vmul.f32 %v1598, 0.5
    %v1601 = vadd.f32 %v1599, 0.5
    %v1602 = vadd.f32 %v1600, 0.5
    %v1603 = vmul.f32 %v1601, %v1590
    %v1604 = vadd.f32 %v1401, %v1603
    %v1605 = vtanh.pop %v1604
    %v1606 = vsub.f32 %v1005, %v1605
    %v1607 = vmul.f32 %v1602, %v1606
    %v1608 = vadd.f32 %v1605, %v1607
    %1609 = vst [vmem:[#allocation8 + $0x8] sm:$0xff] %v1608
    %v1610 = vld [vmem:[#allocation2 + $0x30] sm:$0xff]
    %v1611 = vld [vmem:[#allocation2 + $0x38] sm:$0xff]
    %v1612 = vld [vmem:[#allocation2 + $0x40] sm:$0xff]
    %v1613 = vld [vmem:[#allocation6] sm:$0xff]
    %v1614 = vld [vmem:[#allocation6 + $0x8] sm:$0xff]
    %v1615 = vld [vmem:[#allocation6 + $0x10] sm:$0xff]
    %v1616 = vld [vmem:[#allocation6 + $0x18] sm:$0xff]
    %v1617 = vld [vmem:[#allocation6 + $0x20] sm:$0xff]
    %v1618 = vld [vmem:[#allocation6 + $0x28] sm:$0xff]
    %v1619 = vld [vmem:[#allocation6 + $0x30] sm:$0xff]
    %v1620 = vld [vmem:[#allocation6 + $0x38] sm:$0xff]
    %v1621 = vld [vmem:[#allocation6 + $0x40] sm:$0xff]
    %v1622 = vld [vmem:[#allocation6 + $0x48] sm:$0xff]
    %v1623 = vld [vmem:[#allocation6 + $0x50] sm:$0xff]
    %v1624 = vld [vmem:[#allocation6 + $0x58] sm:$0xff]
    %v1625 = vld [vmem:[#allocation6 + $0x60] sm:$0xff]
    %v1626 = vld [vmem:[#allocation6 + $0x68] sm:$0xff]
    %v1627 = vld [vmem:[#allocation6 + $0x70] sm:$0xff]
    %v1628 = vld [vmem:[#allocation6 + $0x78] sm:$0xff]
    %v1629 = vld [vmem:[#allocation6 + $0x80] sm:$0xff]
    %v1630 = vld [vmem:[#allocation6 + $0x88] sm:$0xff]
    %v1631 = vld [vmem:[#allocation6 + $0x90] sm:$0xff]
    %v1632 = vld [vmem:[#allocation6 + $0x98] sm:$0xff]
    %v1633 = vld [vmem:[#allocation6 + $0xa0] sm:$0xff]
    %v1634 = vld [vmem:[#allocation6 + $0xa8] sm:$0xff]
    %v1635 = vld [vmem:[#allocation6 + $0xb0] sm:$0xff]
    %v1636 = vld [vmem:[#allocation6 + $0xb8] sm:$0xff]
    %v1637 = vld [vmem:[#allocation6 + $0xc0] sm:$0xff]
    %v1638 = vld [vmem:[#allocation6 + $0xc8] sm:$0xff]
    %v1639 = vld [vmem:[#allocation6 + $0xd0] sm:$0xff]
    %v1640 = vld [vmem:[#allocation6 + $0xd8] sm:$0xff]
    %v1641 = vld [vmem:[#allocation6 + $0xe0] sm:$0xff]
    %v1642 = vld [vmem:[#allocation6 + $0xe8] sm:$0xff]
    %v1643 = vld [vmem:[#allocation6 + $0xf0] sm:$0xff]
    %v1644 = vld [vmem:[#allocation6 + $0xf8] sm:$0xff]
    %v1645 = vld [vmem:[#allocation6 + $0x100] sm:$0xff]
    %v1646 = vld [vmem:[#allocation6 + $0x108] sm:$0xff]
    %v1647 = vld [vmem:[#allocation6 + $0x110] sm:$0xff]
    %v1648 = vld [vmem:[#allocation6 + $0x118] sm:$0xff]
    %v1649 = vld [vmem:[#allocation6 + $0x120] sm:$0xff]
    %v1650 = vld [vmem:[#allocation6 + $0x128] sm:$0xff]
    %v1651 = vld [vmem:[#allocation6 + $0x130] sm:$0xff]
    %v1652 = vld [vmem:[#allocation6 + $0x138] sm:$0xff]
    %v1653 = vld [vmem:[#allocation6 + $0x140] sm:$0xff]
    %v1654 = vld [vmem:[#allocation6 + $0x148] sm:$0xff]
    %v1655 = vld [vmem:[#allocation6 + $0x150] sm:$0xff]
    %v1656 = vld [vmem:[#allocation6 + $0x158] sm:$0xff]
    %v1657 = vld [vmem:[#allocation6 + $0x160] sm:$0xff]
    %v1658 = vld [vmem:[#allocation6 + $0x168] sm:$0xff]
    %v1659 = vld [vmem:[#allocation6 + $0x170] sm:$0xff]
    %v1660 = vld [vmem:[#allocation6 + $0x178] sm:$0xff]
    %1661 = vmatprep.subr.mxu0 %v1614
    %1662 = vmatpush1.msra.mxu0 %v1613
    %1663 = vmatprep.subr.mxu0 %v1617
    %1664 = vmatpush1.msra.mxu0 %v1616
    %1665 = vmatprep.subr.mxu0 %v1620
    %1666 = vmatpush1.msra.mxu0 %v1619
    %1667 = vmatprep.subr.mxu0 %v1623
    %1668 = vmatpush1.msra.mxu0 %v1622
    %1669 = vmatprep.subr.mxu0 %v1626
    %1670 = vmatpush1.msra.mxu0 %v1625
    %1671 = vmatprep.subr.mxu0 %v1629
    %1672 = vmatpush1.msra.mxu0 %v1628
    %1673 = vmatprep.subr.mxu0 %v1632
    %1674 = vmatpush1.msra.mxu0 %v1631
    %1675 = vmatprep.subr.mxu0 %v1635
    %1676 = vmatpush1.msra.mxu0 %v1634
    %1677 = vmatprep.subr.mxu0 %v1638
    %1678 = vmatpush1.msra.mxu0 %v1637
    %1679 = vmatprep.subr.mxu0 %v1641
    %1680 = vmatpush1.msra.mxu0 %v1640
    %1681 = vmatprep.subr.mxu0 %v1644
    %1682 = vmatpush1.msra.mxu0 %v1643
    %1683 = vmatprep.subr.mxu0 %v1647
    %1684 = vmatpush1.msra.mxu0 %v1646
    %1685 = vmatprep.subr.mxu0 %v1650
    %1686 = vmatpush1.msra.mxu0 %v1649
    %1687 = vmatprep.subr.mxu0 %v1653
    %1688 = vmatpush1.msra.mxu0 %v1652
    %1689 = vmatprep.subr.mxu0 %v1656
    %1690 = vmatpush1.msra.mxu0 %v1655
    %1691 = vmatprep.subr.mxu0 %v1659
    %1692 = vmatpush1.msra.mxu0 %v1658
    %1693 = vmatprep.subr.mxu0 0.0
    %1694 = vmatpush1.msra.mxu0 0.0
    %1695 = vmatprep.subr.mxu0 0.0
    %1696 = vmatpush1.msra.mxu0 0.0
    %1697 = vmatprep.subr.mxu0 0.0
    %1698 = vmatpush1.msra.mxu0 0.0
    %1699 = vmatprep.subr.mxu0 0.0
    %1700 = vmatpush1.msra.mxu0 0.0
    %1701 = vmatprep.subr.mxu0 0.0
    %1702 = vmatpush1.msra.mxu0 0.0
    %1703 = vmatprep.subr.mxu0 0.0
    %1704 = vmatpush1.msra.mxu0 0.0
    %1705 = vmatprep.subr.mxu0 0.0
    %1706 = vmatpush1.msra.mxu0 0.0
    %1707 = vmatprep.subr.mxu0 0.0
    %1708 = vmatpush1.msra.mxu0 0.0
    %1709 = vmatprep.subr.mxu0 0.0
    %1710 = vmatpush1.msra.mxu0 0.0
    %1711 = vmatprep.subr.mxu0 0.0
    %1712 = vmatpush1.msra.mxu0 0.0
    %1713 = vmatprep.subr.mxu0 0.0
    %1714 = vmatpush1.msra.mxu0 0.0
    %1715 = vmatprep.subr.mxu0 0.0
    %1716 = vmatpush1.msra.mxu0 0.0
    %1717 = vmatprep.subr.mxu0 0.0
    %1718 = vmatpush1.msra.mxu0 0.0
    %1719 = vmatprep.subr.mxu0 0.0
    %1720 = vmatpush1.msra.mxu0 0.0
    %1721 = vmatprep.subr.mxu0 0.0
    %1722 = vmatpush1.msra.mxu0 0.0
    %1723 = vmatprep.subr.mxu0 0.0
    %1724 = vmatpush1.msra.mxu0 0.0
    %1725 = vmatprep.mubr.f32.mxu0 0.0
    %1726 = vmatmul.mubr.f32.gmra.mrb[0].mxu0 %v1214
    %v1727 = vpop.f32.mrb[0].mxu0
    %v1728 = vadd.f32 %v355, %v1727
    %v1729 = vpop.f32.mrb[0].mxu0
    %v1730 = vadd.f32 %v359, %v1729
    %1731 = vdwg.mxu0
    %1732 = vmatprep.subr.mxu0 0.0
    %1733 = vmatpush1.msra.mxu0 %v1615
    %1734 = vmatprep.subr.mxu0 0.0
    %1735 = vmatpush1.msra.mxu0 %v1618
    %1736 = vmatprep.subr.mxu0 0.0
    %1737 = vmatpush1.msra.mxu0 %v1621
    %1738 = vmatprep.subr.mxu0 0.0
    %1739 = vmatpush1.msra.mxu0 %v1624
    %1740 = vmatprep.subr.mxu0 0.0
    %1741 = vmatpush1.msra.mxu0 %v1627
    %1742 = vmatprep.subr.mxu0 0.0
    %1743 = vmatpush1.msra.mxu0 %v1630
    %1744 = vmatprep.subr.mxu0 0.0
    %1745 = vmatpush1.msra.mxu0 %v1633
    %1746 = vmatprep.subr.mxu0 0.0
    %1747 = vmatpush1.msra.mxu0 %v1636
    %1748 = vmatprep.subr.mxu0 0.0
    %1749 = vmatpush1.msra.mxu0 %v1639
    %1750 = vmatprep.subr.mxu0 0.0
    %1751 = vmatpush1.msra.mxu0 %v1642
    %1752 = vmatprep.subr.mxu0 0.0
    %1753 = vmatpush1.msra.mxu0 %v1645
    %1754 = vmatprep.subr.mxu0 0.0
    %1755 = vmatpush1.msra.mxu0 %v1648
    %1756 = vmatprep.subr.mxu0 0.0
    %1757 = vmatpush1.msra.mxu0 %v1651
    %1758 = vmatprep.subr.mxu0 0.0
    %1759 = vmatpush1.msra.mxu0 %v1654
    %1760 = vmatprep.subr.mxu0 0.0
    %1761 = vmatpush1.msra.mxu0 %v1657
    %1762 = vmatprep.subr.mxu0 0.0
    %1763 = vmatpush1.msra.mxu0 %v1660
    %1764 = vmatprep.subr.mxu0 0.0
    %1765 = vmatpush1.msra.mxu0 0.0
    %1766 = vmatprep.subr.mxu0 0.0
    %1767 = vmatpush1.msra.mxu0 0.0
    %1768 = vmatprep.subr.mxu0 0.0
    %1769 = vmatpush1.msra.mxu0 0.0
    %1770 = vmatprep.subr.mxu0 0.0
    %1771 = vmatpush1.msra.mxu0 0.0
    %1772 = vmatprep.subr.mxu0 0.0
    %1773 = vmatpush1.msra.mxu0 0.0
    %1774 = vmatprep.subr.mxu0 0.0
    %1775 = vmatpush1.msra.mxu0 0.0
    %1776 = vmatprep.subr.mxu0 0.0
    %1777 = vmatpush1.msra.mxu0 0.0
    %1778 = vmatprep.subr.mxu0 0.0
    %1779 = vmatpush1.msra.mxu0 0.0
    %1780 = vmatprep.subr.mxu0 0.0
    %1781 = vmatpush1.msra.mxu0 0.0
    %1782 = vmatprep.subr.mxu0 0.0
    %1783 = vmatpush1.msra.mxu0 0.0
    %1784 = vmatprep.subr.mxu0 0.0
    %1785 = vmatpush1.msra.mxu0 0.0
    %1786 = vmatprep.subr.mxu0 0.0
    %1787 = vmatpush1.msra.mxu0 0.0
    %1788 = vmatprep.subr.mxu0 0.0
    %1789 = vmatpush1.msra.mxu0 0.0
    %1790 = vmatprep.subr.mxu0 0.0
    %1791 = vmatpush1.msra.mxu0 0.0
    %1792 = vmatprep.subr.mxu0 0.0
    %1793 = vmatpush1.msra.mxu0 0.0
    %1794 = vmatprep.subr.mxu0 0.0
    %1795 = vmatpush1.msra.mxu0 0.0
    %1796 = vmatprep.mubr.f32.mxu0 0.0
    %1797 = vmatmul.mubr.f32.gmra.mrb[0].mxu0 %v1214
    %v1798 = vpop.f32.mrb[0].mxu0
    %v1799 = vadd.f32 %v363, %v1798
    %v1800 = vpop.f32.mrb[0].mxu0
    %1801 = vdwg.mxu0
    %v1802 = vadd.f32 %v1610, %v1728
    %v1803 = vadd.f32 %v1611, %v1730
    %v1804 = vmul.f32 %v1802, 0.5
    %v1805 = vmul.f32 %v1803, 0.5
    %v1806 = vtanh.pop %v1804
    %v1807 = vtanh.pop %v1805
    %v1808 = vmul.f32 %v1806, 0.5
    %v1809 = vmul.f32 %v1807, 0.5
    %v1810 = vadd.f32 %v1808, 0.5
    %v1811 = vadd.f32 %v1809, 0.5
    %v1812 = vmul.f32 %v1810, %v1799
    %v1813 = vadd.f32 %v1612, %v1812
    %v1814 = vtanh.pop %v1813
    %v1815 = vsub.f32 %v1214, %v1814
    %v1816 = vmul.f32 %v1811, %v1815
    %v1817 = vadd.f32 %v1814, %v1816
    %v1818 = vld [vmem:[#allocation3] sm:$0xff]
    %v1819 = vld [vmem:[#allocation3 + $0x8] sm:$0xff]
    %v1820 = vld [vmem:[#allocation3 + $0x10] sm:$0xff]
    %v1821 = vld [vmem:[#allocation3 + $0x18] sm:$0xff]
    %v1822 = vld [vmem:[#allocation3 + $0x20] sm:$0xff]
    %v1823 = vld [vmem:[#allocation3 + $0x28] sm:$0xff]
    %v1824 = vld [vmem:[#allocation3 + $0x30] sm:$0xff]
    %v1825 = vld [vmem:[#allocation3 + $0x38] sm:$0xff]
    %v1826 = vld [vmem:[#allocation3 + $0x40] sm:$0xff]
    %v1827 = vld [vmem:[#allocation3 + $0x48] sm:$0xff]
    %v1828 = vld [vmem:[#allocation3 + $0x50] sm:$0xff]
    %v1829 = vld [vmem:[#allocation3 + $0x58] sm:$0xff]
    %v1830 = vld [vmem:[#allocation3 + $0x60] sm:$0xff]
    %v1831 = vld [vmem:[#allocation3 + $0x68] sm:$0xff]
    %v1832 = vld [vmem:[#allocation3 + $0x70] sm:$0xff]
    %v1833 = vld [vmem:[#allocation3 + $0x78] sm:$0xff]
    %v1834 = vld [vmem:[#allocation3 + $0x80] sm:$0xff]
    %v1835 = vld [vmem:[#allocation3 + $0x88] sm:$0xff]
    %v1836 = vld [vmem:[#allocation3 + $0x90] sm:$0xff]
    %v1837 = vld [vmem:[#allocation3 + $0x98] sm:$0xff]
    %v1838 = vld [vmem:[#allocation3 + $0xa0] sm:$0xff]
    %v1839 = vld [vmem:[#allocation3 + $0xa8] sm:$0xff]
    %v1840 = vld [vmem:[#allocation3 + $0xb0] sm:$0xff]
    %v1841 = vld [vmem:[#allocation3 + $0xb8] sm:$0xff]
    %v1842 = vld [vmem:[#allocation3 + $0xc0] sm:$0xff]
    %v1843 = vld [vmem:[#allocation3 + $0xc8] sm:$0xff]
    %v1844 = vld [vmem:[#allocation3 + $0xd0] sm:$0xff]
    %v1845 = vld [vmem:[#allocation3 + $0xd8] sm:$0xff]
    %v1846 = vld [vmem:[#allocation3 + $0xe0] sm:$0xff]
    %v1847 = vld [vmem:[#allocation3 + $0xe8] sm:$0xff]
    %v1848 = vld [vmem:[#allocation3 + $0xf0] sm:$0xff]
    %v1849 = vld [vmem:[#allocation3 + $0xf8] sm:$0xff]
    %v1850 = vld [vmem:[#allocation3 + $0x100] sm:$0xff]
    %v1851 = vld [vmem:[#allocation3 + $0x108] sm:$0xff]
    %v1852 = vld [vmem:[#allocation3 + $0x110] sm:$0xff]
    %v1853 = vld [vmem:[#allocation3 + $0x118] sm:$0xff]
    %v1854 = vld [vmem:[#allocation3 + $0x120] sm:$0xff]
    %v1855 = vld [vmem:[#allocation3 + $0x128] sm:$0xff]
    %v1856 = vld [vmem:[#allocation3 + $0x130] sm:$0xff]
    %v1857 = vld [vmem:[#allocation3 + $0x138] sm:$0xff]
    %v1858 = vld [vmem:[#allocation3 + $0x140] sm:$0xff]
    %v1859 = vld [vmem:[#allocation3 + $0x148] sm:$0xff]
    %v1860 = vld [vmem:[#allocation3 + $0x150] sm:$0xff]
    %v1861 = vld [vmem:[#allocation3 + $0x158] sm:$0xff]
    %v1862 = vld [vmem:[#allocation3 + $0x160] sm:$0xff]
    %v1863 = vld [vmem:[#allocation3 + $0x168] sm:$0xff]
    %v1864 = vld [vmem:[#allocation3 + $0x170] sm:$0xff]
    %v1865 = vld [vmem:[#allocation3 + $0x178] sm:$0xff]
    %1866 = vmatprep.subr.mxu0 %v1819
    %1867 = vmatpush1.msra.mxu0 %v1818
    %1868 = vmatprep.subr.mxu0 %v1822
    %1869 = vmatpush1.msra.mxu0 %v1821
    %1870 = vmatprep.subr.mxu0 %v1825
    %1871 = vmatpush1.msra.mxu0 %v1824
    %1872 = vmatprep.subr.mxu0 %v1828
    %1873 = vmatpush1.msra.mxu0 %v1827
    %1874 = vmatprep.subr.mxu0 %v1831
    %1875 = vmatpush1.msra.mxu0 %v1830
    %1876 = vmatprep.subr.mxu0 %v1834
    %1877 = vmatpush1.msra.mxu0 %v1833
    %1878 = vmatprep.subr.mxu0 %v1837
    %1879 = vmatpush1.msra.mxu0 %v1836
    %1880 = vmatprep.subr.mxu0 %v1840
    %1881 = vmatpush1.msra.mxu0 %v1839
    %1882 = vmatprep.subr.mxu0 %v1843
    %1883 = vmatpush1.msra.mxu0 %v1842
    %1884 = vmatprep.subr.mxu0 %v1846
    %1885 = vmatpush1.msra.mxu0 %v1845
    %1886 = vmatprep.subr.mxu0 %v1849
    %1887 = vmatpush1.msra.mxu0 %v1848
    %1888 = vmatprep.subr.mxu0 %v1852
    %1889 = vmatpush1.msra.mxu0 %v1851
    %1890 = vmatprep.subr.mxu0 %v1855
    %1891 = vmatpush1.msra.mxu0 %v1854
    %1892 = vmatprep.subr.mxu0 %v1858
    %1893 = vmatpush1.msra.mxu0 %v1857
    %1894 = vmatprep.subr.mxu0 %v1861
    %1895 = vmatpush1.msra.mxu0 %v1860
    %1896 = vmatprep.subr.mxu0 %v1864
    %1897 = vmatpush1.msra.mxu0 %v1863
    %1898 = vmatprep.subr.mxu0 0.0
    %1899 = vmatpush1.msra.mxu0 0.0
    %1900 = vmatprep.subr.mxu0 0.0
    %1901 = vmatpush1.msra.mxu0 0.0
    %1902 = vmatprep.subr.mxu0 0.0
    %1903 = vmatpush1.msra.mxu0 0.0
    %1904 = vmatprep.subr.mxu0 0.0
    %1905 = vmatpush1.msra.mxu0 0.0
    %1906 = vmatprep.subr.mxu0 0.0
    %1907 = vmatpush1.msra.mxu0 0.0
    %1908 = vmatprep.subr.mxu0 0.0
    %1909 = vmatpush1.msra.mxu0 0.0
    %1910 = vmatprep.subr.mxu0 0.0
    %1911 = vmatpush1.msra.mxu0 0.0
    %1912 = vmatprep.subr.mxu0 0.0
    %1913 = vmatpush1.msra.mxu0 0.0
    %1914 = vmatprep.subr.mxu0 0.0
    %1915 = vmatpush1.msra.mxu0 0.0
    %1916 = vmatprep.subr.mxu0 0.0
    %1917 = vmatpush1.msra.mxu0 0.0
    %1918 = vmatprep.subr.mxu0 0.0
    %1919 = vmatpush1.msra.mxu0 0.0
    %1920 = vmatprep.subr.mxu0 0.0
    %1921 = vmatpush1.msra.mxu0 0.0
    %1922 = vmatprep.subr.mxu0 0.0
    %1923 = vmatpush1.msra.mxu0 0.0
    %1924 = vmatprep.subr.mxu0 0.0
    %1925 = vmatpush1.msra.mxu0 0.0
    %1926 = vmatprep.subr.mxu0 0.0
    %1927 = vmatpush1.msra.mxu0 0.0
    %1928 = vmatprep.subr.mxu0 0.0
    %1929 = vmatpush1.msra.mxu0 0.0
    %1930 = vmatprep.mubr.f32.mxu0 0.0
    %1931 = vmatmul.mubr.f32.gmra.mrb[0].mxu0 %v1817
    %v1932 = vpop.f32.mrb[0].mxu0
    %v1933 = vadd.f32 %v391, %v1932
    %v1934 = vpop.f32.mrb[0].mxu0
    %v1935 = vadd.f32 %v395, %v1934
    %1936 = vdwg.mxu0
    %1937 = vmatprep.subr.mxu0 0.0
    %1938 = vmatpush1.msra.mxu0 %v1820
    %1939 = vmatprep.subr.mxu0 0.0
    %1940 = vmatpush1.msra.mxu0 %v1823
    %1941 = vmatprep.subr.mxu0 0.0
    %1942 = vmatpush1.msra.mxu0 %v1826
    %1943 = vmatprep.subr.mxu0 0.0
    %1944 = vmatpush1.msra.mxu0 %v1829
    %1945 = vmatprep.subr.mxu0 0.0
    %1946 = vmatpush1.msra.mxu0 %v1832
    %1947 = vmatprep.subr.mxu0 0.0
    %1948 = vmatpush1.msra.mxu0 %v1835
    %1949 = vmatprep.subr.mxu0 0.0
    %1950 = vmatpush1.msra.mxu0 %v1838
    %1951 = vmatprep.subr.mxu0 0.0
    %1952 = vmatpush1.msra.mxu0 %v1841
    %1953 = vmatprep.subr.mxu0 0.0
    %1954 = vmatpush1.msra.mxu0 %v1844
    %1955 = vmatprep.subr.mxu0 0.0
    %1956 = vmatpush1.msra.mxu0 %v1847
    %1957 = vmatprep.subr.mxu0 0.0
    %1958 = vmatpush1.msra.mxu0 %v1850
    %1959 = vmatprep.subr.mxu0 0.0
    %1960 = vmatpush1.msra.mxu0 %v1853
    %1961 = vmatprep.subr.mxu0 0.0
    %1962 = vmatpush1.msra.mxu0 %v1856
    %1963 = vmatprep.subr.mxu0 0.0
    %1964 = vmatpush1.msra.mxu0 %v1859
    %1965 = vmatprep.subr.mxu0 0.0
    %1966 = vmatpush1.msra.mxu0 %v1862
    %1967 = vmatprep.subr.mxu0 0.0
    %1968 = vmatpush1.msra.mxu0 %v1865
    %1969 = vmatprep.subr.mxu0 0.0
    %1970 = vmatpush1.msra.mxu0 0.0
    %1971 = vmatprep.subr.mxu0 0.0
    %1972 = vmatpush1.msra.mxu0 0.0
    %1973 = vmatprep.subr.mxu0 0.0
    %1974 = vmatpush1.msra.mxu0 0.0
    %1975 = vmatprep.subr.mxu0 0.0
    %1976 = vmatpush1.msra.mxu0 0.0
    %1977 = vmatprep.subr.mxu0 0.0
    %1978 = vmatpush1.msra.mxu0 0.0
    %1979 = vmatprep.subr.mxu0 0.0
    %1980 = vmatpush1.msra.mxu0 0.0
    %1981 = vmatprep.subr.mxu0 0.0
    %1982 = vmatpush1.msra.mxu0 0.0
    %1983 = vmatprep.subr.mxu0 0.0
    %1984 = vmatpush1.msra.mxu0 0.0
    %1985 = vmatprep.subr.mxu0 0.0
    %1986 = vmatpush1.msra.mxu0 0.0
    %1987 = vmatprep.subr.mxu0 0.0
    %1988 = vmatpush1.msra.mxu0 0.0
    %1989 = vmatprep.subr.mxu0 0.0
    %1990 = vmatpush1.msra.mxu0 0.0
    %1991 = vmatprep.subr.mxu0 0.0
    %1992 = vmatpush1.msra.mxu0 0.0
    %1993 = vmatprep.subr.mxu0 0.0
    %1994 = vmatpush1.msra.mxu0 0.0
    %1995 = vmatprep.subr.mxu0 0.0
    %1996 = vmatpush1.msra.mxu0 0.0
    %1997 = vmatprep.subr.mxu0 0.0
    %1998 = vmatpush1.msra.mxu0 0.0
    %1999 = vmatprep.subr.mxu0 0.0
    %2000 = vmatpush1.msra.mxu0 0.0
    %2001 = vmatprep.mubr.f32.mxu0 0.0
    %2002 = vmatmul.mubr.f32.gmra.mrb[0].mxu0 %v1817
    %v2003 = vpop.f32.mrb[0].mxu0
    %v2004 = vadd.f32 %v399, %v2003
    %v2005 = vpop.f32.mrb[0].mxu0
    %2006 = vdwg.mxu0
    %v2007 = vld [vmem:[%s800] sm:$0xff]
    %v2008 = vld [vmem:[%s800 + $0x8] sm:$0xff]
    %v2009 = vld [vmem:[%s800 + $0x10] sm:$0xff]
    %v2010 = vld [vmem:[%s800 + $0x18] sm:$0xff]
    %v2011 = vld [vmem:[%s800 + $0x20] sm:$0xff]
    %v2012 = vld [vmem:[%s800 + $0x28] sm:$0xff]
    %v2013 = vld [vmem:[%s800 + $0x30] sm:$0xff]
    %v2014 = vld [vmem:[%s800 + $0x38] sm:$0xff]
    %v2015 = vld [vmem:[%s800 + $0x40] sm:$0xff]
    %v2016 = vld [vmem:[%s800 + $0x48] sm:$0xff]
    %v2017 = vld [vmem:[%s800 + $0x50] sm:$0xff]
    %v2018 = vld [vmem:[%s800 + $0x58] sm:$0xff]
    %v2019 = vld [vmem:[%s800 + $0x60] sm:$0xff]
    %v2020 = vld [vmem:[%s800 + $0x68] sm:$0xff]
    %v2021 = vld [vmem:[%s800 + $0x70] sm:$0xff]
    %v2022 = vld [vmem:[%s800 + $0x78] sm:$0xff]
    %v2023 = vld [vmem:[%s800 + $0x80] sm:$0xff]
    %v2024 = vld [vmem:[%s800 + $0x88] sm:$0xff]
    %v2025 = vld [vmem:[%s800 + $0x90] sm:$0xff]
    %v2026 = vld [vmem:[%s800 + $0x98] sm:$0xff]
    %v2027 = vld [vmem:[%s800 + $0xa0] sm:$0xff]
    %v2028 = vld [vmem:[%s800 + $0xa8] sm:$0xff]
    %v2029 = vld [vmem:[%s800 + $0xb0] sm:$0xff]
    %v2030 = vld [vmem:[%s800 + $0xb8] sm:$0xff]
    %v2031 = vld [vmem:[%s800 + $0xc0] sm:$0xff]
    %v2032 = vld [vmem:[%s800 + $0xc8] sm:$0xff]
    %v2033 = vld [vmem:[%s800 + $0xd0] sm:$0xff]
    %v2034 = vld [vmem:[%s800 + $0xd8] sm:$0xff]
    %v2035 = vld [vmem:[%s800 + $0xe0] sm:$0xff]
    %v2036 = vld [vmem:[%s800 + $0xe8] sm:$0xff]
    %v2037 = vld [vmem:[%s800 + $0xf0] sm:$0xff]
    %v2038 = vld [vmem:[%s800 + $0xf8] sm:$0xff]
    %v2039 = vld [vmem:[%s800 + $0x100] sm:$0xff]
    %v2040 = vld [vmem:[%s800 + $0x108] sm:$0xff]
    %v2041 = vld [vmem:[%s800 + $0x110] sm:$0xff]
    %v2042 = vld [vmem:[%s800 + $0x118] sm:$0xff]
    %v2043 = vld [vmem:[%s800 + $0x120] sm:$0xff]
    %v2044 = vld [vmem:[%s800 + $0x128] sm:$0xff]
    %v2045 = vld [vmem:[%s800 + $0x130] sm:$0xff]
    %v2046 = vld [vmem:[%s800 + $0x138] sm:$0xff]
    %v2047 = vld [vmem:[%s800 + $0x140] sm:$0xff]
    %v2048 = vld [vmem:[%s800 + $0x148] sm:$0xff]
    %v2049 = vld [vmem:[%s800 + $0x150] sm:$0xff]
    %v2050 = vld [vmem:[%s800 + $0x158] sm:$0xff]
    %v2051 = vld [vmem:[%s800 + $0x160] sm:$0xff]
    %v2052 = vld [vmem:[%s800 + $0x168] sm:$0xff]
    %v2053 = vld [vmem:[%s800 + $0x170] sm:$0xff]
    %v2054 = vld [vmem:[%s800 + $0x178] sm:$0xff]
    %2055 = vmatprep.subr.mxu0 %v2008
    %2056 = vmatpush1.msra.mxu0 %v2007
    %2057 = vmatprep.subr.mxu0 %v2011
    %2058 = vmatpush1.msra.mxu0 %v2010
    %2059 = vmatprep.subr.mxu0 %v2014
    %2060 = vmatpush1.msra.mxu0 %v2013
    %2061 = vmatprep.subr.mxu0 %v2017
    %2062 = vmatpush1.msra.mxu0 %v2016
    %2063 = vmatprep.subr.mxu0 %v2020
    %2064 = vmatpush1.msra.mxu0 %v2019
    %2065 = vmatprep.subr.mxu0 %v2023
    %2066 = vmatpush1.msra.mxu0 %v2022
    %2067 = vmatprep.subr.mxu0 %v2026
    %2068 = vmatpush1.msra.mxu0 %v2025
    %2069 = vmatprep.subr.mxu0 %v2029
    %2070 = vmatpush1.msra.mxu0 %v2028
    %2071 = vmatprep.subr.mxu0 %v2032
    %2072 = vmatpush1.msra.mxu0 %v2031
    %2073 = vmatprep.subr.mxu0 %v2035
    %2074 = vmatpush1.msra.mxu0 %v2034
    %2075 = vmatprep.subr.mxu0 %v2038
    %2076 = vmatpush1.msra.mxu0 %v2037
    %2077 = vmatprep.subr.mxu0 %v2041
    %2078 = vmatpush1.msra.mxu0 %v2040
    %2079 = vmatprep.subr.mxu0 %v2044
    %2080 = vmatpush1.msra.mxu0 %v2043
    %2081 = vmatprep.subr.mxu0 %v2047
    %2082 = vmatpush1.msra.mxu0 %v2046
    %2083 = vmatprep.subr.mxu0 %v2050
    %2084 = vmatpush1.msra.mxu0 %v2049
    %2085 = vmatprep.subr.mxu0 %v2053
    %2086 = vmatpush1.msra.mxu0 %v2052
    %2087 = vmatprep.subr.mxu0 0.0
    %2088 = vmatpush1.msra.mxu0 0.0
    %2089 = vmatprep.subr.mxu0 0.0
    %2090 = vmatpush1.msra.mxu0 0.0
    %2091 = vmatprep.subr.mxu0 0.0
    %2092 = vmatpush1.msra.mxu0 0.0
    %2093 = vmatprep.subr.mxu0 0.0
    %2094 = vmatpush1.msra.mxu0 0.0
    %2095 = vmatprep.subr.mxu0 0.0
    %2096 = vmatpush1.msra.mxu0 0.0
    %2097 = vmatprep.subr.mxu0 0.0
    %2098 = vmatpush1.msra.mxu0 0.0
    %2099 = vmatprep.subr.mxu0 0.0
    %2100 = vmatpush1.msra.mxu0 0.0
    %2101 = vmatprep.subr.mxu0 0.0
    %2102 = vmatpush1.msra.mxu0 0.0
    %2103 = vmatprep.subr.mxu0 0.0
    %2104 = vmatpush1.msra.mxu0 0.0
    %2105 = vmatprep.subr.mxu0 0.0
    %2106 = vmatpush1.msra.mxu0 0.0
    %2107 = vmatprep.subr.mxu0 0.0
    %2108 = vmatpush1.msra.mxu0 0.0
    %2109 = vmatprep.subr.mxu0 0.0
    %2110 = vmatpush1.msra.mxu0 0.0
    %2111 = vmatprep.subr.mxu0 0.0
    %2112 = vmatpush1.msra.mxu0 0.0
    %2113 = vmatprep.subr.mxu0 0.0
    %2114 = vmatpush1.msra.mxu0 0.0
    %2115 = vmatprep.subr.mxu0 0.0
    %2116 = vmatpush1.msra.mxu0 0.0
    %2117 = vmatprep.subr.mxu0 0.0
    %2118 = vmatpush1.msra.mxu0 0.0
    %2119 = vmatprep.mubr.f32.mxu0 0.0
    %2120 = vmatmul.mubr.f32.gmra.mrb[0].mxu0 %v1608
    %v2121 = vpop.f32.mrb[0].mxu0
    %v2122 = vadd.f32 %v373, %v2121
    %v2123 = vpop.f32.mrb[0].mxu0
    %v2124 = vadd.f32 %v377, %v2123
    %2125 = vdwg.mxu0
    %2126 = vmatprep.subr.mxu0 0.0
    %2127 = vmatpush1.msra.mxu0 %v2009
    %2128 = vmatprep.subr.mxu0 0.0
    %2129 = vmatpush1.msra.mxu0 %v2012
    %2130 = vmatprep.subr.mxu0 0.0
    %2131 = vmatpush1.msra.mxu0 %v2015
    %2132 = vmatprep.subr.mxu0 0.0
    %2133 = vmatpush1.msra.mxu0 %v2018
    %2134 = vmatprep.subr.mxu0 0.0
    %2135 = vmatpush1.msra.mxu0 %v2021
    %2136 = vmatprep.subr.mxu0 0.0
    %2137 = vmatpush1.msra.mxu0 %v2024
    %2138 = vmatprep.subr.mxu0 0.0
    %2139 = vmatpush1.msra.mxu0 %v2027
    %2140 = vmatprep.subr.mxu0 0.0
    %2141 = vmatpush1.msra.mxu0 %v2030
    %2142 = vmatprep.subr.mxu0 0.0
    %2143 = vmatpush1.msra.mxu0 %v2033
    %2144 = vmatprep.subr.mxu0 0.0
    %2145 = vmatpush1.msra.mxu0 %v2036
    %2146 = vmatprep.subr.mxu0 0.0
    %2147 = vmatpush1.msra.mxu0 %v2039
    %2148 = vmatprep.subr.mxu0 0.0
    %2149 = vmatpush1.msra.mxu0 %v2042
    %2150 = vmatprep.subr.mxu0 0.0
    %2151 = vmatpush1.msra.mxu0 %v2045
    %2152 = vmatprep.subr.mxu0 0.0
    %2153 = vmatpush1.msra.mxu0 %v2048
    %2154 = vmatprep.subr.mxu0 0.0
    %2155 = vmatpush1.msra.mxu0 %v2051
    %2156 = vmatprep.subr.mxu0 0.0
    %2157 = vmatpush1.msra.mxu0 %v2054
    %2158 = vmatprep.subr.mxu0 0.0
    %2159 = vmatpush1.msra.mxu0 0.0
    %2160 = vmatprep.subr.mxu0 0.0
    %2161 = vmatpush1.msra.mxu0 0.0
    %2162 = vmatprep.subr.mxu0 0.0
    %2163 = vmatpush1.msra.mxu0 0.0
    %2164 = vmatprep.subr.mxu0 0.0
    %2165 = vmatpush1.msra.mxu0 0.0
    %2166 = vmatprep.subr.mxu0 0.0
    %2167 = vmatpush1.msra.mxu0 0.0
    %2168 = vmatprep.subr.mxu0 0.0
    %2169 = vmatpush1.msra.mxu0 0.0
    %2170 = vmatprep.subr.mxu0 0.0
    %2171 = vmatpush1.msra.mxu0 0.0
    %2172 = vmatprep.subr.mxu0 0.0
    %2173 = vmatpush1.msra.mxu0 0.0
    %2174 = vmatprep.subr.mxu0 0.0
    %2175 = vmatpush1.msra.mxu0 0.0
    %2176 = vmatprep.subr.mxu0 0.0
    %2177 = vmatpush1.msra.mxu0 0.0
    %2178 = vmatprep.subr.mxu0 0.0
    %2179 = vmatpush1.msra.mxu0 0.0
    %2180 = vmatprep.subr.mxu0 0.0
    %2181 = vmatpush1.msra.mxu0 0.0
    %2182 = vmatprep.subr.mxu0 0.0
    %2183 = vmatpush1.msra.mxu0 0.0
    %2184 = vmatprep.subr.mxu0 0.0
    %2185 = vmatpush1.msra.mxu0 0.0
    %2186 = vmatprep.subr.mxu0 0.0
    %2187 = vmatpush1.msra.mxu0 0.0
    %2188 = vmatprep.subr.mxu0 0.0
    %2189 = vmatpush1.msra.mxu0 0.0
    %2190 = vmatprep.mubr.f32.mxu0 0.0
    %2191 = vmatmul.mubr.f32.gmra.mrb[0].mxu0 %v1608
    %v2192 = vpop.f32.mrb[0].mxu0
    %v2193 = vadd.f32 %v381, %v2192
    %v2194 = vpop.f32.mrb[0].mxu0
    %2195 = vdwg.mxu0
    %v2196 = vadd.f32 %v1933, %v2122
    %v2197 = vadd.f32 %v1935, %v2124
    %v2198 = vmul.f32 %v2196, 0.5
    %v2199 = vmul.f32 %v2197, 0.5
    %v2200 = vtanh.pop %v2198
    %v2201 = vtanh.pop %v2199
    %v2202 = vmul.f32 %v2200, 0.5
    %v2203 = vmul.f32 %v2201, 0.5
    %v2204 = vadd.f32 %v2202, 0.5
    %v2205 = vadd.f32 %v2203, 0.5
    %v2206 = vmul.f32 %v2204, %v2193
    %v2207 = vadd.f32 %v2004, %v2206
    %v2208 = vtanh.pop %v2207
    %v2209 = vsub.f32 %v1608, %v2208
    %v2210 = vmul.f32 %v2205, %v2209
    %v2211 = vadd.f32 %v2208, %v2210
    %2212 = vst [vmem:[#allocation8 + $0x10] sm:$0xff] %v2211
    %v2213 = vld [vmem:[#allocation2 + $0x48] sm:$0xff]
    %v2214 = vld [vmem:[#allocation2 + $0x50] sm:$0xff]
    %v2215 = vld [vmem:[#allocation2 + $0x58] sm:$0xff]
    %v2216 = vld [vmem:[#allocation6] sm:$0xff]
    %v2217 = vld [vmem:[#allocation6 + $0x8] sm:$0xff]
    %v2218 = vld [vmem:[#allocation6 + $0x10] sm:$0xff]
    %v2219 = vld [vmem:[#allocation6 + $0x18] sm:$0xff]
    %v2220 = vld [vmem:[#allocation6 + $0x20] sm:$0xff]
    %v2221 = vld [vmem:[#allocation6 + $0x28] sm:$0xff]
    %v2222 = vld [vmem:[#allocation6 + $0x30] sm:$0xff]
    %v2223 = vld [vmem:[#allocation6 + $0x38] sm:$0xff]
    %v2224 = vld [vmem:[#allocation6 + $0x40] sm:$0xff]
    %v2225 = vld [vmem:[#allocation6 + $0x48] sm:$0xff]
    %v2226 = vld [vmem:[#allocation6 + $0x50] sm:$0xff]
    %v2227 = vld [vmem:[#allocation6 + $0x58] sm:$0xff]
    %v2228 = vld [vmem:[#allocation6 + $0x60] sm:$0xff]
    %v2229 = vld [vmem:[#allocation6 + $0x68] sm:$0xff]
    %v2230 = vld [vmem:[#allocation6 + $0x70] sm:$0xff]
    %v2231 = vld [vmem:[#allocation6 + $0x78] sm:$0xff]
    %v2232 = vld [vmem:[#allocation6 + $0x80] sm:$0xff]
    %v2233 = vld [vmem:[#allocation6 + $0x88] sm:$0xff]
    %v2234 = vld [vmem:[#allocation6 + $0x90] sm:$0xff]
    %v2235 = vld [vmem:[#allocation6 + $0x98] sm:$0xff]
    %v2236 = vld [vmem:[#allocation6 + $0xa0] sm:$0xff]
    %v2237 = vld [vmem:[#allocation6 + $0xa8] sm:$0xff]
    %v2238 = vld [vmem:[#allocation6 + $0xb0] sm:$0xff]
    %v2239 = vld [vmem:[#allocation6 + $0xb8] sm:$0xff]
    %v2240 = vld [vmem:[#allocation6 + $0xc0] sm:$0xff]
    %v2241 = vld [vmem:[#allocation6 + $0xc8] sm:$0xff]
    %v2242 = vld [vmem:[#allocation6 + $0xd0] sm:$0xff]
    %v2243 = vld [vmem:[#allocation6 + $0xd8] sm:$0xff]
    %v2244 = vld [vmem:[#allocation6 + $0xe0] sm:$0xff]
    %v2245 = vld [vmem:[#allocation6 + $0xe8] sm:$0xff]
    %v2246 = vld [vmem:[#allocation6 + $0xf0] sm:$0xff]
    %v2247 = vld [vmem:[#allocation6 + $0xf8] sm:$0xff]
    %v2248 = vld [vmem:[#allocation6 + $0x100] sm:$0xff]
    %v2249 = vld [vmem:[#allocation6 + $0x108] sm:$0xff]
    %v2250 = vld [vmem:[#allocation6 + $0x110] sm:$0xff]
    %v2251 = vld [vmem:[#allocation6 + $0x118] sm:$0xff]
    %v2252 = vld [vmem:[#allocation6 + $0x120] sm:$0xff]
    %v2253 = vld [vmem:[#allocation6 + $0x128] sm:$0xff]
    %v2254 = vld [vmem:[#allocation6 + $0x130] sm:$0xff]
    %v2255 = vld [vmem:[#allocation6 + $0x138] sm:$0xff]
    %v2256 = vld [vmem:[#allocation6 + $0x140] sm:$0xff]
    %v2257 = vld [vmem:[#allocation6 + $0x148] sm:$0xff]
    %v2258 = vld [vmem:[#allocation6 + $0x150] sm:$0xff]
    %v2259 = vld [vmem:[#allocation6 + $0x158] sm:$0xff]
    %v2260 = vld [vmem:[#allocation6 + $0x160] sm:$0xff]
    %v2261 = vld [vmem:[#allocation6 + $0x168] sm:$0xff]
    %v2262 = vld [vmem:[#allocation6 + $0x170] sm:$0xff]
    %v2263 = vld [vmem:[#allocation6 + $0x178] sm:$0xff]
    %2264 = vmatprep.subr.mxu0 %v2217
    %2265 = vmatpush1.msra.mxu0 %v2216
    %2266 = vmatprep.subr.mxu0 %v2220
    %2267 = vmatpush1.msra.mxu0 %v2219
    %2268 = vmatprep.subr.mxu0 %v2223
    %2269 = vmatpush1.msra.mxu0 %v2222
    %2270 = vmatprep.subr.mxu0 %v2226
    %2271 = vmatpush1.msra.mxu0 %v2225
    %2272 = vmatprep.subr.mxu0 %v2229
    %2273 = vmatpush1.msra.mxu0 %v2228
    %2274 = vmatprep.subr.mxu0 %v2232
    %2275 = vmatpush1.msra.mxu0 %v2231
    %2276 = vmatprep.subr.mxu0 %v2235
    %2277 = vmatpush1.msra.mxu0 %v2234
    %2278 = vmatprep.subr.mxu0 %v2238
    %2279 = vmatpush1.msra.mxu0 %v2237
    %2280 = vmatprep.subr.mxu0 %v2241
    %2281 = vmatpush1.msra.mxu0 %v2240
    %2282 = vmatprep.subr.mxu0 %v2244
    %2283 = vmatpush1.msra.mxu0 %v2243
    %2284 = vmatprep.subr.mxu0 %v2247
    %2285 = vmatpush1.msra.mxu0 %v2246
    %2286 = vmatprep.subr.mxu0 %v2250
    %2287 = vmatpush1.msra.mxu0 %v2249
    %2288 = vmatprep.subr.mxu0 %v2253
    %2289 = vmatpush1.msra.mxu0 %v2252
    %2290 = vmatprep.subr.mxu0 %v2256
    %2291 = vmatpush1.msra.mxu0 %v2255
    %2292 = vmatprep.subr.mxu0 %v2259
    %2293 = vmatpush1.msra.mxu0 %v2258
    %2294 = vmatprep.subr.mxu0 %v2262
    %2295 = vmatpush1.msra.mxu0 %v2261
    %2296 = vmatprep.subr.mxu0 0.0
    %2297 = vmatpush1.msra.mxu0 0.0
    %2298 = vmatprep.subr.mxu0 0.0
    %2299 = vmatpush1.msra.mxu0 0.0
    %2300 = vmatprep.subr.mxu0 0.0
    %2301 = vmatpush1.msra.mxu0 0.0
    %2302 = vmatprep.subr.mxu0 0.0
    %2303 = vmatpush1.msra.mxu0 0.0
    %2304 = vmatprep.subr.mxu0 0.0
    %2305 = vmatpush1.msra.mxu0 0.0
    %2306 = vmatprep.subr.mxu0 0.0
    %2307 = vmatpush1.msra.mxu0 0.0
    %2308 = vmatprep.subr.mxu0 0.0
    %2309 = vmatpush1.msra.mxu0 0.0
    %2310 = vmatprep.subr.mxu0 0.0
    %2311 = vmatpush1.msra.mxu0 0.0
    %2312 = vmatprep.subr.mxu0 0.0
    %2313 = vmatpush1.msra.mxu0 0.0
    %2314 = vmatprep.subr.mxu0 0.0
    %2315 = vmatpush1.msra.mxu0 0.0
    %2316 = vmatprep.subr.mxu0 0.0
    %2317 = vmatpush1.msra.mxu0 0.0
    %2318 = vmatprep.subr.mxu0 0.0
    %2319 = vmatpush1.msra.mxu0 0.0
    %2320 = vmatprep.subr.mxu0 0.0
    %2321 = vmatpush1.msra.mxu0 0.0
    %2322 = vmatprep.subr.mxu0 0.0
    %2323 = vmatpush1.msra.mxu0 0.0
    %2324 = vmatprep.subr.mxu0 0.0
    %2325 = vmatpush1.msra.mxu0 0.0
    %2326 = vmatprep.subr.mxu0 0.0
    %2327 = vmatpush1.msra.mxu0 0.0
    %2328 = vmatprep.mubr.f32.mxu0 0.0
    %2329 = vmatmul.mubr.f32.gmra.mrb[0].mxu0 %v1817
    %v2330 = vpop.f32.mrb[0].mxu0
    %v2331 = vadd.f32 %v355, %v2330
    %v2332 = vpop.f32.mrb[0].mxu0
    %v2333 = vadd.f32 %v359, %v2332
    %2334 = vdwg.mxu0
    %2335 = vmatprep.subr.mxu0 0.0
    %2336 = vmatpush1.msra.mxu0 %v2218
    %2337 = vmatprep.subr.mxu0 0.0
    %2338 = vmatpush1.msra.mxu0 %v2221
    %2339 = vmatprep.subr.mxu0 0.0
    %2340 = vmatpush1.msra.mxu0 %v2224
    %2341 = vmatprep.subr.mxu0 0.0
    %2342 = vmatpush1.msra.mxu0 %v2227
    %2343 = vmatprep.subr.mxu0 0.0
    %2344 = vmatpush1.msra.mxu0 %v2230
    %2345 = vmatprep.subr.mxu0 0.0
    %2346 = vmatpush1.msra.mxu0 %v2233
    %2347 = vmatprep.subr.mxu0 0.0
    %2348 = vmatpush1.msra.mxu0 %v2236
    %2349 = vmatprep.subr.mxu0 0.0
    %2350 = vmatpush1.msra.mxu0 %v2239
    %2351 = vmatprep.subr.mxu0 0.0
    %2352 = vmatpush1.msra.mxu0 %v2242
    %2353 = vmatprep.subr.mxu0 0.0
    %2354 = vmatpush1.msra.mxu0 %v2245
    %2355 = vmatprep.subr.mxu0 0.0
    %2356 = vmatpush1.msra.mxu0 %v2248
    %2357 = vmatprep.subr.mxu0 0.0
    %2358 = vmatpush1.msra.mxu0 %v2251
    %2359 = vmatprep.subr.mxu0 0.0
    %2360 = vmatpush1.msra.mxu0 %v2254
    %2361 = vmatprep.subr.mxu0 0.0
    %2362 = vmatpush1.msra.mxu0 %v2257
    %2363 = vmatprep.subr.mxu0 0.0
    %2364 = vmatpush1.msra.mxu0 %v2260
    %2365 = vmatprep.subr.mxu0 0.0
    %2366 = vmatpush1.msra.mxu0 %v2263
    %2367 = vmatprep.subr.mxu0 0.0
    %2368 = vmatpush1.msra.mxu0 0.0
    %2369 = vmatprep.subr.mxu0 0.0
    %2370 = vmatpush1.msra.mxu0 0.0
    %2371 = vmatprep.subr.mxu0 0.0
    %2372 = vmatpush1.msra.mxu0 0.0
    %2373 = vmatprep.subr.mxu0 0.0
    %2374 = vmatpush1.msra.mxu0 0.0
    %2375 = vmatprep.subr.mxu0 0.0
    %2376 = vmatpush1.msra.mxu0 0.0
    %2377 = vmatprep.subr.mxu0 0.0
    %2378 = vmatpush1.msra.mxu0 0.0
    %2379 = vmatprep.subr.mxu0 0.0
    %2380 = vmatpush1.msra.mxu0 0.0
    %2381 = vmatprep.subr.mxu0 0.0
    %2382 = vmatpush1.msra.mxu0 0.0
    %2383 = vmatprep.subr.mxu0 0.0
    %2384 = vmatpush1.msra.mxu0 0.0
    %2385 = vmatprep.subr.mxu0 0.0
    %2386 = vmatpush1.msra.mxu0 0.0
    %2387 = vmatprep.subr.mxu0 0.0
    %2388 = vmatpush1.msra.mxu0 0.0
    %2389 = vmatprep.subr.mxu0 0.0
    %2390 = vmatpush1.msra.mxu0 0.0
    %2391 = vmatprep.subr.mxu0 0.0
    %2392 = vmatpush1.msra.mxu0 0.0
    %2393 = vmatprep.subr.mxu0 0.0
    %2394 = vmatpush1.msra.mxu0 0.0
    %2395 = vmatprep.subr.mxu0 0.0
    %2396 = vmatpush1.msra.mxu0 0.0
    %2397 = vmatprep.subr.mxu0 0.0
    %2398 = vmatpush1.msra.mxu0 0.0
    %2399 = vmatprep.mubr.f32.mxu0 0.0
    %2400 = vmatmul.mubr.f32.gmra.mrb[0].mxu0 %v1817
    %v2401 = vpop.f32.mrb[0].mxu0
    %v2402 = vadd.f32 %v363, %v2401
    %v2403 = vpop.f32.mrb[0].mxu0
    %2404 = vdwg.mxu0
    %v2405 = vadd.f32 %v2213, %v2331
    %v2406 = vadd.f32 %v2214, %v2333
    %v2407 = vmul.f32 %v2405, 0.5
    %v2408 = vmul.f32 %v2406, 0.5
    %v2409 = vtanh.pop %v2407
    %v2410 = vtanh.pop %v2408
    %v2411 = vmul.f32 %v2409, 0.5
    %v2412 = vmul.f32 %v2410, 0.5
    %v2413 = vadd.f32 %v2411, 0.5
    %v2414 = vadd.f32 %v2412, 0.5
    %v2415 = vmul.f32 %v2413, %v2402
    %v2416 = vadd.f32 %v2215, %v2415
    %v2417 = vtanh.pop %v2416
    %v2418 = vsub.f32 %v1817, %v2417
    %v2419 = vmul.f32 %v2414, %v2418
    %v2420 = vadd.f32 %v2417, %v2419
    %v2421 = vld [vmem:[#allocation3] sm:$0xff]
    %v2422 = vld [vmem:[#allocation3 + $0x8] sm:$0xff]
    %v2423 = vld [vmem:[#allocation3 + $0x10] sm:$0xff]
    %v2424 = vld [vmem:[#allocation3 + $0x18] sm:$0xff]
    %v2425 = vld [vmem:[#allocation3 + $0x20] sm:$0xff]
    %v2426 = vld [vmem:[#allocation3 + $0x28] sm:$0xff]
    %v2427 = vld [vmem:[#allocation3 + $0x30] sm:$0xff]
    %v2428 = vld [vmem:[#allocation3 + $0x38] sm:$0xff]
    %v2429 = vld [vmem:[#allocation3 + $0x40] sm:$0xff]
    %v2430 = vld [vmem:[#allocation3 + $0x48] sm:$0xff]
    %v2431 = vld [vmem:[#allocation3 + $0x50] sm:$0xff]
    %v2432 = vld [vmem:[#allocation3 + $0x58] sm:$0xff]
    %v2433 = vld [vmem:[#allocation3 + $0x60] sm:$0xff]
    %v2434 = vld [vmem:[#allocation3 + $0x68] sm:$0xff]
    %v2435 = vld [vmem:[#allocation3 + $0x70] sm:$0xff]
    %v2436 = vld [vmem:[#allocation3 + $0x78] sm:$0xff]
    %v2437 = vld [vmem:[#allocation3 + $0x80] sm:$0xff]
    %v2438 = vld [vmem:[#allocation3 + $0x88] sm:$0xff]
    %v2439 = vld [vmem:[#allocation3 + $0x90] sm:$0xff]
    %v2440 = vld [vmem:[#allocation3 + $0x98] sm:$0xff]
    %v2441 = vld [vmem:[#allocation3 + $0xa0] sm:$0xff]
    %v2442 = vld [vmem:[#allocation3 + $0xa8] sm:$0xff]
    %v2443 = vld [vmem:[#allocation3 + $0xb0] sm:$0xff]
    %v2444 = vld [vmem:[#allocation3 + $0xb8] sm:$0xff]
    %v2445 = vld [vmem:[#allocation3 + $0xc0] sm:$0xff]
    %v2446 = vld [vmem:[#allocation3 + $0xc8] sm:$0xff]
    %v2447 = vld [vmem:[#allocation3 + $0xd0] sm:$0xff]
    %v2448 = vld [vmem:[#allocation3 + $0xd8] sm:$0xff]
    %v2449 = vld [vmem:[#allocation3 + $0xe0] sm:$0xff]
    %v2450 = vld [vmem:[#allocation3 + $0xe8] sm:$0xff]
    %v2451 = vld [vmem:[#allocation3 + $0xf0] sm:$0xff]
    %v2452 = vld [vmem:[#allocation3 + $0xf8] sm:$0xff]
    %v2453 = vld [vmem:[#allocation3 + $0x100] sm:$0xff]
    %v2454 = vld [vmem:[#allocation3 + $0x108] sm:$0xff]
    %v2455 = vld [vmem:[#allocation3 + $0x110] sm:$0xff]
    %v2456 = vld [vmem:[#allocation3 + $0x118] sm:$0xff]
    %v2457 = vld [vmem:[#allocation3 + $0x120] sm:$0xff]
    %v2458 = vld [vmem:[#allocation3 + $0x128] sm:$0xff]
    %v2459 = vld [vmem:[#allocation3 + $0x130] sm:$0xff]
    %v2460 = vld [vmem:[#allocation3 + $0x138] sm:$0xff]
    %v2461 = vld [vmem:[#allocation3 + $0x140] sm:$0xff]
    %v2462 = vld [vmem:[#allocation3 + $0x148] sm:$0xff]
    %v2463 = vld [vmem:[#allocation3 + $0x150] sm:$0xff]
    %v2464 = vld [vmem:[#allocation3 + $0x158] sm:$0xff]
    %v2465 = vld [vmem:[#allocation3 + $0x160] sm:$0xff]
    %v2466 = vld [vmem:[#allocation3 + $0x168] sm:$0xff]
    %v2467 = vld [vmem:[#allocation3 + $0x170] sm:$0xff]
    %v2468 = vld [vmem:[#allocation3 + $0x178] sm:$0xff]
    %2469 = vmatprep.subr.mxu0 %v2422
    %2470 = vmatpush1.msra.mxu0 %v2421
    %2471 = vmatprep.subr.mxu0 %v2425
    %2472 = vmatpush1.msra.mxu0 %v2424
    %2473 = vmatprep.subr.mxu0 %v2428
    %2474 = vmatpush1.msra.mxu0 %v2427
    %2475 = vmatprep.subr.mxu0 %v2431
    %2476 = vmatpush1.msra.mxu0 %v2430
    %2477 = vmatprep.subr.mxu0 %v2434
    %2478 = vmatpush1.msra.mxu0 %v2433
    %2479 = vmatprep.subr.mxu0 %v2437
    %2480 = vmatpush1.msra.mxu0 %v2436
    %2481 = vmatprep.subr.mxu0 %v2440
    %2482 = vmatpush1.msra.mxu0 %v2439
    %2483 = vmatprep.subr.mxu0 %v2443
    %2484 = vmatpush1.msra.mxu0 %v2442
    %2485 = vmatprep.subr.mxu0 %v2446
    %2486 = vmatpush1.msra.mxu0 %v2445
    %2487 = vmatprep.subr.mxu0 %v2449
    %2488 = vmatpush1.msra.mxu0 %v2448
    %2489 = vmatprep.subr.mxu0 %v2452
    %2490 = vmatpush1.msra.mxu0 %v2451
    %2491 = vmatprep.subr.mxu0 %v2455
    %2492 = vmatpush1.msra.mxu0 %v2454
    %2493 = vmatprep.subr.mxu0 %v2458
    %2494 = vmatpush1.msra.mxu0 %v2457
    %2495 = vmatprep.subr.mxu0 %v2461
    %2496 = vmatpush1.msra.mxu0 %v2460
    %2497 = vmatprep.subr.mxu0 %v2464
    %2498 = vmatpush1.msra.mxu0 %v2463
    %2499 = vmatprep.subr.mxu0 %v2467
    %2500 = vmatpush1.msra.mxu0 %v2466
    %2501 = vmatprep.subr.mxu0 0.0
    %2502 = vmatpush1.msra.mxu0 0.0
    %2503 = vmatprep.subr.mxu0 0.0
    %2504 = vmatpush1.msra.mxu0 0.0
    %2505 = vmatprep.subr.mxu0 0.0
    %2506 = vmatpush1.msra.mxu0 0.0
    %2507 = vmatprep.subr.mxu0 0.0
    %2508 = vmatpush1.msra.mxu0 0.0
    %2509 = vmatprep.subr.mxu0 0.0
    %2510 = vmatpush1.msra.mxu0 0.0
    %2511 = vmatprep.subr.mxu0 0.0
    %2512 = vmatpush1.msra.mxu0 0.0
    %2513 = vmatprep.subr.mxu0 0.0
    %2514 = vmatpush1.msra.mxu0 0.0
    %2515 = vmatprep.subr.mxu0 0.0
    %2516 = vmatpush1.msra.mxu0 0.0
    %2517 = vmatprep.subr.mxu0 0.0
    %2518 = vmatpush1.msra.mxu0 0.0
    %2519 = vmatprep.subr.mxu0 0.0
    %2520 = vmatpush1.msra.mxu0 0.0
    %2521 = vmatprep.subr.mxu0 0.0
    %2522 = vmatpush1.msra.mxu0 0.0
    %2523 = vmatprep.subr.mxu0 0.0
    %2524 = vmatpush1.msra.mxu0 0.0
    %2525 = vmatprep.subr.mxu0 0.0
    %2526 = vmatpush1.msra.mxu0 0.0
    %2527 = vmatprep.subr.mxu0 0.0
    %2528 = vmatpush1.msra.mxu0 0.0
    %2529 = vmatprep.subr.mxu0 0.0
    %2530 = vmatpush1.msra.mxu0 0.0
    %2531 = vmatprep.subr.mxu0 0.0
    %2532 = vmatpush1.msra.mxu0 0.0
    %2533 = vmatprep.mubr.f32.mxu0 0.0
    %2534 = vmatmul.mubr.f32.gmra.mrb[0].mxu0 %v2420
    %v2535 = vpop.f32.mrb[0].mxu0
    %v2536 = vadd.f32 %v391, %v2535
    %v2537 = vpop.f32.mrb[0].mxu0
    %v2538 = vadd.f32 %v395, %v2537
    %2539 = vdwg.mxu0
    %2540 = vmatprep.subr.mxu0 0.0
    %2541 = vmatpush1.msra.mxu0 %v2423
    %2542 = vmatprep.subr.mxu0 0.0
    %2543 = vmatpush1.msra.mxu0 %v2426
    %2544 = vmatprep.subr.mxu0 0.0
    %2545 = vmatpush1.msra.mxu0 %v2429
    %2546 = vmatprep.subr.mxu0 0.0
    %2547 = vmatpush1.msra.mxu0 %v2432
    %2548 = vmatprep.subr.mxu0 0.0
    %2549 = vmatpush1.msra.mxu0 %v2435
    %2550 = vmatprep.subr.mxu0 0.0
    %2551 = vmatpush1.msra.mxu0 %v2438
    %2552 = vmatprep.subr.mxu0 0.0
    %2553 = vmatpush1.msra.mxu0 %v2441
    %2554 = vmatprep.subr.mxu0 0.0
    %2555 = vmatpush1.msra.mxu0 %v2444
    %2556 = vmatprep.subr.mxu0 0.0
    %2557 = vmatpush1.msra.mxu0 %v2447
    %2558 = vmatprep.subr.mxu0 0.0
    %2559 = vmatpush1.msra.mxu0 %v2450
    %2560 = vmatprep.subr.mxu0 0.0
    %2561 = vmatpush1.msra.mxu0 %v2453
    %2562 = vmatprep.subr.mxu0 0.0
    %2563 = vmatpush1.msra.mxu0 %v2456
    %2564 = vmatprep.subr.mxu0 0.0
    %2565 = vmatpush1.msra.mxu0 %v2459
    %2566 = vmatprep.subr.mxu0 0.0
    %2567 = vmatpush1.msra.mxu0 %v2462
    %2568 = vmatprep.subr.mxu0 0.0
    %2569 = vmatpush1.msra.mxu0 %v2465
    %2570 = vmatprep.subr.mxu0 0.0
    %2571 = vmatpush1.msra.mxu0 %v2468
    %2572 = vmatprep.subr.mxu0 0.0
    %2573 = vmatpush1.msra.mxu0 0.0
    %2574 = vmatprep.subr.mxu0 0.0
    %2575 = vmatpush1.msra.mxu0 0.0
    %2576 = vmatprep.subr.mxu0 0.0
    %2577 = vmatpush1.msra.mxu0 0.0
    %2578 = vmatprep.subr.mxu0 0.0
    %2579 = vmatpush1.msra.mxu0 0.0
    %2580 = vmatprep.subr.mxu0 0.0
    %2581 = vmatpush1.msra.mxu0 0.0
    %2582 = vmatprep.subr.mxu0 0.0
    %2583 = vmatpush1.msra.mxu0 0.0
    %2584 = vmatprep.subr.mxu0 0.0
    %2585 = vmatpush1.msra.mxu0 0.0
    %2586 = vmatprep.subr.mxu0 0.0
    %2587 = vmatpush1.msra.mxu0 0.0
    %2588 = vmatprep.subr.mxu0 0.0
    %2589 = vmatpush1.msra.mxu0 0.0
    %2590 = vmatprep.subr.mxu0 0.0
    %2591 = vmatpush1.msra.mxu0 0.0
    %2592 = vmatprep.subr.mxu0 0.0
    %2593 = vmatpush1.msra.mxu0 0.0
    %2594 = vmatprep.subr.mxu0 0.0
    %2595 = vmatpush1.msra.mxu0 0.0
    %2596 = vmatprep.subr.mxu0 0.0
    %2597 = vmatpush1.msra.mxu0 0.0
    %2598 = vmatprep.subr.mxu0 0.0
    %2599 = vmatpush1.msra.mxu0 0.0
    %2600 = vmatprep.subr.mxu0 0.0
    %2601 = vmatpush1.msra.mxu0 0.0
    %2602 = vmatprep.subr.mxu0 0.0
    %2603 = vmatpush1.msra.mxu0 0.0
    %2604 = vmatprep.mubr.f32.mxu0 0.0
    %2605 = vmatmul.mubr.f32.gmra.mrb[0].mxu0 %v2420
    %v2606 = vpop.f32.mrb[0].mxu0
    %v2607 = vadd.f32 %v399, %v2606
    %v2608 = vpop.f32.mrb[0].mxu0
    %2609 = vdwg.mxu0
    %v2610 = vld [vmem:[%s800] sm:$0xff]
    %v2611 = vld [vmem:[%s800 + $0x8] sm:$0xff]
    %v2612 = vld [vmem:[%s800 + $0x10] sm:$0xff]
    %v2613 = vld [vmem:[%s800 + $0x18] sm:$0xff]
    %v2614 = vld [vmem:[%s800 + $0x20] sm:$0xff]
    %v2615 = vld [vmem:[%s800 + $0x28] sm:$0xff]
    %v2616 = vld [vmem:[%s800 + $0x30] sm:$0xff]
    %v2617 = vld [vmem:[%s800 + $0x38] sm:$0xff]
    %v2618 = vld [vmem:[%s800 + $0x40] sm:$0xff]
    %v2619 = vld [vmem:[%s800 + $0x48] sm:$0xff]
    %v2620 = vld [vmem:[%s800 + $0x50] sm:$0xff]
    %v2621 = vld [vmem:[%s800 + $0x58] sm:$0xff]
    %v2622 = vld [vmem:[%s800 + $0x60] sm:$0xff]
    %v2623 = vld [vmem:[%s800 + $0x68] sm:$0xff]
    %v2624 = vld [vmem:[%s800 + $0x70] sm:$0xff]
    %v2625 = vld [vmem:[%s800 + $0x78] sm:$0xff]
    %v2626 = vld [vmem:[%s800 + $0x80] sm:$0xff]
    %v2627 = vld [vmem:[%s800 + $0x88] sm:$0xff]
    %v2628 = vld [vmem:[%s800 + $0x90] sm:$0xff]
    %v2629 = vld [vmem:[%s800 + $0x98] sm:$0xff]
    %v2630 = vld [vmem:[%s800 + $0xa0] sm:$0xff]
    %v2631 = vld [vmem:[%s800 + $0xa8] sm:$0xff]
    %v2632 = vld [vmem:[%s800 + $0xb0] sm:$0xff]
    %v2633 = vld [vmem:[%s800 + $0xb8] sm:$0xff]
    %v2634 = vld [vmem:[%s800 + $0xc0] sm:$0xff]
    %v2635 = vld [vmem:[%s800 + $0xc8] sm:$0xff]
    %v2636 = vld [vmem:[%s800 + $0xd0] sm:$0xff]
    %v2637 = vld [vmem:[%s800 + $0xd8] sm:$0xff]
    %v2638 = vld [vmem:[%s800 + $0xe0] sm:$0xff]
    %v2639 = vld [vmem:[%s800 + $0xe8] sm:$0xff]
    %v2640 = vld [vmem:[%s800 + $0xf0] sm:$0xff]
    %v2641 = vld [vmem:[%s800 + $0xf8] sm:$0xff]
    %v2642 = vld [vmem:[%s800 + $0x100] sm:$0xff]
    %v2643 = vld [vmem:[%s800 + $0x108] sm:$0xff]
    %v2644 = vld [vmem:[%s800 + $0x110] sm:$0xff]
    %v2645 = vld [vmem:[%s800 + $0x118] sm:$0xff]
    %v2646 = vld [vmem:[%s800 + $0x120] sm:$0xff]
    %v2647 = vld [vmem:[%s800 + $0x128] sm:$0xff]
    %v2648 = vld [vmem:[%s800 + $0x130] sm:$0xff]
    %v2649 = vld [vmem:[%s800 + $0x138] sm:$0xff]
    %v2650 = vld [vmem:[%s800 + $0x140] sm:$0xff]
    %v2651 = vld [vmem:[%s800 + $0x148] sm:$0xff]
    %v2652 = vld [vmem:[%s800 + $0x150] sm:$0xff]
    %v2653 = vld [vmem:[%s800 + $0x158] sm:$0xff]
    %v2654 = vld [vmem:[%s800 + $0x160] sm:$0xff]
    %v2655 = vld [vmem:[%s800 + $0x168] sm:$0xff]
    %v2656 = vld [vmem:[%s800 + $0x170] sm:$0xff]
    %v2657 = vld [vmem:[%s800 + $0x178] sm:$0xff]
    %2658 = vmatprep.subr.mxu0 %v2611
    %2659 = vmatpush1.msra.mxu0 %v2610
    %2660 = vmatprep.subr.mxu0 %v2614
    %2661 = vmatpush1.msra.mxu0 %v2613
    %2662 = vmatprep.subr.mxu0 %v2617
    %2663 = vmatpush1.msra.mxu0 %v2616
    %2664 = vmatprep.subr.mxu0 %v2620
    %2665 = vmatpush1.msra.mxu0 %v2619
    %2666 = vmatprep.subr.mxu0 %v2623
    %2667 = vmatpush1.msra.mxu0 %v2622
    %2668 = vmatprep.subr.mxu0 %v2626
    %2669 = vmatpush1.msra.mxu0 %v2625
    %2670 = vmatprep.subr.mxu0 %v2629
    %2671 = vmatpush1.msra.mxu0 %v2628
    %2672 = vmatprep.subr.mxu0 %v2632
    %2673 = vmatpush1.msra.mxu0 %v2631
    %2674 = vmatprep.subr.mxu0 %v2635
    %2675 = vmatpush1.msra.mxu0 %v2634
    %2676 = vmatprep.subr.mxu0 %v2638
    %2677 = vmatpush1.msra.mxu0 %v2637
    %2678 = vmatprep.subr.mxu0 %v2641
    %2679 = vmatpush1.msra.mxu0 %v2640
    %2680 = vmatprep.subr.mxu0 %v2644
    %2681 = vmatpush1.msra.mxu0 %v2643
    %2682 = vmatprep.subr.mxu0 %v2647
    %2683 = vmatpush1.msra.mxu0 %v2646
    %2684 = vmatprep.subr.mxu0 %v2650
    %2685 = vmatpush1.msra.mxu0 %v2649
    %2686 = vmatprep.subr.mxu0 %v2653
    %2687 = vmatpush1.msra.mxu0 %v2652
    %2688 = vmatprep.subr.mxu0 %v2656
    %2689 = vmatpush1.msra.mxu0 %v2655
    %2690 = vmatprep.subr.mxu0 0.0
    %2691 = vmatpush1.msra.mxu0 0.0
    %2692 = vmatprep.subr.mxu0 0.0
    %2693 = vmatpush1.msra.mxu0 0.0
    %2694 = vmatprep.subr.mxu0 0.0
    %2695 = vmatpush1.msra.mxu0 0.0
    %2696 = vmatprep.subr.mxu0 0.0
    %2697 = vmatpush1.msra.mxu0 0.0
    %2698 = vmatprep.subr.mxu0 0.0
    %2699 = vmatpush1.msra.mxu0 0.0
    %2700 = vmatprep.subr.mxu0 0.0
    %2701 = vmatpush1.msra.mxu0 0.0
    %2702 = vmatprep.subr.mxu0 0.0
    %2703 = vmatpush1.msra.mxu0 0.0
    %2704 = vmatprep.subr.mxu0 0.0
    %2705 = vmatpush1.msra.mxu0 0.0
    %2706 = vmatprep.subr.mxu0 0.0
    %2707 = vmatpush1.msra.mxu0 0.0
    %2708 = vmatprep.subr.mxu0 0.0
    %2709 = vmatpush1.msra.mxu0 0.0
    %2710 = vmatprep.subr.mxu0 0.0
    %2711 = vmatpush1.msra.mxu0 0.0
    %2712 = vmatprep.subr.mxu0 0.0
    %2713 = vmatpush1.msra.mxu0 0.0
    %2714 = vmatprep.subr.mxu0 0.0
    %2715 = vmatpush1.msra.mxu0 0.0
    %2716 = vmatprep.subr.mxu0 0.0
    %2717 = vmatpush1.msra.mxu0 0.0
    %2718 = vmatprep.subr.mxu0 0.0
    %2719 = vmatpush1.msra.mxu0 0.0
    %2720 = vmatprep.subr.mxu0 0.0
    %2721 = vmatpush1.msra.mxu0 0.0
    %2722 = vmatprep.mubr.f32.mxu0 0.0
    %2723 = vmatmul.mubr.f32.gmra.mrb[0].mxu0 %v2211
    %v2724 = vpop.f32.mrb[0].mxu0
    %v2725 = vadd.f32 %v373, %v2724
    %v2726 = vpop.f32.mrb[0].mxu0
    %v2727 = vadd.f32 %v377, %v2726
    %2728 = vdwg.mxu0
    %2729 = vmatprep.subr.mxu0 0.0
    %2730 = vmatpush1.msra.mxu0 %v2612
    %2731 = vmatprep.subr.mxu0 0.0
    %2732 = vmatpush1.msra.mxu0 %v2615
    %2733 = vmatprep.subr.mxu0 0.0
    %2734 = vmatpush1.msra.mxu0 %v2618
    %2735 = vmatprep.subr.mxu0 0.0
    %2736 = vmatpush1.msra.mxu0 %v2621
    %2737 = vmatprep.subr.mxu0 0.0
    %2738 = vmatpush1.msra.mxu0 %v2624
    %2739 = vmatprep.subr.mxu0 0.0
    %2740 = vmatpush1.msra.mxu0 %v2627
    %2741 = vmatprep.subr.mxu0 0.0
    %2742 = vmatpush1.msra.mxu0 %v2630
    %2743 = vmatprep.subr.mxu0 0.0
    %2744 = vmatpush1.msra.mxu0 %v2633
    %2745 = vmatprep.subr.mxu0 0.0
    %2746 = vmatpush1.msra.mxu0 %v2636
    %2747 = vmatprep.subr.mxu0 0.0
    %2748 = vmatpush1.msra.mxu0 %v2639
    %2749 = vmatprep.subr.mxu0 0.0
    %2750 = vmatpush1.msra.mxu0 %v2642
    %2751 = vmatprep.subr.mxu0 0.0
    %2752 = vmatpush1.msra.mxu0 %v2645
    %2753 = vmatprep.subr.mxu0 0.0
    %2754 = vmatpush1.msra.mxu0 %v2648
    %2755 = vmatprep.subr.mxu0 0.0
    %2756 = vmatpush1.msra.mxu0 %v2651
    %2757 = vmatprep.subr.mxu0 0.0
    %2758 = vmatpush1.msra.mxu0 %v2654
    %2759 = vmatprep.subr.mxu0 0.0
    %2760 = vmatpush1.msra.mxu0 %v2657
    %2761 = vmatprep.subr.mxu0 0.0
    %2762 = vmatpush1.msra.mxu0 0.0
    %2763 = vmatprep.subr.mxu0 0.0
    %2764 = vmatpush1.msra.mxu0 0.0
    %2765 = vmatprep.subr.mxu0 0.0
    %2766 = vmatpush1.msra.mxu0 0.0
    %2767 = vmatprep.subr.mxu0 0.0
    %2768 = vmatpush1.msra.mxu0 0.0
    %2769 = vmatprep.subr.mxu0 0.0
    %2770 = vmatpush1.msra.mxu0 0.0
    %2771 = vmatprep.subr.mxu0 0.0
    %2772 = vmatpush1.msra.mxu0 0.0
    %2773 = vmatprep.subr.mxu0 0.0
    %2774 = vmatpush1.msra.mxu0 0.0
    %2775 = vmatprep.subr.mxu0 0.0
    %2776 = vmatpush1.msra.mxu0 0.0
    %2777 = vmatprep.subr.mxu0 0.0
    %2778 = vmatpush1.msra.mxu0 0.0
    %2779 = vmatprep.subr.mxu0 0.0
    %2780 = vmatpush1.msra.mxu0 0.0
    %2781 = vmatprep.subr.mxu0 0.0
    %2782 = vmatpush1.msra.mxu0 0.0
    %2783 = vmatprep.subr.mxu0 0.0
    %2784 = vmatpush1.msra.mxu0 0.0
    %2785 = vmatprep.subr.mxu0 0.0
    %2786 = vmatpush1.msra.mxu0 0.0
    %2787 = vmatprep.subr.mxu0 0.0
    %2788 = vmatpush1.msra.mxu0 0.0
    %2789 = vmatprep.subr.mxu0 0.0
    %2790 = vmatpush1.msra.mxu0 0.0
    %2791 = vmatprep.subr.mxu0 0.0
    %2792 = vmatpush1.msra.mxu0 0.0
    %2793 = vmatprep.mubr.f32.mxu0 0.0
    %2794 = vmatmul.mubr.f32.gmra.mrb[0].mxu0 %v2211
    %v2795 = vpop.f32.mrb[0].mxu0
    %v2796 = vadd.f32 %v381, %v2795
    %v2797 = vpop.f32.mrb[0].mxu0
    %2798 = vdwg.mxu0
    %v2799 = vadd.f32 %v2536, %v2725
    %v2800 = vadd.f32 %v2538, %v2727
    %v2801 = vmul.f32 %v2799, 0.5
    %v2802 = vmul.f32 %v2800, 0.5
    %v2803 = vtanh.pop %v2801
    %v2804 = vtanh.pop %v2802
    %v2805 = vmul.f32 %v2803, 0.5
    %v2806 = vmul.f32 %v2804, 0.5
    %v2807 = vadd.f32 %v2805, 0.5
    %v2808 = vadd.f32 %v2806, 0.5
    %v2809 = vmul.f32 %v2807, %v2796
    %v2810 = vadd.f32 %v2607, %v2809
    %v2811 = vtanh.pop %v2810
    %v2812 = vsub.f32 %v2211, %v2811
    %v2813 = vmul.f32 %v2808, %v2812
    %v2814 = vadd.f32 %v2811, %v2813
    %2815 = vst [vmem:[#allocation8 + $0x18] sm:$0xff] %v2814
    %v2816 = vld [vmem:[#allocation2 + $0x60] sm:$0xff]
    %v2817 = vld [vmem:[#allocation2 + $0x68] sm:$0xff]
    %v2818 = vld [vmem:[#allocation2 + $0x70] sm:$0xff]
    %v2819 = vld [vmem:[#allocation6] sm:$0xff]
    %v2820 = vld [vmem:[#allocation6 + $0x8] sm:$0xff]
    %v2821 = vld [vmem:[#allocation6 + $0x10] sm:$0xff]
    %v2822 = vld [vmem:[#allocation6 + $0x18] sm:$0xff]
    %v2823 = vld [vmem:[#allocation6 + $0x20] sm:$0xff]
    %v2824 = vld [vmem:[#allocation6 + $0x28] sm:$0xff]
    %v2825 = vld [vmem:[#allocation6 + $0x30] sm:$0xff]
    %v2826 = vld [vmem:[#allocation6 + $0x38] sm:$0xff]
    %v2827 = vld [vmem:[#allocation6 + $0x40] sm:$0xff]
    %v2828 = vld [vmem:[#allocation6 + $0x48] sm:$0xff]
    %v2829 = vld [vmem:[#allocation6 + $0x50] sm:$0xff]
    %v2830 = vld [vmem:[#allocation6 + $0x58] sm:$0xff]
    %v2831 = vld [vmem:[#allocation6 + $0x60] sm:$0xff]
    %v2832 = vld [vmem:[#allocation6 + $0x68] sm:$0xff]
    %v2833 = vld [vmem:[#allocation6 + $0x70] sm:$0xff]
    %v2834 = vld [vmem:[#allocation6 + $0x78] sm:$0xff]
    %v2835 = vld [vmem:[#allocation6 + $0x80] sm:$0xff]
    %v2836 = vld [vmem:[#allocation6 + $0x88] sm:$0xff]
    %v2837 = vld [vmem:[#allocation6 + $0x90] sm:$0xff]
    %v2838 = vld [vmem:[#allocation6 + $0x98] sm:$0xff]
    %v2839 = vld [vmem:[#allocation6 + $0xa0] sm:$0xff]
    %v2840 = vld [vmem:[#allocation6 + $0xa8] sm:$0xff]
    %v2841 = vld [vmem:[#allocation6 + $0xb0] sm:$0xff]
    %v2842 = vld [vmem:[#allocation6 + $0xb8] sm:$0xff]
    %v2843 = vld [vmem:[#allocation6 + $0xc0] sm:$0xff]
    %v2844 = vld [vmem:[#allocation6 + $0xc8] sm:$0xff]
    %v2845 = vld [vmem:[#allocation6 + $0xd0] sm:$0xff]
    %v2846 = vld [vmem:[#allocation6 + $0xd8] sm:$0xff]
    %v2847 = vld [vmem:[#allocation6 + $0xe0] sm:$0xff]
    %v2848 = vld [vmem:[#allocation6 + $0xe8] sm:$0xff]
    %v2849 = vld [vmem:[#allocation6 + $0xf0] sm:$0xff]
    %v2850 = vld [vmem:[#allocation6 + $0xf8] sm:$0xff]
    %v2851 = vld [vmem:[#allocation6 + $0x100] sm:$0xff]
    %v2852 = vld [vmem:[#allocation6 + $0x108] sm:$0xff]
    %v2853 = vld [vmem:[#allocation6 + $0x110] sm:$0xff]
    %v2854 = vld [vmem:[#allocation6 + $0x118] sm:$0xff]
    %v2855 = vld [vmem:[#allocation6 + $0x120] sm:$0xff]
    %v2856 = vld [vmem:[#allocation6 + $0x128] sm:$0xff]
    %v2857 = vld [vmem:[#allocation6 + $0x130] sm:$0xff]
    %v2858 = vld [vmem:[#allocation6 + $0x138] sm:$0xff]
    %v2859 = vld [vmem:[#allocation6 + $0x140] sm:$0xff]
    %v2860 = vld [vmem:[#allocation6 + $0x148] sm:$0xff]
    %v2861 = vld [vmem:[#allocation6 + $0x150] sm:$0xff]
    %v2862 = vld [vmem:[#allocation6 + $0x158] sm:$0xff]
    %v2863 = vld [vmem:[#allocation6 + $0x160] sm:$0xff]
    %v2864 = vld [vmem:[#allocation6 + $0x168] sm:$0xff]
    %v2865 = vld [vmem:[#allocation6 + $0x170] sm:$0xff]
    %v2866 = vld [vmem:[#allocation6 + $0x178] sm:$0xff]
    %2867 = vmatprep.subr.mxu0 %v2820
    %2868 = vmatpush1.msra.mxu0 %v2819
    %2869 = vmatprep.subr.mxu0 %v2823
    %2870 = vmatpush1.msra.mxu0 %v2822
    %2871 = vmatprep.subr.mxu0 %v2826
    %2872 = vmatpush1.msra.mxu0 %v2825
    %2873 = vmatprep.subr.mxu0 %v2829
    %2874 = vmatpush1.msra.mxu0 %v2828
    %2875 = vmatprep.subr.mxu0 %v2832
    %2876 = vmatpush1.msra.mxu0 %v2831
    %2877 = vmatprep.subr.mxu0 %v2835
    %2878 = vmatpush1.msra.mxu0 %v2834
    %2879 = vmatprep.subr.mxu0 %v2838
    %2880 = vmatpush1.msra.mxu0 %v2837
    %2881 = vmatprep.subr.mxu0 %v2841
    %2882 = vmatpush1.msra.mxu0 %v2840
    %2883 = vmatprep.subr.mxu0 %v2844
    %2884 = vmatpush1.msra.mxu0 %v2843
    %2885 = vmatprep.subr.mxu0 %v2847
    %2886 = vmatpush1.msra.mxu0 %v2846
    %2887 = vmatprep.subr.mxu0 %v2850
    %2888 = vmatpush1.msra.mxu0 %v2849
    %2889 = vmatprep.subr.mxu0 %v2853
    %2890 = vmatpush1.msra.mxu0 %v2852
    %2891 = vmatprep.subr.mxu0 %v2856
    %2892 = vmatpush1.msra.mxu0 %v2855
    %2893 = vmatprep.subr.mxu0 %v2859
    %2894 = vmatpush1.msra.mxu0 %v2858
    %2895 = vmatprep.subr.mxu0 %v2862
    %2896 = vmatpush1.msra.mxu0 %v2861
    %2897 = vmatprep.subr.mxu0 %v2865
    %2898 = vmatpush1.msra.mxu0 %v2864
    %2899 = vmatprep.subr.mxu0 0.0
    %2900 = vmatpush1.msra.mxu0 0.0
    %2901 = vmatprep.subr.mxu0 0.0
    %2902 = vmatpush1.msra.mxu0 0.0
    %2903 = vmatprep.subr.mxu0 0.0
    %2904 = vmatpush1.msra.mxu0 0.0
    %2905 = vmatprep.subr.mxu0 0.0
    %2906 = vmatpush1.msra.mxu0 0.0
    %2907 = vmatprep.subr.mxu0 0.0
    %2908 = vmatpush1.msra.mxu0 0.0
    %2909 = vmatprep.subr.mxu0 0.0
    %2910 = vmatpush1.msra.mxu0 0.0
    %2911 = vmatprep.subr.mxu0 0.0
    %2912 = vmatpush1.msra.mxu0 0.0
    %2913 = vmatprep.subr.mxu0 0.0
    %2914 = vmatpush1.msra.mxu0 0.0
    %2915 = vmatprep.subr.mxu0 0.0
    %2916 = vmatpush1.msra.mxu0 0.0
    %2917 = vmatprep.subr.mxu0 0.0
    %2918 = vmatpush1.msra.mxu0 0.0
    %2919 = vmatprep.subr.mxu0 0.0
    %2920 = vmatpush1.msra.mxu0 0.0
    %2921 = vmatprep.subr.mxu0 0.0
    %2922 = vmatpush1.msra.mxu0 0.0
    %2923 = vmatprep.subr.mxu0 0.0
    %2924 = vmatpush1.msra.mxu0 0.0
    %2925 = vmatprep.subr.mxu0 0.0
    %2926 = vmatpush1.msra.mxu0 0.0
    %2927 = vmatprep.subr.mxu0 0.0
    %2928 = vmatpush1.msra.mxu0 0.0
    %2929 = vmatprep.subr.mxu0 0.0
    %2930 = vmatpush1.msra.mxu0 0.0
    %2931 = vmatprep.mubr.f32.mxu0 0.0
    %2932 = vmatmul.mubr.f32.gmra.mrb[0].mxu0 %v2420
    %v2933 = vpop.f32.mrb[0].mxu0
    %v2934 = vadd.f32 %v355, %v2933
    %v2935 = vpop.f32.mrb[0].mxu0
    %v2936 = vadd.f32 %v359, %v2935
    %2937 = vdwg.mxu0
    %2938 = vmatprep.subr.mxu0 0.0
    %2939 = vmatpush1.msra.mxu0 %v2821
    %2940 = vmatprep.subr.mxu0 0.0
    %2941 = vmatpush1.msra.mxu0 %v2824
    %2942 = vmatprep.subr.mxu0 0.0
    %2943 = vmatpush1.msra.mxu0 %v2827
    %2944 = vmatprep.subr.mxu0 0.0
    %2945 = vmatpush1.msra.mxu0 %v2830
    %2946 = vmatprep.subr.mxu0 0.0
    %2947 = vmatpush1.msra.mxu0 %v2833
    %2948 = vmatprep.subr.mxu0 0.0
    %2949 = vmatpush1.msra.mxu0 %v2836
    %2950 = vmatprep.subr.mxu0 0.0
    %2951 = vmatpush1.msra.mxu0 %v2839
    %2952 = vmatprep.subr.mxu0 0.0
    %2953 = vmatpush1.msra.mxu0 %v2842
    %2954 = vmatprep.subr.mxu0 0.0
    %2955 = vmatpush1.msra.mxu0 %v2845
    %2956 = vmatprep.subr.mxu0 0.0
    %2957 = vmatpush1.msra.mxu0 %v2848
    %2958 = vmatprep.subr.mxu0 0.0
    %2959 = vmatpush1.msra.mxu0 %v2851
    %2960 = vmatprep.subr.mxu0 0.0
    %2961 = vmatpush1.msra.mxu0 %v2854
    %2962 = vmatprep.subr.mxu0 0.0
    %2963 = vmatpush1.msra.mxu0 %v2857
    %2964 = vmatprep.subr.mxu0 0.0
    %2965 = vmatpush1.msra.mxu0 %v2860
    %2966 = vmatprep.subr.mxu0 0.0
    %2967 = vmatpush1.msra.mxu0 %v2863
    %2968 = vmatprep.subr.mxu0 0.0
    %2969 = vmatpush1.msra.mxu0 %v2866
    %2970 = vmatprep.subr.mxu0 0.0
    %2971 = vmatpush1.msra.mxu0 0.0
    %2972 = vmatprep.subr.mxu0 0.0
    %2973 = vmatpush1.msra.mxu0 0.0
    %2974 = vmatprep.subr.mxu0 0.0
    %2975 = vmatpush1.msra.mxu0 0.0
    %2976 = vmatprep.subr.mxu0 0.0
    %2977 = vmatpush1.msra.mxu0 0.0
    %2978 = vmatprep.subr.mxu0 0.0
    %2979 = vmatpush1.msra.mxu0 0.0
    %2980 = vmatprep.subr.mxu0 0.0
    %2981 = vmatpush1.msra.mxu0 0.0
    %2982 = vmatprep.subr.mxu0 0.0
    %2983 = vmatpush1.msra.mxu0 0.0
    %2984 = vmatprep.subr.mxu0 0.0
    %2985 = vmatpush1.msra.mxu0 0.0
    %2986 = vmatprep.subr.mxu0 0.0
    %2987 = vmatpush1.msra.mxu0 0.0
    %2988 = vmatprep.subr.mxu0 0.0
    %2989 = vmatpush1.msra.mxu0 0.0
    %2990 = vmatprep.subr.mxu0 0.0
    %2991 = vmatpush1.msra.mxu0 0.0
    %2992 = vmatprep.subr.mxu0 0.0
    %2993 = vmatpush1.msra.mxu0 0.0
    %2994 = vmatprep.subr.mxu0 0.0
    %2995 = vmatpush1.msra.mxu0 0.0
    %2996 = vmatprep.subr.mxu0 0.0
    %2997 = vmatpush1.msra.mxu0 0.0
    %2998 = vmatprep.subr.mxu0 0.0
    %2999 = vmatpush1.msra.mxu0 0.0
    %3000 = vmatprep.subr.mxu0 0.0
    %3001 = vmatpush1.msra.mxu0 0.0
    %3002 = vmatprep.mubr.f32.mxu0 0.0
    %3003 = vmatmul.mubr.f32.gmra.mrb[0].mxu0 %v2420
    %v3004 = vpop.f32.mrb[0].mxu0
    %v3005 = vadd.f32 %v363, %v3004
    %v3006 = vpop.f32.mrb[0].mxu0
    %3007 = vdwg.mxu0
    %v3008 = vadd.f32 %v2816, %v2934
    %v3009 = vadd.f32 %v2817, %v2936
    %v3010 = vmul.f32 %v3008, 0.5
    %v3011 = vmul.f32 %v3009, 0.5
    %v3012 = vtanh.pop %v3010
    %v3013 = vtanh.pop %v3011
    %v3014 = vmul.f32 %v3012, 0.5
    %v3015 = vmul.f32 %v3013, 0.5
    %v3016 = vadd.f32 %v3014, 0.5
    %v3017 = vadd.f32 %v3015, 0.5
    %v3018 = vmul.f32 %v3016, %v3005
    %v3019 = vadd.f32 %v2818, %v3018
    %v3020 = vtanh.pop %v3019
    %v3021 = vsub.f32 %v2420, %v3020
    %v3022 = vmul.f32 %v3017, %v3021
    %v3023 = vadd.f32 %v3020, %v3022
    %v3024 = vld [vmem:[#allocation3] sm:$0xff]
    %v3025 = vld [vmem:[#allocation3 + $0x8] sm:$0xff]
    %v3026 = vld [vmem:[#allocation3 + $0x10] sm:$0xff]
    %v3027 = vld [vmem:[#allocation3 + $0x18] sm:$0xff]
    %v3028 = vld [vmem:[#allocation3 + $0x20] sm:$0xff]
    %v3029 = vld [vmem:[#allocation3 + $0x28] sm:$0xff]
    %v3030 = vld [vmem:[#allocation3 + $0x30] sm:$0xff]
    %v3031 = vld [vmem:[#allocation3 + $0x38] sm:$0xff]
    %v3032 = vld [vmem:[#allocation3 + $0x40] sm:$0xff]
    %v3033 = vld [vmem:[#allocation3 + $0x48] sm:$0xff]
    %v3034 = vld [vmem:[#allocation3 + $0x50] sm:$0xff]
    %v3035 = vld [vmem:[#allocation3 + $0x58] sm:$0xff]
    %v3036 = vld [vmem:[#allocation3 + $0x60] sm:$0xff]
    %v3037 = vld [vmem:[#allocation3 + $0x68] sm:$0xff]
    %v3038 = vld [vmem:[#allocation3 + $0x70] sm:$0xff]
    %v3039 = vld [vmem:[#allocation3 + $0x78] sm:$0xff]
    %v3040 = vld [vmem:[#allocation3 + $0x80] sm:$0xff]
    %v3041 = vld [vmem:[#allocation3 + $0x88] sm:$0xff]
    %v3042 = vld [vmem:[#allocation3 + $0x90] sm:$0xff]
    %v3043 = vld [vmem:[#allocation3 + $0x98] sm:$0xff]
    %v3044 = vld [vmem:[#allocation3 + $0xa0] sm:$0xff]
    %v3045 = vld [vmem:[#allocation3 + $0xa8] sm:$0xff]
    %v3046 = vld [vmem:[#allocation3 + $0xb0] sm:$0xff]
    %v3047 = vld [vmem:[#allocation3 + $0xb8] sm:$0xff]
    %v3048 = vld [vmem:[#allocation3 + $0xc0] sm:$0xff]
    %v3049 = vld [vmem:[#allocation3 + $0xc8] sm:$0xff]
    %v3050 = vld [vmem:[#allocation3 + $0xd0] sm:$0xff]
    %v3051 = vld [vmem:[#allocation3 + $0xd8] sm:$0xff]
    %v3052 = vld [vmem:[#allocation3 + $0xe0] sm:$0xff]
    %v3053 = vld [vmem:[#allocation3 + $0xe8] sm:$0xff]
    %v3054 = vld [vmem:[#allocation3 + $0xf0] sm:$0xff]
    %v3055 = vld [vmem:[#allocation3 + $0xf8] sm:$0xff]
    %v3056 = vld [vmem:[#allocation3 + $0x100] sm:$0xff]
    %v3057 = vld [vmem:[#allocation3 + $0x108] sm:$0xff]
    %v3058 = vld [vmem:[#allocation3 + $0x110] sm:$0xff]
    %v3059 = vld [vmem:[#allocation3 + $0x118] sm:$0xff]
    %v3060 = vld [vmem:[#allocation3 + $0x120] sm:$0xff]
    %v3061 = vld [vmem:[#allocation3 + $0x128] sm:$0xff]
    %v3062 = vld [vmem:[#allocation3 + $0x130] sm:$0xff]
    %v3063 = vld [vmem:[#allocation3 + $0x138] sm:$0xff]
    %v3064 = vld [vmem:[#allocation3 + $0x140] sm:$0xff]
    %v3065 = vld [vmem:[#allocation3 + $0x148] sm:$0xff]
    %v3066 = vld [vmem:[#allocation3 + $0x150] sm:$0xff]
    %v3067 = vld [vmem:[#allocation3 + $0x158] sm:$0xff]
    %v3068 = vld [vmem:[#allocation3 + $0x160] sm:$0xff]
    %v3069 = vld [vmem:[#allocation3 + $0x168] sm:$0xff]
    %v3070 = vld [vmem:[#allocation3 + $0x170] sm:$0xff]
    %v3071 = vld [vmem:[#allocation3 + $0x178] sm:$0xff]
    %3072 = vmatprep.subr.mxu0 %v3025
    %3073 = vmatpush1.msra.mxu0 %v3024
    %3074 = vmatprep.subr.mxu0 %v3028
    %3075 = vmatpush1.msra.mxu0 %v3027
    %3076 = vmatprep.subr.mxu0 %v3031
    %3077 = vmatpush1.msra.mxu0 %v3030
    %3078 = vmatprep.subr.mxu0 %v3034
    %3079 = vmatpush1.msra.mxu0 %v3033
    %3080 = vmatprep.subr.mxu0 %v3037
    %3081 = vmatpush1.msra.mxu0 %v3036
    %3082 = vmatprep.subr.mxu0 %v3040
    %3083 = vmatpush1.msra.mxu0 %v3039
    %3084 = vmatprep.subr.mxu0 %v3043
    %3085 = vmatpush1.msra.mxu0 %v3042
    %3086 = vmatprep.subr.mxu0 %v3046
    %3087 = vmatpush1.msra.mxu0 %v3045
    %3088 = vmatprep.subr.mxu0 %v3049
    %3089 = vmatpush1.msra.mxu0 %v3048
    %3090 = vmatprep.subr.mxu0 %v3052
    %3091 = vmatpush1.msra.mxu0 %v3051
    %3092 = vmatprep.subr.mxu0 %v3055
    %3093 = vmatpush1.msra.mxu0 %v3054
    %3094 = vmatprep.subr.mxu0 %v3058
    %3095 = vmatpush1.msra.mxu0 %v3057
    %3096 = vmatprep.subr.mxu0 %v3061
    %3097 = vmatpush1.msra.mxu0 %v3060
    %3098 = vmatprep.subr.mxu0 %v3064
    %3099 = vmatpush1.msra.mxu0 %v3063
    %3100 = vmatprep.subr.mxu0 %v3067
    %3101 = vmatpush1.msra.mxu0 %v3066
    %3102 = vmatprep.subr.mxu0 %v3070
    %3103 = vmatpush1.msra.mxu0 %v3069
    %3104 = vmatprep.subr.mxu0 0.0
    %3105 = vmatpush1.msra.mxu0 0.0
    %3106 = vmatprep.subr.mxu0 0.0
    %3107 = vmatpush1.msra.mxu0 0.0
    %3108 = vmatprep.subr.mxu0 0.0
    %3109 = vmatpush1.msra.mxu0 0.0
    %3110 = vmatprep.subr.mxu0 0.0
    %3111 = vmatpush1.msra.mxu0 0.0
    %3112 = vmatprep.subr.mxu0 0.0
    %3113 = vmatpush1.msra.mxu0 0.0
    %3114 = vmatprep.subr.mxu0 0.0
    %3115 = vmatpush1.msra.mxu0 0.0
    %3116 = vmatprep.subr.mxu0 0.0
    %3117 = vmatpush1.msra.mxu0 0.0
    %3118 = vmatprep.subr.mxu0 0.0
    %3119 = vmatpush1.msra.mxu0 0.0
    %3120 = vmatprep.subr.mxu0 0.0
    %3121 = vmatpush1.msra.mxu0 0.0
    %3122 = vmatprep.subr.mxu0 0.0
    %3123 = vmatpush1.msra.mxu0 0.0
    %3124 = vmatprep.subr.mxu0 0.0
    %3125 = vmatpush1.msra.mxu0 0.0
    %3126 = vmatprep.subr.mxu0 0.0
    %3127 = vmatpush1.msra.mxu0 0.0
    %3128 = vmatprep.subr.mxu0 0.0
    %3129 = vmatpush1.msra.mxu0 0.0
    %3130 = vmatprep.subr.mxu0 0.0
    %3131 = vmatpush1.msra.mxu0 0.0
    %3132 = vmatprep.subr.mxu0 0.0
    %3133 = vmatpush1.msra.mxu0 0.0
    %3134 = vmatprep.subr.mxu0 0.0
    %3135 = vmatpush1.msra.mxu0 0.0
    %3136 = vmatprep.mubr.f32.mxu0 0.0
    %3137 = vmatmul.mubr.f32.gmra.mrb[0].mxu0 %v3023
    %v3138 = vpop.f32.mrb[0].mxu0
    %v3139 = vadd.f32 %v391, %v3138
    %v3140 = vpop.f32.mrb[0].mxu0
    %v3141 = vadd.f32 %v395, %v3140
    %3142 = vdwg.mxu0
    %3143 = vmatprep.subr.mxu0 0.0
    %3144 = vmatpush1.msra.mxu0 %v3026
    %3145 = vmatprep.subr.mxu0 0.0
    %3146 = vmatpush1.msra.mxu0 %v3029
    %3147 = vmatprep.subr.mxu0 0.0
    %3148 = vmatpush1.msra.mxu0 %v3032
    %3149 = vmatprep.subr.mxu0 0.0
    %3150 = vmatpush1.msra.mxu0 %v3035
    %3151 = vmatprep.subr.mxu0 0.0
    %3152 = vmatpush1.msra.mxu0 %v3038
    %3153 = vmatprep.subr.mxu0 0.0
    %3154 = vmatpush1.msra.mxu0 %v3041
    %3155 = vmatprep.subr.mxu0 0.0
    %3156 = vmatpush1.msra.mxu0 %v3044
    %3157 = vmatprep.subr.mxu0 0.0
    %3158 = vmatpush1.msra.mxu0 %v3047
    %3159 = vmatprep.subr.mxu0 0.0
    %3160 = vmatpush1.msra.mxu0 %v3050
    %3161 = vmatprep.subr.mxu0 0.0
    %3162 = vmatpush1.msra.mxu0 %v3053
    %3163 = vmatprep.subr.mxu0 0.0
    %3164 = vmatpush1.msra.mxu0 %v3056
    %3165 = vmatprep.subr.mxu0 0.0
    %3166 = vmatpush1.msra.mxu0 %v3059
    %3167 = vmatprep.subr.mxu0 0.0
    %3168 = vmatpush1.msra.mxu0 %v3062
    %3169 = vmatprep.subr.mxu0 0.0
    %3170 = vmatpush1.msra.mxu0 %v3065
    %3171 = vmatprep.subr.mxu0 0.0
    %3172 = vmatpush1.msra.mxu0 %v3068
    %3173 = vmatprep.subr.mxu0 0.0
    %3174 = vmatpush1.msra.mxu0 %v3071
    %3175 = vmatprep.subr.mxu0 0.0
    %3176 = vmatpush1.msra.mxu0 0.0
    %3177 = vmatprep.subr.mxu0 0.0
    %3178 = vmatpush1.msra.mxu0 0.0
    %3179 = vmatprep.subr.mxu0 0.0
    %3180 = vmatpush1.msra.mxu0 0.0
    %3181 = vmatprep.subr.mxu0 0.0
    %3182 = vmatpush1.msra.mxu0 0.0
    %3183 = vmatprep.subr.mxu0 0.0
    %3184 = vmatpush1.msra.mxu0 0.0
    %3185 = vmatprep.subr.mxu0 0.0
    %3186 = vmatpush1.msra.mxu0 0.0
    %3187 = vmatprep.subr.mxu0 0.0
    %3188 = vmatpush1.msra.mxu0 0.0
    %3189 = vmatprep.subr.mxu0 0.0
    %3190 = vmatpush1.msra.mxu0 0.0
    %3191 = vmatprep.subr.mxu0 0.0
    %3192 = vmatpush1.msra.mxu0 0.0
    %3193 = vmatprep.subr.mxu0 0.0
    %3194 = vmatpush1.msra.mxu0 0.0
    %3195 = vmatprep.subr.mxu0 0.0
    %3196 = vmatpush1.msra.mxu0 0.0
    %3197 = vmatprep.subr.mxu0 0.0
    %3198 = vmatpush1.msra.mxu0 0.0
    %3199 = vmatprep.subr.mxu0 0.0
    %3200 = vmatpush1.msra.mxu0 0.0
    %3201 = vmatprep.subr.mxu0 0.0
    %3202 = vmatpush1.msra.mxu0 0.0
    %3203 = vmatprep.subr.mxu0 0.0
    %3204 = vmatpush1.msra.mxu0 0.0
    %3205 = vmatprep.subr.mxu0 0.0
    %3206 = vmatpush1.msra.mxu0 0.0
    %3207 = vmatprep.mubr.f32.mxu0 0.0
    %3208 = vmatmul.mubr.f32.gmra.mrb[0].mxu0 %v3023
    %v3209 = vpop.f32.mrb[0].mxu0
    %v3210 = vadd.f32 %v399, %v3209
    %v3211 = vpop.f32.mrb[0].mxu0
    %3212 = vdwg.mxu0
    %v3213 = vld [vmem:[%s800] sm:$0xff]
    %v3214 = vld [vmem:[%s800 + $0x8] sm:$0xff]
    %v3215 = vld [vmem:[%s800 + $0x10] sm:$0xff]
    %v3216 = vld [vmem:[%s800 + $0x18] sm:$0xff]
    %v3217 = vld [vmem:[%s800 + $0x20] sm:$0xff]
    %v3218 = vld [vmem:[%s800 + $0x28] sm:$0xff]
    %v3219 = vld [vmem:[%s800 + $0x30] sm:$0xff]
    %v3220 = vld [vmem:[%s800 + $0x38] sm:$0xff]
    %v3221 = vld [vmem:[%s800 + $0x40] sm:$0xff]
    %v3222 = vld [vmem:[%s800 + $0x48] sm:$0xff]
    %v3223 = vld [vmem:[%s800 + $0x50] sm:$0xff]
    %v3224 = vld [vmem:[%s800 + $0x58] sm:$0xff]
    %v3225 = vld [vmem:[%s800 + $0x60] sm:$0xff]
    %v3226 = vld [vmem:[%s800 + $0x68] sm:$0xff]
    %v3227 = vld [vmem:[%s800 + $0x70] sm:$0xff]
    %v3228 = vld [vmem:[%s800 + $0x78] sm:$0xff]
    %v3229 = vld [vmem:[%s800 + $0x80] sm:$0xff]
    %v3230 = vld [vmem:[%s800 + $0x88] sm:$0xff]
    %v3231 = vld [vmem:[%s800 + $0x90] sm:$0xff]
    %v3232 = vld [vmem:[%s800 + $0x98] sm:$0xff]
    %v3233 = vld [vmem:[%s800 + $0xa0] sm:$0xff]
    %v3234 = vld [vmem:[%s800 + $0xa8] sm:$0xff]
    %v3235 = vld [vmem:[%s800 + $0xb0] sm:$0xff]
    %v3236 = vld [vmem:[%s800 + $0xb8] sm:$0xff]
    %v3237 = vld [vmem:[%s800 + $0xc0] sm:$0xff]
    %v3238 = vld [vmem:[%s800 + $0xc8] sm:$0xff]
    %v3239 = vld [vmem:[%s800 + $0xd0] sm:$0xff]
    %v3240 = vld [vmem:[%s800 + $0xd8] sm:$0xff]
    %v3241 = vld [vmem:[%s800 + $0xe0] sm:$0xff]
    %v3242 = vld [vmem:[%s800 + $0xe8] sm:$0xff]
    %v3243 = vld [vmem:[%s800 + $0xf0] sm:$0xff]
    %v3244 = vld [vmem:[%s800 + $0xf8] sm:$0xff]
    %v3245 = vld [vmem:[%s800 + $0x100] sm:$0xff]
    %v3246 = vld [vmem:[%s800 + $0x108] sm:$0xff]
    %v3247 = vld [vmem:[%s800 + $0x110] sm:$0xff]
    %v3248 = vld [vmem:[%s800 + $0x118] sm:$0xff]
    %v3249 = vld [vmem:[%s800 + $0x120] sm:$0xff]
    %v3250 = vld [vmem:[%s800 + $0x128] sm:$0xff]
    %v3251 = vld [vmem:[%s800 + $0x130] sm:$0xff]
    %v3252 = vld [vmem:[%s800 + $0x138] sm:$0xff]
    %v3253 = vld [vmem:[%s800 + $0x140] sm:$0xff]
    %v3254 = vld [vmem:[%s800 + $0x148] sm:$0xff]
    %v3255 = vld [vmem:[%s800 + $0x150] sm:$0xff]
    %v3256 = vld [vmem:[%s800 + $0x158] sm:$0xff]
    %v3257 = vld [vmem:[%s800 + $0x160] sm:$0xff]
    %v3258 = vld [vmem:[%s800 + $0x168] sm:$0xff]
    %v3259 = vld [vmem:[%s800 + $0x170] sm:$0xff]
    %v3260 = vld [vmem:[%s800 + $0x178] sm:$0xff]
    %3261 = vmatprep.subr.mxu0 %v3214
    %3262 = vmatpush1.msra.mxu0 %v3213
    %3263 = vmatprep.subr.mxu0 %v3217
    %3264 = vmatpush1.msra.mxu0 %v3216
    %3265 = vmatprep.subr.mxu0 %v3220
    %3266 = vmatpush1.msra.mxu0 %v3219
    %3267 = vmatprep.subr.mxu0 %v3223
    %3268 = vmatpush1.msra.mxu0 %v3222
    %3269 = vmatprep.subr.mxu0 %v3226
    %3270 = vmatpush1.msra.mxu0 %v3225
    %3271 = vmatprep.subr.mxu0 %v3229
    %3272 = vmatpush1.msra.mxu0 %v3228
    %3273 = vmatprep.subr.mxu0 %v3232
    %3274 = vmatpush1.msra.mxu0 %v3231
    %3275 = vmatprep.subr.mxu0 %v3235
    %3276 = vmatpush1.msra.mxu0 %v3234
    %3277 = vmatprep.subr.mxu0 %v3238
    %3278 = vmatpush1.msra.mxu0 %v3237
    %3279 = vmatprep.subr.mxu0 %v3241
    %3280 = vmatpush1.msra.mxu0 %v3240
    %3281 = vmatprep.subr.mxu0 %v3244
    %3282 = vmatpush1.msra.mxu0 %v3243
    %3283 = vmatprep.subr.mxu0 %v3247
    %3284 = vmatpush1.msra.mxu0 %v3246
    %3285 = vmatprep.subr.mxu0 %v3250
    %3286 = vmatpush1.msra.mxu0 %v3249
    %3287 = vmatprep.subr.mxu0 %v3253
    %3288 = vmatpush1.msra.mxu0 %v3252
    %3289 = vmatprep.subr.mxu0 %v3256
    %3290 = vmatpush1.msra.mxu0 %v3255
    %3291 = vmatprep.subr.mxu0 %v3259
    %3292 = vmatpush1.msra.mxu0 %v3258
    %3293 = vmatprep.subr.mxu0 0.0
    %3294 = vmatpush1.msra.mxu0 0.0
    %3295 = vmatprep.subr.mxu0 0.0
    %3296 = vmatpush1.msra.mxu0 0.0
    %3297 = vmatprep.subr.mxu0 0.0
    %3298 = vmatpush1.msra.mxu0 0.0
    %3299 = vmatprep.subr.mxu0 0.0
    %3300 = vmatpush1.msra.mxu0 0.0
    %3301 = vmatprep.subr.mxu0 0.0
    %3302 = vmatpush1.msra.mxu0 0.0
    %3303 = vmatprep.subr.mxu0 0.0
    %3304 = vmatpush1.msra.mxu0 0.0
    %3305 = vmatprep.subr.mxu0 0.0
    %3306 = vmatpush1.msra.mxu0 0.0
    %3307 = vmatprep.subr.mxu0 0.0
    %3308 = vmatpush1.msra.mxu0 0.0
    %3309 = vmatprep.subr.mxu0 0.0
    %3310 = vmatpush1.msra.mxu0 0.0
    %3311 = vmatprep.subr.mxu0 0.0
    %3312 = vmatpush1.msra.mxu0 0.0
    %3313 = vmatprep.subr.mxu0 0.0
    %3314 = vmatpush1.msra.mxu0 0.0
    %3315 = vmatprep.subr.mxu0 0.0
    %3316 = vmatpush1.msra.mxu0 0.0
    %3317 = vmatprep.subr.mxu0 0.0
    %3318 = vmatpush1.msra.mxu0 0.0
    %3319 = vmatprep.subr.mxu0 0.0
    %3320 = vmatpush1.msra.mxu0 0.0
    %3321 = vmatprep.subr.mxu0 0.0
    %3322 = vmatpush1.msra.mxu0 0.0
    %3323 = vmatprep.subr.mxu0 0.0
    %3324 = vmatpush1.msra.mxu0 0.0
    %3325 = vmatprep.mubr.f32.mxu0 0.0
    %3326 = vmatmul.mubr.f32.gmra.mrb[0].mxu0 %v2814
    %v3327 = vpop.f32.mrb[0].mxu0
    %v3328 = vadd.f32 %v373, %v3327
    %v3329 = vpop.f32.mrb[0].mxu0
    %v3330 = vadd.f32 %v377, %v3329
    %3331 = vdwg.mxu0
    %3332 = vmatprep.subr.mxu0 0.0
    %3333 = vmatpush1.msra.mxu0 %v3215
    %3334 = vmatprep.subr.mxu0 0.0
    %3335 = vmatpush1.msra.mxu0 %v3218
    %3336 = vmatprep.subr.mxu0 0.0
    %3337 = vmatpush1.msra.mxu0 %v3221
    %3338 = vmatprep.subr.mxu0 0.0
    %3339 = vmatpush1.msra.mxu0 %v3224
    %3340 = vmatprep.subr.mxu0 0.0
    %3341 = vmatpush1.msra.mxu0 %v3227
    %3342 = vmatprep.subr.mxu0 0.0
    %3343 = vmatpush1.msra.mxu0 %v3230
    %3344 = vmatprep.subr.mxu0 0.0
    %3345 = vmatpush1.msra.mxu0 %v3233
    %3346 = vmatprep.subr.mxu0 0.0
    %3347 = vmatpush1.msra.mxu0 %v3236
    %3348 = vmatprep.subr.mxu0 0.0
    %3349 = vmatpush1.msra.mxu0 %v3239
    %3350 = vmatprep.subr.mxu0 0.0
    %3351 = vmatpush1.msra.mxu0 %v3242
    %3352 = vmatprep.subr.mxu0 0.0
    %3353 = vmatpush1.msra.mxu0 %v3245
    %3354 = vmatprep.subr.mxu0 0.0
    %3355 = vmatpush1.msra.mxu0 %v3248
    %3356 = vmatprep.subr.mxu0 0.0
    %3357 = vmatpush1.msra.mxu0 %v3251
    %3358 = vmatprep.subr.mxu0 0.0
    %3359 = vmatpush1.msra.mxu0 %v3254
    %3360 = vmatprep.subr.mxu0 0.0
    %3361 = vmatpush1.msra.mxu0 %v3257
    %3362 = vmatprep.subr.mxu0 0.0
    %3363 = vmatpush1.msra.mxu0 %v3260
    %3364 = vmatprep.subr.mxu0 0.0
    %3365 = vmatpush1.msra.mxu0 0.0
    %3366 = vmatprep.subr.mxu0 0.0
    %3367 = vmatpush1.msra.mxu0 0.0
    %3368 = vmatprep.subr.mxu0 0.0
    %3369 = vmatpush1.msra.mxu0 0.0
    %3370 = vmatprep.subr.mxu0 0.0
    %3371 = vmatpush1.msra.mxu0 0.0
    %3372 = vmatprep.subr.mxu0 0.0
    %3373 = vmatpush1.msra.mxu0 0.0
    %3374 = vmatprep.subr.mxu0 0.0
    %3375 = vmatpush1.msra.mxu0 0.0
    %3376 = vmatprep.subr.mxu0 0.0
    %3377 = vmatpush1.msra.mxu0 0.0
    %3378 = vmatprep.subr.mxu0 0.0
    %3379 = vmatpush1.msra.mxu0 0.0
    %3380 = vmatprep.subr.mxu0 0.0
    %3381 = vmatpush1.msra.mxu0 0.0
    %3382 = vmatprep.subr.mxu0 0.0
    %3383 = vmatpush1.msra.mxu0 0.0
    %3384 = vmatprep.subr.mxu0 0.0
    %3385 = vmatpush1.msra.mxu0 0.0
    %3386 = vmatprep.subr.mxu0 0.0
    %3387 = vmatpush1.msra.mxu0 0.0
    %3388 = vmatprep.subr.mxu0 0.0
    %3389 = vmatpush1.msra.mxu0 0.0
    %3390 = vmatprep.subr.mxu0 0.0
    %3391 = vmatpush1.msra.mxu0 0.0
    %3392 = vmatprep.subr.mxu0 0.0
    %3393 = vmatpush1.msra.mxu0 0.0
    %3394 = vmatprep.subr.mxu0 0.0
    %3395 = vmatpush1.msra.mxu0 0.0
    %3396 = vmatprep.mubr.f32.mxu0 0.0
    %3397 = vmatmul.mubr.f32.gmra.mrb[0].mxu0 %v2814
    %v3398 = vpop.f32.mrb[0].mxu0
    %v3399 = vadd.f32 %v381, %v3398
    %v3400 = vpop.f32.mrb[0].mxu0
    %3401 = vdwg.mxu0
    %v3402 = vadd.f32 %v3139, %v3328
    %v3403 = vadd.f32 %v3141, %v3330
    %v3404 = vmul.f32 %v3402, 0.5
    %v3405 = vmul.f32 %v3403, 0.5
    %v3406 = vtanh.pop %v3404
    %v3407 = vtanh.pop %v3405
    %v3408 = vmul.f32 %v3406, 0.5
    %v3409 = vmul.f32 %v3407, 0.5
    %v3410 = vadd.f32 %v3408, 0.5
    %v3411 = vadd.f32 %v3409, 0.5
    %v3412 = vmul.f32 %v3410, %v3399
    %v3413 = vadd.f32 %v3210, %v3412
    %v3414 = vtanh.pop %v3413
    %v3415 = vsub.f32 %v2814, %v3414
    %v3416 = vmul.f32 %v3411, %v3415
    %v3417 = vadd.f32 %v3414, %v3416
    %3418 = vst [vmem:[#allocation8 + $0x20] sm:$0xff] %v3417
    %v3419 = vld [vmem:[#allocation2 + $0x78] sm:$0xff]
    %v3420 = vld [vmem:[#allocation2 + $0x80] sm:$0xff]
    %v3421 = vld [vmem:[#allocation2 + $0x88] sm:$0xff]
    %v3422 = vld [vmem:[#allocation6] sm:$0xff]
    %v3423 = vld [vmem:[#allocation6 + $0x8] sm:$0xff]
    %v3424 = vld [vmem:[#allocation6 + $0x10] sm:$0xff]
    %v3425 = vld [vmem:[#allocation6 + $0x18] sm:$0xff]
    %v3426 = vld [vmem:[#allocation6 + $0x20] sm:$0xff]
    %v3427 = vld [vmem:[#allocation6 + $0x28] sm:$0xff]
    %v3428 = vld [vmem:[#allocation6 + $0x30] sm:$0xff]
    %v3429 = vld [vmem:[#allocation6 + $0x38] sm:$0xff]
    %v3430 = vld [vmem:[#allocation6 + $0x40] sm:$0xff]
    %v3431 = vld [vmem:[#allocation6 + $0x48] sm:$0xff]
    %v3432 = vld [vmem:[#allocation6 + $0x50] sm:$0xff]
    %v3433 = vld [vmem:[#allocation6 + $0x58] sm:$0xff]
    %v3434 = vld [vmem:[#allocation6 + $0x60] sm:$0xff]
    %v3435 = vld [vmem:[#allocation6 + $0x68] sm:$0xff]
    %v3436 = vld [vmem:[#allocation6 + $0x70] sm:$0xff]
    %v3437 = vld [vmem:[#allocation6 + $0x78] sm:$0xff]
    %v3438 = vld [vmem:[#allocation6 + $0x80] sm:$0xff]
    %v3439 = vld [vmem:[#allocation6 + $0x88] sm:$0xff]
    %v3440 = vld [vmem:[#allocation6 + $0x90] sm:$0xff]
    %v3441 = vld [vmem:[#allocation6 + $0x98] sm:$0xff]
    %v3442 = vld [vmem:[#allocation6 + $0xa0] sm:$0xff]
    %v3443 = vld [vmem:[#allocation6 + $0xa8] sm:$0xff]
    %v3444 = vld [vmem:[#allocation6 + $0xb0] sm:$0xff]
    %v3445 = vld [vmem:[#allocation6 + $0xb8] sm:$0xff]
    %v3446 = vld [vmem:[#allocation6 + $0xc0] sm:$0xff]
    %v3447 = vld [vmem:[#allocation6 + $0xc8] sm:$0xff]
    %v3448 = vld [vmem:[#allocation6 + $0xd0] sm:$0xff]
    %v3449 = vld [vmem:[#allocation6 + $0xd8] sm:$0xff]
    %v3450 = vld [vmem:[#allocation6 + $0xe0] sm:$0xff]
    %v3451 = vld [vmem:[#allocation6 + $0xe8] sm:$0xff]
    %v3452 = vld [vmem:[#allocation6 + $0xf0] sm:$0xff]
    %v3453 = vld [vmem:[#allocation6 + $0xf8] sm:$0xff]
    %v3454 = vld [vmem:[#allocation6 + $0x100] sm:$0xff]
    %v3455 = vld [vmem:[#allocation6 + $0x108] sm:$0xff]
    %v3456 = vld [vmem:[#allocation6 + $0x110] sm:$0xff]
    %v3457 = vld [vmem:[#allocation6 + $0x118] sm:$0xff]
    %v3458 = vld [vmem:[#allocation6 + $0x120] sm:$0xff]
    %v3459 = vld [vmem:[#allocation6 + $0x128] sm:$0xff]
    %v3460 = vld [vmem:[#allocation6 + $0x130] sm:$0xff]
    %v3461 = vld [vmem:[#allocation6 + $0x138] sm:$0xff]
    %v3462 = vld [vmem:[#allocation6 + $0x140] sm:$0xff]
    %v3463 = vld [vmem:[#allocation6 + $0x148] sm:$0xff]
    %v3464 = vld [vmem:[#allocation6 + $0x150] sm:$0xff]
    %v3465 = vld [vmem:[#allocation6 + $0x158] sm:$0xff]
    %v3466 = vld [vmem:[#allocation6 + $0x160] sm:$0xff]
    %v3467 = vld [vmem:[#allocation6 + $0x168] sm:$0xff]
    %v3468 = vld [vmem:[#allocation6 + $0x170] sm:$0xff]
    %v3469 = vld [vmem:[#allocation6 + $0x178] sm:$0xff]
    %3470 = vmatprep.subr.mxu0 %v3423
    %3471 = vmatpush1.msra.mxu0 %v3422
    %3472 = vmatprep.subr.mxu0 %v3426
    %3473 = vmatpush1.msra.mxu0 %v3425
    %3474 = vmatprep.subr.mxu0 %v3429
    %3475 = vmatpush1.msra.mxu0 %v3428
    %3476 = vmatprep.subr.mxu0 %v3432
    %3477 = vmatpush1.msra.mxu0 %v3431
    %3478 = vmatprep.subr.mxu0 %v3435
    %3479 = vmatpush1.msra.mxu0 %v3434
    %3480 = vmatprep.subr.mxu0 %v3438
    %3481 = vmatpush1.msra.mxu0 %v3437
    %3482 = vmatprep.subr.mxu0 %v3441
    %3483 = vmatpush1.msra.mxu0 %v3440
    %3484 = vmatprep.subr.mxu0 %v3444
    %3485 = vmatpush1.msra.mxu0 %v3443
    %3486 = vmatprep.subr.mxu0 %v3447
    %3487 = vmatpush1.msra.mxu0 %v3446
    %3488 = vmatprep.subr.mxu0 %v3450
    %3489 = vmatpush1.msra.mxu0 %v3449
    %3490 = vmatprep.subr.mxu0 %v3453
    %3491 = vmatpush1.msra.mxu0 %v3452
    %3492 = vmatprep.subr.mxu0 %v3456
    %3493 = vmatpush1.msra.mxu0 %v3455
    %3494 = vmatprep.subr.mxu0 %v3459
    %3495 = vmatpush1.msra.mxu0 %v3458
    %3496 = vmatprep.subr.mxu0 %v3462
    %3497 = vmatpush1.msra.mxu0 %v3461
    %3498 = vmatprep.subr.mxu0 %v3465
    %3499 = vmatpush1.msra.mxu0 %v3464
    %3500 = vmatprep.subr.mxu0 %v3468
    %3501 = vmatpush1.msra.mxu0 %v3467
    %3502 = vmatprep.subr.mxu0 0.0
    %3503 = vmatpush1.msra.mxu0 0.0
    %3504 = vmatprep.subr.mxu0 0.0
    %3505 = vmatpush1.msra.mxu0 0.0
    %3506 = vmatprep.subr.mxu0 0.0
    %3507 = vmatpush1.msra.mxu0 0.0
    %3508 = vmatprep.subr.mxu0 0.0
    %3509 = vmatpush1.msra.mxu0 0.0
    %3510 = vmatprep.subr.mxu0 0.0
    %3511 = vmatpush1.msra.mxu0 0.0
    %3512 = vmatprep.subr.mxu0 0.0
    %3513 = vmatpush1.msra.mxu0 0.0
    %3514 = vmatprep.subr.mxu0 0.0
    %3515 = vmatpush1.msra.mxu0 0.0
    %3516 = vmatprep.subr.mxu0 0.0
    %3517 = vmatpush1.msra.mxu0 0.0
    %3518 = vmatprep.subr.mxu0 0.0
    %3519 = vmatpush1.msra.mxu0 0.0
    %3520 = vmatprep.subr.mxu0 0.0
    %3521 = vmatpush1.msra.mxu0 0.0
    %3522 = vmatprep.subr.mxu0 0.0
    %3523 = vmatpush1.msra.mxu0 0.0
    %3524 = vmatprep.subr.mxu0 0.0
    %3525 = vmatpush1.msra.mxu0 0.0
    %3526 = vmatprep.subr.mxu0 0.0
    %3527 = vmatpush1.msra.mxu0 0.0
    %3528 = vmatprep.subr.mxu0 0.0
    %3529 = vmatpush1.msra.mxu0 0.0
    %3530 = vmatprep.subr.mxu0 0.0
    %3531 = vmatpush1.msra.mxu0 0.0
    %3532 = vmatprep.subr.mxu0 0.0
    %3533 = vmatpush1.msra.mxu0 0.0
    %3534 = vmatprep.mubr.f32.mxu0 0.0
    %3535 = vmatmul.mubr.f32.gmra.mrb[0].mxu0 %v3023
    %v3536 = vpop.f32.mrb[0].mxu0
    %v3537 = vadd.f32 %v355, %v3536
    %v3538 = vpop.f32.mrb[0].mxu0
    %v3539 = vadd.f32 %v359, %v3538
    %3540 = vdwg.mxu0
    %3541 = vmatprep.subr.mxu0 0.0
    %3542 = vmatpush1.msra.mxu0 %v3424
    %3543 = vmatprep.subr.mxu0 0.0
    %3544 = vmatpush1.msra.mxu0 %v3427
    %3545 = vmatprep.subr.mxu0 0.0
    %3546 = vmatpush1.msra.mxu0 %v3430
    %3547 = vmatprep.subr.mxu0 0.0
    %3548 = vmatpush1.msra.mxu0 %v3433
    %3549 = vmatprep.subr.mxu0 0.0
    %3550 = vmatpush1.msra.mxu0 %v3436
    %3551 = vmatprep.subr.mxu0 0.0
    %3552 = vmatpush1.msra.mxu0 %v3439
    %3553 = vmatprep.subr.mxu0 0.0
    %3554 = vmatpush1.msra.mxu0 %v3442
    %3555 = vmatprep.subr.mxu0 0.0
    %3556 = vmatpush1.msra.mxu0 %v3445
    %3557 = vmatprep.subr.mxu0 0.0
    %3558 = vmatpush1.msra.mxu0 %v3448
    %3559 = vmatprep.subr.mxu0 0.0
    %3560 = vmatpush1.msra.mxu0 %v3451
    %3561 = vmatprep.subr.mxu0 0.0
    %3562 = vmatpush1.msra.mxu0 %v3454
    %3563 = vmatprep.subr.mxu0 0.0
    %3564 = vmatpush1.msra.mxu0 %v3457
    %3565 = vmatprep.subr.mxu0 0.0
    %3566 = vmatpush1.msra.mxu0 %v3460
    %3567 = vmatprep.subr.mxu0 0.0
    %3568 = vmatpush1.msra.mxu0 %v3463
    %3569 = vmatprep.subr.mxu0 0.0
    %3570 = vmatpush1.msra.mxu0 %v3466
    %3571 = vmatprep.subr.mxu0 0.0
    %3572 = vmatpush1.msra.mxu0 %v3469
    %3573 = vmatprep.subr.mxu0 0.0
    %3574 = vmatpush1.msra.mxu0 0.0
    %3575 = vmatprep.subr.mxu0 0.0
    %3576 = vmatpush1.msra.mxu0 0.0
    %3577 = vmatprep.subr.mxu0 0.0
    %3578 = vmatpush1.msra.mxu0 0.0
    %3579 = vmatprep.subr.mxu0 0.0
    %3580 = vmatpush1.msra.mxu0 0.0
    %3581 = vmatprep.subr.mxu0 0.0
    %3582 = vmatpush1.msra.mxu0 0.0
    %3583 = vmatprep.subr.mxu0 0.0
    %3584 = vmatpush1.msra.mxu0 0.0
    %3585 = vmatprep.subr.mxu0 0.0
    %3586 = vmatpush1.msra.mxu0 0.0
    %3587 = vmatprep.subr.mxu0 0.0
    %3588 = vmatpush1.msra.mxu0 0.0
    %3589 = vmatprep.subr.mxu0 0.0
    %3590 = vmatpush1.msra.mxu0 0.0
    %3591 = vmatprep.subr.mxu0 0.0
    %3592 = vmatpush1.msra.mxu0 0.0
    %3593 = vmatprep.subr.mxu0 0.0
    %3594 = vmatpush1.msra.mxu0 0.0
    %3595 = vmatprep.subr.mxu0 0.0
    %3596 = vmatpush1.msra.mxu0 0.0
    %3597 = vmatprep.subr.mxu0 0.0
    %3598 = vmatpush1.msra.mxu0 0.0
    %3599 = vmatprep.subr.mxu0 0.0
    %3600 = vmatpush1.msra.mxu0 0.0
    %3601 = vmatprep.subr.mxu0 0.0
    %3602 = vmatpush1.msra.mxu0 0.0
    %3603 = vmatprep.subr.mxu0 0.0
    %3604 = vmatpush1.msra.mxu0 0.0
    %3605 = vmatprep.mubr.f32.mxu0 0.0
    %3606 = vmatmul.mubr.f32.gmra.mrb[0].mxu0 %v3023
    %v3607 = vpop.f32.mrb[0].mxu0
    %v3608 = vadd.f32 %v363, %v3607
    %v3609 = vpop.f32.mrb[0].mxu0
    %3610 = vdwg.mxu0
    %v3611 = vadd.f32 %v3419, %v3537
    %v3612 = vadd.f32 %v3420, %v3539
    %v3613 = vmul.f32 %v3611, 0.5
    %v3614 = vmul.f32 %v3612, 0.5
    %v3615 = vtanh.pop %v3613
    %v3616 = vtanh.pop %v3614
    %v3617 = vmul.f32 %v3615, 0.5
    %v3618 = vmul.f32 %v3616, 0.5
    %v3619 = vadd.f32 %v3617, 0.5
    %v3620 = vadd.f32 %v3618, 0.5
    %v3621 = vmul.f32 %v3619, %v3608
    %v3622 = vadd.f32 %v3421, %v3621
    %v3623 = vtanh.pop %v3622
    %v3624 = vsub.f32 %v3023, %v3623
    %v3625 = vmul.f32 %v3620, %v3624
    %v3626 = vadd.f32 %v3623, %v3625
    %v3627 = vld [vmem:[#allocation3] sm:$0xff]
    %v3628 = vld [vmem:[#allocation3 + $0x8] sm:$0xff]
    %v3629 = vld [vmem:[#allocation3 + $0x10] sm:$0xff]
    %v3630 = vld [vmem:[#allocation3 + $0x18] sm:$0xff]
    %v3631 = vld [vmem:[#allocation3 + $0x20] sm:$0xff]
    %v3632 = vld [vmem:[#allocation3 + $0x28] sm:$0xff]
    %v3633 = vld [vmem:[#allocation3 + $0x30] sm:$0xff]
    %v3634 = vld [vmem:[#allocation3 + $0x38] sm:$0xff]
    %v3635 = vld [vmem:[#allocation3 + $0x40] sm:$0xff]
    %v3636 = vld [vmem:[#allocation3 + $0x48] sm:$0xff]
    %v3637 = vld [vmem:[#allocation3 + $0x50] sm:$0xff]
    %v3638 = vld [vmem:[#allocation3 + $0x58] sm:$0xff]
    %v3639 = vld [vmem:[#allocation3 + $0x60] sm:$0xff]
    %v3640 = vld [vmem:[#allocation3 + $0x68] sm:$0xff]
    %v3641 = vld [vmem:[#allocation3 + $0x70] sm:$0xff]
    %v3642 = vld [vmem:[#allocation3 + $0x78] sm:$0xff]
    %v3643 = vld [vmem:[#allocation3 + $0x80] sm:$0xff]
    %v3644 = vld [vmem:[#allocation3 + $0x88] sm:$0xff]
    %v3645 = vld [vmem:[#allocation3 + $0x90] sm:$0xff]
    %v3646 = vld [vmem:[#allocation3 + $0x98] sm:$0xff]
    %v3647 = vld [vmem:[#allocation3 + $0xa0] sm:$0xff]
    %v3648 = vld [vmem:[#allocation3 + $0xa8] sm:$0xff]
    %v3649 = vld [vmem:[#allocation3 + $0xb0] sm:$0xff]
    %v3650 = vld [vmem:[#allocation3 + $0xb8] sm:$0xff]
    %v3651 = vld [vmem:[#allocation3 + $0xc0] sm:$0xff]
    %v3652 = vld [vmem:[#allocation3 + $0xc8] sm:$0xff]
    %v3653 = vld [vmem:[#allocation3 + $0xd0] sm:$0xff]
    %v3654 = vld [vmem:[#allocation3 + $0xd8] sm:$0xff]
    %v3655 = vld [vmem:[#allocation3 + $0xe0] sm:$0xff]
    %v3656 = vld [vmem:[#allocation3 + $0xe8] sm:$0xff]
    %v3657 = vld [vmem:[#allocation3 + $0xf0] sm:$0xff]
    %v3658 = vld [vmem:[#allocation3 + $0xf8] sm:$0xff]
    %v3659 = vld [vmem:[#allocation3 + $0x100] sm:$0xff]
    %v3660 = vld [vmem:[#allocation3 + $0x108] sm:$0xff]
    %v3661 = vld [vmem:[#allocation3 + $0x110] sm:$0xff]
    %v3662 = vld [vmem:[#allocation3 + $0x118] sm:$0xff]
    %v3663 = vld [vmem:[#allocation3 + $0x120] sm:$0xff]
    %v3664 = vld [vmem:[#allocation3 + $0x128] sm:$0xff]
    %v3665 = vld [vmem:[#allocation3 + $0x130] sm:$0xff]
    %v3666 = vld [vmem:[#allocation3 + $0x138] sm:$0xff]
    %v3667 = vld [vmem:[#allocation3 + $0x140] sm:$0xff]
    %v3668 = vld [vmem:[#allocation3 + $0x148] sm:$0xff]
    %v3669 = vld [vmem:[#allocation3 + $0x150] sm:$0xff]
    %v3670 = vld [vmem:[#allocation3 + $0x158] sm:$0xff]
    %v3671 = vld [vmem:[#allocation3 + $0x160] sm:$0xff]
    %v3672 = vld [vmem:[#allocation3 + $0x168] sm:$0xff]
    %v3673 = vld [vmem:[#allocation3 + $0x170] sm:$0xff]
    %v3674 = vld [vmem:[#allocation3 + $0x178] sm:$0xff]
    %3675 = vmatprep.subr.mxu0 %v3628
    %3676 = vmatpush1.msra.mxu0 %v3627
    %3677 = vmatprep.subr.mxu0 %v3631
    %3678 = vmatpush1.msra.mxu0 %v3630
    %3679 = vmatprep.subr.mxu0 %v3634
    %3680 = vmatpush1.msra.mxu0 %v3633
    %3681 = vmatprep.subr.mxu0 %v3637
    %3682 = vmatpush1.msra.mxu0 %v3636
    %3683 = vmatprep.subr.mxu0 %v3640
    %3684 = vmatpush1.msra.mxu0 %v3639
    %3685 = vmatprep.subr.mxu0 %v3643
    %3686 = vmatpush1.msra.mxu0 %v3642
    %3687 = vmatprep.subr.mxu0 %v3646
    %3688 = vmatpush1.msra.mxu0 %v3645
    %3689 = vmatprep.subr.mxu0 %v3649
    %3690 = vmatpush1.msra.mxu0 %v3648
    %3691 = vmatprep.subr.mxu0 %v3652
    %3692 = vmatpush1.msra.mxu0 %v3651
    %3693 = vmatprep.subr.mxu0 %v3655
    %3694 = vmatpush1.msra.mxu0 %v3654
    %3695 = vmatprep.subr.mxu0 %v3658
    %3696 = vmatpush1.msra.mxu0 %v3657
    %3697 = vmatprep.subr.mxu0 %v3661
    %3698 = vmatpush1.msra.mxu0 %v3660
    %3699 = vmatprep.subr.mxu0 %v3664
    %3700 = vmatpush1.msra.mxu0 %v3663
    %3701 = vmatprep.subr.mxu0 %v3667
    %3702 = vmatpush1.msra.mxu0 %v3666
    %3703 = vmatprep.subr.mxu0 %v3670
    %3704 = vmatpush1.msra.mxu0 %v3669
    %3705 = vmatprep.subr.mxu0 %v3673
    %3706 = vmatpush1.msra.mxu0 %v3672
    %3707 = vmatprep.subr.mxu0 0.0
    %3708 = vmatpush1.msra.mxu0 0.0
    %3709 = vmatprep.subr.mxu0 0.0
    %3710 = vmatpush1.msra.mxu0 0.0
    %3711 = vmatprep.subr.mxu0 0.0
    %3712 = vmatpush1.msra.mxu0 0.0
    %3713 = vmatprep.subr.mxu0 0.0
    %3714 = vmatpush1.msra.mxu0 0.0
    %3715 = vmatprep.subr.mxu0 0.0
    %3716 = vmatpush1.msra.mxu0 0.0
    %3717 = vmatprep.subr.mxu0 0.0
    %3718 = vmatpush1.msra.mxu0 0.0
    %3719 = vmatprep.subr.mxu0 0.0
    %3720 = vmatpush1.msra.mxu0 0.0
    %3721 = vmatprep.subr.mxu0 0.0
    %3722 = vmatpush1.msra.mxu0 0.0
    %3723 = vmatprep.subr.mxu0 0.0
    %3724 = vmatpush1.msra.mxu0 0.0
    %3725 = vmatprep.subr.mxu0 0.0
    %3726 = vmatpush1.msra.mxu0 0.0
    %3727 = vmatprep.subr.mxu0 0.0
    %3728 = vmatpush1.msra.mxu0 0.0
    %3729 = vmatprep.subr.mxu0 0.0
    %3730 = vmatpush1.msra.mxu0 0.0
    %3731 = vmatprep.subr.mxu0 0.0
    %3732 = vmatpush1.msra.mxu0 0.0
    %3733 = vmatprep.subr.mxu0 0.0
    %3734 = vmatpush1.msra.mxu0 0.0
    %3735 = vmatprep.subr.mxu0 0.0
    %3736 = vmatpush1.msra.mxu0 0.0
    %3737 = vmatprep.subr.mxu0 0.0
    %3738 = vmatpush1.msra.mxu0 0.0
    %3739 = vmatprep.mubr.f32.mxu0 0.0
    %3740 = vmatmul.mubr.f32.gmra.mrb[0].mxu0 %v3626
    %v3741 = vpop.f32.mrb[0].mxu0
    %v3742 = vadd.f32 %v391, %v3741
    %v3743 = vpop.f32.mrb[0].mxu0
    %v3744 = vadd.f32 %v395, %v3743
    %3745 = vdwg.mxu0
    %3746 = vmatprep.subr.mxu0 0.0
    %3747 = vmatpush1.msra.mxu0 %v3629
    %3748 = vmatprep.subr.mxu0 0.0
    %3749 = vmatpush1.msra.mxu0 %v3632
    %3750 = vmatprep.subr.mxu0 0.0
    %3751 = vmatpush1.msra.mxu0 %v3635
    %3752 = vmatprep.subr.mxu0 0.0
    %3753 = vmatpush1.msra.mxu0 %v3638
    %3754 = vmatprep.subr.mxu0 0.0
    %3755 = vmatpush1.msra.mxu0 %v3641
    %3756 = vmatprep.subr.mxu0 0.0
    %3757 = vmatpush1.msra.mxu0 %v3644
    %3758 = vmatprep.subr.mxu0 0.0
    %3759 = vmatpush1.msra.mxu0 %v3647
    %3760 = vmatprep.subr.mxu0 0.0
    %3761 = vmatpush1.msra.mxu0 %v3650
    %3762 = vmatprep.subr.mxu0 0.0
    %3763 = vmatpush1.msra.mxu0 %v3653
    %3764 = vmatprep.subr.mxu0 0.0
    %3765 = vmatpush1.msra.mxu0 %v3656
    %3766 = vmatprep.subr.mxu0 0.0
    %3767 = vmatpush1.msra.mxu0 %v3659
    %3768 = vmatprep.subr.mxu0 0.0
    %3769 = vmatpush1.msra.mxu0 %v3662
    %3770 = vmatprep.subr.mxu0 0.0
    %3771 = vmatpush1.msra.mxu0 %v3665
    %3772 = vmatprep.subr.mxu0 0.0
    %3773 = vmatpush1.msra.mxu0 %v3668
    %3774 = vmatprep.subr.mxu0 0.0
    %3775 = vmatpush1.msra.mxu0 %v3671
    %3776 = vmatprep.subr.mxu0 0.0
    %3777 = vmatpush1.msra.mxu0 %v3674
    %3778 = vmatprep.subr.mxu0 0.0
    %3779 = vmatpush1.msra.mxu0 0.0
    %3780 = vmatprep.subr.mxu0 0.0
    %3781 = vmatpush1.msra.mxu0 0.0
    %3782 = vmatprep.subr.mxu0 0.0
    %3783 = vmatpush1.msra.mxu0 0.0
    %3784 = vmatprep.subr.mxu0 0.0
    %3785 = vmatpush1.msra.mxu0 0.0
    %3786 = vmatprep.subr.mxu0 0.0
    %3787 = vmatpush1.msra.mxu0 0.0
    %3788 = vmatprep.subr.mxu0 0.0
    %3789 = vmatpush1.msra.mxu0 0.0
    %3790 = vmatprep.subr.mxu0 0.0
    %3791 = vmatpush1.msra.mxu0 0.0
    %3792 = vmatprep.subr.mxu0 0.0
    %3793 = vmatpush1.msra.mxu0 0.0
    %3794 = vmatprep.subr.mxu0 0.0
    %3795 = vmatpush1.msra.mxu0 0.0
    %3796 = vmatprep.subr.mxu0 0.0
    %3797 = vmatpush1.msra.mxu0 0.0
    %3798 = vmatprep.subr.mxu0 0.0
    %3799 = vmatpush1.msra.mxu0 0.0
    %3800 = vmatprep.subr.mxu0 0.0
    %3801 = vmatpush1.msra.mxu0 0.0
    %3802 = vmatprep.subr.mxu0 0.0
    %3803 = vmatpush1.msra.mxu0 0.0
    %3804 = vmatprep.subr.mxu0 0.0
    %3805 = vmatpush1.msra.mxu0 0.0
    %3806 = vmatprep.subr.mxu0 0.0
    %3807 = vmatpush1.msra.mxu0 0.0
    %3808 = vmatprep.subr.mxu0 0.0
    %3809 = vmatpush1.msra.mxu0 0.0
    %3810 = vmatprep.mubr.f32.mxu0 0.0
    %3811 = vmatmul.mubr.f32.gmra.mrb[0].mxu0 %v3626
    %v3812 = vpop.f32.mrb[0].mxu0
    %v3813 = vadd.f32 %v399, %v3812
    %v3814 = vpop.f32.mrb[0].mxu0
    %3815 = vdwg.mxu0
    %v3816 = vld [vmem:[%s800] sm:$0xff]
    %v3817 = vld [vmem:[%s800 + $0x8] sm:$0xff]
    %v3818 = vld [vmem:[%s800 + $0x10] sm:$0xff]
    %v3819 = vld [vmem:[%s800 + $0x18] sm:$0xff]
    %v3820 = vld [vmem:[%s800 + $0x20] sm:$0xff]
    %v3821 = vld [vmem:[%s800 + $0x28] sm:$0xff]
    %v3822 = vld [vmem:[%s800 + $0x30] sm:$0xff]
    %v3823 = vld [vmem:[%s800 + $0x38] sm:$0xff]
    %v3824 = vld [vmem:[%s800 + $0x40] sm:$0xff]
    %v3825 = vld [vmem:[%s800 + $0x48] sm:$0xff]
    %v3826 = vld [vmem:[%s800 + $0x50] sm:$0xff]
    %v3827 = vld [vmem:[%s800 + $0x58] sm:$0xff]
    %v3828 = vld [vmem:[%s800 + $0x60] sm:$0xff]
    %v3829 = vld [vmem:[%s800 + $0x68] sm:$0xff]
    %v3830 = vld [vmem:[%s800 + $0x70] sm:$0xff]
    %v3831 = vld [vmem:[%s800 + $0x78] sm:$0xff]
    %v3832 = vld [vmem:[%s800 + $0x80] sm:$0xff]
    %v3833 = vld [vmem:[%s800 + $0x88] sm:$0xff]
    %v3834 = vld [vmem:[%s800 + $0x90] sm:$0xff]
    %v3835 = vld [vmem:[%s800 + $0x98] sm:$0xff]
    %v3836 = vld [vmem:[%s800 + $0xa0] sm:$0xff]
    %v3837 = vld [vmem:[%s800 + $0xa8] sm:$0xff]
    %v3838 = vld [vmem:[%s800 + $0xb0] sm:$0xff]
    %v3839 = vld [vmem:[%s800 + $0xb8] sm:$0xff]
    %v3840 = vld [vmem:[%s800 + $0xc0] sm:$0xff]
    %v3841 = vld [vmem:[%s800 + $0xc8] sm:$0xff]
    %v3842 = vld [vmem:[%s800 + $0xd0] sm:$0xff]
    %v3843 = vld [vmem:[%s800 + $0xd8] sm:$0xff]
    %v3844 = vld [vmem:[%s800 + $0xe0] sm:$0xff]
    %v3845 = vld [vmem:[%s800 + $0xe8] sm:$0xff]
    %v3846 = vld [vmem:[%s800 + $0xf0] sm:$0xff]
    %v3847 = vld [vmem:[%s800 + $0xf8] sm:$0xff]
    %v3848 = vld [vmem:[%s800 + $0x100] sm:$0xff]
    %v3849 = vld [vmem:[%s800 + $0x108] sm:$0xff]
    %v3850 = vld [vmem:[%s800 + $0x110] sm:$0xff]
    %v3851 = vld [vmem:[%s800 + $0x118] sm:$0xff]
    %v3852 = vld [vmem:[%s800 + $0x120] sm:$0xff]
    %v3853 = vld [vmem:[%s800 + $0x128] sm:$0xff]
    %v3854 = vld [vmem:[%s800 + $0x130] sm:$0xff]
    %v3855 = vld [vmem:[%s800 + $0x138] sm:$0xff]
    %v3856 = vld [vmem:[%s800 + $0x140] sm:$0xff]
    %v3857 = vld [vmem:[%s800 + $0x148] sm:$0xff]
    %v3858 = vld [vmem:[%s800 + $0x150] sm:$0xff]
    %v3859 = vld [vmem:[%s800 + $0x158] sm:$0xff]
    %v3860 = vld [vmem:[%s800 + $0x160] sm:$0xff]
    %v3861 = vld [vmem:[%s800 + $0x168] sm:$0xff]
    %v3862 = vld [vmem:[%s800 + $0x170] sm:$0xff]
    %v3863 = vld [vmem:[%s800 + $0x178] sm:$0xff]
    %3864 = vmatprep.subr.mxu0 %v3817
    %3865 = vmatpush1.msra.mxu0 %v3816
    %3866 = vmatprep.subr.mxu0 %v3820
    %3867 = vmatpush1.msra.mxu0 %v3819
    %3868 = vmatprep.subr.mxu0 %v3823
    %3869 = vmatpush1.msra.mxu0 %v3822
    %3870 = vmatprep.subr.mxu0 %v3826
    %3871 = vmatpush1.msra.mxu0 %v3825
    %3872 = vmatprep.subr.mxu0 %v3829
    %3873 = vmatpush1.msra.mxu0 %v3828
    %3874 = vmatprep.subr.mxu0 %v3832
    %3875 = vmatpush1.msra.mxu0 %v3831
    %3876 = vmatprep.subr.mxu0 %v3835
    %3877 = vmatpush1.msra.mxu0 %v3834
    %3878 = vmatprep.subr.mxu0 %v3838
    %3879 = vmatpush1.msra.mxu0 %v3837
    %3880 = vmatprep.subr.mxu0 %v3841
    %3881 = vmatpush1.msra.mxu0 %v3840
    %3882 = vmatprep.subr.mxu0 %v3844
    %3883 = vmatpush1.msra.mxu0 %v3843
    %3884 = vmatprep.subr.mxu0 %v3847
    %3885 = vmatpush1.msra.mxu0 %v3846
    %3886 = vmatprep.subr.mxu0 %v3850
    %3887 = vmatpush1.msra.mxu0 %v3849
    %3888 = vmatprep.subr.mxu0 %v3853
    %3889 = vmatpush1.msra.mxu0 %v3852
    %3890 = vmatprep.subr.mxu0 %v3856
    %3891 = vmatpush1.msra.mxu0 %v3855
    %3892 = vmatprep.subr.mxu0 %v3859
    %3893 = vmatpush1.msra.mxu0 %v3858
    %3894 = vmatprep.subr.mxu0 %v3862
    %3895 = vmatpush1.msra.mxu0 %v3861
    %3896 = vmatprep.subr.mxu0 0.0
    %3897 = vmatpush1.msra.mxu0 0.0
    %3898 = vmatprep.subr.mxu0 0.0
    %3899 = vmatpush1.msra.mxu0 0.0
    %3900 = vmatprep.subr.mxu0 0.0
    %3901 = vmatpush1.msra.mxu0 0.0
    %3902 = vmatprep.subr.mxu0 0.0
    %3903 = vmatpush1.msra.mxu0 0.0
    %3904 = vmatprep.subr.mxu0 0.0
    %3905 = vmatpush1.msra.mxu0 0.0
    %3906 = vmatprep.subr.mxu0 0.0
    %3907 = vmatpush1.msra.mxu0 0.0
    %3908 = vmatprep.subr.mxu0 0.0
    %3909 = vmatpush1.msra.mxu0 0.0
    %3910 = vmatprep.subr.mxu0 0.0
    %3911 = vmatpush1.msra.mxu0 0.0
    %3912 = vmatprep.subr.mxu0 0.0
    %3913 = vmatpush1.msra.mxu0 0.0
    %3914 = vmatprep.subr.mxu0 0.0
    %3915 = vmatpush1.msra.mxu0 0.0
    %3916 = vmatprep.subr.mxu0 0.0
    %3917 = vmatpush1.msra.mxu0 0.0
    %3918 = vmatprep.subr.mxu0 0.0
    %3919 = vmatpush1.msra.mxu0 0.0
    %3920 = vmatprep.subr.mxu0 0.0
    %3921 = vmatpush1.msra.mxu0 0.0
    %3922 = vmatprep.subr.mxu0 0.0
    %3923 = vmatpush1.msra.mxu0 0.0
    %3924 = vmatprep.subr.mxu0 0.0
    %3925 = vmatpush1.msra.mxu0 0.0
    %3926 = vmatprep.subr.mxu0 0.0
    %3927 = vmatpush1.msra.mxu0 0.0
    %3928 = vmatprep.mubr.f32.mxu0 0.0
    %3929 = vmatmul.mubr.f32.gmra.mrb[0].mxu0 %v3417
    %v3930 = vpop.f32.mrb[0].mxu0
    %v3931 = vadd.f32 %v373, %v3930
    %v3932 = vpop.f32.mrb[0].mxu0
    %v3933 = vadd.f32 %v377, %v3932
    %3934 = vdwg.mxu0
    %3935 = vmatprep.subr.mxu0 0.0
    %3936 = vmatpush1.msra.mxu0 %v3818
    %3937 = vmatprep.subr.mxu0 0.0
    %3938 = vmatpush1.msra.mxu0 %v3821
    %3939 = vmatprep.subr.mxu0 0.0
    %3940 = vmatpush1.msra.mxu0 %v3824
    %3941 = vmatprep.subr.mxu0 0.0
    %3942 = vmatpush1.msra.mxu0 %v3827
    %3943 = vmatprep.subr.mxu0 0.0
    %3944 = vmatpush1.msra.mxu0 %v3830
    %3945 = vmatprep.subr.mxu0 0.0
    %3946 = vmatpush1.msra.mxu0 %v3833
    %3947 = vmatprep.subr.mxu0 0.0
    %3948 = vmatpush1.msra.mxu0 %v3836
    %3949 = vmatprep.subr.mxu0 0.0
    %3950 = vmatpush1.msra.mxu0 %v3839
    %3951 = vmatprep.subr.mxu0 0.0
    %3952 = vmatpush1.msra.mxu0 %v3842
    %3953 = vmatprep.subr.mxu0 0.0
    %3954 = vmatpush1.msra.mxu0 %v3845
    %3955 = vmatprep.subr.mxu0 0.0
    %3956 = vmatpush1.msra.mxu0 %v3848
    %3957 = vmatprep.subr.mxu0 0.0
    %3958 = vmatpush1.msra.mxu0 %v3851
    %3959 = vmatprep.subr.mxu0 0.0
    %3960 = vmatpush1.msra.mxu0 %v3854
    %3961 = vmatprep.subr.mxu0 0.0
    %3962 = vmatpush1.msra.mxu0 %v3857
    %3963 = vmatprep.subr.mxu0 0.0
    %3964 = vmatpush1.msra.mxu0 %v3860
    %3965 = vmatprep.subr.mxu0 0.0
    %3966 = vmatpush1.msra.mxu0 %v3863
    %3967 = vmatprep.subr.mxu0 0.0
    %3968 = vmatpush1.msra.mxu0 0.0
    %3969 = vmatprep.subr.mxu0 0.0
    %3970 = vmatpush1.msra.mxu0 0.0
    %3971 = vmatprep.subr.mxu0 0.0
    %3972 = vmatpush1.msra.mxu0 0.0
    %3973 = vmatprep.subr.mxu0 0.0
    %3974 = vmatpush1.msra.mxu0 0.0
    %3975 = vmatprep.subr.mxu0 0.0
    %3976 = vmatpush1.msra.mxu0 0.0
    %3977 = vmatprep.subr.mxu0 0.0
    %3978 = vmatpush1.msra.mxu0 0.0
    %3979 = vmatprep.subr.mxu0 0.0
    %3980 = vmatpush1.msra.mxu0 0.0
    %3981 = vmatprep.subr.mxu0 0.0
    %3982 = vmatpush1.msra.mxu0 0.0
    %3983 = vmatprep.subr.mxu0 0.0
    %3984 = vmatpush1.msra.mxu0 0.0
    %3985 = vmatprep.subr.mxu0 0.0
    %3986 = vmatpush1.msra.mxu0 0.0
    %3987 = vmatprep.subr.mxu0 0.0
    %3988 = vmatpush1.msra.mxu0 0.0
    %3989 = vmatprep.subr.mxu0 0.0
    %3990 = vmatpush1.msra.mxu0 0.0
    %3991 = vmatprep.subr.mxu0 0.0
    %3992 = vmatpush1.msra.mxu0 0.0
    %3993 = vmatprep.subr.mxu0 0.0
    %3994 = vmatpush1.msra.mxu0 0.0
    %3995 = vmatprep.subr.mxu0 0.0
    %3996 = vmatpush1.msra.mxu0 0.0
    %3997 = vmatprep.subr.mxu0 0.0
    %3998 = vmatpush1.msra.mxu0 0.0
    %3999 = vmatprep.mubr.f32.mxu0 0.0
    %4000 = vmatmul.mubr.f32.gmra.mrb[0].mxu0 %v3417
    %v4001 = vpop.f32.mrb[0].mxu0
    %v4002 = vadd.f32 %v381, %v4001
    %v4003 = vpop.f32.mrb[0].mxu0
    %4004 = vdwg.mxu0
    %v4005 = vadd.f32 %v3742, %v3931
    %v4006 = vadd.f32 %v3744, %v3933
    %v4007 = vmul.f32 %v4005, 0.5
    %v4008 = vmul.f32 %v4006, 0.5
    %v4009 = vtanh.pop %v4007
    %v4010 = vtanh.pop %v4008
    %v4011 = vmul.f32 %v4009, 0.5
    %v4012 = vmul.f32 %v4010, 0.5
    %v4013 = vadd.f32 %v4011, 0.5
    %v4014 = vadd.f32 %v4012, 0.5
    %v4015 = vmul.f32 %v4013, %v4002
    %v4016 = vadd.f32 %v3813, %v4015
    %v4017 = vtanh.pop %v4016
    %v4018 = vsub.f32 %v3417, %v4017
    %v4019 = vmul.f32 %v4014, %v4018
    %v4020 = vadd.f32 %v4017, %v4019
    %4021 = vst [vmem:[#allocation8 + $0x28] sm:$0xff] %v4020
    %v4022 = vld [vmem:[#allocation2 + $0x90] sm:$0xff]
    %v4023 = vld [vmem:[#allocation2 + $0x98] sm:$0xff]
    %v4024 = vld [vmem:[#allocation2 + $0xa0] sm:$0xff]
    %v4025 = vld [vmem:[#allocation6] sm:$0xff]
    %v4026 = vld [vmem:[#allocation6 + $0x8] sm:$0xff]
    %v4027 = vld [vmem:[#allocation6 + $0x10] sm:$0xff]
    %v4028 = vld [vmem:[#allocation6 + $0x18] sm:$0xff]
    %v4029 = vld [vmem:[#allocation6 + $0x20] sm:$0xff]
    %v4030 = vld [vmem:[#allocation6 + $0x28] sm:$0xff]
    %v4031 = vld [vmem:[#allocation6 + $0x30] sm:$0xff]
    %v4032 = vld [vmem:[#allocation6 + $0x38] sm:$0xff]
    %v4033 = vld [vmem:[#allocation6 + $0x40] sm:$0xff]
    %v4034 = vld [vmem:[#allocation6 + $0x48] sm:$0xff]
    %v4035 = vld [vmem:[#allocation6 + $0x50] sm:$0xff]
    %v4036 = vld [vmem:[#allocation6 + $0x58] sm:$0xff]
    %v4037 = vld [vmem:[#allocation6 + $0x60] sm:$0xff]
    %v4038 = vld [vmem:[#allocation6 + $0x68] sm:$0xff]
    %v4039 = vld [vmem:[#allocation6 + $0x70] sm:$0xff]
    %v4040 = vld [vmem:[#allocation6 + $0x78] sm:$0xff]
    %v4041 = vld [vmem:[#allocation6 + $0x80] sm:$0xff]
    %v4042 = vld [vmem:[#allocation6 + $0x88] sm:$0xff]
    %v4043 = vld [vmem:[#allocation6 + $0x90] sm:$0xff]
    %v4044 = vld [vmem:[#allocation6 + $0x98] sm:$0xff]
    %v4045 = vld [vmem:[#allocation6 + $0xa0] sm:$0xff]
    %v4046 = vld [vmem:[#allocation6 + $0xa8] sm:$0xff]
    %v4047 = vld [vmem:[#allocation6 + $0xb0] sm:$0xff]
    %v4048 = vld [vmem:[#allocation6 + $0xb8] sm:$0xff]
    %v4049 = vld [vmem:[#allocation6 + $0xc0] sm:$0xff]
    %v4050 = vld [vmem:[#allocation6 + $0xc8] sm:$0xff]
    %v4051 = vld [vmem:[#allocation6 + $0xd0] sm:$0xff]
    %v4052 = vld [vmem:[#allocation6 + $0xd8] sm:$0xff]
    %v4053 = vld [vmem:[#allocation6 + $0xe0] sm:$0xff]
    %v4054 = vld [vmem:[#allocation6 + $0xe8] sm:$0xff]
    %v4055 = vld [vmem:[#allocation6 + $0xf0] sm:$0xff]
    %v4056 = vld [vmem:[#allocation6 + $0xf8] sm:$0xff]
    %v4057 = vld [vmem:[#allocation6 + $0x100] sm:$0xff]
    %v4058 = vld [vmem:[#allocation6 + $0x108] sm:$0xff]
    %v4059 = vld [vmem:[#allocation6 + $0x110] sm:$0xff]
    %v4060 = vld [vmem:[#allocation6 + $0x118] sm:$0xff]
    %v4061 = vld [vmem:[#allocation6 + $0x120] sm:$0xff]
    %v4062 = vld [vmem:[#allocation6 + $0x128] sm:$0xff]
    %v4063 = vld [vmem:[#allocation6 + $0x130] sm:$0xff]
    %v4064 = vld [vmem:[#allocation6 + $0x138] sm:$0xff]
    %v4065 = vld [vmem:[#allocation6 + $0x140] sm:$0xff]
    %v4066 = vld [vmem:[#allocation6 + $0x148] sm:$0xff]
    %v4067 = vld [vmem:[#allocation6 + $0x150] sm:$0xff]
    %v4068 = vld [vmem:[#allocation6 + $0x158] sm:$0xff]
    %v4069 = vld [vmem:[#allocation6 + $0x160] sm:$0xff]
    %v4070 = vld [vmem:[#allocation6 + $0x168] sm:$0xff]
    %v4071 = vld [vmem:[#allocation6 + $0x170] sm:$0xff]
    %v4072 = vld [vmem:[#allocation6 + $0x178] sm:$0xff]
    %4073 = vmatprep.subr.mxu0 %v4026
    %4074 = vmatpush1.msra.mxu0 %v4025
    %4075 = vmatprep.subr.mxu0 %v4029
    %4076 = vmatpush1.msra.mxu0 %v4028
    %4077 = vmatprep.subr.mxu0 %v4032
    %4078 = vmatpush1.msra.mxu0 %v4031
    %4079 = vmatprep.subr.mxu0 %v4035
    %4080 = vmatpush1.msra.mxu0 %v4034
    %4081 = vmatprep.subr.mxu0 %v4038
    %4082 = vmatpush1.msra.mxu0 %v4037
    %4083 = vmatprep.subr.mxu0 %v4041
    %4084 = vmatpush1.msra.mxu0 %v4040
    %4085 = vmatprep.subr.mxu0 %v4044
    %4086 = vmatpush1.msra.mxu0 %v4043
    %4087 = vmatprep.subr.mxu0 %v4047
    %4088 = vmatpush1.msra.mxu0 %v4046
    %4089 = vmatprep.subr.mxu0 %v4050
    %4090 = vmatpush1.msra.mxu0 %v4049
    %4091 = vmatprep.subr.mxu0 %v4053
    %4092 = vmatpush1.msra.mxu0 %v4052
    %4093 = vmatprep.subr.mxu0 %v4056
    %4094 = vmatpush1.msra.mxu0 %v4055
    %4095 = vmatprep.subr.mxu0 %v4059
    %4096 = vmatpush1.msra.mxu0 %v4058
    %4097 = vmatprep.subr.mxu0 %v4062
    %4098 = vmatpush1.msra.mxu0 %v4061
    %4099 = vmatprep.subr.mxu0 %v4065
    %4100 = vmatpush1.msra.mxu0 %v4064
    %4101 = vmatprep.subr.mxu0 %v4068
    %4102 = vmatpush1.msra.mxu0 %v4067
    %4103 = vmatprep.subr.mxu0 %v4071
    %4104 = vmatpush1.msra.mxu0 %v4070
    %4105 = vmatprep.subr.mxu0 0.0
    %4106 = vmatpush1.msra.mxu0 0.0
    %4107 = vmatprep.subr.mxu0 0.0
    %4108 = vmatpush1.msra.mxu0 0.0
    %4109 = vmatprep.subr.mxu0 0.0
    %4110 = vmatpush1.msra.mxu0 0.0
    %4111 = vmatprep.subr.mxu0 0.0
    %4112 = vmatpush1.msra.mxu0 0.0
    %4113 = vmatprep.subr.mxu0 0.0
    %4114 = vmatpush1.msra.mxu0 0.0
    %4115 = vmatprep.subr.mxu0 0.0
    %4116 = vmatpush1.msra.mxu0 0.0
    %4117 = vmatprep.subr.mxu0 0.0
    %4118 = vmatpush1.msra.mxu0 0.0
    %4119 = vmatprep.subr.mxu0 0.0
    %4120 = vmatpush1.msra.mxu0 0.0
    %4121 = vmatprep.subr.mxu0 0.0
    %4122 = vmatpush1.msra.mxu0 0.0
    %4123 = vmatprep.subr.mxu0 0.0
    %4124 = vmatpush1.msra.mxu0 0.0
    %4125 = vmatprep.subr.mxu0 0.0
    %4126 = vmatpush1.msra.mxu0 0.0
    %4127 = vmatprep.subr.mxu0 0.0
    %4128 = vmatpush1.msra.mxu0 0.0
    %4129 = vmatprep.subr.mxu0 0.0
    %4130 = vmatpush1.msra.mxu0 0.0
    %4131 = vmatprep.subr.mxu0 0.0
    %4132 = vmatpush1.msra.mxu0 0.0
    %4133 = vmatprep.subr.mxu0 0.0
    %4134 = vmatpush1.msra.mxu0 0.0
    %4135 = vmatprep.subr.mxu0 0.0
    %4136 = vmatpush1.msra.mxu0 0.0
    %4137 = vmatprep.mubr.f32.mxu0 0.0
    %4138 = vmatmul.mubr.f32.gmra.mrb[0].mxu0 %v3626
    %v4139 = vpop.f32.mrb[0].mxu0
    %v4140 = vadd.f32 %v355, %v4139
    %v4141 = vpop.f32.mrb[0].mxu0
    %v4142 = vadd.f32 %v359, %v4141
    %4143 = vdwg.mxu0
    %4144 = vmatprep.subr.mxu0 0.0
    %4145 = vmatpush1.msra.mxu0 %v4027
    %4146 = vmatprep.subr.mxu0 0.0
    %4147 = vmatpush1.msra.mxu0 %v4030
    %4148 = vmatprep.subr.mxu0 0.0
    %4149 = vmatpush1.msra.mxu0 %v4033
    %4150 = vmatprep.subr.mxu0 0.0
    %4151 = vmatpush1.msra.mxu0 %v4036
    %4152 = vmatprep.subr.mxu0 0.0
    %4153 = vmatpush1.msra.mxu0 %v4039
    %4154 = vmatprep.subr.mxu0 0.0
    %4155 = vmatpush1.msra.mxu0 %v4042
    %4156 = vmatprep.subr.mxu0 0.0
    %4157 = vmatpush1.msra.mxu0 %v4045
    %4158 = vmatprep.subr.mxu0 0.0
    %4159 = vmatpush1.msra.mxu0 %v4048
    %4160 = vmatprep.subr.mxu0 0.0
    %4161 = vmatpush1.msra.mxu0 %v4051
    %4162 = vmatprep.subr.mxu0 0.0
    %4163 = vmatpush1.msra.mxu0 %v4054
    %4164 = vmatprep.subr.mxu0 0.0
    %4165 = vmatpush1.msra.mxu0 %v4057
    %4166 = vmatprep.subr.mxu0 0.0
    %4167 = vmatpush1.msra.mxu0 %v4060
    %4168 = vmatprep.subr.mxu0 0.0
    %4169 = vmatpush1.msra.mxu0 %v4063
    %4170 = vmatprep.subr.mxu0 0.0
    %4171 = vmatpush1.msra.mxu0 %v4066
    %4172 = vmatprep.subr.mxu0 0.0
    %4173 = vmatpush1.msra.mxu0 %v4069
    %4174 = vmatprep.subr.mxu0 0.0
    %4175 = vmatpush1.msra.mxu0 %v4072
    %4176 = vmatprep.subr.mxu0 0.0
    %4177 = vmatpush1.msra.mxu0 0.0
    %4178 = vmatprep.subr.mxu0 0.0
    %4179 = vmatpush1.msra.mxu0 0.0
    %4180 = vmatprep.subr.mxu0 0.0
    %4181 = vmatpush1.msra.mxu0 0.0
    %4182 = vmatprep.subr.mxu0 0.0
    %4183 = vmatpush1.msra.mxu0 0.0
    %4184 = vmatprep.subr.mxu0 0.0
    %4185 = vmatpush1.msra.mxu0 0.0
    %4186 = vmatprep.subr.mxu0 0.0
    %4187 = vmatpush1.msra.mxu0 0.0
    %4188 = vmatprep.subr.mxu0 0.0
    %4189 = vmatpush1.msra.mxu0 0.0
    %4190 = vmatprep.subr.mxu0 0.0
    %4191 = vmatpush1.msra.mxu0 0.0
    %4192 = vmatprep.subr.mxu0 0.0
    %4193 = vmatpush1.msra.mxu0 0.0
    %4194 = vmatprep.subr.mxu0 0.0
    %4195 = vmatpush1.msra.mxu0 0.0
    %4196 = vmatprep.subr.mxu0 0.0
    %4197 = vmatpush1.msra.mxu0 0.0
    %4198 = vmatprep.subr.mxu0 0.0
    %4199 = vmatpush1.msra.mxu0 0.0
    %4200 = vmatprep.subr.mxu0 0.0
    %4201 = vmatpush1.msra.mxu0 0.0
    %4202 = vmatprep.subr.mxu0 0.0
    %4203 = vmatpush1.msra.mxu0 0.0
    %4204 = vmatprep.subr.mxu0 0.0
    %4205 = vmatpush1.msra.mxu0 0.0
    %4206 = vmatprep.subr.mxu0 0.0
    %4207 = vmatpush1.msra.mxu0 0.0
    %4208 = vmatprep.mubr.f32.mxu0 0.0
    %4209 = vmatmul.mubr.f32.gmra.mrb[0].mxu0 %v3626
    %v4210 = vpop.f32.mrb[0].mxu0
    %v4211 = vadd.f32 %v363, %v4210
    %v4212 = vpop.f32.mrb[0].mxu0
    %4213 = vdwg.mxu0
    %v4214 = vadd.f32 %v4022, %v4140
    %v4215 = vadd.f32 %v4023, %v4142
    %v4216 = vmul.f32 %v4214, 0.5
    %v4217 = vmul.f32 %v4215, 0.5
    %v4218 = vtanh.pop %v4216
    %v4219 = vtanh.pop %v4217
    %v4220 = vmul.f32 %v4218, 0.5
    %v4221 = vmul.f32 %v4219, 0.5
    %v4222 = vadd.f32 %v4220, 0.5
    %v4223 = vadd.f32 %v4221, 0.5
    %v4224 = vmul.f32 %v4222, %v4211
    %v4225 = vadd.f32 %v4024, %v4224
    %v4226 = vtanh.pop %v4225
    %v4227 = vsub.f32 %v3626, %v4226
    %v4228 = vmul.f32 %v4223, %v4227
    %v4229 = vadd.f32 %v4226, %v4228
    %v4230 = vld [vmem:[#allocation3] sm:$0xff]
    %v4231 = vld [vmem:[#allocation3 + $0x8] sm:$0xff]
    %v4232 = vld [vmem:[#allocation3 + $0x10] sm:$0xff]
    %v4233 = vld [vmem:[#allocation3 + $0x18] sm:$0xff]
    %v4234 = vld [vmem:[#allocation3 + $0x20] sm:$0xff]
    %v4235 = vld [vmem:[#allocation3 + $0x28] sm:$0xff]
    %v4236 = vld [vmem:[#allocation3 + $0x30] sm:$0xff]
    %v4237 = vld [vmem:[#allocation3 + $0x38] sm:$0xff]
    %v4238 = vld [vmem:[#allocation3 + $0x40] sm:$0xff]
    %v4239 = vld [vmem:[#allocation3 + $0x48] sm:$0xff]
    %v4240 = vld [vmem:[#allocation3 + $0x50] sm:$0xff]
    %v4241 = vld [vmem:[#allocation3 + $0x58] sm:$0xff]
    %v4242 = vld [vmem:[#allocation3 + $0x60] sm:$0xff]
    %v4243 = vld [vmem:[#allocation3 + $0x68] sm:$0xff]
    %v4244 = vld [vmem:[#allocation3 + $0x70] sm:$0xff]
    %v4245 = vld [vmem:[#allocation3 + $0x78] sm:$0xff]
    %v4246 = vld [vmem:[#allocation3 + $0x80] sm:$0xff]
    %v4247 = vld [vmem:[#allocation3 + $0x88] sm:$0xff]
    %v4248 = vld [vmem:[#allocation3 + $0x90] sm:$0xff]
    %v4249 = vld [vmem:[#allocation3 + $0x98] sm:$0xff]
    %v4250 = vld [vmem:[#allocation3 + $0xa0] sm:$0xff]
    %v4251 = vld [vmem:[#allocation3 + $0xa8] sm:$0xff]
    %v4252 = vld [vmem:[#allocation3 + $0xb0] sm:$0xff]
    %v4253 = vld [vmem:[#allocation3 + $0xb8] sm:$0xff]
    %v4254 = vld [vmem:[#allocation3 + $0xc0] sm:$0xff]
    %v4255 = vld [vmem:[#allocation3 + $0xc8] sm:$0xff]
    %v4256 = vld [vmem:[#allocation3 + $0xd0] sm:$0xff]
    %v4257 = vld [vmem:[#allocation3 + $0xd8] sm:$0xff]
    %v4258 = vld [vmem:[#allocation3 + $0xe0] sm:$0xff]
    %v4259 = vld [vmem:[#allocation3 + $0xe8] sm:$0xff]
    %v4260 = vld [vmem:[#allocation3 + $0xf0] sm:$0xff]
    %v4261 = vld [vmem:[#allocation3 + $0xf8] sm:$0xff]
    %v4262 = vld [vmem:[#allocation3 + $0x100] sm:$0xff]
    %v4263 = vld [vmem:[#allocation3 + $0x108] sm:$0xff]
    %v4264 = vld [vmem:[#allocation3 + $0x110] sm:$0xff]
    %v4265 = vld [vmem:[#allocation3 + $0x118] sm:$0xff]
    %v4266 = vld [vmem:[#allocation3 + $0x120] sm:$0xff]
    %v4267 = vld [vmem:[#allocation3 + $0x128] sm:$0xff]
    %v4268 = vld [vmem:[#allocation3 + $0x130] sm:$0xff]
    %v4269 = vld [vmem:[#allocation3 + $0x138] sm:$0xff]
    %v4270 = vld [vmem:[#allocation3 + $0x140] sm:$0xff]
    %v4271 = vld [vmem:[#allocation3 + $0x148] sm:$0xff]
    %v4272 = vld [vmem:[#allocation3 + $0x150] sm:$0xff]
    %v4273 = vld [vmem:[#allocation3 + $0x158] sm:$0xff]
    %v4274 = vld [vmem:[#allocation3 + $0x160] sm:$0xff]
    %v4275 = vld [vmem:[#allocation3 + $0x168] sm:$0xff]
    %v4276 = vld [vmem:[#allocation3 + $0x170] sm:$0xff]
    %v4277 = vld [vmem:[#allocation3 + $0x178] sm:$0xff]
    %4278 = vmatprep.subr.mxu0 %v4231
    %4279 = vmatpush1.msra.mxu0 %v4230
    %4280 = vmatprep.subr.mxu0 %v4234
    %4281 = vmatpush1.msra.mxu0 %v4233
    %4282 = vmatprep.subr.mxu0 %v4237
    %4283 = vmatpush1.msra.mxu0 %v4236
    %4284 = vmatprep.subr.mxu0 %v4240
    %4285 = vmatpush1.msra.mxu0 %v4239
    %4286 = vmatprep.subr.mxu0 %v4243
    %4287 = vmatpush1.msra.mxu0 %v4242
    %4288 = vmatprep.subr.mxu0 %v4246
    %4289 = vmatpush1.msra.mxu0 %v4245
    %4290 = vmatprep.subr.mxu0 %v4249
    %4291 = vmatpush1.msra.mxu0 %v4248
    %4292 = vmatprep.subr.mxu0 %v4252
    %4293 = vmatpush1.msra.mxu0 %v4251
    %4294 = vmatprep.subr.mxu0 %v4255
    %4295 = vmatpush1.msra.mxu0 %v4254
    %4296 = vmatprep.subr.mxu0 %v4258
    %4297 = vmatpush1.msra.mxu0 %v4257
    %4298 = vmatprep.subr.mxu0 %v4261
    %4299 = vmatpush1.msra.mxu0 %v4260
    %4300 = vmatprep.subr.mxu0 %v4264
    %4301 = vmatpush1.msra.mxu0 %v4263
    %4302 = vmatprep.subr.mxu0 %v4267
    %4303 = vmatpush1.msra.mxu0 %v4266
    %4304 = vmatprep.subr.mxu0 %v4270
    %4305 = vmatpush1.msra.mxu0 %v4269
    %4306 = vmatprep.subr.mxu0 %v4273
    %4307 = vmatpush1.msra.mxu0 %v4272
    %4308 = vmatprep.subr.mxu0 %v4276
    %4309 = vmatpush1.msra.mxu0 %v4275
    %4310 = vmatprep.subr.mxu0 0.0
    %4311 = vmatpush1.msra.mxu0 0.0
    %4312 = vmatprep.subr.mxu0 0.0
    %4313 = vmatpush1.msra.mxu0 0.0
    %4314 = vmatprep.subr.mxu0 0.0
    %4315 = vmatpush1.msra.mxu0 0.0
    %4316 = vmatprep.subr.mxu0 0.0
    %4317 = vmatpush1.msra.mxu0 0.0
    %4318 = vmatprep.subr.mxu0 0.0
    %4319 = vmatpush1.msra.mxu0 0.0
    %4320 = vmatprep.subr.mxu0 0.0
    %4321 = vmatpush1.msra.mxu0 0.0
    %4322 = vmatprep.subr.mxu0 0.0
    %4323 = vmatpush1.msra.mxu0 0.0
    %4324 = vmatprep.subr.mxu0 0.0
    %4325 = vmatpush1.msra.mxu0 0.0
    %4326 = vmatprep.subr.mxu0 0.0
    %4327 = vmatpush1.msra.mxu0 0.0
    %4328 = vmatprep.subr.mxu0 0.0
    %4329 = vmatpush1.msra.mxu0 0.0
    %4330 = vmatprep.subr.mxu0 0.0
    %4331 = vmatpush1.msra.mxu0 0.0
    %4332 = vmatprep.subr.mxu0 0.0
    %4333 = vmatpush1.msra.mxu0 0.0
    %4334 = vmatprep.subr.mxu0 0.0
    %4335 = vmatpush1.msra.mxu0 0.0
    %4336 = vmatprep.subr.mxu0 0.0
    %4337 = vmatpush1.msra.mxu0 0.0
    %4338 = vmatprep.subr.mxu0 0.0
    %4339 = vmatpush1.msra.mxu0 0.0
    %4340 = vmatprep.subr.mxu0 0.0
    %4341 = vmatpush1.msra.mxu0 0.0
    %4342 = vmatprep.mubr.f32.mxu0 0.0
    %4343 = vmatmul.mubr.f32.gmra.mrb[0].mxu0 %v4229
    %v4344 = vpop.f32.mrb[0].mxu0
    %v4345 = vadd.f32 %v391, %v4344
    %v4346 = vpop.f32.mrb[0].mxu0
    %v4347 = vadd.f32 %v395, %v4346
    %4348 = vdwg.mxu0
    %4349 = vmatprep.subr.mxu0 0.0
    %4350 = vmatpush1.msra.mxu0 %v4232
    %4351 = vmatprep.subr.mxu0 0.0
    %4352 = vmatpush1.msra.mxu0 %v4235
    %4353 = vmatprep.subr.mxu0 0.0
    %4354 = vmatpush1.msra.mxu0 %v4238
    %4355 = vmatprep.subr.mxu0 0.0
    %4356 = vmatpush1.msra.mxu0 %v4241
    %4357 = vmatprep.subr.mxu0 0.0
    %4358 = vmatpush1.msra.mxu0 %v4244
    %4359 = vmatprep.subr.mxu0 0.0
    %4360 = vmatpush1.msra.mxu0 %v4247
    %4361 = vmatprep.subr.mxu0 0.0
    %4362 = vmatpush1.msra.mxu0 %v4250
    %4363 = vmatprep.subr.mxu0 0.0
    %4364 = vmatpush1.msra.mxu0 %v4253
    %4365 = vmatprep.subr.mxu0 0.0
    %4366 = vmatpush1.msra.mxu0 %v4256
    %4367 = vmatprep.subr.mxu0 0.0
    %4368 = vmatpush1.msra.mxu0 %v4259
    %4369 = vmatprep.subr.mxu0 0.0
    %4370 = vmatpush1.msra.mxu0 %v4262
    %4371 = vmatprep.subr.mxu0 0.0
    %4372 = vmatpush1.msra.mxu0 %v4265
    %4373 = vmatprep.subr.mxu0 0.0
    %4374 = vmatpush1.msra.mxu0 %v4268
    %4375 = vmatprep.subr.mxu0 0.0
    %4376 = vmatpush1.msra.mxu0 %v4271
    %4377 = vmatprep.subr.mxu0 0.0
    %4378 = vmatpush1.msra.mxu0 %v4274
    %4379 = vmatprep.subr.mxu0 0.0
    %4380 = vmatpush1.msra.mxu0 %v4277
    %4381 = vmatprep.subr.mxu0 0.0
    %4382 = vmatpush1.msra.mxu0 0.0
    %4383 = vmatprep.subr.mxu0 0.0
    %4384 = vmatpush1.msra.mxu0 0.0
    %4385 = vmatprep.subr.mxu0 0.0
    %4386 = vmatpush1.msra.mxu0 0.0
    %4387 = vmatprep.subr.mxu0 0.0
    %4388 = vmatpush1.msra.mxu0 0.0
    %4389 = vmatprep.subr.mxu0 0.0
    %4390 = vmatpush1.msra.mxu0 0.0
    %4391 = vmatprep.subr.mxu0 0.0
    %4392 = vmatpush1.msra.mxu0 0.0
    %4393 = vmatprep.subr.mxu0 0.0
    %4394 = vmatpush1.msra.mxu0 0.0
    %4395 = vmatprep.subr.mxu0 0.0
    %4396 = vmatpush1.msra.mxu0 0.0
    %4397 = vmatprep.subr.mxu0 0.0
    %4398 = vmatpush1.msra.mxu0 0.0
    %4399 = vmatprep.subr.mxu0 0.0
    %4400 = vmatpush1.msra.mxu0 0.0
    %4401 = vmatprep.subr.mxu0 0.0
    %4402 = vmatpush1.msra.mxu0 0.0
    %4403 = vmatprep.subr.mxu0 0.0
    %4404 = vmatpush1.msra.mxu0 0.0
    %4405 = vmatprep.subr.mxu0 0.0
    %4406 = vmatpush1.msra.mxu0 0.0
    %4407 = vmatprep.subr.mxu0 0.0
    %4408 = vmatpush1.msra.mxu0 0.0
    %4409 = vmatprep.subr.mxu0 0.0
    %4410 = vmatpush1.msra.mxu0 0.0
    %4411 = vmatprep.subr.mxu0 0.0
    %4412 = vmatpush1.msra.mxu0 0.0
    %4413 = vmatprep.mubr.f32.mxu0 0.0
    %4414 = vmatmul.mubr.f32.gmra.mrb[0].mxu0 %v4229
    %v4415 = vpop.f32.mrb[0].mxu0
    %v4416 = vadd.f32 %v399, %v4415
    %v4417 = vpop.f32.mrb[0].mxu0
    %4418 = vdwg.mxu0
    %v4419 = vld [vmem:[%s800] sm:$0xff]
    %v4420 = vld [vmem:[%s800 + $0x8] sm:$0xff]
    %v4421 = vld [vmem:[%s800 + $0x10] sm:$0xff]
    %v4422 = vld [vmem:[%s800 + $0x18] sm:$0xff]
    %v4423 = vld [vmem:[%s800 + $0x20] sm:$0xff]
    %v4424 = vld [vmem:[%s800 + $0x28] sm:$0xff]
    %v4425 = vld [vmem:[%s800 + $0x30] sm:$0xff]
    %v4426 = vld [vmem:[%s800 + $0x38] sm:$0xff]
    %v4427 = vld [vmem:[%s800 + $0x40] sm:$0xff]
    %v4428 = vld [vmem:[%s800 + $0x48] sm:$0xff]
    %v4429 = vld [vmem:[%s800 + $0x50] sm:$0xff]
    %v4430 = vld [vmem:[%s800 + $0x58] sm:$0xff]
    %v4431 = vld [vmem:[%s800 + $0x60] sm:$0xff]
    %v4432 = vld [vmem:[%s800 + $0x68] sm:$0xff]
    %v4433 = vld [vmem:[%s800 + $0x70] sm:$0xff]
    %v4434 = vld [vmem:[%s800 + $0x78] sm:$0xff]
    %v4435 = vld [vmem:[%s800 + $0x80] sm:$0xff]
    %v4436 = vld [vmem:[%s800 + $0x88] sm:$0xff]
    %v4437 = vld [vmem:[%s800 + $0x90] sm:$0xff]
    %v4438 = vld [vmem:[%s800 + $0x98] sm:$0xff]
    %v4439 = vld [vmem:[%s800 + $0xa0] sm:$0xff]
    %v4440 = vld [vmem:[%s800 + $0xa8] sm:$0xff]
    %v4441 = vld [vmem:[%s800 + $0xb0] sm:$0xff]
    %v4442 = vld [vmem:[%s800 + $0xb8] sm:$0xff]
    %v4443 = vld [vmem:[%s800 + $0xc0] sm:$0xff]
    %v4444 = vld [vmem:[%s800 + $0xc8] sm:$0xff]
    %v4445 = vld [vmem:[%s800 + $0xd0] sm:$0xff]
    %v4446 = vld [vmem:[%s800 + $0xd8] sm:$0xff]
    %v4447 = vld [vmem:[%s800 + $0xe0] sm:$0xff]
    %v4448 = vld [vmem:[%s800 + $0xe8] sm:$0xff]
    %v4449 = vld [vmem:[%s800 + $0xf0] sm:$0xff]
    %v4450 = vld [vmem:[%s800 + $0xf8] sm:$0xff]
    %v4451 = vld [vmem:[%s800 + $0x100] sm:$0xff]
    %v4452 = vld [vmem:[%s800 + $0x108] sm:$0xff]
    %v4453 = vld [vmem:[%s800 + $0x110] sm:$0xff]
    %v4454 = vld [vmem:[%s800 + $0x118] sm:$0xff]
    %v4455 = vld [vmem:[%s800 + $0x120] sm:$0xff]
    %v4456 = vld [vmem:[%s800 + $0x128] sm:$0xff]
    %v4457 = vld [vmem:[%s800 + $0x130] sm:$0xff]
    %v4458 = vld [vmem:[%s800 + $0x138] sm:$0xff]
    %v4459 = vld [vmem:[%s800 + $0x140] sm:$0xff]
    %v4460 = vld [vmem:[%s800 + $0x148] sm:$0xff]
    %v4461 = vld [vmem:[%s800 + $0x150] sm:$0xff]
    %v4462 = vld [vmem:[%s800 + $0x158] sm:$0xff]
    %v4463 = vld [vmem:[%s800 + $0x160] sm:$0xff]
    %v4464 = vld [vmem:[%s800 + $0x168] sm:$0xff]
    %v4465 = vld [vmem:[%s800 + $0x170] sm:$0xff]
    %v4466 = vld [vmem:[%s800 + $0x178] sm:$0xff]
    %4467 = vmatprep.subr.mxu0 %v4420
    %4468 = vmatpush1.msra.mxu0 %v4419
    %4469 = vmatprep.subr.mxu0 %v4423
    %4470 = vmatpush1.msra.mxu0 %v4422
    %4471 = vmatprep.subr.mxu0 %v4426
    %4472 = vmatpush1.msra.mxu0 %v4425
    %4473 = vmatprep.subr.mxu0 %v4429
    %4474 = vmatpush1.msra.mxu0 %v4428
    %4475 = vmatprep.subr.mxu0 %v4432
    %4476 = vmatpush1.msra.mxu0 %v4431
    %4477 = vmatprep.subr.mxu0 %v4435
    %4478 = vmatpush1.msra.mxu0 %v4434
    %4479 = vmatprep.subr.mxu0 %v4438
    %4480 = vmatpush1.msra.mxu0 %v4437
    %4481 = vmatprep.subr.mxu0 %v4441
    %4482 = vmatpush1.msra.mxu0 %v4440
    %4483 = vmatprep.subr.mxu0 %v4444
    %4484 = vmatpush1.msra.mxu0 %v4443
    %4485 = vmatprep.subr.mxu0 %v4447
    %4486 = vmatpush1.msra.mxu0 %v4446
    %4487 = vmatprep.subr.mxu0 %v4450
    %4488 = vmatpush1.msra.mxu0 %v4449
    %4489 = vmatprep.subr.mxu0 %v4453
    %4490 = vmatpush1.msra.mxu0 %v4452
    %4491 = vmatprep.subr.mxu0 %v4456
    %4492 = vmatpush1.msra.mxu0 %v4455
    %4493 = vmatprep.subr.mxu0 %v4459
    %4494 = vmatpush1.msra.mxu0 %v4458
    %4495 = vmatprep.subr.mxu0 %v4462
    %4496 = vmatpush1.msra.mxu0 %v4461
    %4497 = vmatprep.subr.mxu0 %v4465
    %4498 = vmatpush1.msra.mxu0 %v4464
    %4499 = vmatprep.subr.mxu0 0.0
    %4500 = vmatpush1.msra.mxu0 0.0
    %4501 = vmatprep.subr.mxu0 0.0
    %4502 = vmatpush1.msra.mxu0 0.0
    %4503 = vmatprep.subr.mxu0 0.0
    %4504 = vmatpush1.msra.mxu0 0.0
    %4505 = vmatprep.subr.mxu0 0.0
    %4506 = vmatpush1.msra.mxu0 0.0
    %4507 = vmatprep.subr.mxu0 0.0
    %4508 = vmatpush1.msra.mxu0 0.0
    %4509 = vmatprep.subr.mxu0 0.0
    %4510 = vmatpush1.msra.mxu0 0.0
    %4511 = vmatprep.subr.mxu0 0.0
    %4512 = vmatpush1.msra.mxu0 0.0
    %4513 = vmatprep.subr.mxu0 0.0
    %4514 = vmatpush1.msra.mxu0 0.0
    %4515 = vmatprep.subr.mxu0 0.0
    %4516 = vmatpush1.msra.mxu0 0.0
    %4517 = vmatprep.subr.mxu0 0.0
    %4518 = vmatpush1.msra.mxu0 0.0
    %4519 = vmatprep.subr.mxu0 0.0
    %4520 = vmatpush1.msra.mxu0 0.0
    %4521 = vmatprep.subr.mxu0 0.0
    %4522 = vmatpush1.msra.mxu0 0.0
    %4523 = vmatprep.subr.mxu0 0.0
    %4524 = vmatpush1.msra.mxu0 0.0
    %4525 = vmatprep.subr.mxu0 0.0
    %4526 = vmatpush1.msra.mxu0 0.0
    %4527 = vmatprep.subr.mxu0 0.0
    %4528 = vmatpush1.msra.mxu0 0.0
    %4529 = vmatprep.subr.mxu0 0.0
    %4530 = vmatpush1.msra.mxu0 0.0
    %4531 = vmatprep.mubr.f32.mxu0 0.0
    %4532 = vmatmul.mubr.f32.gmra.mrb[0].mxu0 %v4020
    %v4533 = vpop.f32.mrb[0].mxu0
    %v4534 = vadd.f32 %v373, %v4533
    %v4535 = vpop.f32.mrb[0].mxu0
    %v4536 = vadd.f32 %v377, %v4535
    %4537 = vdwg.mxu0
    %4538 = vmatprep.subr.mxu0 0.0
    %4539 = vmatpush1.msra.mxu0 %v4421
    %4540 = vmatprep.subr.mxu0 0.0
    %4541 = vmatpush1.msra.mxu0 %v4424
    %4542 = vmatprep.subr.mxu0 0.0
    %4543 = vmatpush1.msra.mxu0 %v4427
    %4544 = vmatprep.subr.mxu0 0.0
    %4545 = vmatpush1.msra.mxu0 %v4430
    %4546 = vmatprep.subr.mxu0 0.0
    %4547 = vmatpush1.msra.mxu0 %v4433
    %4548 = vmatprep.subr.mxu0 0.0
    %4549 = vmatpush1.msra.mxu0 %v4436
    %4550 = vmatprep.subr.mxu0 0.0
    %4551 = vmatpush1.msra.mxu0 %v4439
    %4552 = vmatprep.subr.mxu0 0.0
    %4553 = vmatpush1.msra.mxu0 %v4442
    %4554 = vmatprep.subr.mxu0 0.0
    %4555 = vmatpush1.msra.mxu0 %v4445
    %4556 = vmatprep.subr.mxu0 0.0
    %4557 = vmatpush1.msra.mxu0 %v4448
    %4558 = vmatprep.subr.mxu0 0.0
    %4559 = vmatpush1.msra.mxu0 %v4451
    %4560 = vmatprep.subr.mxu0 0.0
    %4561 = vmatpush1.msra.mxu0 %v4454
    %4562 = vmatprep.subr.mxu0 0.0
    %4563 = vmatpush1.msra.mxu0 %v4457
    %4564 = vmatprep.subr.mxu0 0.0
    %4565 = vmatpush1.msra.mxu0 %v4460
    %4566 = vmatprep.subr.mxu0 0.0
    %4567 = vmatpush1.msra.mxu0 %v4463
    %4568 = vmatprep.subr.mxu0 0.0
    %4569 = vmatpush1.msra.mxu0 %v4466
    %4570 = vmatprep.subr.mxu0 0.0
    %4571 = vmatpush1.msra.mxu0 0.0
    %4572 = vmatprep.subr.mxu0 0.0
    %4573 = vmatpush1.msra.mxu0 0.0
    %4574 = vmatprep.subr.mxu0 0.0
    %4575 = vmatpush1.msra.mxu0 0.0
    %4576 = vmatprep.subr.mxu0 0.0
    %4577 = vmatpush1.msra.mxu0 0.0
    %4578 = vmatprep.subr.mxu0 0.0
    %4579 = vmatpush1.msra.mxu0 0.0
    %4580 = vmatprep.subr.mxu0 0.0
    %4581 = vmatpush1.msra.mxu0 0.0
    %4582 = vmatprep.subr.mxu0 0.0
    %4583 = vmatpush1.msra.mxu0 0.0
    %4584 = vmatprep.subr.mxu0 0.0
    %4585 = vmatpush1.msra.mxu0 0.0
    %4586 = vmatprep.subr.mxu0 0.0
    %4587 = vmatpush1.msra.mxu0 0.0
    %4588 = vmatprep.subr.mxu0 0.0
    %4589 = vmatpush1.msra.mxu0 0.0
    %4590 = vmatprep.subr.mxu0 0.0
    %4591 = vmatpush1.msra.mxu0 0.0
    %4592 = vmatprep.subr.mxu0 0.0
    %4593 = vmatpush1.msra.mxu0 0.0
    %4594 = vmatprep.subr.mxu0 0.0
    %4595 = vmatpush1.msra.mxu0 0.0
    %4596 = vmatprep.subr.mxu0 0.0
    %4597 = vmatpush1.msra.mxu0 0.0
    %4598 = vmatprep.subr.mxu0 0.0
    %4599 = vmatpush1.msra.mxu0 0.0
    %4600 = vmatprep.subr.mxu0 0.0
    %4601 = vmatpush1.msra.mxu0 0.0
    %4602 = vmatprep.mubr.f32.mxu0 0.0
    %4603 = vmatmul.mubr.f32.gmra.mrb[0].mxu0 %v4020
    %v4604 = vpop.f32.mrb[0].mxu0
    %v4605 = vadd.f32 %v381, %v4604
    %v4606 = vpop.f32.mrb[0].mxu0
    %4607 = vdwg.mxu0
    %v4608 = vadd.f32 %v4345, %v4534
    %v4609 = vadd.f32 %v4347, %v4536
    %v4610 = vmul.f32 %v4608, 0.5
    %v4611 = vmul.f32 %v4609, 0.5
    %v4612 = vtanh.pop %v4610
    %v4613 = vtanh.pop %v4611
    %v4614 = vmul.f32 %v4612, 0.5
    %v4615 = vmul.f32 %v4613, 0.5
    %v4616 = vadd.f32 %v4614, 0.5
    %v4617 = vadd.f32 %v4615, 0.5
    %v4618 = vmul.f32 %v4616, %v4605
    %v4619 = vadd.f32 %v4416, %v4618
    %v4620 = vtanh.pop %v4619
    %v4621 = vsub.f32 %v4020, %v4620
    %v4622 = vmul.f32 %v4617, %v4621
    %v4623 = vadd.f32 %v4620, %v4622
    %4624 = vst [vmem:[#allocation8 + $0x30] sm:$0xff] %v4623
    %v4625 = vld [vmem:[#allocation2 + $0xa8] sm:$0xff]
    %v4626 = vld [vmem:[#allocation2 + $0xb0] sm:$0xff]
    %v4627 = vld [vmem:[#allocation2 + $0xb8] sm:$0xff]
    %v4628 = vld [vmem:[#allocation6] sm:$0xff]
    %v4629 = vld [vmem:[#allocation6 + $0x8] sm:$0xff]
    %v4630 = vld [vmem:[#allocation6 + $0x10] sm:$0xff]
    %v4631 = vld [vmem:[#allocation6 + $0x18] sm:$0xff]
    %v4632 = vld [vmem:[#allocation6 + $0x20] sm:$0xff]
    %v4633 = vld [vmem:[#allocation6 + $0x28] sm:$0xff]
    %v4634 = vld [vmem:[#allocation6 + $0x30] sm:$0xff]
    %v4635 = vld [vmem:[#allocation6 + $0x38] sm:$0xff]
    %v4636 = vld [vmem:[#allocation6 + $0x40] sm:$0xff]
    %v4637 = vld [vmem:[#allocation6 + $0x48] sm:$0xff]
    %v4638 = vld [vmem:[#allocation6 + $0x50] sm:$0xff]
    %v4639 = vld [vmem:[#allocation6 + $0x58] sm:$0xff]
    %v4640 = vld [vmem:[#allocation6 + $0x60] sm:$0xff]
    %v4641 = vld [vmem:[#allocation6 + $0x68] sm:$0xff]
    %v4642 = vld [vmem:[#allocation6 + $0x70] sm:$0xff]
    %v4643 = vld [vmem:[#allocation6 + $0x78] sm:$0xff]
    %v4644 = vld [vmem:[#allocation6 + $0x80] sm:$0xff]
    %v4645 = vld [vmem:[#allocation6 + $0x88] sm:$0xff]
    %v4646 = vld [vmem:[#allocation6 + $0x90] sm:$0xff]
    %v4647 = vld [vmem:[#allocation6 + $0x98] sm:$0xff]
    %v4648 = vld [vmem:[#allocation6 + $0xa0] sm:$0xff]
    %v4649 = vld [vmem:[#allocation6 + $0xa8] sm:$0xff]
    %v4650 = vld [vmem:[#allocation6 + $0xb0] sm:$0xff]
    %v4651 = vld [vmem:[#allocation6 + $0xb8] sm:$0xff]
    %v4652 = vld [vmem:[#allocation6 + $0xc0] sm:$0xff]
    %v4653 = vld [vmem:[#allocation6 + $0xc8] sm:$0xff]
    %v4654 = vld [vmem:[#allocation6 + $0xd0] sm:$0xff]
    %v4655 = vld [vmem:[#allocation6 + $0xd8] sm:$0xff]
    %v4656 = vld [vmem:[#allocation6 + $0xe0] sm:$0xff]
    %v4657 = vld [vmem:[#allocation6 + $0xe8] sm:$0xff]
    %v4658 = vld [vmem:[#allocation6 + $0xf0] sm:$0xff]
    %v4659 = vld [vmem:[#allocation6 + $0xf8] sm:$0xff]
    %v4660 = vld [vmem:[#allocation6 + $0x100] sm:$0xff]
    %v4661 = vld [vmem:[#allocation6 + $0x108] sm:$0xff]
    %v4662 = vld [vmem:[#allocation6 + $0x110] sm:$0xff]
    %v4663 = vld [vmem:[#allocation6 + $0x118] sm:$0xff]
    %v4664 = vld [vmem:[#allocation6 + $0x120] sm:$0xff]
    %v4665 = vld [vmem:[#allocation6 + $0x128] sm:$0xff]
    %v4666 = vld [vmem:[#allocation6 + $0x130] sm:$0xff]
    %v4667 = vld [vmem:[#allocation6 + $0x138] sm:$0xff]
    %v4668 = vld [vmem:[#allocation6 + $0x140] sm:$0xff]
    %v4669 = vld [vmem:[#allocation6 + $0x148] sm:$0xff]
    %v4670 = vld [vmem:[#allocation6 + $0x150] sm:$0xff]
    %v4671 = vld [vmem:[#allocation6 + $0x158] sm:$0xff]
    %v4672 = vld [vmem:[#allocation6 + $0x160] sm:$0xff]
    %v4673 = vld [vmem:[#allocation6 + $0x168] sm:$0xff]
    %v4674 = vld [vmem:[#allocation6 + $0x170] sm:$0xff]
    %v4675 = vld [vmem:[#allocation6 + $0x178] sm:$0xff]
    %4676 = vmatprep.subr.mxu0 %v4629
    %4677 = vmatpush1.msra.mxu0 %v4628
    %4678 = vmatprep.subr.mxu0 %v4632
    %4679 = vmatpush1.msra.mxu0 %v4631
    %4680 = vmatprep.subr.mxu0 %v4635
    %4681 = vmatpush1.msra.mxu0 %v4634
    %4682 = vmatprep.subr.mxu0 %v4638
    %4683 = vmatpush1.msra.mxu0 %v4637
    %4684 = vmatprep.subr.mxu0 %v4641
    %4685 = vmatpush1.msra.mxu0 %v4640
    %4686 = vmatprep.subr.mxu0 %v4644
    %4687 = vmatpush1.msra.mxu0 %v4643
    %4688 = vmatprep.subr.mxu0 %v4647
    %4689 = vmatpush1.msra.mxu0 %v4646
    %4690 = vmatprep.subr.mxu0 %v4650
    %4691 = vmatpush1.msra.mxu0 %v4649
    %4692 = vmatprep.subr.mxu0 %v4653
    %4693 = vmatpush1.msra.mxu0 %v4652
    %4694 = vmatprep.subr.mxu0 %v4656
    %4695 = vmatpush1.msra.mxu0 %v4655
    %4696 = vmatprep.subr.mxu0 %v4659
    %4697 = vmatpush1.msra.mxu0 %v4658
    %4698 = vmatprep.subr.mxu0 %v4662
    %4699 = vmatpush1.msra.mxu0 %v4661
    %4700 = vmatprep.subr.mxu0 %v4665
    %4701 = vmatpush1.msra.mxu0 %v4664
    %4702 = vmatprep.subr.mxu0 %v4668
    %4703 = vmatpush1.msra.mxu0 %v4667
    %4704 = vmatprep.subr.mxu0 %v4671
    %4705 = vmatpush1.msra.mxu0 %v4670
    %4706 = vmatprep.subr.mxu0 %v4674
    %4707 = vmatpush1.msra.mxu0 %v4673
    %4708 = vmatprep.subr.mxu0 0.0
    %4709 = vmatpush1.msra.mxu0 0.0
    %4710 = vmatprep.subr.mxu0 0.0
    %4711 = vmatpush1.msra.mxu0 0.0
    %4712 = vmatprep.subr.mxu0 0.0
    %4713 = vmatpush1.msra.mxu0 0.0
    %4714 = vmatprep.subr.mxu0 0.0
    %4715 = vmatpush1.msra.mxu0 0.0
    %4716 = vmatprep.subr.mxu0 0.0
    %4717 = vmatpush1.msra.mxu0 0.0
    %4718 = vmatprep.subr.mxu0 0.0
    %4719 = vmatpush1.msra.mxu0 0.0
    %4720 = vmatprep.subr.mxu0 0.0
    %4721 = vmatpush1.msra.mxu0 0.0
    %4722 = vmatprep.subr.mxu0 0.0
    %4723 = vmatpush1.msra.mxu0 0.0
    %4724 = vmatprep.subr.mxu0 0.0
    %4725 = vmatpush1.msra.mxu0 0.0
    %4726 = vmatprep.subr.mxu0 0.0
    %4727 = vmatpush1.msra.mxu0 0.0
    %4728 = vmatprep.subr.mxu0 0.0
    %4729 = vmatpush1.msra.mxu0 0.0
    %4730 = vmatprep.subr.mxu0 0.0
    %4731 = vmatpush1.msra.mxu0 0.0
    %4732 = vmatprep.subr.mxu0 0.0
    %4733 = vmatpush1.msra.mxu0 0.0
    %4734 = vmatprep.subr.mxu0 0.0
    %4735 = vmatpush1.msra.mxu0 0.0
    %4736 = vmatprep.subr.mxu0 0.0
    %4737 = vmatpush1.msra.mxu0 0.0
    %4738 = vmatprep.subr.mxu0 0.0
    %4739 = vmatpush1.msra.mxu0 0.0
    %4740 = vmatprep.mubr.f32.mxu0 0.0
    %4741 = vmatmul.mubr.f32.gmra.mrb[0].mxu0 %v4229
    %v4742 = vpop.f32.mrb[0].mxu0
    %v4743 = vadd.f32 %v355, %v4742
    %v4744 = vpop.f32.mrb[0].mxu0
    %v4745 = vadd.f32 %v359, %v4744
    %4746 = vdwg.mxu0
    %4747 = vmatprep.subr.mxu0 0.0
    %4748 = vmatpush1.msra.mxu0 %v4630
    %4749 = vmatprep.subr.mxu0 0.0
    %4750 = vmatpush1.msra.mxu0 %v4633
    %4751 = vmatprep.subr.mxu0 0.0
    %4752 = vmatpush1.msra.mxu0 %v4636
    %4753 = vmatprep.subr.mxu0 0.0
    %4754 = vmatpush1.msra.mxu0 %v4639
    %4755 = vmatprep.subr.mxu0 0.0
    %4756 = vmatpush1.msra.mxu0 %v4642
    %4757 = vmatprep.subr.mxu0 0.0
    %4758 = vmatpush1.msra.mxu0 %v4645
    %4759 = vmatprep.subr.mxu0 0.0
    %4760 = vmatpush1.msra.mxu0 %v4648
    %4761 = vmatprep.subr.mxu0 0.0
    %4762 = vmatpush1.msra.mxu0 %v4651
    %4763 = vmatprep.subr.mxu0 0.0
    %4764 = vmatpush1.msra.mxu0 %v4654
    %4765 = vmatprep.subr.mxu0 0.0
    %4766 = vmatpush1.msra.mxu0 %v4657
    %4767 = vmatprep.subr.mxu0 0.0
    %4768 = vmatpush1.msra.mxu0 %v4660
    %4769 = vmatprep.subr.mxu0 0.0
    %4770 = vmatpush1.msra.mxu0 %v4663
    %4771 = vmatprep.subr.mxu0 0.0
    %4772 = vmatpush1.msra.mxu0 %v4666
    %4773 = vmatprep.subr.mxu0 0.0
    %4774 = vmatpush1.msra.mxu0 %v4669
    %4775 = vmatprep.subr.mxu0 0.0
    %4776 = vmatpush1.msra.mxu0 %v4672
    %4777 = vmatprep.subr.mxu0 0.0
    %4778 = vmatpush1.msra.mxu0 %v4675
    %4779 = vmatprep.subr.mxu0 0.0
    %4780 = vmatpush1.msra.mxu0 0.0
    %4781 = vmatprep.subr.mxu0 0.0
    %4782 = vmatpush1.msra.mxu0 0.0
    %4783 = vmatprep.subr.mxu0 0.0
    %4784 = vmatpush1.msra.mxu0 0.0
    %4785 = vmatprep.subr.mxu0 0.0
    %4786 = vmatpush1.msra.mxu0 0.0
    %4787 = vmatprep.subr.mxu0 0.0
    %4788 = vmatpush1.msra.mxu0 0.0
    %4789 = vmatprep.subr.mxu0 0.0
    %4790 = vmatpush1.msra.mxu0 0.0
    %4791 = vmatprep.subr.mxu0 0.0
    %4792 = vmatpush1.msra.mxu0 0.0
    %4793 = vmatprep.subr.mxu0 0.0
    %4794 = vmatpush1.msra.mxu0 0.0
    %4795 = vmatprep.subr.mxu0 0.0
    %4796 = vmatpush1.msra.mxu0 0.0
    %4797 = vmatprep.subr.mxu0 0.0
    %4798 = vmatpush1.msra.mxu0 0.0
    %4799 = vmatprep.subr.mxu0 0.0
    %4800 = vmatpush1.msra.mxu0 0.0
    %4801 = vmatprep.subr.mxu0 0.0
    %4802 = vmatpush1.msra.mxu0 0.0
    %4803 = vmatprep.subr.mxu0 0.0
    %4804 = vmatpush1.msra.mxu0 0.0
    %4805 = vmatprep.subr.mxu0 0.0
    %4806 = vmatpush1.msra.mxu0 0.0
    %4807 = vmatprep.subr.mxu0 0.0
    %4808 = vmatpush1.msra.mxu0 0.0
    %4809 = vmatprep.subr.mxu0 0.0
    %4810 = vmatpush1.msra.mxu0 0.0
    %4811 = vmatprep.mubr.f32.mxu0 0.0
    %4812 = vmatmul.mubr.f32.gmra.mrb[0].mxu0 %v4229
    %v4813 = vpop.f32.mrb[0].mxu0
    %v4814 = vadd.f32 %v363, %v4813
    %v4815 = vpop.f32.mrb[0].mxu0
    %4816 = vdwg.mxu0
    %v4817 = vadd.f32 %v4625, %v4743
    %v4818 = vadd.f32 %v4626, %v4745
    %v4819 = vmul.f32 %v4817, 0.5
    %v4820 = vmul.f32 %v4818, 0.5
    %v4821 = vtanh.pop %v4819
    %v4822 = vtanh.pop %v4820
    %v4823 = vmul.f32 %v4821, 0.5
    %v4824 = vmul.f32 %v4822, 0.5
    %v4825 = vadd.f32 %v4823, 0.5
    %v4826 = vadd.f32 %v4824, 0.5
    %v4827 = vmul.f32 %v4825, %v4814
    %v4828 = vadd.f32 %v4627, %v4827
    %v4829 = vtanh.pop %v4828
    %v4830 = vsub.f32 %v4229, %v4829
    %v4831 = vmul.f32 %v4826, %v4830
    %v4832 = vadd.f32 %v4829, %v4831
    %v4833 = vld [vmem:[#allocation3] sm:$0xff]
    %v4834 = vld [vmem:[#allocation3 + $0x8] sm:$0xff]
    %v4835 = vld [vmem:[#allocation3 + $0x10] sm:$0xff]
    %v4836 = vld [vmem:[#allocation3 + $0x18] sm:$0xff]
    %v4837 = vld [vmem:[#allocation3 + $0x20] sm:$0xff]
    %v4838 = vld [vmem:[#allocation3 + $0x28] sm:$0xff]
    %v4839 = vld [vmem:[#allocation3 + $0x30] sm:$0xff]
    %v4840 = vld [vmem:[#allocation3 + $0x38] sm:$0xff]
    %v4841 = vld [vmem:[#allocation3 + $0x40] sm:$0xff]
    %v4842 = vld [vmem:[#allocation3 + $0x48] sm:$0xff]
    %v4843 = vld [vmem:[#allocation3 + $0x50] sm:$0xff]
    %v4844 = vld [vmem:[#allocation3 + $0x58] sm:$0xff]
    %v4845 = vld [vmem:[#allocation3 + $0x60] sm:$0xff]
    %v4846 = vld [vmem:[#allocation3 + $0x68] sm:$0xff]
    %v4847 = vld [vmem:[#allocation3 + $0x70] sm:$0xff]
    %v4848 = vld [vmem:[#allocation3 + $0x78] sm:$0xff]
    %v4849 = vld [vmem:[#allocation3 + $0x80] sm:$0xff]
    %v4850 = vld [vmem:[#allocation3 + $0x88] sm:$0xff]
    %v4851 = vld [vmem:[#allocation3 + $0x90] sm:$0xff]
    %v4852 = vld [vmem:[#allocation3 + $0x98] sm:$0xff]
    %v4853 = vld [vmem:[#allocation3 + $0xa0] sm:$0xff]
    %v4854 = vld [vmem:[#allocation3 + $0xa8] sm:$0xff]
    %v4855 = vld [vmem:[#allocation3 + $0xb0] sm:$0xff]
    %v4856 = vld [vmem:[#allocation3 + $0xb8] sm:$0xff]
    %v4857 = vld [vmem:[#allocation3 + $0xc0] sm:$0xff]
    %v4858 = vld [vmem:[#allocation3 + $0xc8] sm:$0xff]
    %v4859 = vld [vmem:[#allocation3 + $0xd0] sm:$0xff]
    %v4860 = vld [vmem:[#allocation3 + $0xd8] sm:$0xff]
    %v4861 = vld [vmem:[#allocation3 + $0xe0] sm:$0xff]
    %v4862 = vld [vmem:[#allocation3 + $0xe8] sm:$0xff]
    %v4863 = vld [vmem:[#allocation3 + $0xf0] sm:$0xff]
    %v4864 = vld [vmem:[#allocation3 + $0xf8] sm:$0xff]
    %v4865 = vld [vmem:[#allocation3 + $0x100] sm:$0xff]
    %v4866 = vld [vmem:[#allocation3 + $0x108] sm:$0xff]
    %v4867 = vld [vmem:[#allocation3 + $0x110] sm:$0xff]
    %v4868 = vld [vmem:[#allocation3 + $0x118] sm:$0xff]
    %v4869 = vld [vmem:[#allocation3 + $0x120] sm:$0xff]
    %v4870 = vld [vmem:[#allocation3 + $0x128] sm:$0xff]
    %v4871 = vld [vmem:[#allocation3 + $0x130] sm:$0xff]
    %v4872 = vld [vmem:[#allocation3 + $0x138] sm:$0xff]
    %v4873 = vld [vmem:[#allocation3 + $0x140] sm:$0xff]
    %v4874 = vld [vmem:[#allocation3 + $0x148] sm:$0xff]
    %v4875 = vld [vmem:[#allocation3 + $0x150] sm:$0xff]
    %v4876 = vld [vmem:[#allocation3 + $0x158] sm:$0xff]
    %v4877 = vld [vmem:[#allocation3 + $0x160] sm:$0xff]
    %v4878 = vld [vmem:[#allocation3 + $0x168] sm:$0xff]
    %v4879 = vld [vmem:[#allocation3 + $0x170] sm:$0xff]
    %v4880 = vld [vmem:[#allocation3 + $0x178] sm:$0xff]
    %4881 = vmatprep.subr.mxu0 %v4834
    %4882 = vmatpush1.msra.mxu0 %v4833
    %4883 = vmatprep.subr.mxu0 %v4837
    %4884 = vmatpush1.msra.mxu0 %v4836
    %4885 = vmatprep.subr.mxu0 %v4840
    %4886 = vmatpush1.msra.mxu0 %v4839
    %4887 = vmatprep.subr.mxu0 %v4843
    %4888 = vmatpush1.msra.mxu0 %v4842
    %4889 = vmatprep.subr.mxu0 %v4846
    %4890 = vmatpush1.msra.mxu0 %v4845
    %4891 = vmatprep.subr.mxu0 %v4849
    %4892 = vmatpush1.msra.mxu0 %v4848
    %4893 = vmatprep.subr.mxu0 %v4852
    %4894 = vmatpush1.msra.mxu0 %v4851
    %4895 = vmatprep.subr.mxu0 %v4855
    %4896 = vmatpush1.msra.mxu0 %v4854
    %4897 = vmatprep.subr.mxu0 %v4858
    %4898 = vmatpush1.msra.mxu0 %v4857
    %4899 = vmatprep.subr.mxu0 %v4861
    %4900 = vmatpush1.msra.mxu0 %v4860
    %4901 = vmatprep.subr.mxu0 %v4864
    %4902 = vmatpush1.msra.mxu0 %v4863
    %4903 = vmatprep.subr.mxu0 %v4867
    %4904 = vmatpush1.msra.mxu0 %v4866
    %4905 = vmatprep.subr.mxu0 %v4870
    %4906 = vmatpush1.msra.mxu0 %v4869
    %4907 = vmatprep.subr.mxu0 %v4873
    %4908 = vmatpush1.msra.mxu0 %v4872
    %4909 = vmatprep.subr.mxu0 %v4876
    %4910 = vmatpush1.msra.mxu0 %v4875
    %4911 = vmatprep.subr.mxu0 %v4879
    %4912 = vmatpush1.msra.mxu0 %v4878
    %4913 = vmatprep.subr.mxu0 0.0
    %4914 = vmatpush1.msra.mxu0 0.0
    %4915 = vmatprep.subr.mxu0 0.0
    %4916 = vmatpush1.msra.mxu0 0.0
    %4917 = vmatprep.subr.mxu0 0.0
    %4918 = vmatpush1.msra.mxu0 0.0
    %4919 = vmatprep.subr.mxu0 0.0
    %4920 = vmatpush1.msra.mxu0 0.0
    %4921 = vmatprep.subr.mxu0 0.0
    %4922 = vmatpush1.msra.mxu0 0.0
    %4923 = vmatprep.subr.mxu0 0.0
    %4924 = vmatpush1.msra.mxu0 0.0
    %4925 = vmatprep.subr.mxu0 0.0
    %4926 = vmatpush1.msra.mxu0 0.0
    %4927 = vmatprep.subr.mxu0 0.0
    %4928 = vmatpush1.msra.mxu0 0.0
    %4929 = vmatprep.subr.mxu0 0.0
    %4930 = vmatpush1.msra.mxu0 0.0
    %4931 = vmatprep.subr.mxu0 0.0
    %4932 = vmatpush1.msra.mxu0 0.0
    %4933 = vmatprep.subr.mxu0 0.0
    %4934 = vmatpush1.msra.mxu0 0.0
    %4935 = vmatprep.subr.mxu0 0.0
    %4936 = vmatpush1.msra.mxu0 0.0
    %4937 = vmatprep.subr.mxu0 0.0
    %4938 = vmatpush1.msra.mxu0 0.0
    %4939 = vmatprep.subr.mxu0 0.0
    %4940 = vmatpush1.msra.mxu0 0.0
    %4941 = vmatprep.subr.mxu0 0.0
    %4942 = vmatpush1.msra.mxu0 0.0
    %4943 = vmatprep.subr.mxu0 0.0
    %4944 = vmatpush1.msra.mxu0 0.0
    %4945 = vmatprep.mubr.f32.mxu0 0.0
    %4946 = vmatmul.mubr.f32.gmra.mrb[0].mxu0 %v4832
    %v4947 = vpop.f32.mrb[0].mxu0
    %v4948 = vadd.f32 %v391, %v4947
    %v4949 = vpop.f32.mrb[0].mxu0
    %v4950 = vadd.f32 %v395, %v4949
    %4951 = vdwg.mxu0
    %4952 = vmatprep.subr.mxu0 0.0
    %4953 = vmatpush1.msra.mxu0 %v4835
    %4954 = vmatprep.subr.mxu0 0.0
    %4955 = vmatpush1.msra.mxu0 %v4838
    %4956 = vmatprep.subr.mxu0 0.0
    %4957 = vmatpush1.msra.mxu0 %v4841
    %4958 = vmatprep.subr.mxu0 0.0
    %4959 = vmatpush1.msra.mxu0 %v4844
    %4960 = vmatprep.subr.mxu0 0.0
    %4961 = vmatpush1.msra.mxu0 %v4847
    %4962 = vmatprep.subr.mxu0 0.0
    %4963 = vmatpush1.msra.mxu0 %v4850
    %4964 = vmatprep.subr.mxu0 0.0
    %4965 = vmatpush1.msra.mxu0 %v4853
    %4966 = vmatprep.subr.mxu0 0.0
    %4967 = vmatpush1.msra.mxu0 %v4856
    %4968 = vmatprep.subr.mxu0 0.0
    %4969 = vmatpush1.msra.mxu0 %v4859
    %4970 = vmatprep.subr.mxu0 0.0
    %4971 = vmatpush1.msra.mxu0 %v4862
    %4972 = vmatprep.subr.mxu0 0.0
    %4973 = vmatpush1.msra.mxu0 %v4865
    %4974 = vmatprep.subr.mxu0 0.0
    %4975 = vmatpush1.msra.mxu0 %v4868
    %4976 = vmatprep.subr.mxu0 0.0
    %4977 = vmatpush1.msra.mxu0 %v4871
    %4978 = vmatprep.subr.mxu0 0.0
    %4979 = vmatpush1.msra.mxu0 %v4874
    %4980 = vmatprep.subr.mxu0 0.0
    %4981 = vmatpush1.msra.mxu0 %v4877
    %4982 = vmatprep.subr.mxu0 0.0
    %4983 = vmatpush1.msra.mxu0 %v4880
    %4984 = vmatprep.subr.mxu0 0.0
    %4985 = vmatpush1.msra.mxu0 0.0
    %4986 = vmatprep.subr.mxu0 0.0
    %4987 = vmatpush1.msra.mxu0 0.0
    %4988 = vmatprep.subr.mxu0 0.0
    %4989 = vmatpush1.msra.mxu0 0.0
    %4990 = vmatprep.subr.mxu0 0.0
    %4991 = vmatpush1.msra.mxu0 0.0
    %4992 = vmatprep.subr.mxu0 0.0
    %4993 = vmatpush1.msra.mxu0 0.0
    %4994 = vmatprep.subr.mxu0 0.0
    %4995 = vmatpush1.msra.mxu0 0.0
    %4996 = vmatprep.subr.mxu0 0.0
    %4997 = vmatpush1.msra.mxu0 0.0
    %4998 = vmatprep.subr.mxu0 0.0
    %4999 = vmatpush1.msra.mxu0 0.0
    %5000 = vmatprep.subr.mxu0 0.0
    %5001 = vmatpush1.msra.mxu0 0.0
    %5002 = vmatprep.subr.mxu0 0.0
    %5003 = vmatpush1.msra.mxu0 0.0
    %5004 = vmatprep.subr.mxu0 0.0
    %5005 = vmatpush1.msra.mxu0 0.0
    %5006 = vmatprep.subr.mxu0 0.0
    %5007 = vmatpush1.msra.mxu0 0.0
    %5008 = vmatprep.subr.mxu0 0.0
    %5009 = vmatpush1.msra.mxu0 0.0
    %5010 = vmatprep.subr.mxu0 0.0
    %5011 = vmatpush1.msra.mxu0 0.0
    %5012 = vmatprep.subr.mxu0 0.0
    %5013 = vmatpush1.msra.mxu0 0.0
    %5014 = vmatprep.subr.mxu0 0.0
    %5015 = vmatpush1.msra.mxu0 0.0
    %5016 = vmatprep.mubr.f32.mxu0 0.0
    %5017 = vmatmul.mubr.f32.gmra.mrb[0].mxu0 %v4832
    %v5018 = vpop.f32.mrb[0].mxu0
    %v5019 = vadd.f32 %v399, %v5018
    %v5020 = vpop.f32.mrb[0].mxu0
    %5021 = vdwg.mxu0
    %v5022 = vld [vmem:[%s800] sm:$0xff]
    %v5023 = vld [vmem:[%s800 + $0x8] sm:$0xff]
    %v5024 = vld [vmem:[%s800 + $0x10] sm:$0xff]
    %v5025 = vld [vmem:[%s800 + $0x18] sm:$0xff]
    %v5026 = vld [vmem:[%s800 + $0x20] sm:$0xff]
    %v5027 = vld [vmem:[%s800 + $0x28] sm:$0xff]
    %v5028 = vld [vmem:[%s800 + $0x30] sm:$0xff]
    %v5029 = vld [vmem:[%s800 + $0x38] sm:$0xff]
    %v5030 = vld [vmem:[%s800 + $0x40] sm:$0xff]
    %v5031 = vld [vmem:[%s800 + $0x48] sm:$0xff]
    %v5032 = vld [vmem:[%s800 + $0x50] sm:$0xff]
    %v5033 = vld [vmem:[%s800 + $0x58] sm:$0xff]
    %v5034 = vld [vmem:[%s800 + $0x60] sm:$0xff]
    %v5035 = vld [vmem:[%s800 + $0x68] sm:$0xff]
    %v5036 = vld [vmem:[%s800 + $0x70] sm:$0xff]
    %v5037 = vld [vmem:[%s800 + $0x78] sm:$0xff]
    %v5038 = vld [vmem:[%s800 + $0x80] sm:$0xff]
    %v5039 = vld [vmem:[%s800 + $0x88] sm:$0xff]
    %v5040 = vld [vmem:[%s800 + $0x90] sm:$0xff]
    %v5041 = vld [vmem:[%s800 + $0x98] sm:$0xff]
    %v5042 = vld [vmem:[%s800 + $0xa0] sm:$0xff]
    %v5043 = vld [vmem:[%s800 + $0xa8] sm:$0xff]
    %v5044 = vld [vmem:[%s800 + $0xb0] sm:$0xff]
    %v5045 = vld [vmem:[%s800 + $0xb8] sm:$0xff]
    %v5046 = vld [vmem:[%s800 + $0xc0] sm:$0xff]
    %v5047 = vld [vmem:[%s800 + $0xc8] sm:$0xff]
    %v5048 = vld [vmem:[%s800 + $0xd0] sm:$0xff]
    %v5049 = vld [vmem:[%s800 + $0xd8] sm:$0xff]
    %v5050 = vld [vmem:[%s800 + $0xe0] sm:$0xff]
    %v5051 = vld [vmem:[%s800 + $0xe8] sm:$0xff]
    %v5052 = vld [vmem:[%s800 + $0xf0] sm:$0xff]
    %v5053 = vld [vmem:[%s800 + $0xf8] sm:$0xff]
    %v5054 = vld [vmem:[%s800 + $0x100] sm:$0xff]
    %v5055 = vld [vmem:[%s800 + $0x108] sm:$0xff]
    %v5056 = vld [vmem:[%s800 + $0x110] sm:$0xff]
    %v5057 = vld [vmem:[%s800 + $0x118] sm:$0xff]
    %v5058 = vld [vmem:[%s800 + $0x120] sm:$0xff]
    %v5059 = vld [vmem:[%s800 + $0x128] sm:$0xff]
    %v5060 = vld [vmem:[%s800 + $0x130] sm:$0xff]
    %v5061 = vld [vmem:[%s800 + $0x138] sm:$0xff]
    %v5062 = vld [vmem:[%s800 + $0x140] sm:$0xff]
    %v5063 = vld [vmem:[%s800 + $0x148] sm:$0xff]
    %v5064 = vld [vmem:[%s800 + $0x150] sm:$0xff]
    %v5065 = vld [vmem:[%s800 + $0x158] sm:$0xff]
    %v5066 = vld [vmem:[%s800 + $0x160] sm:$0xff]
    %v5067 = vld [vmem:[%s800 + $0x168] sm:$0xff]
    %v5068 = vld [vmem:[%s800 + $0x170] sm:$0xff]
    %v5069 = vld [vmem:[%s800 + $0x178] sm:$0xff]
    %5070 = vmatprep.subr.mxu0 %v5023
    %5071 = vmatpush1.msra.mxu0 %v5022
    %5072 = vmatprep.subr.mxu0 %v5026
    %5073 = vmatpush1.msra.mxu0 %v5025
    %5074 = vmatprep.subr.mxu0 %v5029
    %5075 = vmatpush1.msra.mxu0 %v5028
    %5076 = vmatprep.subr.mxu0 %v5032
    %5077 = vmatpush1.msra.mxu0 %v5031
    %5078 = vmatprep.subr.mxu0 %v5035
    %5079 = vmatpush1.msra.mxu0 %v5034
    %5080 = vmatprep.subr.mxu0 %v5038
    %5081 = vmatpush1.msra.mxu0 %v5037
    %5082 = vmatprep.subr.mxu0 %v5041
    %5083 = vmatpush1.msra.mxu0 %v5040
    %5084 = vmatprep.subr.mxu0 %v5044
    %5085 = vmatpush1.msra.mxu0 %v5043
    %5086 = vmatprep.subr.mxu0 %v5047
    %5087 = vmatpush1.msra.mxu0 %v5046
    %5088 = vmatprep.subr.mxu0 %v5050
    %5089 = vmatpush1.msra.mxu0 %v5049
    %5090 = vmatprep.subr.mxu0 %v5053
    %5091 = vmatpush1.msra.mxu0 %v5052
    %5092 = vmatprep.subr.mxu0 %v5056
    %5093 = vmatpush1.msra.mxu0 %v5055
    %5094 = vmatprep.subr.mxu0 %v5059
    %5095 = vmatpush1.msra.mxu0 %v5058
    %5096 = vmatprep.subr.mxu0 %v5062
    %5097 = vmatpush1.msra.mxu0 %v5061
    %5098 = vmatprep.subr.mxu0 %v5065
    %5099 = vmatpush1.msra.mxu0 %v5064
    %5100 = vmatprep.subr.mxu0 %v5068
    %5101 = vmatpush1.msra.mxu0 %v5067
    %5102 = vmatprep.subr.mxu0 0.0
    %5103 = vmatpush1.msra.mxu0 0.0
    %5104 = vmatprep.subr.mxu0 0.0
    %5105 = vmatpush1.msra.mxu0 0.0
    %5106 = vmatprep.subr.mxu0 0.0
    %5107 = vmatpush1.msra.mxu0 0.0
    %5108 = vmatprep.subr.mxu0 0.0
    %5109 = vmatpush1.msra.mxu0 0.0
    %5110 = vmatprep.subr.mxu0 0.0
    %5111 = vmatpush1.msra.mxu0 0.0
    %5112 = vmatprep.subr.mxu0 0.0
    %5113 = vmatpush1.msra.mxu0 0.0
    %5114 = vmatprep.subr.mxu0 0.0
    %5115 = vmatpush1.msra.mxu0 0.0
    %5116 = vmatprep.subr.mxu0 0.0
    %5117 = vmatpush1.msra.mxu0 0.0
    %5118 = vmatprep.subr.mxu0 0.0
    %5119 = vmatpush1.msra.mxu0 0.0
    %5120 = vmatprep.subr.mxu0 0.0
    %5121 = vmatpush1.msra.mxu0 0.0
    %5122 = vmatprep.subr.mxu0 0.0
    %5123 = vmatpush1.msra.mxu0 0.0
    %5124 = vmatprep.subr.mxu0 0.0
    %5125 = vmatpush1.msra.mxu0 0.0
    %5126 = vmatprep.subr.mxu0 0.0
    %5127 = vmatpush1.msra.mxu0 0.0
    %5128 = vmatprep.subr.mxu0 0.0
    %5129 = vmatpush1.msra.mxu0 0.0
    %5130 = vmatprep.subr.mxu0 0.0
    %5131 = vmatpush1.msra.mxu0 0.0
    %5132 = vmatprep.subr.mxu0 0.0
    %5133 = vmatpush1.msra.mxu0 0.0
    %5134 = vmatprep.mubr.f32.mxu0 0.0
    %5135 = vmatmul.mubr.f32.gmra.mrb[0].mxu0 %v4623
    %v5136 = vpop.f32.mrb[0].mxu0
    %v5137 = vadd.f32 %v373, %v5136
    %v5138 = vpop.f32.mrb[0].mxu0
    %v5139 = vadd.f32 %v377, %v5138
    %5140 = vdwg.mxu0
    %5141 = vmatprep.subr.mxu0 0.0
    %5142 = vmatpush1.msra.mxu0 %v5024
    %5143 = vmatprep.subr.mxu0 0.0
    %5144 = vmatpush1.msra.mxu0 %v5027
    %5145 = vmatprep.subr.mxu0 0.0
    %5146 = vmatpush1.msra.mxu0 %v5030
    %5147 = vmatprep.subr.mxu0 0.0
    %5148 = vmatpush1.msra.mxu0 %v5033
    %5149 = vmatprep.subr.mxu0 0.0
    %5150 = vmatpush1.msra.mxu0 %v5036
    %5151 = vmatprep.subr.mxu0 0.0
    %5152 = vmatpush1.msra.mxu0 %v5039
    %5153 = vmatprep.subr.mxu0 0.0
    %5154 = vmatpush1.msra.mxu0 %v5042
    %5155 = vmatprep.subr.mxu0 0.0
    %5156 = vmatpush1.msra.mxu0 %v5045
    %5157 = vmatprep.subr.mxu0 0.0
    %5158 = vmatpush1.msra.mxu0 %v5048
    %5159 = vmatprep.subr.mxu0 0.0
    %5160 = vmatpush1.msra.mxu0 %v5051
    %5161 = vmatprep.subr.mxu0 0.0
    %5162 = vmatpush1.msra.mxu0 %v5054
    %5163 = vmatprep.subr.mxu0 0.0
    %5164 = vmatpush1.msra.mxu0 %v5057
    %5165 = vmatprep.subr.mxu0 0.0
    %5166 = vmatpush1.msra.mxu0 %v5060
    %5167 = vmatprep.subr.mxu0 0.0
    %5168 = vmatpush1.msra.mxu0 %v5063
    %5169 = vmatprep.subr.mxu0 0.0
    %5170 = vmatpush1.msra.mxu0 %v5066
    %5171 = vmatprep.subr.mxu0 0.0
    %5172 = vmatpush1.msra.mxu0 %v5069
    %5173 = vmatprep.subr.mxu0 0.0
    %5174 = vmatpush1.msra.mxu0 0.0
    %5175 = vmatprep.subr.mxu0 0.0
    %5176 = vmatpush1.msra.mxu0 0.0
    %5177 = vmatprep.subr.mxu0 0.0
    %5178 = vmatpush1.msra.mxu0 0.0
    %5179 = vmatprep.subr.mxu0 0.0
    %5180 = vmatpush1.msra.mxu0 0.0
    %5181 = vmatprep.subr.mxu0 0.0
    %5182 = vmatpush1.msra.mxu0 0.0
    %5183 = vmatprep.subr.mxu0 0.0
    %5184 = vmatpush1.msra.mxu0 0.0
    %5185 = vmatprep.subr.mxu0 0.0
    %5186 = vmatpush1.msra.mxu0 0.0
    %5187 = vmatprep.subr.mxu0 0.0
    %5188 = vmatpush1.msra.mxu0 0.0
    %5189 = vmatprep.subr.mxu0 0.0
    %5190 = vmatpush1.msra.mxu0 0.0
    %5191 = vmatprep.subr.mxu0 0.0
    %5192 = vmatpush1.msra.mxu0 0.0
    %5193 = vmatprep.subr.mxu0 0.0
    %5194 = vmatpush1.msra.mxu0 0.0
    %5195 = vmatprep.subr.mxu0 0.0
    %5196 = vmatpush1.msra.mxu0 0.0
    %5197 = vmatprep.subr.mxu0 0.0
    %5198 = vmatpush1.msra.mxu0 0.0
    %5199 = vmatprep.subr.mxu0 0.0
    %5200 = vmatpush1.msra.mxu0 0.0
    %5201 = vmatprep.subr.mxu0 0.0
    %5202 = vmatpush1.msra.mxu0 0.0
    %5203 = vmatprep.subr.mxu0 0.0
    %5204 = vmatpush1.msra.mxu0 0.0
    %5205 = vmatprep.mubr.f32.mxu0 0.0
    %5206 = vmatmul.mubr.f32.gmra.mrb[0].mxu0 %v4623
    %v5207 = vpop.f32.mrb[0].mxu0
    %v5208 = vadd.f32 %v381, %v5207
    %v5209 = vpop.f32.mrb[0].mxu0
    %5210 = vdwg.mxu0
    %v5211 = vadd.f32 %v4948, %v5137
    %v5212 = vadd.f32 %v4950, %v5139
    %v5213 = vmul.f32 %v5211, 0.5
    %v5214 = vmul.f32 %v5212, 0.5
    %v5215 = vtanh.pop %v5213
    %v5216 = vtanh.pop %v5214
    %v5217 = vmul.f32 %v5215, 0.5
    %v5218 = vmul.f32 %v5216, 0.5
    %v5219 = vadd.f32 %v5217, 0.5
    %v5220 = vadd.f32 %v5218, 0.5
    %v5221 = vmul.f32 %v5219, %v5208
    %v5222 = vadd.f32 %v5019, %v5221
    %v5223 = vtanh.pop %v5222
    %v5224 = vsub.f32 %v4623, %v5223
    %v5225 = vmul.f32 %v5220, %v5224
    %v5226 = vadd.f32 %v5223, %v5225
    %5227 = vst [vmem:[#allocation8 + $0x38] sm:$0xff] %v5226
    // Predicated region
    $region34: #{tpu_custom_call.1} parent=1 // pred_check
      _
    $region35: #{tpu_custom_call.1} parent=1 // pred_check_branch
      %5229 = sbr.rel (0) target = $region37
    $region36: #{tpu_custom_call.1} parent=1 // pred_region
      %s5231 = ssub.s32 1024, 1024
      %5232 = vsyncadd [#allocation5], %s5231
      %s5233 = sshll.u32 [#allocation8], 4
      %s5234 = int_to_ptr.vmem [resolvable:$true] %s5233
      %5239 = dma.vmem_to_hbm [thread:$0]  %s5234, 1024, %s6, [#allocation5], 128, 128, 8
    $region37: #{tpu_custom_call.1} parent=1 // pred_fallthru
      _
    // Predicated region
    $region38: #{tpu_custom_call.1} parent=1 // pred_check
      _
    $region39: #{tpu_custom_call.1} parent=1 // pred_check_branch
      %5241 = sbr.rel (0) target = $region41
    $region40: #{tpu_custom_call.1} parent=1 // pred_region
      %5242 = dma.done [#allocation5], 1024
    $region41: #{tpu_custom_call.1} parent=1 // pred_fallthru
      _
    %5243 = vsyncpa [#allocation4], 1
    %5244 = vsyncpa [#allocation7], 1
    %5245 = vsyncpa [#allocation5], 1

</llo_original>
